<compile_context>
chip_gen: v7x
topology: tpu7x:2x2x1
jax: 0.10.0
libtpu: 0.0.40
codegen_flags: <defaults>
</compile_context>

<pallas_src>
import functools

import jax
import jax.numpy as jnp
import numpy as np
from jax.experimental import pallas as pl
from jax.experimental.pallas import tpu as pltpu

EPS_IN = 1e-5   # InstanceNorm2d default eps


def _ddn_kernel(dils, x_ref, *refs):
    """Fused DilatedDenseNet forward for one batch sample.

    refs = (w_0, b_0, gamma_0, beta_0, alpha_0, ..., w_{d-1}, ..., alpha_{d-1},
            o_ref, skip_ref).
    w_i: (3, (i+1)*C, 2*C) bf16 -- per kw, K channels in buffer order
         [x, out_0, ..., out_{i-1}], output columns [kh=0 tap | kh=1 tap].
    skip_ref: (maxdil+T, F+2, depth*C) bf16 padded dense-skip scratch.
    """
    depth = len(dils)
    maxd = dils[-1]
    o_ref, skip_ref = refs[-2], refs[-1]
    layer_refs = refs[:-2]
    _, T, F, C = x_ref.shape
    TF = T * F

    # Zero the padded dense-skip buffer (pad rows/cols must read as zero), then
    # drop x (already bf16) into channel block 0 of the interior.
    skip_ref[...] = jnp.zeros(skip_ref.shape, skip_ref.dtype)
    skip_ref[maxd:maxd + T, 1:F + 1, 0:C] = x_ref[0]

    for i in range(depth):
        w_ref, b_ref, g_ref, bt_ref, al_ref = layer_refs[5 * i:5 * (i + 1)]
        dil = dils[i]
        K = (i + 1) * C
        M = (T + dil) * F

        # Accumulator seeded with the conv bias (replaces zeros init + bias pass).
        acc = jnp.broadcast_to(b_ref[...], (TF, C)).astype(jnp.float32)

        # 3 matmuls per layer (one per kw): K=(i+1)*C against the whole dense-skip
        # buffer, N=2*C (both kh taps side by side).  Taps are shifted on the
        # *source* side via the zero-padded buffer, so the accumulator only sees
        # aligned full-value adds (rows 0:TF and dil*F:dil*F+TF of the result).
        for kw in range(3):
            src = skip_ref[maxd - dil:maxd + T, kw:kw + F, 0:K]     # (T+dil, F, K) bf16
            r = jnp.dot(src.reshape(M, K), w_ref[kw],
                        preferred_element_type=jnp.float32)         # (M, 2C) f32
            acc = acc + r[0:TF, 0:C] + r[dil * F:dil * F + TF, C:2 * C]

        # InstanceNorm2d (biased variance, single pass) + affine + PReLU, all f32.
        inv_n = 1.0 / TF
        mean = jnp.sum(acc, axis=0, keepdims=True) * inv_n          # (1, C)
        ex2 = jnp.sum(acc * acc, axis=0, keepdims=True) * inv_n
        var = ex2 - mean * mean
        zn = (acc - mean) * jax.lax.rsqrt(var + EPS_IN)
        zn = zn * g_ref[...] + bt_ref[...]
        act = jnp.where(zn >= 0.0, zn, al_ref[...] * zn)            # (TF, C) f32

        if i + 1 < depth:
            # Feeds the next layer's dense-skip input as channel block i+1.
            skip_ref[maxd:maxd + T, 1:F + 1, (i + 1) * C:(i + 2) * C] = (
                act.reshape(T, F, C).astype(skip_ref.dtype))
        else:
            # Only the last layer's activation is the module output.
            o_ref[0] = act.reshape(T, F, C).astype(o_ref.dtype)


def convert_conv_weight(w_pt, chunks):
    """PyTorch Conv2d weight (Cout, chunks*C, 2, 3) -> (3, chunks*C, 2*Cout) bf16.

    Input-channel chunks are reordered from PyTorch dense-skip order
    [out_{i-1}, ..., out_0, x] to buffer order [x, out_0, ..., out_{i-1}];
    output columns are [kh=0 tap | kh=1 tap] so both time taps come out of one matmul.
    """
    cout = w_pt.shape[0]
    w = w_pt.reshape(cout, chunks, cout, 2, 3)      # (Cout, chunk, Cin_local, kh, kw)
    w = w[:, ::-1]                                  # PyTorch chunk order -> buffer order
    w = jnp.transpose(w, (4, 1, 2, 3, 0))           # (kw, chunk, Cin_local, kh, Cout)
    return w.reshape(3, chunks * cout, 2 * cout).astype(jnp.bfloat16)


def dilated_dense_net(x_bchw, params):
    """x_bchw: (B, C, T, F) float32.  params: per layer
    (w_pt (C, (i+1)*C, 2, 3), bias (C,), gamma (C,), beta (C,), alpha (C,))."""
    depth = len(params)
    B, C, T, F = x_bchw.shape
    dils = tuple(2 ** i for i in range(depth))
    maxd = dils[-1]

    # channels-last + bf16 input (halves input DMA; matmuls are bf16 anyway)
    x_cl = jnp.transpose(x_bchw, (0, 2, 3, 1)).astype(jnp.bfloat16)

    flat = [x_cl]
    in_specs = [pl.BlockSpec((1, T, F, C), lambda b: (b, 0, 0, 0))]
    w_bytes = 0
    for i, (w_pt, bias, gamma, beta, alpha) in enumerate(params):
        packed = (convert_conv_weight(w_pt, i + 1),
                  bias.reshape(1, C), gamma.reshape(1, C),
                  beta.reshape(1, C), alpha.reshape(1, C))
        w_bytes += int(np.prod(packed[0].shape)) * 2
        for p in packed:
            flat.append(p)
            in_specs.append(pl.BlockSpec(p.shape, lambda b, nd=p.ndim: (0,) * nd))

    out_itemsize = jnp.dtype(x_bchw.dtype).itemsize
    small_bytes = depth * 4 * C * 4

    # Advisory cost estimate: 3 matmuls/layer of (T+dil)*F x (i+1)*C x 2C.
    flops = 0
    for i in range(depth):
        flops += 2 * B * 3 * (T + dils[i]) * F * ((i + 1) * C) * (2 * C)
    cost = pl.CostEstimate(
        flops=int(flops),
        transcendentals=int(B * depth * C),
        bytes_accessed=int(B * T * F * C * (2 + out_itemsize) + w_bytes + small_bytes))

    # VMEM budget: blocks (double-buffered), weights, skip scratch, live values.
    # Cap at 64 MiB so the same choice is safe on v7x (64 MiB physical VMEM).
    # TODO(synk): tile T inside a sample (carried InstanceNorm partials) for very
    # long sequences / B==1, to keep >=2 parallel grid steps and stay under VMEM.
    blk_bytes = T * F * C * (2 + out_itemsize)
    scratch_bytes = (maxd + T) * (F + 2) * depth * C * 2
    work_bytes = 8 * (T + maxd) * (F + 2) * C * 4
    need = 2 * (blk_bytes + w_bytes + small_bytes) + scratch_bytes + work_bytes
    vmem_limit = int(min(64 * 1024 * 1024, max(32 * 1024 * 1024, 2 * need)))

    out_cl = pl.pallas_call(
        functools.partial(_ddn_kernel, dils),
        out_shape=jax.ShapeDtypeStruct((B, T, F, C), x_bchw.dtype),
        grid_spec=pltpu.PrefetchScalarGridSpec(
            num_scalar_prefetch=0,
            grid=(B,),
            in_specs=in_specs,
            out_specs=pl.BlockSpec((1, T, F, C), lambda b: (b, 0, 0, 0)),
            scratch_shapes=[
                pltpu.VMEM((maxd + T, F + 2, depth * C), jnp.bfloat16)],
        ),
        compiler_params=pltpu.CompilerParams(
            dimension_semantics=("parallel",),
            vmem_limit_bytes=vmem_limit,
        ),
        cost_estimate=cost,
    )(*flat)

    return jnp.transpose(out_cl, (0, 3, 1, 2))            # back to (B, C, T, F)


def init_params(key, depth, in_channels):
    """PyTorch-layout parameters (as the nn.Module holds them)."""
    C = in_channels
    params = []
    keys = jax.random.split(key, 2 * depth)
    for i in range(depth):
        cin = C * (i + 1)
        bound = 1.0 / np.sqrt(cin * 2 * 3)
        w_pt = jax.random.uniform(keys[2 * i], (C, cin, 2, 3), jnp.float32,
                                  -bound, bound)           # Conv2d weight layout
        b = jax.random.uniform(keys[2 * i + 1], (C,), jnp.float32, -bound, bound)
        gamma = jnp.ones((C,), jnp.float32)                # InstanceNorm2d affine init
        beta = jnp.zeros((C,), jnp.float32)
        alpha = jnp.full((C,), 0.25, jnp.float32)          # PReLU init
        params.append((w_pt, b, gamma, beta, alpha))
    return params


def reference_forward(x_bchw, params):
    """Plain-JAX reference (same bf16 matmul operands as the kernel)."""
    x = jnp.transpose(x_bchw, (0, 2, 3, 1))                # (B, T, F, C)
    B, T, F, C = x.shape
    skip, out = x, None
    for i, (w_pt, b, g, bt, al) in enumerate(params):
        dil = 2 ** i
        w = jnp.transpose(w_pt, (2, 3, 1, 0))              # (2, 3, Cin, Cout)
        xp = jnp.pad(skip, ((0, 0), (dil, 0), (1, 1), (0, 0))).astype(jnp.bfloat16)
        acc = jnp.zeros((B, T, F, C), jnp.float32) + b.reshape(1, 1, 1, C)
        for kh in range(2):
            for kw in range(3):
                win = xp[:, kh * dil:kh * dil + T, kw:kw + F, :]
                acc = acc + jnp.einsum('btfc,cd->btfd', win,
                                       w[kh, kw].astype(jnp.bfloat16),
                                       preferred_element_type=jnp.float32)
        mu = acc.mean(axis=(1, 2), keepdims=True)
        var = jnp.square(acc - mu).mean(axis=(1, 2), keepdims=True)
        zn = (acc - mu) * jax.lax.rsqrt(var + EPS_IN)
        zn = zn * g.reshape(1, 1, 1, C) + bt.reshape(1, 1, 1, C)
        out = jnp.where(zn >= 0.0, zn, al.reshape(1, 1, 1, C) * zn)
        skip = jnp.concatenate([out, skip], axis=-1)
    return jnp.transpose(out, (0, 3, 1, 2))


if __name__ == "__main__":
    depth = 4
    in_channels = 64          # module default
    B, T, F = 2, 16, 8        # small (batch, time, freq)

    key = jax.random.PRNGKey(0)
    kx, kp = jax.random.split(key)
    x = jax.random.normal(kx, (B, in_channels, T, F), jnp.float32)  # (B, C, T, F)
    params = init_params(kp, depth, in_channels)

    out = jax.block_until_ready(jax.jit(dilated_dense_net)(x, params))
    assert out.shape == (B, in_channels, T, F), out.shape

    ref = jax.block_until_ready(reference_forward(x, params))
    max_err = float(jnp.max(jnp.abs(out - ref)))
    assert max_err < 2e-2, f"mismatch vs reference: {max_err}"
    print("KERNEL_OK")
</pallas_src>

<mosaic_0001>
module attributes {stable_mosaic.version = 11 : i64} {
  func.func @_ddn_kernel(%arg0: i32, %arg1: memref<1x16x8x64xbf16, #tpu.memory_space<vmem>>, %arg2: memref<3x64x128xbf16, #tpu.memory_space<vmem>>, %arg3: memref<1x64xf32, #tpu.memory_space<vmem>>, %arg4: memref<1x64xf32, #tpu.memory_space<vmem>>, %arg5: memref<1x64xf32, #tpu.memory_space<vmem>>, %arg6: memref<1x64xf32, #tpu.memory_space<vmem>>, %arg7: memref<3x128x128xbf16, #tpu.memory_space<vmem>>, %arg8: memref<1x64xf32, #tpu.memory_space<vmem>>, %arg9: memref<1x64xf32, #tpu.memory_space<vmem>>, %arg10: memref<1x64xf32, #tpu.memory_space<vmem>>, %arg11: memref<1x64xf32, #tpu.memory_space<vmem>>, %arg12: memref<3x192x128xbf16, #tpu.memory_space<vmem>>, %arg13: memref<1x64xf32, #tpu.memory_space<vmem>>, %arg14: memref<1x64xf32, #tpu.memory_space<vmem>>, %arg15: memref<1x64xf32, #tpu.memory_space<vmem>>, %arg16: memref<1x64xf32, #tpu.memory_space<vmem>>, %arg17: memref<3x256x128xbf16, #tpu.memory_space<vmem>>, %arg18: memref<1x64xf32, #tpu.memory_space<vmem>>, %arg19: memref<1x64xf32, #tpu.memory_space<vmem>>, %arg20: memref<1x64xf32, #tpu.memory_space<vmem>>, %arg21: memref<1x64xf32, #tpu.memory_space<vmem>>, %arg22: memref<1x16x8x64xf32, #tpu.memory_space<vmem>>, %arg23: memref<24x10x256xbf16, #tpu.memory_space<vmem>>) attributes {dimension_semantics = [#tpu.dimension_semantics<parallel>], iteration_bounds = array<i64: 2>, scalar_prefetch = 0 : i64, scratch_operands = 1 : i64, tpu.core_type = #tpu.core_type<tc>, window_params = [{transform_indices = @transform_0, window_bounds = array<i64: 1, 16, 8, 64>}, {pipeline_mode = #tpu.pipeline_mode<synchronous>, transform_indices = @transform_1, window_bounds = array<i64: 3, 64, 128>}, {pipeline_mode = #tpu.pipeline_mode<synchronous>, transform_indices = @transform_2, window_bounds = array<i64: 1, 64>}, {pipeline_mode = #tpu.pipeline_mode<synchronous>, transform_indices = @transform_3, window_bounds = array<i64: 1, 64>}, {pipeline_mode = #tpu.pipeline_mode<synchronous>, transform_indices = @transform_4, window_bounds = array<i64: 1, 64>}, {pipeline_mode = #tpu.pipeline_mode<synchronous>, transform_indices = @transform_5, window_bounds = array<i64: 1, 64>}, {pipeline_mode = #tpu.pipeline_mode<synchronous>, transform_indices = @transform_6, window_bounds = array<i64: 3, 128, 128>}, {pipeline_mode = #tpu.pipeline_mode<synchronous>, transform_indices = @transform_7, window_bounds = array<i64: 1, 64>}, {pipeline_mode = #tpu.pipeline_mode<synchronous>, transform_indices = @transform_8, window_bounds = array<i64: 1, 64>}, {pipeline_mode = #tpu.pipeline_mode<synchronous>, transform_indices = @transform_9, window_bounds = array<i64: 1, 64>}, {pipeline_mode = #tpu.pipeline_mode<synchronous>, transform_indices = @transform_10, window_bounds = array<i64: 1, 64>}, {pipeline_mode = #tpu.pipeline_mode<synchronous>, transform_indices = @transform_11, window_bounds = array<i64: 3, 192, 128>}, {pipeline_mode = #tpu.pipeline_mode<synchronous>, transform_indices = @transform_12, window_bounds = array<i64: 1, 64>}, {pipeline_mode = #tpu.pipeline_mode<synchronous>, transform_indices = @transform_13, window_bounds = array<i64: 1, 64>}, {pipeline_mode = #tpu.pipeline_mode<synchronous>, transform_indices = @transform_14, window_bounds = array<i64: 1, 64>}, {pipeline_mode = #tpu.pipeline_mode<synchronous>, transform_indices = @transform_15, window_bounds = array<i64: 1, 64>}, {pipeline_mode = #tpu.pipeline_mode<synchronous>, transform_indices = @transform_16, window_bounds = array<i64: 3, 256, 128>}, {pipeline_mode = #tpu.pipeline_mode<synchronous>, transform_indices = @transform_17, window_bounds = array<i64: 1, 64>}, {pipeline_mode = #tpu.pipeline_mode<synchronous>, transform_indices = @transform_18, window_bounds = array<i64: 1, 64>}, {pipeline_mode = #tpu.pipeline_mode<synchronous>, transform_indices = @transform_19, window_bounds = array<i64: 1, 64>}, {pipeline_mode = #tpu.pipeline_mode<synchronous>, transform_indices = @transform_20, window_bounds = array<i64: 1, 64>}, {transform_indices = @transform_21, window_bounds = array<i64: 1, 16, 8, 64>}]} {
    %cst = arith.constant 0.000000e+00 : bf16
    %0 = vector.broadcast %cst : bf16 to vector<24x10x256xbf16>
    %c0 = arith.constant 0 : index
    %c0_0 = arith.constant 0 : index
    %c0_1 = arith.constant 0 : index
    %1 = vector.load %arg23[%c0, %c0_0, %c0_1] : memref<24x10x256xbf16, #tpu.memory_space<vmem>>, vector<24x10x256xbf16>
    tpu.vector_store %arg23[%c0, %c0_0, %c0_1], %0 {strides = array<i32>} : memref<24x10x256xbf16, #tpu.memory_space<vmem>>, vector<24x10x256xbf16>,
    %c0_2 = arith.constant 0 : index
    %c0_3 = arith.constant 0 : index
    %c0_4 = arith.constant 0 : index
    %c0_5 = arith.constant 0 : index
    %2 = vector.load %arg1[%c0_2, %c0_3, %c0_4, %c0_5] : memref<1x16x8x64xbf16, #tpu.memory_space<vmem>>, vector<1x16x8x64xbf16>
    %3 = vector.shape_cast %2 : vector<1x16x8x64xbf16> to vector<16x8x64xbf16>
    %c8 = arith.constant 8 : index
    %c1 = arith.constant 1 : index
    %c0_6 = arith.constant 0 : index
    %4 = vector.load %arg23[%c8, %c1, %c0_6] : memref<24x10x256xbf16, #tpu.memory_space<vmem>>, vector<16x8x64xbf16>
    tpu.vector_store %arg23[%c8, %c1, %c0_6], %3 {strides = array<i32>} : memref<24x10x256xbf16, #tpu.memory_space<vmem>>, vector<16x8x64xbf16>,
    %c0_7 = arith.constant 0 : index
    %c0_8 = arith.constant 0 : index
    %5 = vector.load %arg3[%c0_7, %c0_8] : memref<1x64xf32, #tpu.memory_space<vmem>>, vector<1x64xf32>
    %6 = vector.shape_cast %5 : vector<1x64xf32> to vector<1x64xf32>
    %7 = vector.broadcast %6 : vector<1x64xf32> to vector<128x64xf32>
    %c7 = arith.constant 7 : index
    %c0_9 = arith.constant 0 : index
    %c0_10 = arith.constant 0 : index
    %8 = vector.load %arg23[%c7, %c0_9, %c0_10] : memref<24x10x256xbf16, #tpu.memory_space<vmem>>, vector<17x8x64xbf16>
    %9 = vector.shape_cast %8 : vector<17x8x64xbf16> to vector<136x64xbf16>
    %c0_11 = arith.constant 0 : index
    %c0_12 = arith.constant 0 : index
    %c0_13 = arith.constant 0 : index
    %10 = vector.load %arg2[%c0_11, %c0_12, %c0_13] : memref<3x64x128xbf16, #tpu.memory_space<vmem>>, vector<1x64x128xbf16>
    %11 = vector.shape_cast %10 : vector<1x64x128xbf16> to vector<64x128xbf16>
    %cst_14 = arith.constant dense<0.000000e+00> : vector<136x128xf32>
    %12 = tpu.matmul %9, %11, %cst_14 {dimension_numbers = #tpu.dot_dimension_numbers<[1], [0], [0], [1], [0, 0, 1, 1], [], []>} : vector<136x64xbf16>, vector<64x128xbf16>, vector<136x128xf32> -> vector<136x128xf32>
    %13 = vector.extract_strided_slice %12 {offsets = [0, 0], sizes = [128, 64], strides = [1, 1]} : vector<136x128xf32> to vector<128x64xf32>
    %14 = arith.addf %7, %13 : vector<128x64xf32>
    %15 = vector.extract_strided_slice %12 {offsets = [8, 64], sizes = [128, 64], strides = [1, 1]} : vector<136x128xf32> to vector<128x64xf32>
    %16 = arith.addf %14, %15 : vector<128x64xf32>
    %c7_15 = arith.constant 7 : index
    %c1_16 = arith.constant 1 : index
    %c0_17 = arith.constant 0 : index
    %17 = vector.load %arg23[%c7_15, %c1_16, %c0_17] : memref<24x10x256xbf16, #tpu.memory_space<vmem>>, vector<17x8x64xbf16>
    %18 = vector.shape_cast %17 : vector<17x8x64xbf16> to vector<136x64xbf16>
    %c1_18 = arith.constant 1 : index
    %c0_19 = arith.constant 0 : index
    %c0_20 = arith.constant 0 : index
    %19 = vector.load %arg2[%c1_18, %c0_19, %c0_20] : memref<3x64x128xbf16, #tpu.memory_space<vmem>>, vector<1x64x128xbf16>
    %20 = vector.shape_cast %19 : vector<1x64x128xbf16> to vector<64x128xbf16>
    %cst_21 = arith.constant dense<0.000000e+00> : vector<136x128xf32>
    %21 = tpu.matmul %18, %20, %cst_21 {dimension_numbers = #tpu.dot_dimension_numbers<[1], [0], [0], [1], [0, 0, 1, 1], [], []>} : vector<136x64xbf16>, vector<64x128xbf16>, vector<136x128xf32> -> vector<136x128xf32>
    %22 = vector.extract_strided_slice %21 {offsets = [0, 0], sizes = [128, 64], strides = [1, 1]} : vector<136x128xf32> to vector<128x64xf32>
    %23 = arith.addf %16, %22 : vector<128x64xf32>
    %24 = vector.extract_strided_slice %21 {offsets = [8, 64], sizes = [128, 64], strides = [1, 1]} : vector<136x128xf32> to vector<128x64xf32>
    %25 = arith.addf %23, %24 : vector<128x64xf32>
    %c7_22 = arith.constant 7 : index
    %c2 = arith.constant 2 : index
    %c0_23 = arith.constant 0 : index
    %26 = vector.load %arg23[%c7_22, %c2, %c0_23] : memref<24x10x256xbf16, #tpu.memory_space<vmem>>, vector<17x8x64xbf16>
    %27 = vector.shape_cast %26 : vector<17x8x64xbf16> to vector<136x64xbf16>
    %c2_24 = arith.constant 2 : index
    %c0_25 = arith.constant 0 : index
    %c0_26 = arith.constant 0 : index
    %28 = vector.load %arg2[%c2_24, %c0_25, %c0_26] : memref<3x64x128xbf16, #tpu.memory_space<vmem>>, vector<1x64x128xbf16>
    %29 = vector.shape_cast %28 : vector<1x64x128xbf16> to vector<64x128xbf16>
    %cst_27 = arith.constant dense<0.000000e+00> : vector<136x128xf32>
    %30 = tpu.matmul %27, %29, %cst_27 {dimension_numbers = #tpu.dot_dimension_numbers<[1], [0], [0], [1], [0, 0, 1, 1], [], []>} : vector<136x64xbf16>, vector<64x128xbf16>, vector<136x128xf32> -> vector<136x128xf32>
    %31 = vector.extract_strided_slice %30 {offsets = [0, 0], sizes = [128, 64], strides = [1, 1]} : vector<136x128xf32> to vector<128x64xf32>
    %32 = arith.addf %25, %31 : vector<128x64xf32>
    %33 = vector.extract_strided_slice %30 {offsets = [8, 64], sizes = [128, 64], strides = [1, 1]} : vector<136x128xf32> to vector<128x64xf32>
    %34 = arith.addf %32, %33 : vector<128x64xf32>
    %cst_28 = arith.constant dense<0.000000e+00> : vector<64xf32>
    %35 = vector.multi_reduction <add>, %34, %cst_28 [0] : vector<128x64xf32> to vector<64xf32>
    %36 = vector.shape_cast %35 : vector<64xf32> to vector<1x64xf32>
    %cst_29 = arith.constant 7.812500e-03 : f32
    %37 = vector.broadcast %cst_29 : f32 to vector<1x64xf32>
    %38 = arith.mulf %36, %37 : vector<1x64xf32>
    %39 = arith.mulf %34, %34 : vector<128x64xf32>
    %cst_30 = arith.constant dense<0.000000e+00> : vector<64xf32>
    %40 = vector.multi_reduction <add>, %39, %cst_30 [0] : vector<128x64xf32> to vector<64xf32>
    %41 = vector.shape_cast %40 : vector<64xf32> to vector<1x64xf32>
    %cst_31 = arith.constant 7.812500e-03 : f32
    %42 = vector.broadcast %cst_31 : f32 to vector<1x64xf32>
    %43 = arith.mulf %41, %42 : vector<1x64xf32>
    %44 = arith.mulf %38, %38 : vector<1x64xf32>
    %45 = arith.subf %43, %44 : vector<1x64xf32>
    %46 = vector.broadcast %38 : vector<1x64xf32> to vector<128x64xf32>
    %47 = arith.subf %34, %46 : vector<128x64xf32>
    %cst_32 = arith.constant 9.99999974E-6 : f32
    %48 = vector.broadcast %cst_32 : f32 to vector<1x64xf32>
    %49 = arith.addf %45, %48 : vector<1x64xf32>
    %50 = math.rsqrt %49 : vector<1x64xf32>
    %51 = vector.broadcast %50 : vector<1x64xf32> to vector<128x64xf32>
    %52 = arith.mulf %47, %51 : vector<128x64xf32>
    %c0_33 = arith.constant 0 : index
    %c0_34 = arith.constant 0 : index
    %53 = vector.load %arg4[%c0_33, %c0_34] : memref<1x64xf32, #tpu.memory_space<vmem>>, vector<1x64xf32>
    %54 = vector.broadcast %53 : vector<1x64xf32> to vector<128x64xf32>
    %55 = arith.mulf %52, %54 : vector<128x64xf32>
    %c0_35 = arith.constant 0 : index
    %c0_36 = arith.constant 0 : index
    %56 = vector.load %arg5[%c0_35, %c0_36] : memref<1x64xf32, #tpu.memory_space<vmem>>, vector<1x64xf32>
    %57 = vector.broadcast %56 : vector<1x64xf32> to vector<128x64xf32>
    %58 = arith.addf %55, %57 : vector<128x64xf32>
    %cst_37 = arith.constant 0.000000e+00 : f32
    %59 = vector.broadcast %cst_37 : f32 to vector<128x64xf32>
    %60 = arith.cmpf oge, %58, %59 : vector<128x64xf32>
    %c0_38 = arith.constant 0 : index
    %c0_39 = arith.constant 0 : index
    %61 = vector.load %arg6[%c0_38, %c0_39] : memref<1x64xf32, #tpu.memory_space<vmem>>, vector<1x64xf32>
    %62 = vector.broadcast %61 : vector<1x64xf32> to vector<128x64xf32>
    %63 = arith.mulf %62, %58 : vector<128x64xf32>
    %64 = arith.select %60, %58, %63 : vector<128x64xi1>, vector<128x64xf32>
    %65 = vector.shape_cast %64 : vector<128x64xf32> to vector<16x8x64xf32>
    %66 = arith.truncf %65 : vector<16x8x64xf32> to vector<16x8x64xbf16>
    %c8_40 = arith.constant 8 : index
    %c1_41 = arith.constant 1 : index
    %c64 = arith.constant 64 : index
    %67 = vector.load %arg23[%c8_40, %c1_41, %c64] : memref<24x10x256xbf16, #tpu.memory_space<vmem>>, vector<16x8x64xbf16>
    tpu.vector_store %arg23[%c8_40, %c1_41, %c64], %66 {strides = array<i32>} : memref<24x10x256xbf16, #tpu.memory_space<vmem>>, vector<16x8x64xbf16>,
    %c0_42 = arith.constant 0 : index
    %c0_43 = arith.constant 0 : index
    %68 = vector.load %arg8[%c0_42, %c0_43] : memref<1x64xf32, #tpu.memory_space<vmem>>, vector<1x64xf32>
    %69 = vector.shape_cast %68 : vector<1x64xf32> to vector<1x64xf32>
    %70 = vector.broadcast %69 : vector<1x64xf32> to vector<128x64xf32>
    %c6 = arith.constant 6 : index
    %c0_44 = arith.constant 0 : index
    %c0_45 = arith.constant 0 : index
    %71 = vector.load %arg23[%c6, %c0_44, %c0_45] : memref<24x10x256xbf16, #tpu.memory_space<vmem>>, vector<18x8x128xbf16>
    %72 = vector.shape_cast %71 : vector<18x8x128xbf16> to vector<144x128xbf16>
    %c0_46 = arith.constant 0 : index
    %c0_47 = arith.constant 0 : index
    %c0_48 = arith.constant 0 : index
    %73 = vector.load %arg7[%c0_46, %c0_47, %c0_48] : memref<3x128x128xbf16, #tpu.memory_space<vmem>>, vector<1x128x128xbf16>
    %74 = vector.shape_cast %73 : vector<1x128x128xbf16> to vector<128x128xbf16>
    %cst_49 = arith.constant dense<0.000000e+00> : vector<144x128xf32>
    %75 = tpu.matmul %72, %74, %cst_49 {dimension_numbers = #tpu.dot_dimension_numbers<[1], [0], [0], [1], [0, 0, 1, 1], [], []>} : vector<144x128xbf16>, vector<128x128xbf16>, vector<144x128xf32> -> vector<144x128xf32>
    %76 = vector.extract_strided_slice %75 {offsets = [0, 0], sizes = [128, 64], strides = [1, 1]} : vector<144x128xf32> to vector<128x64xf32>
    %77 = arith.addf %70, %76 : vector<128x64xf32>
    %78 = vector.extract_strided_slice %75 {offsets = [16, 64], sizes = [128, 64], strides = [1, 1]} : vector<144x128xf32> to vector<128x64xf32>
    %79 = arith.addf %77, %78 : vector<128x64xf32>
    %c6_50 = arith.constant 6 : index
    %c1_51 = arith.constant 1 : index
    %c0_52 = arith.constant 0 : index
    %80 = vector.load %arg23[%c6_50, %c1_51, %c0_52] : memref<24x10x256xbf16, #tpu.memory_space<vmem>>, vector<18x8x128xbf16>
    %81 = vector.shape_cast %80 : vector<18x8x128xbf16> to vector<144x128xbf16>
    %c1_53 = arith.constant 1 : index
    %c0_54 = arith.constant 0 : index
    %c0_55 = arith.constant 0 : index
    %82 = vector.load %arg7[%c1_53, %c0_54, %c0_55] : memref<3x128x128xbf16, #tpu.memory_space<vmem>>, vector<1x128x128xbf16>
    %83 = vector.shape_cast %82 : vector<1x128x128xbf16> to vector<128x128xbf16>
    %cst_56 = arith.constant dense<0.000000e+00> : vector<144x128xf32>
    %84 = tpu.matmul %81, %83, %cst_56 {dimension_numbers = #tpu.dot_dimension_numbers<[1], [0], [0], [1], [0, 0, 1, 1], [], []>} : vector<144x128xbf16>, vector<128x128xbf16>, vector<144x128xf32> -> vector<144x128xf32>
    %85 = vector.extract_strided_slice %84 {offsets = [0, 0], sizes = [128, 64], strides = [1, 1]} : vector<144x128xf32> to vector<128x64xf32>
    %86 = arith.addf %79, %85 : vector<128x64xf32>
    %87 = vector.extract_strided_slice %84 {offsets = [16, 64], sizes = [128, 64], strides = [1, 1]} : vector<144x128xf32> to vector<128x64xf32>
    %88 = arith.addf %86, %87 : vector<128x64xf32>
    %c6_57 = arith.constant 6 : index
    %c2_58 = arith.constant 2 : index
    %c0_59 = arith.constant 0 : index
    %89 = vector.load %arg23[%c6_57, %c2_58, %c0_59] : memref<24x10x256xbf16, #tpu.memory_space<vmem>>, vector<18x8x128xbf16>
    %90 = vector.shape_cast %89 : vector<18x8x128xbf16> to vector<144x128xbf16>
    %c2_60 = arith.constant 2 : index
    %c0_61 = arith.constant 0 : index
    %c0_62 = arith.constant 0 : index
    %91 = vector.load %arg7[%c2_60, %c0_61, %c0_62] : memref<3x128x128xbf16, #tpu.memory_space<vmem>>, vector<1x128x128xbf16>
    %92 = vector.shape_cast %91 : vector<1x128x128xbf16> to vector<128x128xbf16>
    %cst_63 = arith.constant dense<0.000000e+00> : vector<144x128xf32>
    %93 = tpu.matmul %90, %92, %cst_63 {dimension_numbers = #tpu.dot_dimension_numbers<[1], [0], [0], [1], [0, 0, 1, 1], [], []>} : vector<144x128xbf16>, vector<128x128xbf16>, vector<144x128xf32> -> vector<144x128xf32>
    %94 = vector.extract_strided_slice %93 {offsets = [0, 0], sizes = [128, 64], strides = [1, 1]} : vector<144x128xf32> to vector<128x64xf32>
    %95 = arith.addf %88, %94 : vector<128x64xf32>
    %96 = vector.extract_strided_slice %93 {offsets = [16, 64], sizes = [128, 64], strides = [1, 1]} : vector<144x128xf32> to vector<128x64xf32>
    %97 = arith.addf %95, %96 : vector<128x64xf32>
    %cst_64 = arith.constant dense<0.000000e+00> : vector<64xf32>
    %98 = vector.multi_reduction <add>, %97, %cst_64 [0] : vector<128x64xf32> to vector<64xf32>
    %99 = vector.shape_cast %98 : vector<64xf32> to vector<1x64xf32>
    %cst_65 = arith.constant 7.812500e-03 : f32
    %100 = vector.broadcast %cst_65 : f32 to vector<1x64xf32>
    %101 = arith.mulf %99, %100 : vector<1x64xf32>
    %102 = arith.mulf %97, %97 : vector<128x64xf32>
    %cst_66 = arith.constant dense<0.000000e+00> : vector<64xf32>
    %103 = vector.multi_reduction <add>, %102, %cst_66 [0] : vector<128x64xf32> to vector<64xf32>
    %104 = vector.shape_cast %103 : vector<64xf32> to vector<1x64xf32>
    %cst_67 = arith.constant 7.812500e-03 : f32
    %105 = vector.broadcast %cst_67 : f32 to vector<1x64xf32>
    %106 = arith.mulf %104, %105 : vector<1x64xf32>
    %107 = arith.mulf %101, %101 : vector<1x64xf32>
    %108 = arith.subf %106, %107 : vector<1x64xf32>
    %109 = vector.broadcast %101 : vector<1x64xf32> to vector<128x64xf32>
    %110 = arith.subf %97, %109 : vector<128x64xf32>
    %cst_68 = arith.constant 9.99999974E-6 : f32
    %111 = vector.broadcast %cst_68 : f32 to vector<1x64xf32>
    %112 = arith.addf %108, %111 : vector<1x64xf32>
    %113 = math.rsqrt %112 : vector<1x64xf32>
    %114 = vector.broadcast %113 : vector<1x64xf32> to vector<128x64xf32>
    %115 = arith.mulf %110, %114 : vector<128x64xf32>
    %c0_69 = arith.constant 0 : index
    %c0_70 = arith.constant 0 : index
    %116 = vector.load %arg9[%c0_69, %c0_70] : memref<1x64xf32, #tpu.memory_space<vmem>>, vector<1x64xf32>
    %117 = vector.broadcast %116 : vector<1x64xf32> to vector<128x64xf32>
    %118 = arith.mulf %115, %117 : vector<128x64xf32>
    %c0_71 = arith.constant 0 : index
    %c0_72 = arith.constant 0 : index
    %119 = vector.load %arg10[%c0_71, %c0_72] : memref<1x64xf32, #tpu.memory_space<vmem>>, vector<1x64xf32>
    %120 = vector.broadcast %119 : vector<1x64xf32> to vector<128x64xf32>
    %121 = arith.addf %118, %120 : vector<128x64xf32>
    %cst_73 = arith.constant 0.000000e+00 : f32
    %122 = vector.broadcast %cst_73 : f32 to vector<128x64xf32>
    %123 = arith.cmpf oge, %121, %122 : vector<128x64xf32>
    %c0_74 = arith.constant 0 : index
    %c0_75 = arith.constant 0 : index
    %124 = vector.load %arg11[%c0_74, %c0_75] : memref<1x64xf32, #tpu.memory_space<vmem>>, vector<1x64xf32>
    %125 = vector.broadcast %124 : vector<1x64xf32> to vector<128x64xf32>
    %126 = arith.mulf %125, %121 : vector<128x64xf32>
    %127 = arith.select %123, %121, %126 : vector<128x64xi1>, vector<128x64xf32>
    %128 = vector.shape_cast %127 : vector<128x64xf32> to vector<16x8x64xf32>
    %129 = arith.truncf %128 : vector<16x8x64xf32> to vector<16x8x64xbf16>
    %c8_76 = arith.constant 8 : index
    %c1_77 = arith.constant 1 : index
    %c128 = arith.constant 128 : index
    %130 = vector.load %arg23[%c8_76, %c1_77, %c128] : memref<24x10x256xbf16, #tpu.memory_space<vmem>>, vector<16x8x64xbf16>
    tpu.vector_store %arg23[%c8_76, %c1_77, %c128], %129 {strides = array<i32>} : memref<24x10x256xbf16, #tpu.memory_space<vmem>>, vector<16x8x64xbf16>,
    %c0_78 = arith.constant 0 : index
    %c0_79 = arith.constant 0 : index
    %131 = vector.load %arg13[%c0_78, %c0_79] : memref<1x64xf32, #tpu.memory_space<vmem>>, vector<1x64xf32>
    %132 = vector.shape_cast %131 : vector<1x64xf32> to vector<1x64xf32>
    %133 = vector.broadcast %132 : vector<1x64xf32> to vector<128x64xf32>
    %c4 = arith.constant 4 : index
    %c0_80 = arith.constant 0 : index
    %c0_81 = arith.constant 0 : index
    %134 = vector.load %arg23[%c4, %c0_80, %c0_81] : memref<24x10x256xbf16, #tpu.memory_space<vmem>>, vector<20x8x192xbf16>
    %135 = vector.shape_cast %134 : vector<20x8x192xbf16> to vector<160x192xbf16>
    %c0_82 = arith.constant 0 : index
    %c0_83 = arith.constant 0 : index
    %c0_84 = arith.constant 0 : index
    %136 = vector.load %arg12[%c0_82, %c0_83, %c0_84] : memref<3x192x128xbf16, #tpu.memory_space<vmem>>, vector<1x192x128xbf16>
    %137 = vector.shape_cast %136 : vector<1x192x128xbf16> to vector<192x128xbf16>
    %cst_85 = arith.constant dense<0.000000e+00> : vector<160x128xf32>
    %138 = tpu.matmul %135, %137, %cst_85 {dimension_numbers = #tpu.dot_dimension_numbers<[1], [0], [0], [1], [0, 0, 1, 1], [], []>} : vector<160x192xbf16>, vector<192x128xbf16>, vector<160x128xf32> -> vector<160x128xf32>
    %139 = vector.extract_strided_slice %138 {offsets = [0, 0], sizes = [128, 64], strides = [1, 1]} : vector<160x128xf32> to vector<128x64xf32>
    %140 = arith.addf %133, %139 : vector<128x64xf32>
    %141 = vector.extract_strided_slice %138 {offsets = [32, 64], sizes = [128, 64], strides = [1, 1]} : vector<160x128xf32> to vector<128x64xf32>
    %142 = arith.addf %140, %141 : vector<128x64xf32>
    %c4_86 = arith.constant 4 : index
    %c1_87 = arith.constant 1 : index
    %c0_88 = arith.constant 0 : index
    %143 = vector.load %arg23[%c4_86, %c1_87, %c0_88] : memref<24x10x256xbf16, #tpu.memory_space<vmem>>, vector<20x8x192xbf16>
    %144 = vector.shape_cast %143 : vector<20x8x192xbf16> to vector<160x192xbf16>
    %c1_89 = arith.constant 1 : index
    %c0_90 = arith.constant 0 : index
    %c0_91 = arith.constant 0 : index
    %145 = vector.load %arg12[%c1_89, %c0_90, %c0_91] : memref<3x192x128xbf16, #tpu.memory_space<vmem>>, vector<1x192x128xbf16>
    %146 = vector.shape_cast %145 : vector<1x192x128xbf16> to vector<192x128xbf16>
    %cst_92 = arith.constant dense<0.000000e+00> : vector<160x128xf32>
    %147 = tpu.matmul %144, %146, %cst_92 {dimension_numbers = #tpu.dot_dimension_numbers<[1], [0], [0], [1], [0, 0, 1, 1], [], []>} : vector<160x192xbf16>, vector<192x128xbf16>, vector<160x128xf32> -> vector<160x128xf32>
    %148 = vector.extract_strided_slice %147 {offsets = [0, 0], sizes = [128, 64], strides = [1, 1]} : vector<160x128xf32> to vector<128x64xf32>
    %149 = arith.addf %142, %148 : vector<128x64xf32>
    %150 = vector.extract_strided_slice %147 {offsets = [32, 64], sizes = [128, 64], strides = [1, 1]} : vector<160x128xf32> to vector<128x64xf32>
    %151 = arith.addf %149, %150 : vector<128x64xf32>
    %c4_93 = arith.constant 4 : index
    %c2_94 = arith.constant 2 : index
    %c0_95 = arith.constant 0 : index
    %152 = vector.load %arg23[%c4_93, %c2_94, %c0_95] : memref<24x10x256xbf16, #tpu.memory_space<vmem>>, vector<20x8x192xbf16>
    %153 = vector.shape_cast %152 : vector<20x8x192xbf16> to vector<160x192xbf16>
    %c2_96 = arith.constant 2 : index
    %c0_97 = arith.constant 0 : index
    %c0_98 = arith.constant 0 : index
    %154 = vector.load %arg12[%c2_96, %c0_97, %c0_98] : memref<3x192x128xbf16, #tpu.memory_space<vmem>>, vector<1x192x128xbf16>
    %155 = vector.shape_cast %154 : vector<1x192x128xbf16> to vector<192x128xbf16>
    %cst_99 = arith.constant dense<0.000000e+00> : vector<160x128xf32>
    %156 = tpu.matmul %153, %155, %cst_99 {dimension_numbers = #tpu.dot_dimension_numbers<[1], [0], [0], [1], [0, 0, 1, 1], [], []>} : vector<160x192xbf16>, vector<192x128xbf16>, vector<160x128xf32> -> vector<160x128xf32>
    %157 = vector.extract_strided_slice %156 {offsets = [0, 0], sizes = [128, 64], strides = [1, 1]} : vector<160x128xf32> to vector<128x64xf32>
    %158 = arith.addf %151, %157 : vector<128x64xf32>
    %159 = vector.extract_strided_slice %156 {offsets = [32, 64], sizes = [128, 64], strides = [1, 1]} : vector<160x128xf32> to vector<128x64xf32>
    %160 = arith.addf %158, %159 : vector<128x64xf32>
    %cst_100 = arith.constant dense<0.000000e+00> : vector<64xf32>
    %161 = vector.multi_reduction <add>, %160, %cst_100 [0] : vector<128x64xf32> to vector<64xf32>
    %162 = vector.shape_cast %161 : vector<64xf32> to vector<1x64xf32>
    %cst_101 = arith.constant 7.812500e-03 : f32
    %163 = vector.broadcast %cst_101 : f32 to vector<1x64xf32>
    %164 = arith.mulf %162, %163 : vector<1x64xf32>
    %165 = arith.mulf %160, %160 : vector<128x64xf32>
    %cst_102 = arith.constant dense<0.000000e+00> : vector<64xf32>
    %166 = vector.multi_reduction <add>, %165, %cst_102 [0] : vector<128x64xf32> to vector<64xf32>
    %167 = vector.shape_cast %166 : vector<64xf32> to vector<1x64xf32>
    %cst_103 = arith.constant 7.812500e-03 : f32
    %168 = vector.broadcast %cst_103 : f32 to vector<1x64xf32>
    %169 = arith.mulf %167, %168 : vector<1x64xf32>
    %170 = arith.mulf %164, %164 : vector<1x64xf32>
    %171 = arith.subf %169, %170 : vector<1x64xf32>
    %172 = vector.broadcast %164 : vector<1x64xf32> to vector<128x64xf32>
    %173 = arith.subf %160, %172 : vector<128x64xf32>
    %cst_104 = arith.constant 9.99999974E-6 : f32
    %174 = vector.broadcast %cst_104 : f32 to vector<1x64xf32>
    %175 = arith.addf %171, %174 : vector<1x64xf32>
    %176 = math.rsqrt %175 : vector<1x64xf32>
    %177 = vector.broadcast %176 : vector<1x64xf32> to vector<128x64xf32>
    %178 = arith.mulf %173, %177 : vector<128x64xf32>
    %c0_105 = arith.constant 0 : index
    %c0_106 = arith.constant 0 : index
    %179 = vector.load %arg14[%c0_105, %c0_106] : memref<1x64xf32, #tpu.memory_space<vmem>>, vector<1x64xf32>
    %180 = vector.broadcast %179 : vector<1x64xf32> to vector<128x64xf32>
    %181 = arith.mulf %178, %180 : vector<128x64xf32>
    %c0_107 = arith.constant 0 : index
    %c0_108 = arith.constant 0 : index
    %182 = vector.load %arg15[%c0_107, %c0_108] : memref<1x64xf32, #tpu.memory_space<vmem>>, vector<1x64xf32>
    %183 = vector.broadcast %182 : vector<1x64xf32> to vector<128x64xf32>
    %184 = arith.addf %181, %183 : vector<128x64xf32>
    %cst_109 = arith.constant 0.000000e+00 : f32
    %185 = vector.broadcast %cst_109 : f32 to vector<128x64xf32>
    %186 = arith.cmpf oge, %184, %185 : vector<128x64xf32>
    %c0_110 = arith.constant 0 : index
    %c0_111 = arith.constant 0 : index
    %187 = vector.load %arg16[%c0_110, %c0_111] : memref<1x64xf32, #tpu.memory_space<vmem>>, vector<1x64xf32>
    %188 = vector.broadcast %187 : vector<1x64xf32> to vector<128x64xf32>
    %189 = arith.mulf %188, %184 : vector<128x64xf32>
    %190 = arith.select %186, %184, %189 : vector<128x64xi1>, vector<128x64xf32>
    %191 = vector.shape_cast %190 : vector<128x64xf32> to vector<16x8x64xf32>
    %192 = arith.truncf %191 : vector<16x8x64xf32> to vector<16x8x64xbf16>
    %c8_112 = arith.constant 8 : index
    %c1_113 = arith.constant 1 : index
    %c192 = arith.constant 192 : index
    %193 = vector.load %arg23[%c8_112, %c1_113, %c192] : memref<24x10x256xbf16, #tpu.memory_space<vmem>>, vector<16x8x64xbf16>
    tpu.vector_store %arg23[%c8_112, %c1_113, %c192], %192 {strides = array<i32>} : memref<24x10x256xbf16, #tpu.memory_space<vmem>>, vector<16x8x64xbf16>,
    %c0_114 = arith.constant 0 : index
    %c0_115 = arith.constant 0 : index
    %194 = vector.load %arg18[%c0_114, %c0_115] : memref<1x64xf32, #tpu.memory_space<vmem>>, vector<1x64xf32>
    %195 = vector.shape_cast %194 : vector<1x64xf32> to vector<1x64xf32>
    %196 = vector.broadcast %195 : vector<1x64xf32> to vector<128x64xf32>
    %c0_116 = arith.constant 0 : index
    %c0_117 = arith.constant 0 : index
    %c0_118 = arith.constant 0 : index
    %197 = vector.load %arg23[%c0_116, %c0_117, %c0_118] : memref<24x10x256xbf16, #tpu.memory_space<vmem>>, vector<24x8x256xbf16>
    %198 = vector.shape_cast %197 : vector<24x8x256xbf16> to vector<192x256xbf16>
    %c0_119 = arith.constant 0 : index
    %c0_120 = arith.constant 0 : index
    %c0_121 = arith.constant 0 : index
    %199 = vector.load %arg17[%c0_119, %c0_120, %c0_121] : memref<3x256x128xbf16, #tpu.memory_space<vmem>>, vector<1x256x128xbf16>
    %200 = vector.shape_cast %199 : vector<1x256x128xbf16> to vector<256x128xbf16>
    %cst_122 = arith.constant dense<0.000000e+00> : vector<192x128xf32>
    %201 = tpu.matmul %198, %200, %cst_122 {dimension_numbers = #tpu.dot_dimension_numbers<[1], [0], [0], [1], [0, 0, 1, 1], [], []>} : vector<192x256xbf16>, vector<256x128xbf16>, vector<192x128xf32> -> vector<192x128xf32>
    %202 = vector.extract_strided_slice %201 {offsets = [0, 0], sizes = [128, 64], strides = [1, 1]} : vector<192x128xf32> to vector<128x64xf32>
    %203 = arith.addf %196, %202 : vector<128x64xf32>
    %204 = vector.extract_strided_slice %201 {offsets = [64, 64], sizes = [128, 64], strides = [1, 1]} : vector<192x128xf32> to vector<128x64xf32>
    %205 = arith.addf %203, %204 : vector<128x64xf32>
    %c0_123 = arith.constant 0 : index
    %c1_124 = arith.constant 1 : index
    %c0_125 = arith.constant 0 : index
    %206 = vector.load %arg23[%c0_123, %c1_124, %c0_125] : memref<24x10x256xbf16, #tpu.memory_space<vmem>>, vector<24x8x256xbf16>
    %207 = vector.shape_cast %206 : vector<24x8x256xbf16> to vector<192x256xbf16>
    %c1_126 = arith.constant 1 : index
    %c0_127 = arith.constant 0 : index
    %c0_128 = arith.constant 0 : index
    %208 = vector.load %arg17[%c1_126, %c0_127, %c0_128] : memref<3x256x128xbf16, #tpu.memory_space<vmem>>, vector<1x256x128xbf16>
    %209 = vector.shape_cast %208 : vector<1x256x128xbf16> to vector<256x128xbf16>
    %cst_129 = arith.constant dense<0.000000e+00> : vector<192x128xf32>
    %210 = tpu.matmul %207, %209, %cst_129 {dimension_numbers = #tpu.dot_dimension_numbers<[1], [0], [0], [1], [0, 0, 1, 1], [], []>} : vector<192x256xbf16>, vector<256x128xbf16>, vector<192x128xf32> -> vector<192x128xf32>
    %211 = vector.extract_strided_slice %210 {offsets = [0, 0], sizes = [128, 64], strides = [1, 1]} : vector<192x128xf32> to vector<128x64xf32>
    %212 = arith.addf %205, %211 : vector<128x64xf32>
    %213 = vector.extract_strided_slice %210 {offsets = [64, 64], sizes = [128, 64], strides = [1, 1]} : vector<192x128xf32> to vector<128x64xf32>
    %214 = arith.addf %212, %213 : vector<128x64xf32>
    %c0_130 = arith.constant 0 : index
    %c2_131 = arith.constant 2 : index
    %c0_132 = arith.constant 0 : index
    %215 = vector.load %arg23[%c0_130, %c2_131, %c0_132] : memref<24x10x256xbf16, #tpu.memory_space<vmem>>, vector<24x8x256xbf16>
    %216 = vector.shape_cast %215 : vector<24x8x256xbf16> to vector<192x256xbf16>
    %c2_133 = arith.constant 2 : index
    %c0_134 = arith.constant 0 : index
    %c0_135 = arith.constant 0 : index
    %217 = vector.load %arg17[%c2_133, %c0_134, %c0_135] : memref<3x256x128xbf16, #tpu.memory_space<vmem>>, vector<1x256x128xbf16>
    %218 = vector.shape_cast %217 : vector<1x256x128xbf16> to vector<256x128xbf16>
    %cst_136 = arith.constant dense<0.000000e+00> : vector<192x128xf32>
    %219 = tpu.matmul %216, %218, %cst_136 {dimension_numbers = #tpu.dot_dimension_numbers<[1], [0], [0], [1], [0, 0, 1, 1], [], []>} : vector<192x256xbf16>, vector<256x128xbf16>, vector<192x128xf32> -> vector<192x128xf32>
    %220 = vector.extract_strided_slice %219 {offsets = [0, 0], sizes = [128, 64], strides = [1, 1]} : vector<192x128xf32> to vector<128x64xf32>
    %221 = arith.addf %214, %220 : vector<128x64xf32>
    %222 = vector.extract_strided_slice %219 {offsets = [64, 64], sizes = [128, 64], strides = [1, 1]} : vector<192x128xf32> to vector<128x64xf32>
    %223 = arith.addf %221, %222 : vector<128x64xf32>
    %cst_137 = arith.constant dense<0.000000e+00> : vector<64xf32>
    %224 = vector.multi_reduction <add>, %223, %cst_137 [0] : vector<128x64xf32> to vector<64xf32>
    %225 = vector.shape_cast %224 : vector<64xf32> to vector<1x64xf32>
    %cst_138 = arith.constant 7.812500e-03 : f32
    %226 = vector.broadcast %cst_138 : f32 to vector<1x64xf32>
    %227 = arith.mulf %225, %226 : vector<1x64xf32>
    %228 = arith.mulf %223, %223 : vector<128x64xf32>
    %cst_139 = arith.constant dense<0.000000e+00> : vector<64xf32>
    %229 = vector.multi_reduction <add>, %228, %cst_139 [0] : vector<128x64xf32> to vector<64xf32>
    %230 = vector.shape_cast %229 : vector<64xf32> to vector<1x64xf32>
    %cst_140 = arith.constant 7.812500e-03 : f32
    %231 = vector.broadcast %cst_140 : f32 to vector<1x64xf32>
    %232 = arith.mulf %230, %231 : vector<1x64xf32>
    %233 = arith.mulf %227, %227 : vector<1x64xf32>
    %234 = arith.subf %232, %233 : vector<1x64xf32>
    %235 = vector.broadcast %227 : vector<1x64xf32> to vector<128x64xf32>
    %236 = arith.subf %223, %235 : vector<128x64xf32>
    %cst_141 = arith.constant 9.99999974E-6 : f32
    %237 = vector.broadcast %cst_141 : f32 to vector<1x64xf32>
    %238 = arith.addf %234, %237 : vector<1x64xf32>
    %239 = math.rsqrt %238 : vector<1x64xf32>
    %240 = vector.broadcast %239 : vector<1x64xf32> to vector<128x64xf32>
    %241 = arith.mulf %236, %240 : vector<128x64xf32>
    %c0_142 = arith.constant 0 : index
    %c0_143 = arith.constant 0 : index
    %242 = vector.load %arg19[%c0_142, %c0_143] : memref<1x64xf32, #tpu.memory_space<vmem>>, vector<1x64xf32>
    %243 = vector.broadcast %242 : vector<1x64xf32> to vector<128x64xf32>
    %244 = arith.mulf %241, %243 : vector<128x64xf32>
    %c0_144 = arith.constant 0 : index
    %c0_145 = arith.constant 0 : index
    %245 = vector.load %arg20[%c0_144, %c0_145] : memref<1x64xf32, #tpu.memory_space<vmem>>, vector<1x64xf32>
    %246 = vector.broadcast %245 : vector<1x64xf32> to vector<128x64xf32>
    %247 = arith.addf %244, %246 : vector<128x64xf32>
    %cst_146 = arith.constant 0.000000e+00 : f32
    %248 = vector.broadcast %cst_146 : f32 to vector<128x64xf32>
    %249 = arith.cmpf oge, %247, %248 : vector<128x64xf32>
    %c0_147 = arith.constant 0 : index
    %c0_148 = arith.constant 0 : index
    %250 = vector.load %arg21[%c0_147, %c0_148] : memref<1x64xf32, #tpu.memory_space<vmem>>, vector<1x64xf32>
    %251 = vector.broadcast %250 : vector<1x64xf32> to vector<128x64xf32>
    %252 = arith.mulf %251, %247 : vector<128x64xf32>
    %253 = arith.select %249, %247, %252 : vector<128x64xi1>, vector<128x64xf32>
    %254 = vector.shape_cast %253 : vector<128x64xf32> to vector<16x8x64xf32>
    %c0_149 = arith.constant 0 : index
    %c0_150 = arith.constant 0 : index
    %c0_151 = arith.constant 0 : index
    %c0_152 = arith.constant 0 : index
    %255 = vector.load %arg22[%c0_149, %c0_150, %c0_151, %c0_152] : memref<1x16x8x64xf32, #tpu.memory_space<vmem>>, vector<1x16x8x64xf32>
    %256 = vector.shape_cast %255 : vector<1x16x8x64xf32> to vector<16x8x64xf32>
    %257 = vector.shape_cast %254 : vector<16x8x64xf32> to vector<1x16x8x64xf32>
    tpu.vector_store %arg22[%c0_149, %c0_150, %c0_151, %c0_152], %257 {strides = array<i32>} : memref<1x16x8x64xf32, #tpu.memory_space<vmem>>, vector<1x16x8x64xf32>,
    return
  }
  func.func @transform_0(%arg0: i32) -> (i32, i32, i32, i32) {
    %c0_i32 = arith.constant 0 : i32
    %c0_i32_0 = arith.constant 0 : i32
    %c0_i32_1 = arith.constant 0 : i32
    %c0_i32_2 = arith.constant 0 : i32
    return %arg0, %c0_i32, %c0_i32_0, %c0_i32_1 : i32, i32, i32, i32
  }
  func.func @transform_1(%arg0: i32) -> (i32, i32, i32) {
    %c0_i32 = arith.constant 0 : i32
    %c0_i32_0 = arith.constant 0 : i32
    %c0_i32_1 = arith.constant 0 : i32
    %c0_i32_2 = arith.constant 0 : i32
    return %c0_i32, %c0_i32_0, %c0_i32_1 : i32, i32, i32
  }
  func.func @transform_2(%arg0: i32) -> (i32, i32) {
    %c0_i32 = arith.constant 0 : i32
    %c0_i32_0 = arith.constant 0 : i32
    %c0_i32_1 = arith.constant 0 : i32
    return %c0_i32, %c0_i32_0 : i32, i32
  }
  func.func @transform_3(%arg0: i32) -> (i32, i32) {
    %c0_i32 = arith.constant 0 : i32
    %c0_i32_0 = arith.constant 0 : i32
    %c0_i32_1 = arith.constant 0 : i32
    return %c0_i32, %c0_i32_0 : i32, i32
  }
  func.func @transform_4(%arg0: i32) -> (i32, i32) {
    %c0_i32 = arith.constant 0 : i32
    %c0_i32_0 = arith.constant 0 : i32
    %c0_i32_1 = arith.constant 0 : i32
    return %c0_i32, %c0_i32_0 : i32, i32
  }
  func.func @transform_5(%arg0: i32) -> (i32, i32) {
    %c0_i32 = arith.constant 0 : i32
    %c0_i32_0 = arith.constant 0 : i32
    %c0_i32_1 = arith.constant 0 : i32
    return %c0_i32, %c0_i32_0 : i32, i32
  }
  func.func @transform_6(%arg0: i32) -> (i32, i32, i32) {
    %c0_i32 = arith.constant 0 : i32
    %c0_i32_0 = arith.constant 0 : i32
    %c0_i32_1 = arith.constant 0 : i32
    %c0_i32_2 = arith.constant 0 : i32
    return %c0_i32, %c0_i32_0, %c0_i32_1 : i32, i32, i32
  }
  func.func @transform_7(%arg0: i32) -> (i32, i32) {
    %c0_i32 = arith.constant 0 : i32
    %c0_i32_0 = arith.constant 0 : i32
    %c0_i32_1 = arith.constant 0 : i32
    return %c0_i32, %c0_i32_0 : i32, i32
  }
  func.func @transform_8(%arg0: i32) -> (i32, i32) {
    %c0_i32 = arith.constant 0 : i32
    %c0_i32_0 = arith.constant 0 : i32
    %c0_i32_1 = arith.constant 0 : i32
    return %c0_i32, %c0_i32_0 : i32, i32
  }
  func.func @transform_9(%arg0: i32) -> (i32, i32) {
    %c0_i32 = arith.constant 0 : i32
    %c0_i32_0 = arith.constant 0 : i32
    %c0_i32_1 = arith.constant 0 : i32
    return %c0_i32, %c0_i32_0 : i32, i32
  }
  func.func @transform_10(%arg0: i32) -> (i32, i32) {
    %c0_i32 = arith.constant 0 : i32
    %c0_i32_0 = arith.constant 0 : i32
    %c0_i32_1 = arith.constant 0 : i32
    return %c0_i32, %c0_i32_0 : i32, i32
  }
  func.func @transform_11(%arg0: i32) -> (i32, i32, i32) {
    %c0_i32 = arith.constant 0 : i32
    %c0_i32_0 = arith.constant 0 : i32
    %c0_i32_1 = arith.constant 0 : i32
    %c0_i32_2 = arith.constant 0 : i32
    return %c0_i32, %c0_i32_0, %c0_i32_1 : i32, i32, i32
  }
  func.func @transform_12(%arg0: i32) -> (i32, i32) {
    %c0_i32 = arith.constant 0 : i32
    %c0_i32_0 = arith.constant 0 : i32
    %c0_i32_1 = arith.constant 0 : i32
    return %c0_i32, %c0_i32_0 : i32, i32
  }
  func.func @transform_13(%arg0: i32) -> (i32, i32) {
    %c0_i32 = arith.constant 0 : i32
    %c0_i32_0 = arith.constant 0 : i32
    %c0_i32_1 = arith.constant 0 : i32
    return %c0_i32, %c0_i32_0 : i32, i32
  }
  func.func @transform_14(%arg0: i32) -> (i32, i32) {
    %c0_i32 = arith.constant 0 : i32
    %c0_i32_0 = arith.constant 0 : i32
    %c0_i32_1 = arith.constant 0 : i32
    return %c0_i32, %c0_i32_0 : i32, i32
  }
  func.func @transform_15(%arg0: i32) -> (i32, i32) {
    %c0_i32 = arith.constant 0 : i32
    %c0_i32_0 = arith.constant 0 : i32
    %c0_i32_1 = arith.constant 0 : i32
    return %c0_i32, %c0_i32_0 : i32, i32
  }
  func.func @transform_16(%arg0: i32) -> (i32, i32, i32) {
    %c0_i32 = arith.constant 0 : i32
    %c0_i32_0 = arith.constant 0 : i32
    %c0_i32_1 = arith.constant 0 : i32
    %c0_i32_2 = arith.constant 0 : i32
    return %c0_i32, %c0_i32_0, %c0_i32_1 : i32, i32, i32
  }
  func.func @transform_17(%arg0: i32) -> (i32, i32) {
    %c0_i32 = arith.constant 0 : i32
    %c0_i32_0 = arith.constant 0 : i32
    %c0_i32_1 = arith.constant 0 : i32
    return %c0_i32, %c0_i32_0 : i32, i32
  }
  func.func @transform_18(%arg0: i32) -> (i32, i32) {
    %c0_i32 = arith.constant 0 : i32
    %c0_i32_0 = arith.constant 0 : i32
    %c0_i32_1 = arith.constant 0 : i32
    return %c0_i32, %c0_i32_0 : i32, i32
  }
  func.func @transform_19(%arg0: i32) -> (i32, i32) {
    %c0_i32 = arith.constant 0 : i32
    %c0_i32_0 = arith.constant 0 : i32
    %c0_i32_1 = arith.constant 0 : i32
    return %c0_i32, %c0_i32_0 : i32, i32
  }
  func.func @transform_20(%arg0: i32) -> (i32, i32) {
    %c0_i32 = arith.constant 0 : i32
    %c0_i32_0 = arith.constant 0 : i32
    %c0_i32_1 = arith.constant 0 : i32
    return %c0_i32, %c0_i32_0 : i32, i32
  }
  func.func @transform_21(%arg0: i32) -> (i32, i32, i32, i32) {
    %c0_i32 = arith.constant 0 : i32
    %c0_i32_0 = arith.constant 0 : i32
    %c0_i32_1 = arith.constant 0 : i32
    %c0_i32_2 = arith.constant 0 : i32
    return %arg0, %c0_i32, %c0_i32_0, %c0_i32_1 : i32, i32, i32, i32
  }
}

</mosaic_0001>

<llo_original>
// kernel: dilated_dense_net.1
$region0: #{dilated_dense_net.1}
  #allocation0 [shape = 'u32[]', space=smem, size = 0x4, offset = 0x4, fixed_abs, tag = 'smem constant byte address 0x4 - core index']
  #allocation1 [shape = 'u32[144,128]{1,0:T(1,128)}', space=vmem, size = 0x12000, scoped, tag = 'internal scratch']
  #allocation2 [shape = 'bf16[24,10,256]{2,1,0:T(8,128)(2,1)}', space=vmem, size = 0x30000, scoped, tag = 'scratch operand']
  %s0 = inlined_call_operand.vmem [shape: bf16[2,16,8,64], index: 0, kind: input, shape index: {}]
  %s1 = inlined_call_operand.vmem [shape: bf16[3,64,128], index: 1, kind: input, shape index: {}]
  %s2 = inlined_call_operand.vmem [shape: f32[1,64], index: 2, kind: input, shape index: {}]
  %s3 = inlined_call_operand.vmem [shape: f32[1,64], index: 3, kind: input, shape index: {}]
  %s4 = inlined_call_operand.vmem [shape: f32[1,64], index: 4, kind: input, shape index: {}]
  %s5 = inlined_call_operand.vmem [shape: f32[1,64], index: 5, kind: input, shape index: {}]
  %s6 = inlined_call_operand.vmem [shape: bf16[3,128,128], index: 6, kind: input, shape index: {}]
  %s7 = inlined_call_operand.vmem [shape: f32[1,64], index: 7, kind: input, shape index: {}]
  %s8 = inlined_call_operand.vmem [shape: f32[1,64], index: 8, kind: input, shape index: {}]
  %s9 = inlined_call_operand.vmem [shape: f32[1,64], index: 9, kind: input, shape index: {}]
  %s10 = inlined_call_operand.vmem [shape: f32[1,64], index: 10, kind: input, shape index: {}]
  %s11 = inlined_call_operand.vmem [shape: bf16[3,192,128], index: 11, kind: input, shape index: {}]
  %s12 = inlined_call_operand.vmem [shape: f32[1,64], index: 12, kind: input, shape index: {}]
  %s13 = inlined_call_operand.vmem [shape: f32[1,64], index: 13, kind: input, shape index: {}]
  %s14 = inlined_call_operand.vmem [shape: f32[1,64], index: 14, kind: input, shape index: {}]
  %s15 = inlined_call_operand.vmem [shape: f32[1,64], index: 15, kind: input, shape index: {}]
  %s16 = inlined_call_operand.vmem [shape: bf16[3,256,128], index: 16, kind: input, shape index: {}]
  %s17 = inlined_call_operand.vmem [shape: f32[1,64], index: 17, kind: input, shape index: {}]
  %s18 = inlined_call_operand.vmem [shape: f32[1,64], index: 18, kind: input, shape index: {}]
  %s19 = inlined_call_operand.vmem [shape: f32[1,64], index: 19, kind: input, shape index: {}]
  %s20 = inlined_call_operand.vmem [shape: f32[1,64], index: 20, kind: input, shape index: {}]
  %s21 = inlined_call_operand.hbm [shape: f32[2,16,8,64], index: 21, kind: output, shape index: {}]
  %s22 = sld [smem:[#allocation0]]
  $region117: #{dilated_dense_net.1} parent=0
    _
  %s24 = ssub.s32 1, %s22
  %s25 = scalar_select 0, %s24, %s22
  $region1: #{dilated_dense_net.1} parent=0
    #allocation3 [shape = 'u8[131072]{0}', space=vmem, size = 0x20000, scoped, tag = 'output window, operand 0']
    #allocation4 [shape = 's32[2]{0}', space=sflag, size = 0x8, scoped, tag = 'scoped memory for dilated_dense_net.1']
    %26 = vsyncpa [#allocation4], 0
    %s27 = scalar_lea.sflag [#allocation4], 1
    %28 = vsyncpa %s27, 0
    loop: start=0, step=1, limit=4
    $region2: #{dilated_dense_net.1} parent=1 // loop_pre_header
      _
    $region3: #{dilated_dense_net.1} parent=1 // loop_header
      %s30 = sphi 0, %s34
      %p31 = scmp.ge.s32.totalorder %s30, 4
      %s40 = sphi 0, %s42
      %s43 = sphi 0, %s40
      %s44 = sphi 0, %s43
      %s60 = sphi 0, %s44
      %s64 = sphi 0, %s64
      %s66 = sphi 0, %s64
      %s67 = sphi 0, %s66
      %s81 = sphi 0, %s67
      %s85 = sphi 0, %s85
      %s87 = sphi 0, %s85
      %s88 = sphi 0, %s87
      %s102 = sphi 0, %s88
      %s106 = sphi 0, %s106
      %s108 = sphi 0, %s106
      %s109 = sphi 0, %s108
      %s123 = sphi 0, %s109
      %s127 = sphi 0, %s127
      %s129 = sphi 0, %s127
      %s130 = sphi 0, %s129
      %s144 = sphi 0, %s130
      %s148 = sphi 0, %s148
      %s150 = sphi 0, %s148
      %s151 = sphi 0, %s150
      %s165 = sphi 0, %s151
      %s169 = sphi 0, %s169
      %s171 = sphi 0, %s169
      %s172 = sphi 0, %s171
      %s186 = sphi 0, %s172
      %s190 = sphi 0, %s190
      %s192 = sphi 0, %s190
      %s193 = sphi 0, %s192
      %s207 = sphi 0, %s193
      %s211 = sphi 0, %s211
      %s213 = sphi 0, %s211
      %s214 = sphi 0, %s213
      %s228 = sphi 0, %s214
      %s232 = sphi 0, %s232
      %s234 = sphi 0, %s232
      %s235 = sphi 0, %s234
      %s249 = sphi 0, %s235
      %s253 = sphi 0, %s253
      %s255 = sphi 0, %s253
      %s256 = sphi 0, %s255
      %s270 = sphi 0, %s256
      %s274 = sphi 0, %s274
      %s276 = sphi 0, %s274
      %s277 = sphi 0, %s276
      %s291 = sphi 0, %s277
      %s295 = sphi 0, %s295
      %s297 = sphi 0, %s295
      %s298 = sphi 0, %s297
      %s312 = sphi 0, %s298
      %s316 = sphi 0, %s316
      %s318 = sphi 0, %s316
      %s319 = sphi 0, %s318
      %s333 = sphi 0, %s319
      %s337 = sphi 0, %s337
      %s339 = sphi 0, %s337
      %s340 = sphi 0, %s339
      %s354 = sphi 0, %s340
      %s358 = sphi 0, %s358
      %s360 = sphi 0, %s358
      %s361 = sphi 0, %s360
      %s375 = sphi 0, %s361
      %s379 = sphi 0, %s379
      %s381 = sphi 0, %s379
      %s382 = sphi 0, %s381
      %s396 = sphi 0, %s382
      %s400 = sphi 0, %s400
      %s402 = sphi 0, %s400
      %s403 = sphi 0, %s402
      %s417 = sphi 0, %s403
      %s421 = sphi 0, %s421
      %s423 = sphi 0, %s421
      %s424 = sphi 0, %s423
      %s438 = sphi 0, %s424
      %s442 = sphi 0, %s442
      %s444 = sphi 0, %s442
      %s445 = sphi 0, %s444
      %s459 = sphi 0, %s445
      %s463 = sphi 0, %s463
      %s465 = sphi 0, %s463
      %s466 = sphi 0, %s465
      %s480 = sphi 0, %s466
      %s486 = sphi 0, %s488
      %s489 = sphi 0, %s486
      %s490 = sphi 0, %s489
      %s506 = sphi 0, %s490
    $region4: #{dilated_dense_net.1} parent=1 // loop_header_branch
      %33 = sbr.rel (%p31) target = $region8
    $region5: #{dilated_dense_net.1} parent=1 // loop_body
      %s35 = ssub.s32 %s30, 1
      %s36 = ssub.s32 %s30, 2
      %s37 = sadd.s32 %s30, 1
      %s38 = ssub.s32 %s30, %s37
      %p39 = scmp.eq.s32.totalorder %s38, 0
      %s41 = sadd.s32 %s40, 1
      %s42 = scalar_select %p39, %s40, %s41
      %p45 = pneg %p39
      %p46 = scmp.eq.s32.totalorder %s30, 1
      %p47 = por %p45, %p46
      %p48 = scmp.ne.s32.totalorder %s40, %s43
      %p49 = scmp.eq.s32.totalorder %s30, 0
      %p50 = por %p48, %p49
      %p51 = scmp.ne.s32.totalorder %s40, %s43
      %p52 = scmp.eq.s32.totalorder %s35, 1
      %p53 = por %p51, %p52
      %p54 = scmp.ne.s32.totalorder %s43, %s44
      %p55 = scmp.eq.s32.totalorder %s35, 0
      %p56 = por %p54, %p55
      %p57 = scmp.ne.s32.totalorder %s43, %s44
      %p58 = scmp.eq.s32.totalorder %s36, 1
      %p59 = por %p57, %p58
      %p61 = scmp.ne.s32.totalorder %s44, %s60
      %p62 = scmp.eq.s32.totalorder %s36, 0
      %p63 = por %p61, %p62
      %s65 = sadd.s32 %s64, 1
      %p68 = scmp.eq.s32.totalorder %s30, 1
      %p69 = scmp.ne.s32.totalorder %s64, %s66
      %p70 = scmp.eq.s32.totalorder %s30, 0
      %p71 = por %p69, %p70
      %p72 = scmp.ne.s32.totalorder %s64, %s66
      %p73 = scmp.eq.s32.totalorder %s35, 1
      %p74 = por %p72, %p73
      %p75 = scmp.ne.s32.totalorder %s66, %s67
      %p76 = scmp.eq.s32.totalorder %s35, 0
      %p77 = por %p75, %p76
      %p78 = scmp.ne.s32.totalorder %s66, %s67
      %p79 = scmp.eq.s32.totalorder %s36, 1
      %p80 = por %p78, %p79
      %p82 = scmp.ne.s32.totalorder %s67, %s81
      %p83 = scmp.eq.s32.totalorder %s36, 0
      %p84 = por %p82, %p83
      %s86 = sadd.s32 %s85, 1
      %p89 = scmp.eq.s32.totalorder %s30, 1
      %p90 = scmp.ne.s32.totalorder %s85, %s87
      %p91 = scmp.eq.s32.totalorder %s30, 0
      %p92 = por %p90, %p91
      %p93 = scmp.ne.s32.totalorder %s85, %s87
      %p94 = scmp.eq.s32.totalorder %s35, 1
      %p95 = por %p93, %p94
      %p96 = scmp.ne.s32.totalorder %s87, %s88
      %p97 = scmp.eq.s32.totalorder %s35, 0
      %p98 = por %p96, %p97
      %p99 = scmp.ne.s32.totalorder %s87, %s88
      %p100 = scmp.eq.s32.totalorder %s36, 1
      %p101 = por %p99, %p100
      %p103 = scmp.ne.s32.totalorder %s88, %s102
      %p104 = scmp.eq.s32.totalorder %s36, 0
      %p105 = por %p103, %p104
      %s107 = sadd.s32 %s106, 1
      %p110 = scmp.eq.s32.totalorder %s30, 1
      %p111 = scmp.ne.s32.totalorder %s106, %s108
      %p112 = scmp.eq.s32.totalorder %s30, 0
      %p113 = por %p111, %p112
      %p114 = scmp.ne.s32.totalorder %s106, %s108
      %p115 = scmp.eq.s32.totalorder %s35, 1
      %p116 = por %p114, %p115
      %p117 = scmp.ne.s32.totalorder %s108, %s109
      %p118 = scmp.eq.s32.totalorder %s35, 0
      %p119 = por %p117, %p118
      %p120 = scmp.ne.s32.totalorder %s108, %s109
      %p121 = scmp.eq.s32.totalorder %s36, 1
      %p122 = por %p120, %p121
      %p124 = scmp.ne.s32.totalorder %s109, %s123
      %p125 = scmp.eq.s32.totalorder %s36, 0
      %p126 = por %p124, %p125
      %s128 = sadd.s32 %s127, 1
      %p131 = scmp.eq.s32.totalorder %s30, 1
      %p132 = scmp.ne.s32.totalorder %s127, %s129
      %p133 = scmp.eq.s32.totalorder %s30, 0
      %p134 = por %p132, %p133
      %p135 = scmp.ne.s32.totalorder %s127, %s129
      %p136 = scmp.eq.s32.totalorder %s35, 1
      %p137 = por %p135, %p136
      %p138 = scmp.ne.s32.totalorder %s129, %s130
      %p139 = scmp.eq.s32.totalorder %s35, 0
      %p140 = por %p138, %p139
      %p141 = scmp.ne.s32.totalorder %s129, %s130
      %p142 = scmp.eq.s32.totalorder %s36, 1
      %p143 = por %p141, %p142
      %p145 = scmp.ne.s32.totalorder %s130, %s144
      %p146 = scmp.eq.s32.totalorder %s36, 0
      %p147 = por %p145, %p146
      %s149 = sadd.s32 %s148, 1
      %p152 = scmp.eq.s32.totalorder %s30, 1
      %p153 = scmp.ne.s32.totalorder %s148, %s150
      %p154 = scmp.eq.s32.totalorder %s30, 0
      %p155 = por %p153, %p154
      %p156 = scmp.ne.s32.totalorder %s148, %s150
      %p157 = scmp.eq.s32.totalorder %s35, 1
      %p158 = por %p156, %p157
      %p159 = scmp.ne.s32.totalorder %s150, %s151
      %p160 = scmp.eq.s32.totalorder %s35, 0
      %p161 = por %p159, %p160
      %p162 = scmp.ne.s32.totalorder %s150, %s151
      %p163 = scmp.eq.s32.totalorder %s36, 1
      %p164 = por %p162, %p163
      %p166 = scmp.ne.s32.totalorder %s151, %s165
      %p167 = scmp.eq.s32.totalorder %s36, 0
      %p168 = por %p166, %p167
      %s170 = sadd.s32 %s169, 1
      %p173 = scmp.eq.s32.totalorder %s30, 1
      %p174 = scmp.ne.s32.totalorder %s169, %s171
      %p175 = scmp.eq.s32.totalorder %s30, 0
      %p176 = por %p174, %p175
      %p177 = scmp.ne.s32.totalorder %s169, %s171
      %p178 = scmp.eq.s32.totalorder %s35, 1
      %p179 = por %p177, %p178
      %p180 = scmp.ne.s32.totalorder %s171, %s172
      %p181 = scmp.eq.s32.totalorder %s35, 0
      %p182 = por %p180, %p181
      %p183 = scmp.ne.s32.totalorder %s171, %s172
      %p184 = scmp.eq.s32.totalorder %s36, 1
      %p185 = por %p183, %p184
      %p187 = scmp.ne.s32.totalorder %s172, %s186
      %p188 = scmp.eq.s32.totalorder %s36, 0
      %p189 = por %p187, %p188
      %s191 = sadd.s32 %s190, 1
      %p194 = scmp.eq.s32.totalorder %s30, 1
      %p195 = scmp.ne.s32.totalorder %s190, %s192
      %p196 = scmp.eq.s32.totalorder %s30, 0
      %p197 = por %p195, %p196
      %p198 = scmp.ne.s32.totalorder %s190, %s192
      %p199 = scmp.eq.s32.totalorder %s35, 1
      %p200 = por %p198, %p199
      %p201 = scmp.ne.s32.totalorder %s192, %s193
      %p202 = scmp.eq.s32.totalorder %s35, 0
      %p203 = por %p201, %p202
      %p204 = scmp.ne.s32.totalorder %s192, %s193
      %p205 = scmp.eq.s32.totalorder %s36, 1
      %p206 = por %p204, %p205
      %p208 = scmp.ne.s32.totalorder %s193, %s207
      %p209 = scmp.eq.s32.totalorder %s36, 0
      %p210 = por %p208, %p209
      %s212 = sadd.s32 %s211, 1
      %p215 = scmp.eq.s32.totalorder %s30, 1
      %p216 = scmp.ne.s32.totalorder %s211, %s213
      %p217 = scmp.eq.s32.totalorder %s30, 0
      %p218 = por %p216, %p217
      %p219 = scmp.ne.s32.totalorder %s211, %s213
      %p220 = scmp.eq.s32.totalorder %s35, 1
      %p221 = por %p219, %p220
      %p222 = scmp.ne.s32.totalorder %s213, %s214
      %p223 = scmp.eq.s32.totalorder %s35, 0
      %p224 = por %p222, %p223
      %p225 = scmp.ne.s32.totalorder %s213, %s214
      %p226 = scmp.eq.s32.totalorder %s36, 1
      %p227 = por %p225, %p226
      %p229 = scmp.ne.s32.totalorder %s214, %s228
      %p230 = scmp.eq.s32.totalorder %s36, 0
      %p231 = por %p229, %p230
      %s233 = sadd.s32 %s232, 1
      %p236 = scmp.eq.s32.totalorder %s30, 1
      %p237 = scmp.ne.s32.totalorder %s232, %s234
      %p238 = scmp.eq.s32.totalorder %s30, 0
      %p239 = por %p237, %p238
      %p240 = scmp.ne.s32.totalorder %s232, %s234
      %p241 = scmp.eq.s32.totalorder %s35, 1
      %p242 = por %p240, %p241
      %p243 = scmp.ne.s32.totalorder %s234, %s235
      %p244 = scmp.eq.s32.totalorder %s35, 0
      %p245 = por %p243, %p244
      %p246 = scmp.ne.s32.totalorder %s234, %s235
      %p247 = scmp.eq.s32.totalorder %s36, 1
      %p248 = por %p246, %p247
      %p250 = scmp.ne.s32.totalorder %s235, %s249
      %p251 = scmp.eq.s32.totalorder %s36, 0
      %p252 = por %p250, %p251
      %s254 = sadd.s32 %s253, 1
      %p257 = scmp.eq.s32.totalorder %s30, 1
      %p258 = scmp.ne.s32.totalorder %s253, %s255
      %p259 = scmp.eq.s32.totalorder %s30, 0
      %p260 = por %p258, %p259
      %p261 = scmp.ne.s32.totalorder %s253, %s255
      %p262 = scmp.eq.s32.totalorder %s35, 1
      %p263 = por %p261, %p262
      %p264 = scmp.ne.s32.totalorder %s255, %s256
      %p265 = scmp.eq.s32.totalorder %s35, 0
      %p266 = por %p264, %p265
      %p267 = scmp.ne.s32.totalorder %s255, %s256
      %p268 = scmp.eq.s32.totalorder %s36, 1
      %p269 = por %p267, %p268
      %p271 = scmp.ne.s32.totalorder %s256, %s270
      %p272 = scmp.eq.s32.totalorder %s36, 0
      %p273 = por %p271, %p272
      %s275 = sadd.s32 %s274, 1
      %p278 = scmp.eq.s32.totalorder %s30, 1
      %p279 = scmp.ne.s32.totalorder %s274, %s276
      %p280 = scmp.eq.s32.totalorder %s30, 0
      %p281 = por %p279, %p280
      %p282 = scmp.ne.s32.totalorder %s274, %s276
      %p283 = scmp.eq.s32.totalorder %s35, 1
      %p284 = por %p282, %p283
      %p285 = scmp.ne.s32.totalorder %s276, %s277
      %p286 = scmp.eq.s32.totalorder %s35, 0
      %p287 = por %p285, %p286
      %p288 = scmp.ne.s32.totalorder %s276, %s277
      %p289 = scmp.eq.s32.totalorder %s36, 1
      %p290 = por %p288, %p289
      %p292 = scmp.ne.s32.totalorder %s277, %s291
      %p293 = scmp.eq.s32.totalorder %s36, 0
      %p294 = por %p292, %p293
      %s296 = sadd.s32 %s295, 1
      %p299 = scmp.eq.s32.totalorder %s30, 1
      %p300 = scmp.ne.s32.totalorder %s295, %s297
      %p301 = scmp.eq.s32.totalorder %s30, 0
      %p302 = por %p300, %p301
      %p303 = scmp.ne.s32.totalorder %s295, %s297
      %p304 = scmp.eq.s32.totalorder %s35, 1
      %p305 = por %p303, %p304
      %p306 = scmp.ne.s32.totalorder %s297, %s298
      %p307 = scmp.eq.s32.totalorder %s35, 0
      %p308 = por %p306, %p307
      %p309 = scmp.ne.s32.totalorder %s297, %s298
      %p310 = scmp.eq.s32.totalorder %s36, 1
      %p311 = por %p309, %p310
      %p313 = scmp.ne.s32.totalorder %s298, %s312
      %p314 = scmp.eq.s32.totalorder %s36, 0
      %p315 = por %p313, %p314
      %s317 = sadd.s32 %s316, 1
      %p320 = scmp.eq.s32.totalorder %s30, 1
      %p321 = scmp.ne.s32.totalorder %s316, %s318
      %p322 = scmp.eq.s32.totalorder %s30, 0
      %p323 = por %p321, %p322
      %p324 = scmp.ne.s32.totalorder %s316, %s318
      %p325 = scmp.eq.s32.totalorder %s35, 1
      %p326 = por %p324, %p325
      %p327 = scmp.ne.s32.totalorder %s318, %s319
      %p328 = scmp.eq.s32.totalorder %s35, 0
      %p329 = por %p327, %p328
      %p330 = scmp.ne.s32.totalorder %s318, %s319
      %p331 = scmp.eq.s32.totalorder %s36, 1
      %p332 = por %p330, %p331
      %p334 = scmp.ne.s32.totalorder %s319, %s333
      %p335 = scmp.eq.s32.totalorder %s36, 0
      %p336 = por %p334, %p335
      %s338 = sadd.s32 %s337, 1
      %p341 = scmp.eq.s32.totalorder %s30, 1
      %p342 = scmp.ne.s32.totalorder %s337, %s339
      %p343 = scmp.eq.s32.totalorder %s30, 0
      %p344 = por %p342, %p343
      %p345 = scmp.ne.s32.totalorder %s337, %s339
      %p346 = scmp.eq.s32.totalorder %s35, 1
      %p347 = por %p345, %p346
      %p348 = scmp.ne.s32.totalorder %s339, %s340
      %p349 = scmp.eq.s32.totalorder %s35, 0
      %p350 = por %p348, %p349
      %p351 = scmp.ne.s32.totalorder %s339, %s340
      %p352 = scmp.eq.s32.totalorder %s36, 1
      %p353 = por %p351, %p352
      %p355 = scmp.ne.s32.totalorder %s340, %s354
      %p356 = scmp.eq.s32.totalorder %s36, 0
      %p357 = por %p355, %p356
      %s359 = sadd.s32 %s358, 1
      %p362 = scmp.eq.s32.totalorder %s30, 1
      %p363 = scmp.ne.s32.totalorder %s358, %s360
      %p364 = scmp.eq.s32.totalorder %s30, 0
      %p365 = por %p363, %p364
      %p366 = scmp.ne.s32.totalorder %s358, %s360
      %p367 = scmp.eq.s32.totalorder %s35, 1
      %p368 = por %p366, %p367
      %p369 = scmp.ne.s32.totalorder %s360, %s361
      %p370 = scmp.eq.s32.totalorder %s35, 0
      %p371 = por %p369, %p370
      %p372 = scmp.ne.s32.totalorder %s360, %s361
      %p373 = scmp.eq.s32.totalorder %s36, 1
      %p374 = por %p372, %p373
      %p376 = scmp.ne.s32.totalorder %s361, %s375
      %p377 = scmp.eq.s32.totalorder %s36, 0
      %p378 = por %p376, %p377
      %s380 = sadd.s32 %s379, 1
      %p383 = scmp.eq.s32.totalorder %s30, 1
      %p384 = scmp.ne.s32.totalorder %s379, %s381
      %p385 = scmp.eq.s32.totalorder %s30, 0
      %p386 = por %p384, %p385
      %p387 = scmp.ne.s32.totalorder %s379, %s381
      %p388 = scmp.eq.s32.totalorder %s35, 1
      %p389 = por %p387, %p388
      %p390 = scmp.ne.s32.totalorder %s381, %s382
      %p391 = scmp.eq.s32.totalorder %s35, 0
      %p392 = por %p390, %p391
      %p393 = scmp.ne.s32.totalorder %s381, %s382
      %p394 = scmp.eq.s32.totalorder %s36, 1
      %p395 = por %p393, %p394
      %p397 = scmp.ne.s32.totalorder %s382, %s396
      %p398 = scmp.eq.s32.totalorder %s36, 0
      %p399 = por %p397, %p398
      %s401 = sadd.s32 %s400, 1
      %p404 = scmp.eq.s32.totalorder %s30, 1
      %p405 = scmp.ne.s32.totalorder %s400, %s402
      %p406 = scmp.eq.s32.totalorder %s30, 0
      %p407 = por %p405, %p406
      %p408 = scmp.ne.s32.totalorder %s400, %s402
      %p409 = scmp.eq.s32.totalorder %s35, 1
      %p410 = por %p408, %p409
      %p411 = scmp.ne.s32.totalorder %s402, %s403
      %p412 = scmp.eq.s32.totalorder %s35, 0
      %p413 = por %p411, %p412
      %p414 = scmp.ne.s32.totalorder %s402, %s403
      %p415 = scmp.eq.s32.totalorder %s36, 1
      %p416 = por %p414, %p415
      %p418 = scmp.ne.s32.totalorder %s403, %s417
      %p419 = scmp.eq.s32.totalorder %s36, 0
      %p420 = por %p418, %p419
      %s422 = sadd.s32 %s421, 1
      %p425 = scmp.eq.s32.totalorder %s30, 1
      %p426 = scmp.ne.s32.totalorder %s421, %s423
      %p427 = scmp.eq.s32.totalorder %s30, 0
      %p428 = por %p426, %p427
      %p429 = scmp.ne.s32.totalorder %s421, %s423
      %p430 = scmp.eq.s32.totalorder %s35, 1
      %p431 = por %p429, %p430
      %p432 = scmp.ne.s32.totalorder %s423, %s424
      %p433 = scmp.eq.s32.totalorder %s35, 0
      %p434 = por %p432, %p433
      %p435 = scmp.ne.s32.totalorder %s423, %s424
      %p436 = scmp.eq.s32.totalorder %s36, 1
      %p437 = por %p435, %p436
      %p439 = scmp.ne.s32.totalorder %s424, %s438
      %p440 = scmp.eq.s32.totalorder %s36, 0
      %p441 = por %p439, %p440
      %s443 = sadd.s32 %s442, 1
      %p446 = scmp.eq.s32.totalorder %s30, 1
      %p447 = scmp.ne.s32.totalorder %s442, %s444
      %p448 = scmp.eq.s32.totalorder %s30, 0
      %p449 = por %p447, %p448
      %p450 = scmp.ne.s32.totalorder %s442, %s444
      %p451 = scmp.eq.s32.totalorder %s35, 1
      %p452 = por %p450, %p451
      %p453 = scmp.ne.s32.totalorder %s444, %s445
      %p454 = scmp.eq.s32.totalorder %s35, 0
      %p455 = por %p453, %p454
      %p456 = scmp.ne.s32.totalorder %s444, %s445
      %p457 = scmp.eq.s32.totalorder %s36, 1
      %p458 = por %p456, %p457
      %p460 = scmp.ne.s32.totalorder %s445, %s459
      %p461 = scmp.eq.s32.totalorder %s36, 0
      %p462 = por %p460, %p461
      %s464 = sadd.s32 %s463, 1
      %p467 = scmp.eq.s32.totalorder %s30, 1
      %p468 = scmp.ne.s32.totalorder %s463, %s465
      %p469 = scmp.eq.s32.totalorder %s30, 0
      %p470 = por %p468, %p469
      %p471 = scmp.ne.s32.totalorder %s463, %s465
      %p472 = scmp.eq.s32.totalorder %s35, 1
      %p473 = por %p471, %p472
      %p474 = scmp.ne.s32.totalorder %s465, %s466
      %p475 = scmp.eq.s32.totalorder %s35, 0
      %p476 = por %p474, %p475
      %p477 = scmp.ne.s32.totalorder %s465, %s466
      %p478 = scmp.eq.s32.totalorder %s36, 1
      %p479 = por %p477, %p478
      %p481 = scmp.ne.s32.totalorder %s466, %s480
      %p482 = scmp.eq.s32.totalorder %s36, 0
      %p483 = por %p481, %p482
      %s484 = ssub.s32 %s30, %s37
      %p485 = scmp.eq.s32.totalorder %s484, 0
      %s487 = sadd.s32 %s486, 1
      %s488 = scalar_select %p485, %s486, %s487
      %p491 = pneg %p485
      %p492 = scmp.eq.s32.totalorder %s30, 1
      %p493 = por %p491, %p492
      %p494 = scmp.ne.s32.totalorder %s486, %s489
      %p495 = scmp.eq.s32.totalorder %s30, 0
      %p496 = por %p494, %p495
      %p497 = scmp.ne.s32.totalorder %s486, %s489
      %p498 = scmp.eq.s32.totalorder %s35, 1
      %p499 = por %p497, %p498
      %p500 = scmp.ne.s32.totalorder %s489, %s490
      %p501 = scmp.eq.s32.totalorder %s35, 0
      %p502 = por %p500, %p501
      %p503 = scmp.ne.s32.totalorder %s489, %s490
      %p504 = scmp.eq.s32.totalorder %s36, 1
      %p505 = por %p503, %p504
      %p507 = scmp.ne.s32.totalorder %s490, %s506
      %p508 = scmp.eq.s32.totalorder %s36, 0
      %p509 = por %p507, %p508
      %p510 = scmp.le.s32.totalorder 1, %s30
      %p511 = scmp.lt.s32.totalorder %s30, 3
      %p512 = pnand %p510, %p511
      %p513 = pneg %p512
      // Predicated region
      $region9: #{dilated_dense_net.1} parent=5 // pred_check
        _
      $region10: #{dilated_dense_net.1} parent=5 // pred_check_branch
        %515 = sbr.rel (%p512) target = $region12
      $region11: #{dilated_dense_net.1} parent=5 // pred_region
        %s516 = ssub.s32 %s30, 1
        // Predicated region
        $region13: #{dilated_dense_net.1} parent=11 // pred_check
          %p517 = pneg %p77
        $region14: #{dilated_dense_net.1} parent=11 // pred_check_branch
          %519 = sbr.rel (%p517) target = $region16
        $region15: #{dilated_dense_net.1} parent=11 // pred_region
          _
        $region16: #{dilated_dense_net.1} parent=11 // pred_fallthru
          _
        // Predicated region
        $region17: #{dilated_dense_net.1} parent=11 // pred_check
          %p520 = pneg %p98
        $region18: #{dilated_dense_net.1} parent=11 // pred_check_branch
          %522 = sbr.rel (%p520) target = $region20
        $region19: #{dilated_dense_net.1} parent=11 // pred_region
          _
        $region20: #{dilated_dense_net.1} parent=11 // pred_fallthru
          _
        // Predicated region
        $region21: #{dilated_dense_net.1} parent=11 // pred_check
          %p523 = pneg %p119
        $region22: #{dilated_dense_net.1} parent=11 // pred_check_branch
          %525 = sbr.rel (%p523) target = $region24
        $region23: #{dilated_dense_net.1} parent=11 // pred_region
          _
        $region24: #{dilated_dense_net.1} parent=11 // pred_fallthru
          _
        // Predicated region
        $region25: #{dilated_dense_net.1} parent=11 // pred_check
          %p526 = pneg %p140
        $region26: #{dilated_dense_net.1} parent=11 // pred_check_branch
          %528 = sbr.rel (%p526) target = $region28
        $region27: #{dilated_dense_net.1} parent=11 // pred_region
          _
        $region28: #{dilated_dense_net.1} parent=11 // pred_fallthru
          _
        // Predicated region
        $region29: #{dilated_dense_net.1} parent=11 // pred_check
          %p529 = pneg %p161
        $region30: #{dilated_dense_net.1} parent=11 // pred_check_branch
          %531 = sbr.rel (%p529) target = $region32
        $region31: #{dilated_dense_net.1} parent=11 // pred_region
          _
        $region32: #{dilated_dense_net.1} parent=11 // pred_fallthru
          _
        // Predicated region
        $region33: #{dilated_dense_net.1} parent=11 // pred_check
          %p532 = pneg %p182
        $region34: #{dilated_dense_net.1} parent=11 // pred_check_branch
          %534 = sbr.rel (%p532) target = $region36
        $region35: #{dilated_dense_net.1} parent=11 // pred_region
          _
        $region36: #{dilated_dense_net.1} parent=11 // pred_fallthru
          _
        // Predicated region
        $region37: #{dilated_dense_net.1} parent=11 // pred_check
          %p535 = pneg %p203
        $region38: #{dilated_dense_net.1} parent=11 // pred_check_branch
          %537 = sbr.rel (%p535) target = $region40
        $region39: #{dilated_dense_net.1} parent=11 // pred_region
          _
        $region40: #{dilated_dense_net.1} parent=11 // pred_fallthru
          _
        // Predicated region
        $region41: #{dilated_dense_net.1} parent=11 // pred_check
          %p538 = pneg %p224
        $region42: #{dilated_dense_net.1} parent=11 // pred_check_branch
          %540 = sbr.rel (%p538) target = $region44
        $region43: #{dilated_dense_net.1} parent=11 // pred_region
          _
        $region44: #{dilated_dense_net.1} parent=11 // pred_fallthru
          _
        // Predicated region
        $region45: #{dilated_dense_net.1} parent=11 // pred_check
          %p541 = pneg %p245
        $region46: #{dilated_dense_net.1} parent=11 // pred_check_branch
          %543 = sbr.rel (%p541) target = $region48
        $region47: #{dilated_dense_net.1} parent=11 // pred_region
          _
        $region48: #{dilated_dense_net.1} parent=11 // pred_fallthru
          _
        // Predicated region
        $region49: #{dilated_dense_net.1} parent=11 // pred_check
          %p544 = pneg %p266
        $region50: #{dilated_dense_net.1} parent=11 // pred_check_branch
          %546 = sbr.rel (%p544) target = $region52
        $region51: #{dilated_dense_net.1} parent=11 // pred_region
          _
        $region52: #{dilated_dense_net.1} parent=11 // pred_fallthru
          _
        // Predicated region
        $region53: #{dilated_dense_net.1} parent=11 // pred_check
          %p547 = pneg %p287
        $region54: #{dilated_dense_net.1} parent=11 // pred_check_branch
          %549 = sbr.rel (%p547) target = $region56
        $region55: #{dilated_dense_net.1} parent=11 // pred_region
          _
        $region56: #{dilated_dense_net.1} parent=11 // pred_fallthru
          _
        // Predicated region
        $region57: #{dilated_dense_net.1} parent=11 // pred_check
          %p550 = pneg %p308
        $region58: #{dilated_dense_net.1} parent=11 // pred_check_branch
          %552 = sbr.rel (%p550) target = $region60
        $region59: #{dilated_dense_net.1} parent=11 // pred_region
          _
        $region60: #{dilated_dense_net.1} parent=11 // pred_fallthru
          _
        // Predicated region
        $region61: #{dilated_dense_net.1} parent=11 // pred_check
          %p553 = pneg %p329
        $region62: #{dilated_dense_net.1} parent=11 // pred_check_branch
          %555 = sbr.rel (%p553) target = $region64
        $region63: #{dilated_dense_net.1} parent=11 // pred_region
          _
        $region64: #{dilated_dense_net.1} parent=11 // pred_fallthru
          _
        // Predicated region
        $region65: #{dilated_dense_net.1} parent=11 // pred_check
          %p556 = pneg %p350
        $region66: #{dilated_dense_net.1} parent=11 // pred_check_branch
          %558 = sbr.rel (%p556) target = $region68
        $region67: #{dilated_dense_net.1} parent=11 // pred_region
          _
        $region68: #{dilated_dense_net.1} parent=11 // pred_fallthru
          _
        // Predicated region
        $region69: #{dilated_dense_net.1} parent=11 // pred_check
          %p559 = pneg %p371
        $region70: #{dilated_dense_net.1} parent=11 // pred_check_branch
          %561 = sbr.rel (%p559) target = $region72
        $region71: #{dilated_dense_net.1} parent=11 // pred_region
          _
        $region72: #{dilated_dense_net.1} parent=11 // pred_fallthru
          _
        // Predicated region
        $region73: #{dilated_dense_net.1} parent=11 // pred_check
          %p562 = pneg %p392
        $region74: #{dilated_dense_net.1} parent=11 // pred_check_branch
          %564 = sbr.rel (%p562) target = $region76
        $region75: #{dilated_dense_net.1} parent=11 // pred_region
          _
        $region76: #{dilated_dense_net.1} parent=11 // pred_fallthru
          _
        // Predicated region
        $region77: #{dilated_dense_net.1} parent=11 // pred_check
          %p565 = pneg %p413
        $region78: #{dilated_dense_net.1} parent=11 // pred_check_branch
          %567 = sbr.rel (%p565) target = $region80
        $region79: #{dilated_dense_net.1} parent=11 // pred_region
          _
        $region80: #{dilated_dense_net.1} parent=11 // pred_fallthru
          _
        // Predicated region
        $region81: #{dilated_dense_net.1} parent=11 // pred_check
          %p568 = pneg %p434
        $region82: #{dilated_dense_net.1} parent=11 // pred_check_branch
          %570 = sbr.rel (%p568) target = $region84
        $region83: #{dilated_dense_net.1} parent=11 // pred_region
          _
        $region84: #{dilated_dense_net.1} parent=11 // pred_fallthru
          _
        // Predicated region
        $region85: #{dilated_dense_net.1} parent=11 // pred_check
          %p571 = pneg %p455
        $region86: #{dilated_dense_net.1} parent=11 // pred_check_branch
          %573 = sbr.rel (%p571) target = $region88
        $region87: #{dilated_dense_net.1} parent=11 // pred_region
          _
        $region88: #{dilated_dense_net.1} parent=11 // pred_fallthru
          _
        // Predicated region
        $region89: #{dilated_dense_net.1} parent=11 // pred_check
          %p574 = pneg %p476
        $region90: #{dilated_dense_net.1} parent=11 // pred_check_branch
          %576 = sbr.rel (%p574) target = $region92
        $region91: #{dilated_dense_net.1} parent=11 // pred_region
          _
        $region92: #{dilated_dense_net.1} parent=11 // pred_fallthru
          _
      $region12: #{dilated_dense_net.1} parent=5 // pred_fallthru
        _
      %p577 = scmp.lt.s32.totalorder %s30, 2
      // Predicated region
      $region93: #{dilated_dense_net.1} parent=5 // pred_check
        %p578 = pneg %p577
      $region94: #{dilated_dense_net.1} parent=5 // pred_check_branch
        %580 = sbr.rel (%p578) target = $region96
      $region95: #{dilated_dense_net.1} parent=5 // pred_region
        // Predicated region
        $region97: #{dilated_dense_net.1} parent=95 // pred_check
          %p581 = pneg %p50
        $region98: #{dilated_dense_net.1} parent=95 // pred_check_branch
          %583 = sbr.rel (%p581) target = $region100
        $region99: #{dilated_dense_net.1} parent=95 // pred_region
          %p584 = scmp.lt.s32.totalorder %s30, 1
          %s585 = scalar_select %p584, %s30, 1
          %s586 = smul.addr %s585, 16
          %s587 = smul.addr %s586, 4
          %s588 = scalar_lea.vmem %s0, %s587
        $region100: #{dilated_dense_net.1} parent=95 // pred_fallthru
          _
      $region96: #{dilated_dense_net.1} parent=5 // pred_fallthru
        _
      %p589 = scmp.le.s32.totalorder 1, %s30
      %p590 = scmp.lt.s32.totalorder %s30, 3
      %p591 = pnand %p589, %p590
      %p592 = pneg %p591
      // Predicated region
      $region101: #{dilated_dense_net.1} parent=5 // pred_check
        _
      $region102: #{dilated_dense_net.1} parent=5 // pred_check_branch
        %594 = sbr.rel (%p591) target = $region104
      $region103: #{dilated_dense_net.1} parent=5 // pred_region
        %s595 = ssub.s32 %s30, 1
        %p596 = scmp.lt.s32.totalorder %s35, 1
        %s597 = scalar_select %p596, %s35, 1
        %s598 = smul.addr %s597, 16
        %s599 = smul.addr %s598, 4
        %s600 = scalar_lea.vmem %s0, %s599
        %p601 = pneg %p56
        %p602 = pneg %p53
        %p603 = pneg %p77
        %p604 = pneg %p74
        %p605 = pneg %p98
        %p606 = pneg %p95
        %p607 = pneg %p119
        %p608 = pneg %p116
        %p609 = pneg %p140
        %p610 = pneg %p137
        %p611 = pneg %p161
        %p612 = pneg %p158
        %p613 = pneg %p182
        %p614 = pneg %p179
        %p615 = pneg %p203
        %p616 = pneg %p200
        %p617 = pneg %p224
        %p618 = pneg %p221
        %p619 = pneg %p245
        %p620 = pneg %p242
        %p621 = pneg %p266
        %p622 = pneg %p263
        %p623 = pneg %p287
        %p624 = pneg %p284
        %p625 = pneg %p308
        %p626 = pneg %p305
        %p627 = pneg %p329
        %p628 = pneg %p326
        %p629 = pneg %p350
        %p630 = pneg %p347
        %p631 = pneg %p371
        %p632 = pneg %p368
        %p633 = pneg %p392
        %p634 = pneg %p389
        %p635 = pneg %p413
        %p636 = pneg %p410
        %p637 = pneg %p434
        %p638 = pneg %p431
        %p639 = pneg %p455
        %p640 = pneg %p452
        %p641 = pneg %p476
        %p642 = pneg %p473
        %p643 = pneg %p502
        %p644 = pneg %p499
        %s645 = sand.u32 %s489, 1
        %s646 = scalar_lea.sflag [#allocation4], %s645
        %s647 = sand.u32 %s489, 1
        %s648 = smul.addr %s647, 128
        %s649 = scalar_lea.vmem [#allocation3], %s648
        %p650 = scmp.lt.s32.totalorder %s35, 1
        %s651 = scalar_select %p650, %s35, 1
        %s652 = smul.addr %s651, 16
        %s653 = smul.addr %s652, 4
        %s654 = scalar_lea.vmem %s0, %s653
        %656 = vst [vmem:[#allocation2] sm:$0xff] 0
        %657 = vst [vmem:[#allocation2 + $0x8] sm:$0x11] 0
        %658 = vst [vmem:[#allocation2 + $0x10] sm:$0xff] 0
        %659 = vst [vmem:[#allocation2 + $0x18] sm:$0x11] 0
        %660 = vst [vmem:[#allocation2 + $0x20] sm:$0xff] 0
        %661 = vst [vmem:[#allocation2 + $0x28] sm:$0x11] 0
        %662 = vst [vmem:[#allocation2 + $0x30] sm:$0xff] 0
        %663 = vst [vmem:[#allocation2 + $0x38] sm:$0x11] 0
        %664 = vst [vmem:[#allocation2 + $0x40] sm:$0xff] 0
        %665 = vst [vmem:[#allocation2 + $0x48] sm:$0x11] 0
        %666 = vst [vmem:[#allocation2 + $0x50] sm:$0xff] 0
        %667 = vst [vmem:[#allocation2 + $0x58] sm:$0x11] 0
        %668 = vst [vmem:[#allocation2 + $0x60] sm:$0xff] 0
        %669 = vst [vmem:[#allocation2 + $0x68] sm:$0x11] 0
        %670 = vst [vmem:[#allocation2 + $0x70] sm:$0xff] 0
        %671 = vst [vmem:[#allocation2 + $0x78] sm:$0x11] 0
        %672 = vst [vmem:[#allocation2 + $0x80] sm:$0xff] 0
        %673 = vst [vmem:[#allocation2 + $0x88] sm:$0x11] 0
        %674 = vst [vmem:[#allocation2 + $0x90] sm:$0xff] 0
        %675 = vst [vmem:[#allocation2 + $0x98] sm:$0x11] 0
        %676 = vst [vmem:[#allocation2 + $0xa0] sm:$0xff] 0
        %677 = vst [vmem:[#allocation2 + $0xa8] sm:$0x11] 0
        %678 = vst [vmem:[#allocation2 + $0xb0] sm:$0xff] 0
        %679 = vst [vmem:[#allocation2 + $0xb8] sm:$0x11] 0
        %680 = vst [vmem:[#allocation2 + $0xc0] sm:$0xff] 0
        %681 = vst [vmem:[#allocation2 + $0xc8] sm:$0x11] 0
        %682 = vst [vmem:[#allocation2 + $0xd0] sm:$0xff] 0
        %683 = vst [vmem:[#allocation2 + $0xd8] sm:$0x11] 0
        %684 = vst [vmem:[#allocation2 + $0xe0] sm:$0xff] 0
        %685 = vst [vmem:[#allocation2 + $0xe8] sm:$0x11] 0
        %686 = vst [vmem:[#allocation2 + $0xf0] sm:$0xff] 0
        %687 = vst [vmem:[#allocation2 + $0xf8] sm:$0x11] 0
        %688 = vst [vmem:[#allocation2 + $0x100] sm:$0xff] 0
        %689 = vst [vmem:[#allocation2 + $0x108] sm:$0x11] 0
        %690 = vst [vmem:[#allocation2 + $0x110] sm:$0xff] 0
        %691 = vst [vmem:[#allocation2 + $0x118] sm:$0x11] 0
        %692 = vst [vmem:[#allocation2 + $0x120] sm:$0xff] 0
        %693 = vst [vmem:[#allocation2 + $0x128] sm:$0x11] 0
        %694 = vst [vmem:[#allocation2 + $0x130] sm:$0xff] 0
        %695 = vst [vmem:[#allocation2 + $0x138] sm:$0x11] 0
        %696 = vst [vmem:[#allocation2 + $0x140] sm:$0xff] 0
        %697 = vst [vmem:[#allocation2 + $0x148] sm:$0x11] 0
        %698 = vst [vmem:[#allocation2 + $0x150] sm:$0xff] 0
        %699 = vst [vmem:[#allocation2 + $0x158] sm:$0x11] 0
        %700 = vst [vmem:[#allocation2 + $0x160] sm:$0xff] 0
        %701 = vst [vmem:[#allocation2 + $0x168] sm:$0x11] 0
        %702 = vst [vmem:[#allocation2 + $0x170] sm:$0xff] 0
        %703 = vst [vmem:[#allocation2 + $0x178] sm:$0x11] 0
        %v704 = vld [vmem:[%s654] sm:$0xf]
        %v705 = vld [vmem:[%s654 + $0x4] sm:$0xf]
        %v706 = vld [vmem:[%s654 + $0x8] sm:$0xf]
        %v707 = vld [vmem:[%s654 + $0xc] sm:$0xf]
        %v708 = vld [vmem:[%s654 + $0x10] sm:$0xf]
        %v709 = vld [vmem:[%s654 + $0x14] sm:$0xf]
        %v710 = vld [vmem:[%s654 + $0x18] sm:$0xf]
        %v711 = vld [vmem:[%s654 + $0x1c] sm:$0xf]
        %v712 = vld [vmem:[%s654 + $0x20] sm:$0xf]
        %v713 = vld [vmem:[%s654 + $0x24] sm:$0xf]
        %v714 = vld [vmem:[%s654 + $0x28] sm:$0xf]
        %v715 = vld [vmem:[%s654 + $0x2c] sm:$0xf]
        %v716 = vld [vmem:[%s654 + $0x30] sm:$0xf]
        %v717 = vld [vmem:[%s654 + $0x34] sm:$0xf]
        %v718 = vld [vmem:[%s654 + $0x38] sm:$0xf]
        %v719 = vld [vmem:[%s654 + $0x3c] sm:$0xf]
        %v721 = vshrl.u32 %v704, 16
        %v723 = vrot.slane %v721, 7
        %v724 = vshll.u32 %v704, 16
        %v726 = vor.u32 %v723, %v724
        %v727 = vrot.slane %v723, 4
        %v729 = vshrl.u32 %v705, 16
        %v731 = vrot.slane %v729, 7
        %v732 = vshll.u32 %v705, 16
        %v734 = vor.u32 %v731, %v732
        %v735 = vrot.slane %v731, 4
        %v737 = vshrl.u32 %v706, 16
        %v739 = vrot.slane %v737, 7
        %v740 = vshll.u32 %v706, 16
        %v742 = vor.u32 %v739, %v740
        %v743 = vrot.slane %v739, 4
        %v745 = vshrl.u32 %v707, 16
        %v747 = vrot.slane %v745, 7
        %v748 = vshll.u32 %v707, 16
        %v750 = vor.u32 %v747, %v748
        %v751 = vrot.slane %v747, 4
        %v753 = vshrl.u32 %v708, 16
        %v755 = vrot.slane %v753, 7
        %v756 = vshll.u32 %v708, 16
        %v758 = vor.u32 %v755, %v756
        %v759 = vrot.slane %v755, 4
        %v761 = vshrl.u32 %v709, 16
        %v763 = vrot.slane %v761, 7
        %v764 = vshll.u32 %v709, 16
        %v766 = vor.u32 %v763, %v764
        %v767 = vrot.slane %v763, 4
        %v769 = vshrl.u32 %v710, 16
        %v771 = vrot.slane %v769, 7
        %v772 = vshll.u32 %v710, 16
        %v774 = vor.u32 %v771, %v772
        %v775 = vrot.slane %v771, 4
        %v777 = vshrl.u32 %v711, 16
        %v779 = vrot.slane %v777, 7
        %v780 = vshll.u32 %v711, 16
        %v782 = vor.u32 %v779, %v780
        %v783 = vrot.slane %v779, 4
        %v785 = vshrl.u32 %v712, 16
        %v787 = vrot.slane %v785, 7
        %v788 = vshll.u32 %v712, 16
        %v790 = vor.u32 %v787, %v788
        %v791 = vrot.slane %v787, 4
        %v793 = vshrl.u32 %v713, 16
        %v795 = vrot.slane %v793, 7
        %v796 = vshll.u32 %v713, 16
        %v798 = vor.u32 %v795, %v796
        %v799 = vrot.slane %v795, 4
        %v801 = vshrl.u32 %v714, 16
        %v803 = vrot.slane %v801, 7
        %v804 = vshll.u32 %v714, 16
        %v806 = vor.u32 %v803, %v804
        %v807 = vrot.slane %v803, 4
        %v809 = vshrl.u32 %v715, 16
        %v811 = vrot.slane %v809, 7
        %v812 = vshll.u32 %v715, 16
        %v814 = vor.u32 %v811, %v812
        %v815 = vrot.slane %v811, 4
        %v817 = vshrl.u32 %v716, 16
        %v819 = vrot.slane %v817, 7
        %v820 = vshll.u32 %v716, 16
        %v822 = vor.u32 %v819, %v820
        %v823 = vrot.slane %v819, 4
        %v825 = vshrl.u32 %v717, 16
        %v827 = vrot.slane %v825, 7
        %v828 = vshll.u32 %v717, 16
        %v830 = vor.u32 %v827, %v828
        %v831 = vrot.slane %v827, 4
        %v833 = vshrl.u32 %v718, 16
        %v835 = vrot.slane %v833, 7
        %v836 = vshll.u32 %v718, 16
        %v838 = vor.u32 %v835, %v836
        %v839 = vrot.slane %v835, 4
        %v841 = vshrl.u32 %v719, 16
        %v843 = vrot.slane %v841, 7
        %v844 = vshll.u32 %v719, 16
        %v846 = vor.u32 %v843, %v844
        %v847 = vrot.slane %v843, 4
        %s880 = scalar_lea.vmem [#allocation2], 128
        %vm881 = vcmask 519168
        %vm882 = vsmask.f32 7938
        %vm883 = vmand %vm881, %vm882
        %v884 = vld [vmem:[%s880] sm:$0xf]
        %v885 = vsel %vm883, %v726, %v884
        %886 = vst [vmem:[%s880] sm:$0xf] %v885
        %vm887 = vcmask 516096
        %vm888 = vsmask.f32 256
        %vm889 = vmand %vm887, %vm888
        %v890 = vld [vmem:[%s880 + $0x8] sm:$0x1]
        %v891 = vsel %vm889, %v727, %v890
        %892 = vst [vmem:[%s880 + $0x8] sm:$0x1] %v891
        %v893 = vld [vmem:[%s880 + $0x10] sm:$0xf]
        %v894 = vsel %vm883, %v734, %v893
        %895 = vst [vmem:[%s880 + $0x10] sm:$0xf] %v894
        %v896 = vld [vmem:[%s880 + $0x18] sm:$0x1]
        %v897 = vsel %vm889, %v735, %v896
        %898 = vst [vmem:[%s880 + $0x18] sm:$0x1] %v897
        %v899 = vld [vmem:[%s880 + $0x20] sm:$0xf]
        %v900 = vsel %vm883, %v742, %v899
        %901 = vst [vmem:[%s880 + $0x20] sm:$0xf] %v900
        %v902 = vld [vmem:[%s880 + $0x28] sm:$0x1]
        %v903 = vsel %vm889, %v743, %v902
        %904 = vst [vmem:[%s880 + $0x28] sm:$0x1] %v903
        %v905 = vld [vmem:[%s880 + $0x30] sm:$0xf]
        %v906 = vsel %vm883, %v750, %v905
        %907 = vst [vmem:[%s880 + $0x30] sm:$0xf] %v906
        %v908 = vld [vmem:[%s880 + $0x38] sm:$0x1]
        %v909 = vsel %vm889, %v751, %v908
        %910 = vst [vmem:[%s880 + $0x38] sm:$0x1] %v909
        %v911 = vld [vmem:[%s880 + $0x40] sm:$0xf]
        %v912 = vsel %vm883, %v758, %v911
        %913 = vst [vmem:[%s880 + $0x40] sm:$0xf] %v912
        %v914 = vld [vmem:[%s880 + $0x48] sm:$0x1]
        %v915 = vsel %vm889, %v759, %v914
        %916 = vst [vmem:[%s880 + $0x48] sm:$0x1] %v915
        %v917 = vld [vmem:[%s880 + $0x50] sm:$0xf]
        %v918 = vsel %vm883, %v766, %v917
        %919 = vst [vmem:[%s880 + $0x50] sm:$0xf] %v918
        %v920 = vld [vmem:[%s880 + $0x58] sm:$0x1]
        %v921 = vsel %vm889, %v767, %v920
        %922 = vst [vmem:[%s880 + $0x58] sm:$0x1] %v921
        %v923 = vld [vmem:[%s880 + $0x60] sm:$0xf]
        %v924 = vsel %vm883, %v774, %v923
        %925 = vst [vmem:[%s880 + $0x60] sm:$0xf] %v924
        %v926 = vld [vmem:[%s880 + $0x68] sm:$0x1]
        %v927 = vsel %vm889, %v775, %v926
        %928 = vst [vmem:[%s880 + $0x68] sm:$0x1] %v927
        %v929 = vld [vmem:[%s880 + $0x70] sm:$0xf]
        %v930 = vsel %vm883, %v782, %v929
        %931 = vst [vmem:[%s880 + $0x70] sm:$0xf] %v930
        %v932 = vld [vmem:[%s880 + $0x78] sm:$0x1]
        %v933 = vsel %vm889, %v783, %v932
        %934 = vst [vmem:[%s880 + $0x78] sm:$0x1] %v933
        %v935 = vld [vmem:[%s880 + $0x80] sm:$0xf]
        %v936 = vsel %vm883, %v790, %v935
        %937 = vst [vmem:[%s880 + $0x80] sm:$0xf] %v936
        %v938 = vld [vmem:[%s880 + $0x88] sm:$0x1]
        %v939 = vsel %vm889, %v791, %v938
        %940 = vst [vmem:[%s880 + $0x88] sm:$0x1] %v939
        %v941 = vld [vmem:[%s880 + $0x90] sm:$0xf]
        %v942 = vsel %vm883, %v798, %v941
        %943 = vst [vmem:[%s880 + $0x90] sm:$0xf] %v942
        %v944 = vld [vmem:[%s880 + $0x98] sm:$0x1]
        %v945 = vsel %vm889, %v799, %v944
        %946 = vst [vmem:[%s880 + $0x98] sm:$0x1] %v945
        %v947 = vld [vmem:[%s880 + $0xa0] sm:$0xf]
        %v948 = vsel %vm883, %v806, %v947
        %949 = vst [vmem:[%s880 + $0xa0] sm:$0xf] %v948
        %v950 = vld [vmem:[%s880 + $0xa8] sm:$0x1]
        %v951 = vsel %vm889, %v807, %v950
        %952 = vst [vmem:[%s880 + $0xa8] sm:$0x1] %v951
        %v953 = vld [vmem:[%s880 + $0xb0] sm:$0xf]
        %v954 = vsel %vm883, %v814, %v953
        %955 = vst [vmem:[%s880 + $0xb0] sm:$0xf] %v954
        %v956 = vld [vmem:[%s880 + $0xb8] sm:$0x1]
        %v957 = vsel %vm889, %v815, %v956
        %958 = vst [vmem:[%s880 + $0xb8] sm:$0x1] %v957
        %v959 = vld [vmem:[%s880 + $0xc0] sm:$0xf]
        %v960 = vsel %vm883, %v822, %v959
        %961 = vst [vmem:[%s880 + $0xc0] sm:$0xf] %v960
        %v962 = vld [vmem:[%s880 + $0xc8] sm:$0x1]
        %v963 = vsel %vm889, %v823, %v962
        %964 = vst [vmem:[%s880 + $0xc8] sm:$0x1] %v963
        %v965 = vld [vmem:[%s880 + $0xd0] sm:$0xf]
        %v966 = vsel %vm883, %v830, %v965
        %967 = vst [vmem:[%s880 + $0xd0] sm:$0xf] %v966
        %v968 = vld [vmem:[%s880 + $0xd8] sm:$0x1]
        %v969 = vsel %vm889, %v831, %v968
        %970 = vst [vmem:[%s880 + $0xd8] sm:$0x1] %v969
        %v971 = vld [vmem:[%s880 + $0xe0] sm:$0xf]
        %v972 = vsel %vm883, %v838, %v971
        %973 = vst [vmem:[%s880 + $0xe0] sm:$0xf] %v972
        %v974 = vld [vmem:[%s880 + $0xe8] sm:$0x1]
        %v975 = vsel %vm889, %v839, %v974
        %976 = vst [vmem:[%s880 + $0xe8] sm:$0x1] %v975
        %v977 = vld [vmem:[%s880 + $0xf0] sm:$0xf]
        %v978 = vsel %vm883, %v846, %v977
        %979 = vst [vmem:[%s880 + $0xf0] sm:$0xf] %v978
        %v980 = vld [vmem:[%s880 + $0xf8] sm:$0x1]
        %v981 = vsel %vm889, %v847, %v980
        %982 = vst [vmem:[%s880 + $0xf8] sm:$0x1] %v981
        %v983 = vld [vmem:[%s2] sm:$0x1]
        %v985 = vlaneseq
        %v986 = vshrl.u32 %v985, 7
        %v987 = vsub.s32 0, %v986
        %v988 = vrot.slane %v983, %v987
        %s990 = scalar_lea.vmem [#allocation2], 112
        %v991 = vld [vmem:[%s990] sm:$0xf]
        %v992 = vld [vmem:[%s990 + $0x10] sm:$0xf]
        %v993 = vld [vmem:[%s990 + $0x20] sm:$0xf]
        %v994 = vld [vmem:[%s990 + $0x30] sm:$0xf]
        %v995 = vld [vmem:[%s990 + $0x40] sm:$0xf]
        %v996 = vld [vmem:[%s990 + $0x50] sm:$0xf]
        %v997 = vld [vmem:[%s990 + $0x60] sm:$0xf]
        %v998 = vld [vmem:[%s990 + $0x70] sm:$0xf]
        %v999 = vld [vmem:[%s990 + $0x80] sm:$0xf]
        %v1000 = vld [vmem:[%s990 + $0x90] sm:$0xf]
        %v1001 = vld [vmem:[%s990 + $0xa0] sm:$0xf]
        %v1002 = vld [vmem:[%s990 + $0xb0] sm:$0xf]
        %v1003 = vld [vmem:[%s990 + $0xc0] sm:$0xf]
        %v1004 = vld [vmem:[%s990 + $0xd0] sm:$0xf]
        %v1005 = vld [vmem:[%s990 + $0xe0] sm:$0xf]
        %v1006 = vld [vmem:[%s990 + $0xf0] sm:$0xf]
        %v1007 = vld [vmem:[%s990 + $0x100] sm:$0xf]
        %v1008 = vld [vmem:[%s1] sm:$0xf]
        %v1009 = vld [vmem:[%s1 + $0x4] sm:$0xf]
        %v1010 = vld [vmem:[%s1 + $0x8] sm:$0xf]
        %v1011 = vld [vmem:[%s1 + $0xc] sm:$0xf]
        %v1012 = vld [vmem:[%s1 + $0x10] sm:$0xf]
        %v1013 = vld [vmem:[%s1 + $0x14] sm:$0xf]
        %v1014 = vld [vmem:[%s1 + $0x18] sm:$0xf]
        %v1015 = vld [vmem:[%s1 + $0x1c] sm:$0xf]
        %v1033 = vunpack.c.l.b16 %v991
        %v1034 = vunpack.c.l.b16 %v992
        %v1035 = vunpack.c.l.b16 %v993
        %v1036 = vunpack.c.l.b16 %v994
        %v1037 = vunpack.c.l.b16 %v995
        %v1038 = vunpack.c.l.b16 %v996
        %v1039 = vunpack.c.l.b16 %v997
        %v1040 = vunpack.c.l.b16 %v998
        %v1041 = vunpack.c.l.b16 %v999
        %v1042 = vunpack.c.l.b16 %v1000
        %v1043 = vunpack.c.l.b16 %v1001
        %v1044 = vunpack.c.l.b16 %v1002
        %v1045 = vunpack.c.l.b16 %v1003
        %v1046 = vunpack.c.l.b16 %v1004
        %v1047 = vunpack.c.l.b16 %v1005
        %v1048 = vunpack.c.l.b16 %v1006
        %v1049 = vunpack.c.l.b16 %v1007
        %v1050 = vpack.c.b16 %v1034, %v1033
        %v1051 = vpack.c.b16 %v1036, %v1035
        %v1052 = vpack.c.b16 %v1038, %v1037
        %v1053 = vpack.c.b16 %v1040, %v1039
        %v1054 = vpack.c.b16 %v1042, %v1041
        %v1055 = vpack.c.b16 %v1044, %v1043
        %v1056 = vpack.c.b16 %v1046, %v1045
        %v1057 = vpack.c.b16 %v1048, %v1047
        %v1058 = vpack.c.b16 %v1049, %v1049
        %v1067 = vunpack.c.l.b16 %v1008
        %v1068 = vunpack.c.l.b16 %v1009
        %v1069 = vunpack.c.l.b16 %v1010
        %v1070 = vunpack.c.l.b16 %v1011
        %v1071 = vunpack.c.l.b16 %v1012
        %v1072 = vunpack.c.l.b16 %v1013
        %v1073 = vunpack.c.l.b16 %v1014
        %v1074 = vunpack.c.l.b16 %v1015
        %v1075 = vpack.c.b16 %v1068, %v1067
        %v1076 = vpack.c.b16 %v1070, %v1069
        %v1077 = vpack.c.b16 %v1072, %v1071
        %v1078 = vpack.c.b16 %v1074, %v1073
        %vm1083 = vcmask 523264
        %v1085 = vsel %vm1083, %v1050, 0
        %v1088 = vsel %vm1083, %v1051, 0
        %v1091 = vsel %vm1083, %v1052, 0
        %v1094 = vsel %vm1083, %v1053, 0
        %v1097 = vsel %vm1083, %v1054, 0
        %v1100 = vsel %vm1083, %v1055, 0
        %v1103 = vsel %vm1083, %v1056, 0
        %v1106 = vsel %vm1083, %v1057, 0
        %v1109 = vsel %vm1083, %v1058, 0
        %1111 = vmatprep.subr.bf16.mxu0 0
        %1112 = vmatpush1.bf16.msra.mxu0 %v1075
        %1113 = vmatprep.subr.bf16.mxu0 0
        %1114 = vmatpush1.bf16.msra.mxu0 %v1076
        %1115 = vmatprep.subr.bf16.mxu0 0
        %1116 = vmatpush1.bf16.msra.mxu0 %v1077
        %1117 = vmatprep.subr.bf16.mxu0 0
        %1118 = vmatpush1.bf16.msra.mxu0 %v1078
        %1119 = vmatprep.subr.bf16.mxu0 0
        %1120 = vmatpush1.bf16.msra.mxu0 0
        %1121 = vmatprep.subr.bf16.mxu0 0
        %1122 = vmatpush1.bf16.msra.mxu0 0
        %1123 = vmatprep.subr.bf16.mxu0 0
        %1124 = vmatpush1.bf16.msra.mxu0 0
        %1125 = vmatprep.subr.bf16.mxu0 0
        %1126 = vmatpush1.bf16.msra.mxu0 0
        %1127 = vmatprep.subr.bf16.mxu0 0
        %1128 = vmatpush1.bf16.msra.mxu0 0
        %1129 = vmatprep.subr.bf16.mxu0 0
        %1130 = vmatpush1.bf16.msra.mxu0 0
        %1131 = vmatprep.subr.bf16.mxu0 0
        %1132 = vmatpush1.bf16.msra.mxu0 0
        %1133 = vmatprep.subr.bf16.mxu0 0
        %1134 = vmatpush1.bf16.msra.mxu0 0
        %1135 = vmatprep.subr.bf16.mxu0 0
        %1136 = vmatpush1.bf16.msra.mxu0 0
        %1137 = vmatprep.subr.bf16.mxu0 0
        %1138 = vmatpush1.bf16.msra.mxu0 0
        %1139 = vmatprep.subr.bf16.mxu0 0
        %1140 = vmatpush1.bf16.msra.mxu0 0
        %1141 = vmatprep.subr.bf16.mxu0 0
        %1142 = vmatpush1.bf16.msra.mxu0 0
        %1143 = vmatprep.mubr.bf16.mxu0 0
        %1144 = vmatmul.mubr.bf16.gmra.mrb[0].mxu0 %v1085
        %v1145 = vpop.f32.mrb[0].mxu0
        %v1146 = vadd.f32 0.0, %v1145
        %v1147 = vpop.f32.mrb[0].mxu0
        %v1148 = vpop.f32.mrb[0].mxu0
        %v1149 = vadd.f32 0.0, %v1148
        %v1150 = vpop.f32.mrb[0].mxu0
        %1151 = vmatprep.mubr.bf16.mxu0 0
        %1152 = vmatmul.mubr.bf16.gmra.mrb[0].mxu0 %v1088
        %v1153 = vpop.f32.mrb[0].mxu0
        %v1154 = vadd.f32 0.0, %v1153
        %v1155 = vpop.f32.mrb[0].mxu0
        %v1156 = vpop.f32.mrb[0].mxu0
        %v1157 = vadd.f32 0.0, %v1156
        %v1158 = vpop.f32.mrb[0].mxu0
        %1159 = vmatprep.mubr.bf16.mxu0 0
        %1160 = vmatmul.mubr.bf16.gmra.mrb[0].mxu0 %v1091
        %v1161 = vpop.f32.mrb[0].mxu0
        %v1162 = vadd.f32 0.0, %v1161
        %v1163 = vpop.f32.mrb[0].mxu0
        %v1164 = vpop.f32.mrb[0].mxu0
        %v1165 = vadd.f32 0.0, %v1164
        %v1166 = vpop.f32.mrb[0].mxu0
        %1167 = vmatprep.mubr.bf16.mxu0 0
        %1168 = vmatmul.mubr.bf16.gmra.mrb[0].mxu0 %v1094
        %v1169 = vpop.f32.mrb[0].mxu0
        %v1170 = vadd.f32 0.0, %v1169
        %v1171 = vpop.f32.mrb[0].mxu0
        %v1172 = vpop.f32.mrb[0].mxu0
        %v1173 = vadd.f32 0.0, %v1172
        %v1174 = vpop.f32.mrb[0].mxu0
        %1175 = vmatprep.mubr.bf16.mxu0 0
        %1176 = vmatmul.mubr.bf16.gmra.mrb[0].mxu0 %v1097
        %v1177 = vpop.f32.mrb[0].mxu0
        %v1178 = vadd.f32 0.0, %v1177
        %v1179 = vpop.f32.mrb[0].mxu0
        %v1180 = vpop.f32.mrb[0].mxu0
        %v1181 = vadd.f32 0.0, %v1180
        %v1182 = vpop.f32.mrb[0].mxu0
        %1183 = vmatprep.mubr.bf16.mxu0 0
        %1184 = vmatmul.mubr.bf16.gmra.mrb[0].mxu0 %v1100
        %v1185 = vpop.f32.mrb[0].mxu0
        %v1186 = vadd.f32 0.0, %v1185
        %v1187 = vpop.f32.mrb[0].mxu0
        %v1188 = vpop.f32.mrb[0].mxu0
        %v1189 = vadd.f32 0.0, %v1188
        %v1190 = vpop.f32.mrb[0].mxu0
        %1191 = vmatprep.mubr.bf16.mxu0 0
        %1192 = vmatmul.mubr.bf16.gmra.mrb[0].mxu0 %v1103
        %v1193 = vpop.f32.mrb[0].mxu0
        %v1194 = vadd.f32 0.0, %v1193
        %v1195 = vpop.f32.mrb[0].mxu0
        %v1196 = vpop.f32.mrb[0].mxu0
        %v1197 = vadd.f32 0.0, %v1196
        %v1198 = vpop.f32.mrb[0].mxu0
        %1199 = vmatprep.mubr.bf16.mxu0 0
        %1200 = vmatmul.mubr.bf16.gmra.mrb[0].mxu0 %v1106
        %v1201 = vpop.f32.mrb[0].mxu0
        %v1202 = vadd.f32 0.0, %v1201
        %v1203 = vpop.f32.mrb[0].mxu0
        %v1204 = vpop.f32.mrb[0].mxu0
        %v1205 = vadd.f32 0.0, %v1204
        %v1206 = vpop.f32.mrb[0].mxu0
        %1207 = vmatprep.mubr.bf16.mxu0 0
        %1208 = vmatmul.mubr.bf16.gmra.mrb[0].mxu0 %v1109
        %v1209 = vpop.f32.mrb[0].mxu0
        %v1210 = vadd.f32 0.0, %v1209
        %v1211 = vpop.f32.mrb[0].mxu0
        %v1212 = vpop.f32.mrb[0].mxu0
        %v1213 = vpop.f32.mrb[0].mxu0
        %1214 = vdwg.mxu0
        %v1215 = vadd.f32 %v988, %v1146
        %v1216 = vadd.f32 %v988, %v1149
        %v1217 = vadd.f32 %v988, %v1154
        %v1218 = vadd.f32 %v988, %v1157
        %v1219 = vadd.f32 %v988, %v1162
        %v1220 = vadd.f32 %v988, %v1165
        %v1221 = vadd.f32 %v988, %v1170
        %v1222 = vadd.f32 %v988, %v1173
        %v1223 = vadd.f32 %v988, %v1178
        %v1224 = vadd.f32 %v988, %v1181
        %v1225 = vadd.f32 %v988, %v1186
        %v1226 = vadd.f32 %v988, %v1189
        %v1227 = vadd.f32 %v988, %v1194
        %v1228 = vadd.f32 %v988, %v1197
        %v1229 = vadd.f32 %v988, %v1202
        %v1230 = vadd.f32 %v988, %v1205
        %1247 = vrot.lane.b32.xlu0 %v1149, 64
        %v1248 = vpop.permute.xlu0 %1247
        %1249 = vrot.lane.b32.xlu0 %v1154, 64
        %v1250 = vpop.permute.xlu0 %1249
        %1251 = vrot.lane.b32.xlu0 %v1157, 64
        %v1252 = vpop.permute.xlu0 %1251
        %1253 = vrot.lane.b32.xlu0 %v1162, 64
        %v1254 = vpop.permute.xlu0 %1253
        %1255 = vrot.lane.b32.xlu0 %v1165, 64
        %v1256 = vpop.permute.xlu0 %1255
        %1257 = vrot.lane.b32.xlu0 %v1170, 64
        %v1258 = vpop.permute.xlu0 %1257
        %1259 = vrot.lane.b32.xlu0 %v1173, 64
        %v1260 = vpop.permute.xlu0 %1259
        %1261 = vrot.lane.b32.xlu0 %v1178, 64
        %v1262 = vpop.permute.xlu0 %1261
        %1263 = vrot.lane.b32.xlu0 %v1181, 64
        %v1264 = vpop.permute.xlu0 %1263
        %1265 = vrot.lane.b32.xlu0 %v1186, 64
        %v1266 = vpop.permute.xlu0 %1265
        %1267 = vrot.lane.b32.xlu0 %v1189, 64
        %v1268 = vpop.permute.xlu0 %1267
        %1269 = vrot.lane.b32.xlu0 %v1194, 64
        %v1270 = vpop.permute.xlu0 %1269
        %1271 = vrot.lane.b32.xlu0 %v1197, 64
        %v1272 = vpop.permute.xlu0 %1271
        %1273 = vrot.lane.b32.xlu0 %v1202, 64
        %v1274 = vpop.permute.xlu0 %1273
        %1275 = vrot.lane.b32.xlu0 %v1205, 64
        %v1276 = vpop.permute.xlu0 %1275
        %1277 = vrot.lane.b32.xlu0 %v1210, 64
        %v1278 = vpop.permute.xlu0 %1277
        %v1295 = vadd.f32 %v1215, %v1248
        %v1296 = vadd.f32 %v1216, %v1250
        %v1297 = vadd.f32 %v1217, %v1252
        %v1298 = vadd.f32 %v1218, %v1254
        %v1299 = vadd.f32 %v1219, %v1256
        %v1300 = vadd.f32 %v1220, %v1258
        %v1301 = vadd.f32 %v1221, %v1260
        %v1302 = vadd.f32 %v1222, %v1262
        %v1303 = vadd.f32 %v1223, %v1264
        %v1304 = vadd.f32 %v1224, %v1266
        %v1305 = vadd.f32 %v1225, %v1268
        %v1306 = vadd.f32 %v1226, %v1270
        %v1307 = vadd.f32 %v1227, %v1272
        %v1308 = vadd.f32 %v1228, %v1274
        %v1309 = vadd.f32 %v1229, %v1276
        %v1310 = vadd.f32 %v1230, %v1278
        %v1311 = vld [vmem:[%s990] sm:$0xf]
        %v1312 = vld [vmem:[%s990 + $0x8] sm:$0x1]
        %v1313 = vld [vmem:[%s990 + $0x10] sm:$0xf]
        %v1314 = vld [vmem:[%s990 + $0x18] sm:$0x1]
        %v1315 = vld [vmem:[%s990 + $0x20] sm:$0xf]
        %v1316 = vld [vmem:[%s990 + $0x28] sm:$0x1]
        %v1317 = vld [vmem:[%s990 + $0x30] sm:$0xf]
        %v1318 = vld [vmem:[%s990 + $0x38] sm:$0x1]
        %v1319 = vld [vmem:[%s990 + $0x40] sm:$0xf]
        %v1320 = vld [vmem:[%s990 + $0x48] sm:$0x1]
        %v1321 = vld [vmem:[%s990 + $0x50] sm:$0xf]
        %v1322 = vld [vmem:[%s990 + $0x58] sm:$0x1]
        %v1323 = vld [vmem:[%s990 + $0x60] sm:$0xf]
        %v1324 = vld [vmem:[%s990 + $0x68] sm:$0x1]
        %v1325 = vld [vmem:[%s990 + $0x70] sm:$0xf]
        %v1326 = vld [vmem:[%s990 + $0x78] sm:$0x1]
        %v1327 = vld [vmem:[%s990 + $0x80] sm:$0xf]
        %v1328 = vld [vmem:[%s990 + $0x88] sm:$0x1]
        %v1329 = vld [vmem:[%s990 + $0x90] sm:$0xf]
        %v1330 = vld [vmem:[%s990 + $0x98] sm:$0x1]
        %v1331 = vld [vmem:[%s990 + $0xa0] sm:$0xf]
        %v1332 = vld [vmem:[%s990 + $0xa8] sm:$0x1]
        %v1333 = vld [vmem:[%s990 + $0xb0] sm:$0xf]
        %v1334 = vld [vmem:[%s990 + $0xb8] sm:$0x1]
        %v1335 = vld [vmem:[%s990 + $0xc0] sm:$0xf]
        %v1336 = vld [vmem:[%s990 + $0xc8] sm:$0x1]
        %v1337 = vld [vmem:[%s990 + $0xd0] sm:$0xf]
        %v1338 = vld [vmem:[%s990 + $0xd8] sm:$0x1]
        %v1339 = vld [vmem:[%s990 + $0xe0] sm:$0xf]
        %v1340 = vld [vmem:[%s990 + $0xe8] sm:$0x1]
        %v1341 = vld [vmem:[%s990 + $0xf0] sm:$0xf]
        %v1342 = vld [vmem:[%s990 + $0xf8] sm:$0x1]
        %v1343 = vld [vmem:[%s990 + $0x100] sm:$0xf]
        %v1344 = vld [vmem:[%s990 + $0x108] sm:$0x1]
        %vm1345 = vsmask.f32 3328
        %vm1346 = vsmask.f32 7440
        %vm1347 = vmor %vm1345, %vm1346
        %v1349 = vshrl.u32 %v1311, 16
        %v1351 = vrot.slane %v1349, 4
        %v1352 = vshll.u32 %v1311, 16
        %v1354 = vrot.slane %v1352, 5
        %v1355 = vor.u32 %v1351, %v1354
        %v1356 = vrot.slane %v1355, 4
        %v1358 = vshll.u32 %v1312, 16
        %v1360 = vrot.slane %v1358, 5
        %v1361 = vsel %vm1347, %v1356, %v1360
        %v1363 = vshrl.u32 %v1313, 16
        %v1365 = vrot.slane %v1363, 4
        %v1366 = vshll.u32 %v1313, 16
        %v1368 = vrot.slane %v1366, 5
        %v1369 = vor.u32 %v1365, %v1368
        %v1370 = vrot.slane %v1369, 4
        %v1372 = vshll.u32 %v1314, 16
        %v1374 = vrot.slane %v1372, 5
        %v1375 = vsel %vm1347, %v1370, %v1374
        %v1377 = vshrl.u32 %v1315, 16
        %v1379 = vrot.slane %v1377, 4
        %v1380 = vshll.u32 %v1315, 16
        %v1382 = vrot.slane %v1380, 5
        %v1383 = vor.u32 %v1379, %v1382
        %v1384 = vrot.slane %v1383, 4
        %v1386 = vshll.u32 %v1316, 16
        %v1388 = vrot.slane %v1386, 5
        %v1389 = vsel %vm1347, %v1384, %v1388
        %v1391 = vshrl.u32 %v1317, 16
        %v1393 = vrot.slane %v1391, 4
        %v1394 = vshll.u32 %v1317, 16
        %v1396 = vrot.slane %v1394, 5
        %v1397 = vor.u32 %v1393, %v1396
        %v1398 = vrot.slane %v1397, 4
        %v1400 = vshll.u32 %v1318, 16
        %v1402 = vrot.slane %v1400, 5
        %v1403 = vsel %vm1347, %v1398, %v1402
        %v1405 = vshrl.u32 %v1319, 16
        %v1407 = vrot.slane %v1405, 4
        %v1408 = vshll.u32 %v1319, 16
        %v1410 = vrot.slane %v1408, 5
        %v1411 = vor.u32 %v1407, %v1410
        %v1412 = vrot.slane %v1411, 4
        %v1414 = vshll.u32 %v1320, 16
        %v1416 = vrot.slane %v1414, 5
        %v1417 = vsel %vm1347, %v1412, %v1416
        %v1419 = vshrl.u32 %v1321, 16
        %v1421 = vrot.slane %v1419, 4
        %v1422 = vshll.u32 %v1321, 16
        %v1424 = vrot.slane %v1422, 5
        %v1425 = vor.u32 %v1421, %v1424
        %v1426 = vrot.slane %v1425, 4
        %v1428 = vshll.u32 %v1322, 16
        %v1430 = vrot.slane %v1428, 5
        %v1431 = vsel %vm1347, %v1426, %v1430
        %v1433 = vshrl.u32 %v1323, 16
        %v1435 = vrot.slane %v1433, 4
        %v1436 = vshll.u32 %v1323, 16
        %v1438 = vrot.slane %v1436, 5
        %v1439 = vor.u32 %v1435, %v1438
        %v1440 = vrot.slane %v1439, 4
        %v1442 = vshll.u32 %v1324, 16
        %v1444 = vrot.slane %v1442, 5
        %v1445 = vsel %vm1347, %v1440, %v1444
        %v1447 = vshrl.u32 %v1325, 16
        %v1449 = vrot.slane %v1447, 4
        %v1450 = vshll.u32 %v1325, 16
        %v1452 = vrot.slane %v1450, 5
        %v1453 = vor.u32 %v1449, %v1452
        %v1454 = vrot.slane %v1453, 4
        %v1456 = vshll.u32 %v1326, 16
        %v1458 = vrot.slane %v1456, 5
        %v1459 = vsel %vm1347, %v1454, %v1458
        %v1461 = vshrl.u32 %v1327, 16
        %v1463 = vrot.slane %v1461, 4
        %v1464 = vshll.u32 %v1327, 16
        %v1466 = vrot.slane %v1464, 5
        %v1467 = vor.u32 %v1463, %v1466
        %v1468 = vrot.slane %v1467, 4
        %v1470 = vshll.u32 %v1328, 16
        %v1472 = vrot.slane %v1470, 5
        %v1473 = vsel %vm1347, %v1468, %v1472
        %v1475 = vshrl.u32 %v1329, 16
        %v1477 = vrot.slane %v1475, 4
        %v1478 = vshll.u32 %v1329, 16
        %v1480 = vrot.slane %v1478, 5
        %v1481 = vor.u32 %v1477, %v1480
        %v1482 = vrot.slane %v1481, 4
        %v1484 = vshll.u32 %v1330, 16
        %v1486 = vrot.slane %v1484, 5
        %v1487 = vsel %vm1347, %v1482, %v1486
        %v1489 = vshrl.u32 %v1331, 16
        %v1491 = vrot.slane %v1489, 4
        %v1492 = vshll.u32 %v1331, 16
        %v1494 = vrot.slane %v1492, 5
        %v1495 = vor.u32 %v1491, %v1494
        %v1496 = vrot.slane %v1495, 4
        %v1498 = vshll.u32 %v1332, 16
        %v1500 = vrot.slane %v1498, 5
        %v1501 = vsel %vm1347, %v1496, %v1500
        %v1503 = vshrl.u32 %v1333, 16
        %v1505 = vrot.slane %v1503, 4
        %v1506 = vshll.u32 %v1333, 16
        %v1508 = vrot.slane %v1506, 5
        %v1509 = vor.u32 %v1505, %v1508
        %v1510 = vrot.slane %v1509, 4
        %v1512 = vshll.u32 %v1334, 16
        %v1514 = vrot.slane %v1512, 5
        %v1515 = vsel %vm1347, %v1510, %v1514
        %v1517 = vshrl.u32 %v1335, 16
        %v1519 = vrot.slane %v1517, 4
        %v1520 = vshll.u32 %v1335, 16
        %v1522 = vrot.slane %v1520, 5
        %v1523 = vor.u32 %v1519, %v1522
        %v1524 = vrot.slane %v1523, 4
        %v1526 = vshll.u32 %v1336, 16
        %v1528 = vrot.slane %v1526, 5
        %v1529 = vsel %vm1347, %v1524, %v1528
        %v1531 = vshrl.u32 %v1337, 16
        %v1533 = vrot.slane %v1531, 4
        %v1534 = vshll.u32 %v1337, 16
        %v1536 = vrot.slane %v1534, 5
        %v1537 = vor.u32 %v1533, %v1536
        %v1538 = vrot.slane %v1537, 4
        %v1540 = vshll.u32 %v1338, 16
        %v1542 = vrot.slane %v1540, 5
        %v1543 = vsel %vm1347, %v1538, %v1542
        %v1545 = vshrl.u32 %v1339, 16
        %v1547 = vrot.slane %v1545, 4
        %v1548 = vshll.u32 %v1339, 16
        %v1550 = vrot.slane %v1548, 5
        %v1551 = vor.u32 %v1547, %v1550
        %v1552 = vrot.slane %v1551, 4
        %v1554 = vshll.u32 %v1340, 16
        %v1556 = vrot.slane %v1554, 5
        %v1557 = vsel %vm1347, %v1552, %v1556
        %v1559 = vshrl.u32 %v1341, 16
        %v1561 = vrot.slane %v1559, 4
        %v1562 = vshll.u32 %v1341, 16
        %v1564 = vrot.slane %v1562, 5
        %v1565 = vor.u32 %v1561, %v1564
        %v1566 = vrot.slane %v1565, 4
        %v1568 = vshll.u32 %v1342, 16
        %v1570 = vrot.slane %v1568, 5
        %v1571 = vsel %vm1347, %v1566, %v1570
        %v1573 = vshrl.u32 %v1343, 16
        %v1575 = vrot.slane %v1573, 4
        %v1576 = vshll.u32 %v1343, 16
        %v1578 = vrot.slane %v1576, 5
        %v1579 = vor.u32 %v1575, %v1578
        %v1580 = vrot.slane %v1579, 4
        %v1582 = vshll.u32 %v1344, 16
        %v1584 = vrot.slane %v1582, 5
        %v1585 = vsel %vm1347, %v1580, %v1584
        %s1586 = scalar_lea.vmem %s1, 32
        %v1587 = vld [vmem:[%s1586] sm:$0xf]
        %v1588 = vld [vmem:[%s1586 + $0x4] sm:$0xf]
        %v1589 = vld [vmem:[%s1586 + $0x8] sm:$0xf]
        %v1590 = vld [vmem:[%s1586 + $0xc] sm:$0xf]
        %v1591 = vld [vmem:[%s1586 + $0x10] sm:$0xf]
        %v1592 = vld [vmem:[%s1586 + $0x14] sm:$0xf]
        %v1593 = vld [vmem:[%s1586 + $0x18] sm:$0xf]
        %v1594 = vld [vmem:[%s1586 + $0x1c] sm:$0xf]
        %v1595 = vunpack.c.l.b16 %v1361
        %v1596 = vunpack.c.l.b16 %v1375
        %v1597 = vunpack.c.l.b16 %v1389
        %v1598 = vunpack.c.l.b16 %v1403
        %v1599 = vunpack.c.l.b16 %v1417
        %v1600 = vunpack.c.l.b16 %v1431
        %v1601 = vunpack.c.l.b16 %v1445
        %v1602 = vunpack.c.l.b16 %v1459
        %v1603 = vunpack.c.l.b16 %v1473
        %v1604 = vunpack.c.l.b16 %v1487
        %v1605 = vunpack.c.l.b16 %v1501
        %v1606 = vunpack.c.l.b16 %v1515
        %v1607 = vunpack.c.l.b16 %v1529
        %v1608 = vunpack.c.l.b16 %v1543
        %v1609 = vunpack.c.l.b16 %v1557
        %v1610 = vunpack.c.l.b16 %v1571
        %v1611 = vunpack.c.l.b16 %v1585
        %v1612 = vpack.c.b16 %v1596, %v1595
        %v1613 = vpack.c.b16 %v1598, %v1597
        %v1614 = vpack.c.b16 %v1600, %v1599
        %v1615 = vpack.c.b16 %v1602, %v1601
        %v1616 = vpack.c.b16 %v1604, %v1603
        %v1617 = vpack.c.b16 %v1606, %v1605
        %v1618 = vpack.c.b16 %v1608, %v1607
        %v1619 = vpack.c.b16 %v1610, %v1609
        %v1620 = vpack.c.b16 %v1611, %v1611
        %v1629 = vunpack.c.l.b16 %v1587
        %v1630 = vunpack.c.l.b16 %v1588
        %v1631 = vunpack.c.l.b16 %v1589
        %v1632 = vunpack.c.l.b16 %v1590
        %v1633 = vunpack.c.l.b16 %v1591
        %v1634 = vunpack.c.l.b16 %v1592
        %v1635 = vunpack.c.l.b16 %v1593
        %v1636 = vunpack.c.l.b16 %v1594
        %v1637 = vpack.c.b16 %v1630, %v1629
        %v1638 = vpack.c.b16 %v1632, %v1631
        %v1639 = vpack.c.b16 %v1634, %v1633
        %v1640 = vpack.c.b16 %v1636, %v1635
        %v1646 = vsel %vm1083, %v1612, 0
        %v1649 = vsel %vm1083, %v1613, 0
        %v1652 = vsel %vm1083, %v1614, 0
        %v1655 = vsel %vm1083, %v1615, 0
        %v1658 = vsel %vm1083, %v1616, 0
        %v1661 = vsel %vm1083, %v1617, 0
        %v1664 = vsel %vm1083, %v1618, 0
        %v1667 = vsel %vm1083, %v1619, 0
        %v1670 = vsel %vm1083, %v1620, 0
        %1672 = vmatprep.subr.bf16.mxu0 0
        %1673 = vmatpush1.bf16.msra.mxu0 %v1637
        %1674 = vmatprep.subr.bf16.mxu0 0
        %1675 = vmatpush1.bf16.msra.mxu0 %v1638
        %1676 = vmatprep.subr.bf16.mxu0 0
        %1677 = vmatpush1.bf16.msra.mxu0 %v1639
        %1678 = vmatprep.subr.bf16.mxu0 0
        %1679 = vmatpush1.bf16.msra.mxu0 %v1640
        %1680 = vmatprep.subr.bf16.mxu0 0
        %1681 = vmatpush1.bf16.msra.mxu0 0
        %1682 = vmatprep.subr.bf16.mxu0 0
        %1683 = vmatpush1.bf16.msra.mxu0 0
        %1684 = vmatprep.subr.bf16.mxu0 0
        %1685 = vmatpush1.bf16.msra.mxu0 0
        %1686 = vmatprep.subr.bf16.mxu0 0
        %1687 = vmatpush1.bf16.msra.mxu0 0
        %1688 = vmatprep.subr.bf16.mxu0 0
        %1689 = vmatpush1.bf16.msra.mxu0 0
        %1690 = vmatprep.subr.bf16.mxu0 0
        %1691 = vmatpush1.bf16.msra.mxu0 0
        %1692 = vmatprep.subr.bf16.mxu0 0
        %1693 = vmatpush1.bf16.msra.mxu0 0
        %1694 = vmatprep.subr.bf16.mxu0 0
        %1695 = vmatpush1.bf16.msra.mxu0 0
        %1696 = vmatprep.subr.bf16.mxu0 0
        %1697 = vmatpush1.bf16.msra.mxu0 0
        %1698 = vmatprep.subr.bf16.mxu0 0
        %1699 = vmatpush1.bf16.msra.mxu0 0
        %1700 = vmatprep.subr.bf16.mxu0 0
        %1701 = vmatpush1.bf16.msra.mxu0 0
        %1702 = vmatprep.subr.bf16.mxu0 0
        %1703 = vmatpush1.bf16.msra.mxu0 0
        %1704 = vmatprep.mubr.bf16.mxu0 0
        %1705 = vmatmul.mubr.bf16.gmra.mrb[0].mxu0 %v1646
        %v1706 = vpop.f32.mrb[0].mxu0
        %v1707 = vadd.f32 0.0, %v1706
        %v1708 = vpop.f32.mrb[0].mxu0
        %v1709 = vpop.f32.mrb[0].mxu0
        %v1710 = vadd.f32 0.0, %v1709
        %v1711 = vpop.f32.mrb[0].mxu0
        %1712 = vmatprep.mubr.bf16.mxu0 0
        %1713 = vmatmul.mubr.bf16.gmra.mrb[0].mxu0 %v1649
        %v1714 = vpop.f32.mrb[0].mxu0
        %v1715 = vadd.f32 0.0, %v1714
        %v1716 = vpop.f32.mrb[0].mxu0
        %v1717 = vpop.f32.mrb[0].mxu0
        %v1718 = vadd.f32 0.0, %v1717
        %v1719 = vpop.f32.mrb[0].mxu0
        %1720 = vmatprep.mubr.bf16.mxu0 0
        %1721 = vmatmul.mubr.bf16.gmra.mrb[0].mxu0 %v1652
        %v1722 = vpop.f32.mrb[0].mxu0
        %v1723 = vadd.f32 0.0, %v1722
        %v1724 = vpop.f32.mrb[0].mxu0
        %v1725 = vpop.f32.mrb[0].mxu0
        %v1726 = vadd.f32 0.0, %v1725
        %v1727 = vpop.f32.mrb[0].mxu0
        %1728 = vmatprep.mubr.bf16.mxu0 0
        %1729 = vmatmul.mubr.bf16.gmra.mrb[0].mxu0 %v1655
        %v1730 = vpop.f32.mrb[0].mxu0
        %v1731 = vadd.f32 0.0, %v1730
        %v1732 = vpop.f32.mrb[0].mxu0
        %v1733 = vpop.f32.mrb[0].mxu0
        %v1734 = vadd.f32 0.0, %v1733
        %v1735 = vpop.f32.mrb[0].mxu0
        %1736 = vmatprep.mubr.bf16.mxu0 0
        %1737 = vmatmul.mubr.bf16.gmra.mrb[0].mxu0 %v1658
        %v1738 = vpop.f32.mrb[0].mxu0
        %v1739 = vadd.f32 0.0, %v1738
        %v1740 = vpop.f32.mrb[0].mxu0
        %v1741 = vpop.f32.mrb[0].mxu0
        %v1742 = vadd.f32 0.0, %v1741
        %v1743 = vpop.f32.mrb[0].mxu0
        %1744 = vmatprep.mubr.bf16.mxu0 0
        %1745 = vmatmul.mubr.bf16.gmra.mrb[0].mxu0 %v1661
        %v1746 = vpop.f32.mrb[0].mxu0
        %v1747 = vadd.f32 0.0, %v1746
        %v1748 = vpop.f32.mrb[0].mxu0
        %v1749 = vpop.f32.mrb[0].mxu0
        %v1750 = vadd.f32 0.0, %v1749
        %v1751 = vpop.f32.mrb[0].mxu0
        %1752 = vmatprep.mubr.bf16.mxu0 0
        %1753 = vmatmul.mubr.bf16.gmra.mrb[0].mxu0 %v1664
        %v1754 = vpop.f32.mrb[0].mxu0
        %v1755 = vadd.f32 0.0, %v1754
        %v1756 = vpop.f32.mrb[0].mxu0
        %v1757 = vpop.f32.mrb[0].mxu0
        %v1758 = vadd.f32 0.0, %v1757
        %v1759 = vpop.f32.mrb[0].mxu0
        %1760 = vmatprep.mubr.bf16.mxu0 0
        %1761 = vmatmul.mubr.bf16.gmra.mrb[0].mxu0 %v1667
        %v1762 = vpop.f32.mrb[0].mxu0
        %v1763 = vadd.f32 0.0, %v1762
        %v1764 = vpop.f32.mrb[0].mxu0
        %v1765 = vpop.f32.mrb[0].mxu0
        %v1766 = vadd.f32 0.0, %v1765
        %v1767 = vpop.f32.mrb[0].mxu0
        %1768 = vmatprep.mubr.bf16.mxu0 0
        %1769 = vmatmul.mubr.bf16.gmra.mrb[0].mxu0 %v1670
        %v1770 = vpop.f32.mrb[0].mxu0
        %v1771 = vadd.f32 0.0, %v1770
        %v1772 = vpop.f32.mrb[0].mxu0
        %v1773 = vpop.f32.mrb[0].mxu0
        %v1774 = vpop.f32.mrb[0].mxu0
        %1775 = vdwg.mxu0
        %v1776 = vadd.f32 %v1295, %v1707
        %v1777 = vadd.f32 %v1296, %v1710
        %v1778 = vadd.f32 %v1297, %v1715
        %v1779 = vadd.f32 %v1298, %v1718
        %v1780 = vadd.f32 %v1299, %v1723
        %v1781 = vadd.f32 %v1300, %v1726
        %v1782 = vadd.f32 %v1301, %v1731
        %v1783 = vadd.f32 %v1302, %v1734
        %v1784 = vadd.f32 %v1303, %v1739
        %v1785 = vadd.f32 %v1304, %v1742
        %v1786 = vadd.f32 %v1305, %v1747
        %v1787 = vadd.f32 %v1306, %v1750
        %v1788 = vadd.f32 %v1307, %v1755
        %v1789 = vadd.f32 %v1308, %v1758
        %v1790 = vadd.f32 %v1309, %v1763
        %v1791 = vadd.f32 %v1310, %v1766
        %1808 = vrot.lane.b32.xlu0 %v1710, 64
        %v1809 = vpop.permute.xlu0 %1808
        %1810 = vrot.lane.b32.xlu0 %v1715, 64
        %v1811 = vpop.permute.xlu0 %1810
        %1812 = vrot.lane.b32.xlu0 %v1718, 64
        %v1813 = vpop.permute.xlu0 %1812
        %1814 = vrot.lane.b32.xlu0 %v1723, 64
        %v1815 = vpop.permute.xlu0 %1814
        %1816 = vrot.lane.b32.xlu0 %v1726, 64
        %v1817 = vpop.permute.xlu0 %1816
        %1818 = vrot.lane.b32.xlu0 %v1731, 64
        %v1819 = vpop.permute.xlu0 %1818
        %1820 = vrot.lane.b32.xlu0 %v1734, 64
        %v1821 = vpop.permute.xlu0 %1820
        %1822 = vrot.lane.b32.xlu0 %v1739, 64
        %v1823 = vpop.permute.xlu0 %1822
        %1824 = vrot.lane.b32.xlu0 %v1742, 64
        %v1825 = vpop.permute.xlu0 %1824
        %1826 = vrot.lane.b32.xlu0 %v1747, 64
        %v1827 = vpop.permute.xlu0 %1826
        %1828 = vrot.lane.b32.xlu0 %v1750, 64
        %v1829 = vpop.permute.xlu0 %1828
        %1830 = vrot.lane.b32.xlu0 %v1755, 64
        %v1831 = vpop.permute.xlu0 %1830
        %1832 = vrot.lane.b32.xlu0 %v1758, 64
        %v1833 = vpop.permute.xlu0 %1832
        %1834 = vrot.lane.b32.xlu0 %v1763, 64
        %v1835 = vpop.permute.xlu0 %1834
        %1836 = vrot.lane.b32.xlu0 %v1766, 64
        %v1837 = vpop.permute.xlu0 %1836
        %1838 = vrot.lane.b32.xlu0 %v1771, 64
        %v1839 = vpop.permute.xlu0 %1838
        %v1856 = vadd.f32 %v1776, %v1809
        %v1857 = vadd.f32 %v1777, %v1811
        %v1858 = vadd.f32 %v1778, %v1813
        %v1859 = vadd.f32 %v1779, %v1815
        %v1860 = vadd.f32 %v1780, %v1817
        %v1861 = vadd.f32 %v1781, %v1819
        %v1862 = vadd.f32 %v1782, %v1821
        %v1863 = vadd.f32 %v1783, %v1823
        %v1864 = vadd.f32 %v1784, %v1825
        %v1865 = vadd.f32 %v1785, %v1827
        %v1866 = vadd.f32 %v1786, %v1829
        %v1867 = vadd.f32 %v1787, %v1831
        %v1868 = vadd.f32 %v1788, %v1833
        %v1869 = vadd.f32 %v1789, %v1835
        %v1870 = vadd.f32 %v1790, %v1837
        %v1871 = vadd.f32 %v1791, %v1839
        %v1872 = vld [vmem:[%s990] sm:$0xe]
        %v1873 = vld [vmem:[%s990 + $0x10] sm:$0xe]
        %v1874 = vld [vmem:[%s990 + $0x20] sm:$0xe]
        %v1875 = vld [vmem:[%s990 + $0x30] sm:$0xe]
        %v1876 = vld [vmem:[%s990 + $0x40] sm:$0xe]
        %v1877 = vld [vmem:[%s990 + $0x50] sm:$0xe]
        %v1878 = vld [vmem:[%s990 + $0x60] sm:$0xe]
        %v1879 = vld [vmem:[%s990 + $0x70] sm:$0xe]
        %v1880 = vld [vmem:[%s990 + $0x80] sm:$0xe]
        %v1881 = vld [vmem:[%s990 + $0x90] sm:$0xe]
        %v1882 = vld [vmem:[%s990 + $0xa0] sm:$0xe]
        %v1883 = vld [vmem:[%s990 + $0xb0] sm:$0xe]
        %v1884 = vld [vmem:[%s990 + $0xc0] sm:$0xe]
        %v1885 = vld [vmem:[%s990 + $0xd0] sm:$0xe]
        %v1886 = vld [vmem:[%s990 + $0xe0] sm:$0xe]
        %v1887 = vld [vmem:[%s990 + $0xf0] sm:$0xe]
        %v1888 = vld [vmem:[%s990 + $0x100] sm:$0xe]
        %vm1923 = vcmask 1042432
        %vm1924 = vcmask 1046532
        %vm1925 = vmor %vm1923, %vm1924
        %v1926 = vrot.slane %v1872, 5
        %v1927 = vrot.slane %v1926, 4
        %v1928 = vrot.slane %v1312, 5
        %v1929 = vsel %vm1925, %v1927, %v1928
        %v1930 = vrot.slane %v1873, 5
        %v1931 = vrot.slane %v1930, 4
        %v1932 = vrot.slane %v1314, 5
        %v1933 = vsel %vm1925, %v1931, %v1932
        %v1934 = vrot.slane %v1874, 5
        %v1935 = vrot.slane %v1934, 4
        %v1936 = vrot.slane %v1316, 5
        %v1937 = vsel %vm1925, %v1935, %v1936
        %v1938 = vrot.slane %v1875, 5
        %v1939 = vrot.slane %v1938, 4
        %v1940 = vrot.slane %v1318, 5
        %v1941 = vsel %vm1925, %v1939, %v1940
        %v1942 = vrot.slane %v1876, 5
        %v1943 = vrot.slane %v1942, 4
        %v1944 = vrot.slane %v1320, 5
        %v1945 = vsel %vm1925, %v1943, %v1944
        %v1946 = vrot.slane %v1877, 5
        %v1947 = vrot.slane %v1946, 4
        %v1948 = vrot.slane %v1322, 5
        %v1949 = vsel %vm1925, %v1947, %v1948
        %v1950 = vrot.slane %v1878, 5
        %v1951 = vrot.slane %v1950, 4
        %v1952 = vrot.slane %v1324, 5
        %v1953 = vsel %vm1925, %v1951, %v1952
        %v1954 = vrot.slane %v1879, 5
        %v1955 = vrot.slane %v1954, 4
        %v1956 = vrot.slane %v1326, 5
        %v1957 = vsel %vm1925, %v1955, %v1956
        %v1958 = vrot.slane %v1880, 5
        %v1959 = vrot.slane %v1958, 4
        %v1960 = vrot.slane %v1328, 5
        %v1961 = vsel %vm1925, %v1959, %v1960
        %v1962 = vrot.slane %v1881, 5
        %v1963 = vrot.slane %v1962, 4
        %v1964 = vrot.slane %v1330, 5
        %v1965 = vsel %vm1925, %v1963, %v1964
        %v1966 = vrot.slane %v1882, 5
        %v1967 = vrot.slane %v1966, 4
        %v1968 = vrot.slane %v1332, 5
        %v1969 = vsel %vm1925, %v1967, %v1968
        %v1970 = vrot.slane %v1883, 5
        %v1971 = vrot.slane %v1970, 4
        %v1972 = vrot.slane %v1334, 5
        %v1973 = vsel %vm1925, %v1971, %v1972
        %v1974 = vrot.slane %v1884, 5
        %v1975 = vrot.slane %v1974, 4
        %v1976 = vrot.slane %v1336, 5
        %v1977 = vsel %vm1925, %v1975, %v1976
        %v1978 = vrot.slane %v1885, 5
        %v1979 = vrot.slane %v1978, 4
        %v1980 = vrot.slane %v1338, 5
        %v1981 = vsel %vm1925, %v1979, %v1980
        %v1982 = vrot.slane %v1886, 5
        %v1983 = vrot.slane %v1982, 4
        %v1984 = vrot.slane %v1340, 5
        %v1985 = vsel %vm1925, %v1983, %v1984
        %v1986 = vrot.slane %v1887, 5
        %v1987 = vrot.slane %v1986, 4
        %v1988 = vrot.slane %v1342, 5
        %v1989 = vsel %vm1925, %v1987, %v1988
        %v1990 = vrot.slane %v1888, 5
        %v1991 = vrot.slane %v1990, 4
        %v1992 = vrot.slane %v1344, 5
        %v1993 = vsel %vm1925, %v1991, %v1992
        %s1994 = scalar_lea.vmem %s1, 64
        %v1995 = vld [vmem:[%s1994] sm:$0xf]
        %v1996 = vld [vmem:[%s1994 + $0x4] sm:$0xf]
        %v1997 = vld [vmem:[%s1994 + $0x8] sm:$0xf]
        %v1998 = vld [vmem:[%s1994 + $0xc] sm:$0xf]
        %v1999 = vld [vmem:[%s1994 + $0x10] sm:$0xf]
        %v2000 = vld [vmem:[%s1994 + $0x14] sm:$0xf]
        %v2001 = vld [vmem:[%s1994 + $0x18] sm:$0xf]
        %v2002 = vld [vmem:[%s1994 + $0x1c] sm:$0xf]
        %v2003 = vunpack.c.l.b16 %v1929
        %v2004 = vunpack.c.l.b16 %v1933
        %v2005 = vunpack.c.l.b16 %v1937
        %v2006 = vunpack.c.l.b16 %v1941
        %v2007 = vunpack.c.l.b16 %v1945
        %v2008 = vunpack.c.l.b16 %v1949
        %v2009 = vunpack.c.l.b16 %v1953
        %v2010 = vunpack.c.l.b16 %v1957
        %v2011 = vunpack.c.l.b16 %v1961
        %v2012 = vunpack.c.l.b16 %v1965
        %v2013 = vunpack.c.l.b16 %v1969
        %v2014 = vunpack.c.l.b16 %v1973
        %v2015 = vunpack.c.l.b16 %v1977
        %v2016 = vunpack.c.l.b16 %v1981
        %v2017 = vunpack.c.l.b16 %v1985
        %v2018 = vunpack.c.l.b16 %v1989
        %v2019 = vunpack.c.l.b16 %v1993
        %v2020 = vpack.c.b16 %v2004, %v2003
        %v2021 = vpack.c.b16 %v2006, %v2005
        %v2022 = vpack.c.b16 %v2008, %v2007
        %v2023 = vpack.c.b16 %v2010, %v2009
        %v2024 = vpack.c.b16 %v2012, %v2011
        %v2025 = vpack.c.b16 %v2014, %v2013
        %v2026 = vpack.c.b16 %v2016, %v2015
        %v2027 = vpack.c.b16 %v2018, %v2017
        %v2028 = vpack.c.b16 %v2019, %v2019
        %v2037 = vunpack.c.l.b16 %v1995
        %v2038 = vunpack.c.l.b16 %v1996
        %v2039 = vunpack.c.l.b16 %v1997
        %v2040 = vunpack.c.l.b16 %v1998
        %v2041 = vunpack.c.l.b16 %v1999
        %v2042 = vunpack.c.l.b16 %v2000
        %v2043 = vunpack.c.l.b16 %v2001
        %v2044 = vunpack.c.l.b16 %v2002
        %v2045 = vpack.c.b16 %v2038, %v2037
        %v2046 = vpack.c.b16 %v2040, %v2039
        %v2047 = vpack.c.b16 %v2042, %v2041
        %v2048 = vpack.c.b16 %v2044, %v2043
        %v2054 = vsel %vm1083, %v2020, 0
        %v2057 = vsel %vm1083, %v2021, 0
        %v2060 = vsel %vm1083, %v2022, 0
        %v2063 = vsel %vm1083, %v2023, 0
        %v2066 = vsel %vm1083, %v2024, 0
        %v2069 = vsel %vm1083, %v2025, 0
        %v2072 = vsel %vm1083, %v2026, 0
        %v2075 = vsel %vm1083, %v2027, 0
        %v2078 = vsel %vm1083, %v2028, 0
        %2080 = vmatprep.subr.bf16.mxu0 0
        %2081 = vmatpush1.bf16.msra.mxu0 %v2045
        %2082 = vmatprep.subr.bf16.mxu0 0
        %2083 = vmatpush1.bf16.msra.mxu0 %v2046
        %2084 = vmatprep.subr.bf16.mxu0 0
        %2085 = vmatpush1.bf16.msra.mxu0 %v2047
        %2086 = vmatprep.subr.bf16.mxu0 0
        %2087 = vmatpush1.bf16.msra.mxu0 %v2048
        %2088 = vmatprep.subr.bf16.mxu0 0
        %2089 = vmatpush1.bf16.msra.mxu0 0
        %2090 = vmatprep.subr.bf16.mxu0 0
        %2091 = vmatpush1.bf16.msra.mxu0 0
        %2092 = vmatprep.subr.bf16.mxu0 0
        %2093 = vmatpush1.bf16.msra.mxu0 0
        %2094 = vmatprep.subr.bf16.mxu0 0
        %2095 = vmatpush1.bf16.msra.mxu0 0
        %2096 = vmatprep.subr.bf16.mxu0 0
        %2097 = vmatpush1.bf16.msra.mxu0 0
        %2098 = vmatprep.subr.bf16.mxu0 0
        %2099 = vmatpush1.bf16.msra.mxu0 0
        %2100 = vmatprep.subr.bf16.mxu0 0
        %2101 = vmatpush1.bf16.msra.mxu0 0
        %2102 = vmatprep.subr.bf16.mxu0 0
        %2103 = vmatpush1.bf16.msra.mxu0 0
        %2104 = vmatprep.subr.bf16.mxu0 0
        %2105 = vmatpush1.bf16.msra.mxu0 0
        %2106 = vmatprep.subr.bf16.mxu0 0
        %2107 = vmatpush1.bf16.msra.mxu0 0
        %2108 = vmatprep.subr.bf16.mxu0 0
        %2109 = vmatpush1.bf16.msra.mxu0 0
        %2110 = vmatprep.subr.bf16.mxu0 0
        %2111 = vmatpush1.bf16.msra.mxu0 0
        %2112 = vmatprep.mubr.bf16.mxu0 0
        %2113 = vmatmul.mubr.bf16.gmra.mrb[0].mxu0 %v2054
        %v2114 = vpop.f32.mrb[0].mxu0
        %v2115 = vadd.f32 0.0, %v2114
        %v2116 = vpop.f32.mrb[0].mxu0
        %v2117 = vpop.f32.mrb[0].mxu0
        %v2118 = vadd.f32 0.0, %v2117
        %v2119 = vpop.f32.mrb[0].mxu0
        %2120 = vmatprep.mubr.bf16.mxu0 0
        %2121 = vmatmul.mubr.bf16.gmra.mrb[0].mxu0 %v2057
        %v2122 = vpop.f32.mrb[0].mxu0
        %v2123 = vadd.f32 0.0, %v2122
        %v2124 = vpop.f32.mrb[0].mxu0
        %v2125 = vpop.f32.mrb[0].mxu0
        %v2126 = vadd.f32 0.0, %v2125
        %v2127 = vpop.f32.mrb[0].mxu0
        %2128 = vmatprep.mubr.bf16.mxu0 0
        %2129 = vmatmul.mubr.bf16.gmra.mrb[0].mxu0 %v2060
        %v2130 = vpop.f32.mrb[0].mxu0
        %v2131 = vadd.f32 0.0, %v2130
        %v2132 = vpop.f32.mrb[0].mxu0
        %v2133 = vpop.f32.mrb[0].mxu0
        %v2134 = vadd.f32 0.0, %v2133
        %v2135 = vpop.f32.mrb[0].mxu0
        %2136 = vmatprep.mubr.bf16.mxu0 0
        %2137 = vmatmul.mubr.bf16.gmra.mrb[0].mxu0 %v2063
        %v2138 = vpop.f32.mrb[0].mxu0
        %v2139 = vadd.f32 0.0, %v2138
        %v2140 = vpop.f32.mrb[0].mxu0
        %v2141 = vpop.f32.mrb[0].mxu0
        %v2142 = vadd.f32 0.0, %v2141
        %v2143 = vpop.f32.mrb[0].mxu0
        %2144 = vmatprep.mubr.bf16.mxu0 0
        %2145 = vmatmul.mubr.bf16.gmra.mrb[0].mxu0 %v2066
        %v2146 = vpop.f32.mrb[0].mxu0
        %v2147 = vadd.f32 0.0, %v2146
        %v2148 = vpop.f32.mrb[0].mxu0
        %v2149 = vpop.f32.mrb[0].mxu0
        %v2150 = vadd.f32 0.0, %v2149
        %v2151 = vpop.f32.mrb[0].mxu0
        %2152 = vmatprep.mubr.bf16.mxu0 0
        %2153 = vmatmul.mubr.bf16.gmra.mrb[0].mxu0 %v2069
        %v2154 = vpop.f32.mrb[0].mxu0
        %v2155 = vadd.f32 0.0, %v2154
        %v2156 = vpop.f32.mrb[0].mxu0
        %v2157 = vpop.f32.mrb[0].mxu0
        %v2158 = vadd.f32 0.0, %v2157
        %v2159 = vpop.f32.mrb[0].mxu0
        %2160 = vmatprep.mubr.bf16.mxu0 0
        %2161 = vmatmul.mubr.bf16.gmra.mrb[0].mxu0 %v2072
        %v2162 = vpop.f32.mrb[0].mxu0
        %v2163 = vadd.f32 0.0, %v2162
        %v2164 = vpop.f32.mrb[0].mxu0
        %v2165 = vpop.f32.mrb[0].mxu0
        %v2166 = vadd.f32 0.0, %v2165
        %v2167 = vpop.f32.mrb[0].mxu0
        %2168 = vmatprep.mubr.bf16.mxu0 0
        %2169 = vmatmul.mubr.bf16.gmra.mrb[0].mxu0 %v2075
        %v2170 = vpop.f32.mrb[0].mxu0
        %v2171 = vadd.f32 0.0, %v2170
        %v2172 = vpop.f32.mrb[0].mxu0
        %v2173 = vpop.f32.mrb[0].mxu0
        %v2174 = vadd.f32 0.0, %v2173
        %v2175 = vpop.f32.mrb[0].mxu0
        %2176 = vmatprep.mubr.bf16.mxu0 0
        %2177 = vmatmul.mubr.bf16.gmra.mrb[0].mxu0 %v2078
        %v2178 = vpop.f32.mrb[0].mxu0
        %v2179 = vadd.f32 0.0, %v2178
        %v2180 = vpop.f32.mrb[0].mxu0
        %v2181 = vpop.f32.mrb[0].mxu0
        %v2182 = vpop.f32.mrb[0].mxu0
        %2183 = vdwg.mxu0
        %v2184 = vadd.f32 %v1856, %v2115
        %v2185 = vadd.f32 %v1857, %v2118
        %v2186 = vadd.f32 %v1858, %v2123
        %v2187 = vadd.f32 %v1859, %v2126
        %v2188 = vadd.f32 %v1860, %v2131
        %v2189 = vadd.f32 %v1861, %v2134
        %v2190 = vadd.f32 %v1862, %v2139
        %v2191 = vadd.f32 %v1863, %v2142
        %v2192 = vadd.f32 %v1864, %v2147
        %v2193 = vadd.f32 %v1865, %v2150
        %v2194 = vadd.f32 %v1866, %v2155
        %v2195 = vadd.f32 %v1867, %v2158
        %v2196 = vadd.f32 %v1868, %v2163
        %v2197 = vadd.f32 %v1869, %v2166
        %v2198 = vadd.f32 %v1870, %v2171
        %v2199 = vadd.f32 %v1871, %v2174
        %2216 = vrot.lane.b32.xlu0 %v2118, 64
        %v2217 = vpop.permute.xlu0 %2216
        %2218 = vrot.lane.b32.xlu0 %v2123, 64
        %v2219 = vpop.permute.xlu0 %2218
        %2220 = vrot.lane.b32.xlu0 %v2126, 64
        %v2221 = vpop.permute.xlu0 %2220
        %2222 = vrot.lane.b32.xlu0 %v2131, 64
        %v2223 = vpop.permute.xlu0 %2222
        %2224 = vrot.lane.b32.xlu0 %v2134, 64
        %v2225 = vpop.permute.xlu0 %2224
        %2226 = vrot.lane.b32.xlu0 %v2139, 64
        %v2227 = vpop.permute.xlu0 %2226
        %2228 = vrot.lane.b32.xlu0 %v2142, 64
        %v2229 = vpop.permute.xlu0 %2228
        %2230 = vrot.lane.b32.xlu0 %v2147, 64
        %v2231 = vpop.permute.xlu0 %2230
        %2232 = vrot.lane.b32.xlu0 %v2150, 64
        %v2233 = vpop.permute.xlu0 %2232
        %2234 = vrot.lane.b32.xlu0 %v2155, 64
        %v2235 = vpop.permute.xlu0 %2234
        %2236 = vrot.lane.b32.xlu0 %v2158, 64
        %v2237 = vpop.permute.xlu0 %2236
        %2238 = vrot.lane.b32.xlu0 %v2163, 64
        %v2239 = vpop.permute.xlu0 %2238
        %2240 = vrot.lane.b32.xlu0 %v2166, 64
        %v2241 = vpop.permute.xlu0 %2240
        %2242 = vrot.lane.b32.xlu0 %v2171, 64
        %v2243 = vpop.permute.xlu0 %2242
        %2244 = vrot.lane.b32.xlu0 %v2174, 64
        %v2245 = vpop.permute.xlu0 %2244
        %2246 = vrot.lane.b32.xlu0 %v2179, 64
        %v2247 = vpop.permute.xlu0 %2246
        %v2264 = vadd.f32 %v2184, %v2217
        %v2265 = vadd.f32 %v2185, %v2219
        %v2266 = vadd.f32 %v2186, %v2221
        %v2267 = vadd.f32 %v2187, %v2223
        %v2268 = vadd.f32 %v2188, %v2225
        %v2269 = vadd.f32 %v2189, %v2227
        %v2270 = vadd.f32 %v2190, %v2229
        %v2271 = vadd.f32 %v2191, %v2231
        %v2272 = vadd.f32 %v2192, %v2233
        %v2273 = vadd.f32 %v2193, %v2235
        %v2274 = vadd.f32 %v2194, %v2237
        %v2275 = vadd.f32 %v2195, %v2239
        %v2276 = vadd.f32 %v2196, %v2241
        %v2277 = vadd.f32 %v2197, %v2243
        %v2278 = vadd.f32 %v2198, %v2245
        %v2279 = vadd.f32 %v2199, %v2247
        %v2280 = vsel %vm1083, %v2264, 0.0
        %v2281 = vsel %vm1083, %v2265, 0.0
        %v2282 = vadd.f32 %v2280, %v2281
        %v2283 = vsel %vm1083, %v2266, 0.0
        %v2284 = vadd.f32 %v2282, %v2283
        %v2285 = vsel %vm1083, %v2267, 0.0
        %v2286 = vadd.f32 %v2284, %v2285
        %v2287 = vsel %vm1083, %v2268, 0.0
        %v2288 = vadd.f32 %v2286, %v2287
        %v2289 = vsel %vm1083, %v2269, 0.0
        %v2290 = vadd.f32 %v2288, %v2289
        %v2291 = vsel %vm1083, %v2270, 0.0
        %v2292 = vadd.f32 %v2290, %v2291
        %v2293 = vsel %vm1083, %v2271, 0.0
        %v2294 = vadd.f32 %v2292, %v2293
        %v2295 = vsel %vm1083, %v2272, 0.0
        %v2296 = vadd.f32 %v2294, %v2295
        %v2297 = vsel %vm1083, %v2273, 0.0
        %v2298 = vadd.f32 %v2296, %v2297
        %v2299 = vsel %vm1083, %v2274, 0.0
        %v2300 = vadd.f32 %v2298, %v2299
        %v2301 = vsel %vm1083, %v2275, 0.0
        %v2302 = vadd.f32 %v2300, %v2301
        %v2303 = vsel %vm1083, %v2276, 0.0
        %v2304 = vadd.f32 %v2302, %v2303
        %v2305 = vsel %vm1083, %v2277, 0.0
        %v2306 = vadd.f32 %v2304, %v2305
        %v2307 = vsel %vm1083, %v2278, 0.0
        %v2308 = vadd.f32 %v2306, %v2307
        %v2309 = vsel %vm1083, %v2279, 0.0
        %v2310 = vadd.f32 %v2308, %v2309
        %v2311 = vrot.slane %v2310, 4
        %v2312 = vadd.f32 %v2310, %v2311
        %v2313 = vrot.slane %v2312, 2
        %v2314 = vadd.f32 %v2312, %v2313
        %v2315 = vrot.slane %v2314, 1
        %v2316 = vadd.f32 %v2314, %v2315
        %v2317 = vmul.f32 %v2316, 0.0078125
        %v2318 = vmul.f32 %v2264, %v2264
        %v2319 = vmul.f32 %v2265, %v2265
        %v2320 = vmul.f32 %v2266, %v2266
        %v2321 = vmul.f32 %v2267, %v2267
        %v2322 = vmul.f32 %v2268, %v2268
        %v2323 = vmul.f32 %v2269, %v2269
        %v2324 = vmul.f32 %v2270, %v2270
        %v2325 = vmul.f32 %v2271, %v2271
        %v2326 = vmul.f32 %v2272, %v2272
        %v2327 = vmul.f32 %v2273, %v2273
        %v2328 = vmul.f32 %v2274, %v2274
        %v2329 = vmul.f32 %v2275, %v2275
        %v2330 = vmul.f32 %v2276, %v2276
        %v2331 = vmul.f32 %v2277, %v2277
        %v2332 = vmul.f32 %v2278, %v2278
        %v2333 = vmul.f32 %v2279, %v2279
        %v2334 = vsel %vm1083, %v2318, 0.0
        %v2335 = vsel %vm1083, %v2319, 0.0
        %v2336 = vadd.f32 %v2334, %v2335
        %v2337 = vsel %vm1083, %v2320, 0.0
        %v2338 = vadd.f32 %v2336, %v2337
        %v2339 = vsel %vm1083, %v2321, 0.0
        %v2340 = vadd.f32 %v2338, %v2339
        %v2341 = vsel %vm1083, %v2322, 0.0
        %v2342 = vadd.f32 %v2340, %v2341
        %v2343 = vsel %vm1083, %v2323, 0.0
        %v2344 = vadd.f32 %v2342, %v2343
        %v2345 = vsel %vm1083, %v2324, 0.0
        %v2346 = vadd.f32 %v2344, %v2345
        %v2347 = vsel %vm1083, %v2325, 0.0
        %v2348 = vadd.f32 %v2346, %v2347
        %v2349 = vsel %vm1083, %v2326, 0.0
        %v2350 = vadd.f32 %v2348, %v2349
        %v2351 = vsel %vm1083, %v2327, 0.0
        %v2352 = vadd.f32 %v2350, %v2351
        %v2353 = vsel %vm1083, %v2328, 0.0
        %v2354 = vadd.f32 %v2352, %v2353
        %v2355 = vsel %vm1083, %v2329, 0.0
        %v2356 = vadd.f32 %v2354, %v2355
        %v2357 = vsel %vm1083, %v2330, 0.0
        %v2358 = vadd.f32 %v2356, %v2357
        %v2359 = vsel %vm1083, %v2331, 0.0
        %v2360 = vadd.f32 %v2358, %v2359
        %v2361 = vsel %vm1083, %v2332, 0.0
        %v2362 = vadd.f32 %v2360, %v2361
        %v2363 = vsel %vm1083, %v2333, 0.0
        %v2364 = vadd.f32 %v2362, %v2363
        %v2365 = vrot.slane %v2364, 4
        %v2366 = vadd.f32 %v2364, %v2365
        %v2367 = vrot.slane %v2366, 2
        %v2368 = vadd.f32 %v2366, %v2367
        %v2369 = vrot.slane %v2368, 1
        %v2370 = vadd.f32 %v2368, %v2369
        %v2371 = vmul.f32 %v2370, 0.0078125
        %v2372 = vmul.f32 %v2317, %v2317
        %v2373 = vsub.f32 %v2371, %v2372
        %v2374 = vsub.f32 %v2264, %v2317
        %v2375 = vsub.f32 %v2265, %v2317
        %v2376 = vsub.f32 %v2266, %v2317
        %v2377 = vsub.f32 %v2267, %v2317
        %v2378 = vsub.f32 %v2268, %v2317
        %v2379 = vsub.f32 %v2269, %v2317
        %v2380 = vsub.f32 %v2270, %v2317
        %v2381 = vsub.f32 %v2271, %v2317
        %v2382 = vsub.f32 %v2272, %v2317
        %v2383 = vsub.f32 %v2273, %v2317
        %v2384 = vsub.f32 %v2274, %v2317
        %v2385 = vsub.f32 %v2275, %v2317
        %v2386 = vsub.f32 %v2276, %v2317
        %v2387 = vsub.f32 %v2277, %v2317
        %v2388 = vsub.f32 %v2278, %v2317
        %v2389 = vsub.f32 %v2279, %v2317
        %v2390 = vadd.f32 %v2373, 1e-05
        %v2391 = vrsqrt.pop %v2390
        %v2392 = vmul.f32 %v2374, %v2391
        %v2393 = vmul.f32 %v2375, %v2391
        %v2394 = vmul.f32 %v2376, %v2391
        %v2395 = vmul.f32 %v2377, %v2391
        %v2396 = vmul.f32 %v2378, %v2391
        %v2397 = vmul.f32 %v2379, %v2391
        %v2398 = vmul.f32 %v2380, %v2391
        %v2399 = vmul.f32 %v2381, %v2391
        %v2400 = vmul.f32 %v2382, %v2391
        %v2401 = vmul.f32 %v2383, %v2391
        %v2402 = vmul.f32 %v2384, %v2391
        %v2403 = vmul.f32 %v2385, %v2391
        %v2404 = vmul.f32 %v2386, %v2391
        %v2405 = vmul.f32 %v2387, %v2391
        %v2406 = vmul.f32 %v2388, %v2391
        %v2407 = vmul.f32 %v2389, %v2391
        %v2408 = vld [vmem:[%s3] sm:$0x1]
        %v2410 = vlaneseq
        %v2411 = vshrl.u32 %v2410, 7
        %v2412 = vsub.s32 0, %v2411
        %v2413 = vrot.slane %v2408, %v2412
        %v2415 = vmul.f32 %v2392, %v2413
        %v2416 = vmul.f32 %v2393, %v2413
        %v2417 = vmul.f32 %v2394, %v2413
        %v2418 = vmul.f32 %v2395, %v2413
        %v2419 = vmul.f32 %v2396, %v2413
        %v2420 = vmul.f32 %v2397, %v2413
        %v2421 = vmul.f32 %v2398, %v2413
        %v2422 = vmul.f32 %v2399, %v2413
        %v2423 = vmul.f32 %v2400, %v2413
        %v2424 = vmul.f32 %v2401, %v2413
        %v2425 = vmul.f32 %v2402, %v2413
        %v2426 = vmul.f32 %v2403, %v2413
        %v2427 = vmul.f32 %v2404, %v2413
        %v2428 = vmul.f32 %v2405, %v2413
        %v2429 = vmul.f32 %v2406, %v2413
        %v2430 = vmul.f32 %v2407, %v2413
        %v2431 = vld [vmem:[%s4] sm:$0x1]
        %v2433 = vlaneseq
        %v2434 = vshrl.u32 %v2433, 7
        %v2435 = vsub.s32 0, %v2434
        %v2436 = vrot.slane %v2431, %v2435
        %v2438 = vadd.f32 %v2415, %v2436
        %v2439 = vadd.f32 %v2416, %v2436
        %v2440 = vadd.f32 %v2417, %v2436
        %v2441 = vadd.f32 %v2418, %v2436
        %v2442 = vadd.f32 %v2419, %v2436
        %v2443 = vadd.f32 %v2420, %v2436
        %v2444 = vadd.f32 %v2421, %v2436
        %v2445 = vadd.f32 %v2422, %v2436
        %v2446 = vadd.f32 %v2423, %v2436
        %v2447 = vadd.f32 %v2424, %v2436
        %v2448 = vadd.f32 %v2425, %v2436
        %v2449 = vadd.f32 %v2426, %v2436
        %v2450 = vadd.f32 %v2427, %v2436
        %v2451 = vadd.f32 %v2428, %v2436
        %v2452 = vadd.f32 %v2429, %v2436
        %v2453 = vadd.f32 %v2430, %v2436
        %vm2454 = vcmp.ge.f32.partialorder %v2438, 0.0
        %vm2455 = vcmp.ge.f32.partialorder %v2439, 0.0
        %vm2456 = vcmp.ge.f32.partialorder %v2440, 0.0
        %vm2457 = vcmp.ge.f32.partialorder %v2441, 0.0
        %vm2458 = vcmp.ge.f32.partialorder %v2442, 0.0
        %vm2459 = vcmp.ge.f32.partialorder %v2443, 0.0
        %vm2460 = vcmp.ge.f32.partialorder %v2444, 0.0
        %vm2461 = vcmp.ge.f32.partialorder %v2445, 0.0
        %vm2462 = vcmp.ge.f32.partialorder %v2446, 0.0
        %vm2463 = vcmp.ge.f32.partialorder %v2447, 0.0
        %vm2464 = vcmp.ge.f32.partialorder %v2448, 0.0
        %vm2465 = vcmp.ge.f32.partialorder %v2449, 0.0
        %vm2466 = vcmp.ge.f32.partialorder %v2450, 0.0
        %vm2467 = vcmp.ge.f32.partialorder %v2451, 0.0
        %vm2468 = vcmp.ge.f32.partialorder %v2452, 0.0
        %vm2469 = vcmp.ge.f32.partialorder %v2453, 0.0
        %v2470 = vld [vmem:[%s5] sm:$0x1]
        %v2472 = vlaneseq
        %v2473 = vshrl.u32 %v2472, 7
        %v2474 = vsub.s32 0, %v2473
        %v2475 = vrot.slane %v2470, %v2474
        %v2477 = vmul.f32 %v2475, %v2438
        %v2478 = vmul.f32 %v2475, %v2439
        %v2479 = vmul.f32 %v2475, %v2440
        %v2480 = vmul.f32 %v2475, %v2441
        %v2481 = vmul.f32 %v2475, %v2442
        %v2482 = vmul.f32 %v2475, %v2443
        %v2483 = vmul.f32 %v2475, %v2444
        %v2484 = vmul.f32 %v2475, %v2445
        %v2485 = vmul.f32 %v2475, %v2446
        %v2486 = vmul.f32 %v2475, %v2447
        %v2487 = vmul.f32 %v2475, %v2448
        %v2488 = vmul.f32 %v2475, %v2449
        %v2489 = vmul.f32 %v2475, %v2450
        %v2490 = vmul.f32 %v2475, %v2451
        %v2491 = vmul.f32 %v2475, %v2452
        %v2492 = vmul.f32 %v2475, %v2453
        %v2493 = vsel %vm2454, %v2438, %v2477
        %v2494 = vsel %vm2455, %v2439, %v2478
        %v2495 = vsel %vm2456, %v2440, %v2479
        %v2496 = vsel %vm2457, %v2441, %v2480
        %v2497 = vsel %vm2458, %v2442, %v2481
        %v2498 = vsel %vm2459, %v2443, %v2482
        %v2499 = vsel %vm2460, %v2444, %v2483
        %v2500 = vsel %vm2461, %v2445, %v2484
        %v2501 = vsel %vm2462, %v2446, %v2485
        %v2502 = vsel %vm2463, %v2447, %v2486
        %v2503 = vsel %vm2464, %v2448, %v2487
        %v2504 = vsel %vm2465, %v2449, %v2488
        %v2505 = vsel %vm2466, %v2450, %v2489
        %v2506 = vsel %vm2467, %v2451, %v2490
        %v2507 = vsel %vm2468, %v2452, %v2491
        %v2508 = vsel %vm2469, %v2453, %v2492
        %v2509 = vpack.c.bf16 %v2493, %v2493
        %v2510 = vpack.c.bf16 %v2494, %v2494
        %v2511 = vpack.c.bf16 %v2495, %v2495
        %v2512 = vpack.c.bf16 %v2496, %v2496
        %v2513 = vpack.c.bf16 %v2497, %v2497
        %v2514 = vpack.c.bf16 %v2498, %v2498
        %v2515 = vpack.c.bf16 %v2499, %v2499
        %v2516 = vpack.c.bf16 %v2500, %v2500
        %v2517 = vpack.c.bf16 %v2501, %v2501
        %v2518 = vpack.c.bf16 %v2502, %v2502
        %v2519 = vpack.c.bf16 %v2503, %v2503
        %v2520 = vpack.c.bf16 %v2504, %v2504
        %v2521 = vpack.c.bf16 %v2505, %v2505
        %v2522 = vpack.c.bf16 %v2506, %v2506
        %v2523 = vpack.c.bf16 %v2507, %v2507
        %v2524 = vpack.c.bf16 %v2508, %v2508
        %v2541 = vunpack.c.l.b16 %v2509
        %v2542 = vunpack.c.l.b16 %v2510
        %v2543 = vunpack.c.l.b16 %v2511
        %v2544 = vunpack.c.l.b16 %v2512
        %v2545 = vunpack.c.l.b16 %v2513
        %v2546 = vunpack.c.l.b16 %v2514
        %v2547 = vunpack.c.l.b16 %v2515
        %v2548 = vunpack.c.l.b16 %v2516
        %v2549 = vunpack.c.l.b16 %v2517
        %v2550 = vunpack.c.l.b16 %v2518
        %v2551 = vunpack.c.l.b16 %v2519
        %v2552 = vunpack.c.l.b16 %v2520
        %v2553 = vunpack.c.l.b16 %v2521
        %v2554 = vunpack.c.l.b16 %v2522
        %v2555 = vunpack.c.l.b16 %v2523
        %v2556 = vunpack.c.l.b16 %v2524
        %v2557 = vpack.c.b16 %v2541, %v2541
        %v2558 = vpack.c.b16 %v2542, %v2542
        %v2559 = vpack.c.b16 %v2543, %v2543
        %v2560 = vpack.c.b16 %v2544, %v2544
        %v2561 = vpack.c.b16 %v2545, %v2545
        %v2562 = vpack.c.b16 %v2546, %v2546
        %v2563 = vpack.c.b16 %v2547, %v2547
        %v2564 = vpack.c.b16 %v2548, %v2548
        %v2565 = vpack.c.b16 %v2549, %v2549
        %v2566 = vpack.c.b16 %v2550, %v2550
        %v2567 = vpack.c.b16 %v2551, %v2551
        %v2568 = vpack.c.b16 %v2552, %v2552
        %v2569 = vpack.c.b16 %v2553, %v2553
        %v2570 = vpack.c.b16 %v2554, %v2554
        %v2571 = vpack.c.b16 %v2555, %v2555
        %v2572 = vpack.c.b16 %v2556, %v2556
        %v2574 = vshrl.u32 %v2557, 16
        %v2576 = vrot.slane %v2574, 7
        %v2577 = vshll.u32 %v2557, 16
        %v2579 = vor.u32 %v2576, %v2577
        %v2580 = vrot.slane %v2576, 4
        %v2582 = vshrl.u32 %v2558, 16
        %v2584 = vrot.slane %v2582, 7
        %v2585 = vshll.u32 %v2558, 16
        %v2587 = vor.u32 %v2584, %v2585
        %v2588 = vrot.slane %v2584, 4
        %v2590 = vshrl.u32 %v2559, 16
        %v2592 = vrot.slane %v2590, 7
        %v2593 = vshll.u32 %v2559, 16
        %v2595 = vor.u32 %v2592, %v2593
        %v2596 = vrot.slane %v2592, 4
        %v2598 = vshrl.u32 %v2560, 16
        %v2600 = vrot.slane %v2598, 7
        %v2601 = vshll.u32 %v2560, 16
        %v2603 = vor.u32 %v2600, %v2601
        %v2604 = vrot.slane %v2600, 4
        %v2606 = vshrl.u32 %v2561, 16
        %v2608 = vrot.slane %v2606, 7
        %v2609 = vshll.u32 %v2561, 16
        %v2611 = vor.u32 %v2608, %v2609
        %v2612 = vrot.slane %v2608, 4
        %v2614 = vshrl.u32 %v2562, 16
        %v2616 = vrot.slane %v2614, 7
        %v2617 = vshll.u32 %v2562, 16
        %v2619 = vor.u32 %v2616, %v2617
        %v2620 = vrot.slane %v2616, 4
        %v2622 = vshrl.u32 %v2563, 16
        %v2624 = vrot.slane %v2622, 7
        %v2625 = vshll.u32 %v2563, 16
        %v2627 = vor.u32 %v2624, %v2625
        %v2628 = vrot.slane %v2624, 4
        %v2630 = vshrl.u32 %v2564, 16
        %v2632 = vrot.slane %v2630, 7
        %v2633 = vshll.u32 %v2564, 16
        %v2635 = vor.u32 %v2632, %v2633
        %v2636 = vrot.slane %v2632, 4
        %v2638 = vshrl.u32 %v2565, 16
        %v2640 = vrot.slane %v2638, 7
        %v2641 = vshll.u32 %v2565, 16
        %v2643 = vor.u32 %v2640, %v2641
        %v2644 = vrot.slane %v2640, 4
        %v2646 = vshrl.u32 %v2566, 16
        %v2648 = vrot.slane %v2646, 7
        %v2649 = vshll.u32 %v2566, 16
        %v2651 = vor.u32 %v2648, %v2649
        %v2652 = vrot.slane %v2648, 4
        %v2654 = vshrl.u32 %v2567, 16
        %v2656 = vrot.slane %v2654, 7
        %v2657 = vshll.u32 %v2567, 16
        %v2659 = vor.u32 %v2656, %v2657
        %v2660 = vrot.slane %v2656, 4
        %v2662 = vshrl.u32 %v2568, 16
        %v2664 = vrot.slane %v2662, 7
        %v2665 = vshll.u32 %v2568, 16
        %v2667 = vor.u32 %v2664, %v2665
        %v2668 = vrot.slane %v2664, 4
        %v2670 = vshrl.u32 %v2569, 16
        %v2672 = vrot.slane %v2670, 7
        %v2673 = vshll.u32 %v2569, 16
        %v2675 = vor.u32 %v2672, %v2673
        %v2676 = vrot.slane %v2672, 4
        %v2678 = vshrl.u32 %v2570, 16
        %v2680 = vrot.slane %v2678, 7
        %v2681 = vshll.u32 %v2570, 16
        %v2683 = vor.u32 %v2680, %v2681
        %v2684 = vrot.slane %v2680, 4
        %v2686 = vshrl.u32 %v2571, 16
        %v2688 = vrot.slane %v2686, 7
        %v2689 = vshll.u32 %v2571, 16
        %v2691 = vor.u32 %v2688, %v2689
        %v2692 = vrot.slane %v2688, 4
        %v2694 = vshrl.u32 %v2572, 16
        %v2696 = vrot.slane %v2694, 7
        %v2697 = vshll.u32 %v2572, 16
        %v2699 = vor.u32 %v2696, %v2697
        %v2700 = vrot.slane %v2696, 4
        %2701 = vrot.lane.b32.xlu0 %v2579, 64
        %v2702 = vpop.permute.xlu0 %2701
        %2703 = vrot.lane.b32.xlu0 %v2580, 64
        %v2704 = vpop.permute.xlu0 %2703
        %2705 = vrot.lane.b32.xlu0 %v2587, 64
        %v2706 = vpop.permute.xlu0 %2705
        %2707 = vrot.lane.b32.xlu0 %v2588, 64
        %v2708 = vpop.permute.xlu0 %2707
        %2709 = vrot.lane.b32.xlu0 %v2595, 64
        %v2710 = vpop.permute.xlu0 %2709
        %2711 = vrot.lane.b32.xlu0 %v2596, 64
        %v2712 = vpop.permute.xlu0 %2711
        %2713 = vrot.lane.b32.xlu0 %v2603, 64
        %v2714 = vpop.permute.xlu0 %2713
        %2715 = vrot.lane.b32.xlu0 %v2604, 64
        %v2716 = vpop.permute.xlu0 %2715
        %2717 = vrot.lane.b32.xlu0 %v2611, 64
        %v2718 = vpop.permute.xlu0 %2717
        %2719 = vrot.lane.b32.xlu0 %v2612, 64
        %v2720 = vpop.permute.xlu0 %2719
        %2721 = vrot.lane.b32.xlu0 %v2619, 64
        %v2722 = vpop.permute.xlu0 %2721
        %2723 = vrot.lane.b32.xlu0 %v2620, 64
        %v2724 = vpop.permute.xlu0 %2723
        %2725 = vrot.lane.b32.xlu0 %v2627, 64
        %v2726 = vpop.permute.xlu0 %2725
        %2727 = vrot.lane.b32.xlu0 %v2628, 64
        %v2728 = vpop.permute.xlu0 %2727
        %2729 = vrot.lane.b32.xlu0 %v2635, 64
        %v2730 = vpop.permute.xlu0 %2729
        %2731 = vrot.lane.b32.xlu0 %v2636, 64
        %v2732 = vpop.permute.xlu0 %2731
        %2733 = vrot.lane.b32.xlu0 %v2643, 64
        %v2734 = vpop.permute.xlu0 %2733
        %2735 = vrot.lane.b32.xlu0 %v2644, 64
        %v2736 = vpop.permute.xlu0 %2735
        %2737 = vrot.lane.b32.xlu0 %v2651, 64
        %v2738 = vpop.permute.xlu0 %2737
        %2739 = vrot.lane.b32.xlu0 %v2652, 64
        %v2740 = vpop.permute.xlu0 %2739
        %2741 = vrot.lane.b32.xlu0 %v2659, 64
        %v2742 = vpop.permute.xlu0 %2741
        %2743 = vrot.lane.b32.xlu0 %v2660, 64
        %v2744 = vpop.permute.xlu0 %2743
        %2745 = vrot.lane.b32.xlu0 %v2667, 64
        %v2746 = vpop.permute.xlu0 %2745
        %2747 = vrot.lane.b32.xlu0 %v2668, 64
        %v2748 = vpop.permute.xlu0 %2747
        %2749 = vrot.lane.b32.xlu0 %v2675, 64
        %v2750 = vpop.permute.xlu0 %2749
        %2751 = vrot.lane.b32.xlu0 %v2676, 64
        %v2752 = vpop.permute.xlu0 %2751
        %2753 = vrot.lane.b32.xlu0 %v2683, 64
        %v2754 = vpop.permute.xlu0 %2753
        %2755 = vrot.lane.b32.xlu0 %v2684, 64
        %v2756 = vpop.permute.xlu0 %2755
        %2757 = vrot.lane.b32.xlu0 %v2691, 64
        %v2758 = vpop.permute.xlu0 %2757
        %2759 = vrot.lane.b32.xlu0 %v2692, 64
        %v2760 = vpop.permute.xlu0 %2759
        %2761 = vrot.lane.b32.xlu0 %v2699, 64
        %v2762 = vpop.permute.xlu0 %2761
        %2763 = vrot.lane.b32.xlu0 %v2700, 64
        %v2764 = vpop.permute.xlu0 %2763
        %vm2797 = vcmask 1043968
        %vm2798 = vmand %vm2797, %vm882
        %v2799 = vld [vmem:[%s880] sm:$0xf]
        %v2800 = vsel %vm2798, %v2702, %v2799
        %2801 = vst [vmem:[%s880] sm:$0xf] %v2800
        %vm2802 = vcmask 1040896
        %vm2803 = vmand %vm2802, %vm888
        %v2804 = vld [vmem:[%s880 + $0x8] sm:$0x1]
        %v2805 = vsel %vm2803, %v2704, %v2804
        %2806 = vst [vmem:[%s880 + $0x8] sm:$0x1] %v2805
        %v2807 = vld [vmem:[%s880 + $0x10] sm:$0xf]
        %v2808 = vsel %vm2798, %v2706, %v2807
        %2809 = vst [vmem:[%s880 + $0x10] sm:$0xf] %v2808
        %v2810 = vld [vmem:[%s880 + $0x18] sm:$0x1]
        %v2811 = vsel %vm2803, %v2708, %v2810
        %2812 = vst [vmem:[%s880 + $0x18] sm:$0x1] %v2811
        %v2813 = vld [vmem:[%s880 + $0x20] sm:$0xf]
        %v2814 = vsel %vm2798, %v2710, %v2813
        %2815 = vst [vmem:[%s880 + $0x20] sm:$0xf] %v2814
        %v2816 = vld [vmem:[%s880 + $0x28] sm:$0x1]
        %v2817 = vsel %vm2803, %v2712, %v2816
        %2818 = vst [vmem:[%s880 + $0x28] sm:$0x1] %v2817
        %v2819 = vld [vmem:[%s880 + $0x30] sm:$0xf]
        %v2820 = vsel %vm2798, %v2714, %v2819
        %2821 = vst [vmem:[%s880 + $0x30] sm:$0xf] %v2820
        %v2822 = vld [vmem:[%s880 + $0x38] sm:$0x1]
        %v2823 = vsel %vm2803, %v2716, %v2822
        %2824 = vst [vmem:[%s880 + $0x38] sm:$0x1] %v2823
        %v2825 = vld [vmem:[%s880 + $0x40] sm:$0xf]
        %v2826 = vsel %vm2798, %v2718, %v2825
        %2827 = vst [vmem:[%s880 + $0x40] sm:$0xf] %v2826
        %v2828 = vld [vmem:[%s880 + $0x48] sm:$0x1]
        %v2829 = vsel %vm2803, %v2720, %v2828
        %2830 = vst [vmem:[%s880 + $0x48] sm:$0x1] %v2829
        %v2831 = vld [vmem:[%s880 + $0x50] sm:$0xf]
        %v2832 = vsel %vm2798, %v2722, %v2831
        %2833 = vst [vmem:[%s880 + $0x50] sm:$0xf] %v2832
        %v2834 = vld [vmem:[%s880 + $0x58] sm:$0x1]
        %v2835 = vsel %vm2803, %v2724, %v2834
        %2836 = vst [vmem:[%s880 + $0x58] sm:$0x1] %v2835
        %v2837 = vld [vmem:[%s880 + $0x60] sm:$0xf]
        %v2838 = vsel %vm2798, %v2726, %v2837
        %2839 = vst [vmem:[%s880 + $0x60] sm:$0xf] %v2838
        %v2840 = vld [vmem:[%s880 + $0x68] sm:$0x1]
        %v2841 = vsel %vm2803, %v2728, %v2840
        %2842 = vst [vmem:[%s880 + $0x68] sm:$0x1] %v2841
        %v2843 = vld [vmem:[%s880 + $0x70] sm:$0xf]
        %v2844 = vsel %vm2798, %v2730, %v2843
        %2845 = vst [vmem:[%s880 + $0x70] sm:$0xf] %v2844
        %v2846 = vld [vmem:[%s880 + $0x78] sm:$0x1]
        %v2847 = vsel %vm2803, %v2732, %v2846
        %2848 = vst [vmem:[%s880 + $0x78] sm:$0x1] %v2847
        %v2849 = vld [vmem:[%s880 + $0x80] sm:$0xf]
        %v2850 = vsel %vm2798, %v2734, %v2849
        %2851 = vst [vmem:[%s880 + $0x80] sm:$0xf] %v2850
        %v2852 = vld [vmem:[%s880 + $0x88] sm:$0x1]
        %v2853 = vsel %vm2803, %v2736, %v2852
        %2854 = vst [vmem:[%s880 + $0x88] sm:$0x1] %v2853
        %v2855 = vld [vmem:[%s880 + $0x90] sm:$0xf]
        %v2856 = vsel %vm2798, %v2738, %v2855
        %2857 = vst [vmem:[%s880 + $0x90] sm:$0xf] %v2856
        %v2858 = vld [vmem:[%s880 + $0x98] sm:$0x1]
        %v2859 = vsel %vm2803, %v2740, %v2858
        %2860 = vst [vmem:[%s880 + $0x98] sm:$0x1] %v2859
        %v2861 = vld [vmem:[%s880 + $0xa0] sm:$0xf]
        %v2862 = vsel %vm2798, %v2742, %v2861
        %2863 = vst [vmem:[%s880 + $0xa0] sm:$0xf] %v2862
        %v2864 = vld [vmem:[%s880 + $0xa8] sm:$0x1]
        %v2865 = vsel %vm2803, %v2744, %v2864
        %2866 = vst [vmem:[%s880 + $0xa8] sm:$0x1] %v2865
        %v2867 = vld [vmem:[%s880 + $0xb0] sm:$0xf]
        %v2868 = vsel %vm2798, %v2746, %v2867
        %2869 = vst [vmem:[%s880 + $0xb0] sm:$0xf] %v2868
        %v2870 = vld [vmem:[%s880 + $0xb8] sm:$0x1]
        %v2871 = vsel %vm2803, %v2748, %v2870
        %2872 = vst [vmem:[%s880 + $0xb8] sm:$0x1] %v2871
        %v2873 = vld [vmem:[%s880 + $0xc0] sm:$0xf]
        %v2874 = vsel %vm2798, %v2750, %v2873
        %2875 = vst [vmem:[%s880 + $0xc0] sm:$0xf] %v2874
        %v2876 = vld [vmem:[%s880 + $0xc8] sm:$0x1]
        %v2877 = vsel %vm2803, %v2752, %v2876
        %2878 = vst [vmem:[%s880 + $0xc8] sm:$0x1] %v2877
        %v2879 = vld [vmem:[%s880 + $0xd0] sm:$0xf]
        %v2880 = vsel %vm2798, %v2754, %v2879
        %2881 = vst [vmem:[%s880 + $0xd0] sm:$0xf] %v2880
        %v2882 = vld [vmem:[%s880 + $0xd8] sm:$0x1]
        %v2883 = vsel %vm2803, %v2756, %v2882
        %2884 = vst [vmem:[%s880 + $0xd8] sm:$0x1] %v2883
        %v2885 = vld [vmem:[%s880 + $0xe0] sm:$0xf]
        %v2886 = vsel %vm2798, %v2758, %v2885
        %2887 = vst [vmem:[%s880 + $0xe0] sm:$0xf] %v2886
        %v2888 = vld [vmem:[%s880 + $0xe8] sm:$0x1]
        %v2889 = vsel %vm2803, %v2760, %v2888
        %2890 = vst [vmem:[%s880 + $0xe8] sm:$0x1] %v2889
        %v2891 = vld [vmem:[%s880 + $0xf0] sm:$0xf]
        %v2892 = vsel %vm2798, %v2762, %v2891
        %2893 = vst [vmem:[%s880 + $0xf0] sm:$0xf] %v2892
        %v2894 = vld [vmem:[%s880 + $0xf8] sm:$0x1]
        %v2895 = vsel %vm2803, %v2764, %v2894
        %2896 = vst [vmem:[%s880 + $0xf8] sm:$0x1] %v2895
        %v2897 = vld [vmem:[%s7] sm:$0x1]
        %v2899 = vlaneseq
        %v2900 = vshrl.u32 %v2899, 7
        %v2901 = vsub.s32 0, %v2900
        %v2902 = vrot.slane %v2897, %v2901
        %s2904 = scalar_lea.vmem [#allocation2], 96
        %v2905 = vld [vmem:[%s2904] sm:$0xf]
        %v2906 = vld [vmem:[%s2904 + $0x10] sm:$0xf]
        %v2907 = vld [vmem:[%s2904 + $0x20] sm:$0xf]
        %v2908 = vld [vmem:[%s2904 + $0x30] sm:$0xf]
        %v2909 = vld [vmem:[%s2904 + $0x40] sm:$0xf]
        %v2910 = vld [vmem:[%s2904 + $0x50] sm:$0xf]
        %v2911 = vld [vmem:[%s2904 + $0x60] sm:$0xf]
        %v2912 = vld [vmem:[%s2904 + $0x70] sm:$0xf]
        %v2913 = vld [vmem:[%s2904 + $0x80] sm:$0xf]
        %v2914 = vld [vmem:[%s2904 + $0x90] sm:$0xf]
        %v2915 = vld [vmem:[%s2904 + $0xa0] sm:$0xf]
        %v2916 = vld [vmem:[%s2904 + $0xb0] sm:$0xf]
        %v2917 = vld [vmem:[%s2904 + $0xc0] sm:$0xf]
        %v2918 = vld [vmem:[%s2904 + $0xd0] sm:$0xf]
        %v2919 = vld [vmem:[%s2904 + $0xe0] sm:$0xf]
        %v2920 = vld [vmem:[%s2904 + $0xf0] sm:$0xf]
        %v2921 = vld [vmem:[%s2904 + $0x100] sm:$0xf]
        %v2922 = vld [vmem:[%s2904 + $0x110] sm:$0xf]
        %v2923 = vld [vmem:[%s6] sm:$0xf]
        %v2924 = vld [vmem:[%s6 + $0x4] sm:$0xf]
        %v2925 = vld [vmem:[%s6 + $0x8] sm:$0xf]
        %v2926 = vld [vmem:[%s6 + $0xc] sm:$0xf]
        %v2927 = vld [vmem:[%s6 + $0x10] sm:$0xf]
        %v2928 = vld [vmem:[%s6 + $0x14] sm:$0xf]
        %v2929 = vld [vmem:[%s6 + $0x18] sm:$0xf]
        %v2930 = vld [vmem:[%s6 + $0x1c] sm:$0xf]
        %v2931 = vld [vmem:[%s6 + $0x20] sm:$0xf]
        %v2932 = vld [vmem:[%s6 + $0x24] sm:$0xf]
        %v2933 = vld [vmem:[%s6 + $0x28] sm:$0xf]
        %v2934 = vld [vmem:[%s6 + $0x2c] sm:$0xf]
        %v2935 = vld [vmem:[%s6 + $0x30] sm:$0xf]
        %v2936 = vld [vmem:[%s6 + $0x34] sm:$0xf]
        %v2937 = vld [vmem:[%s6 + $0x38] sm:$0xf]
        %v2938 = vld [vmem:[%s6 + $0x3c] sm:$0xf]
        %v2957 = vunpack.c.l.b16 %v2905
        %v2958 = vunpack.c.l.b16 %v2906
        %v2959 = vunpack.c.l.b16 %v2907
        %v2960 = vunpack.c.l.b16 %v2908
        %v2961 = vunpack.c.l.b16 %v2909
        %v2962 = vunpack.c.l.b16 %v2910
        %v2963 = vunpack.c.l.b16 %v2911
        %v2964 = vunpack.c.l.b16 %v2912
        %v2965 = vunpack.c.l.b16 %v2913
        %v2966 = vunpack.c.l.b16 %v2914
        %v2967 = vunpack.c.l.b16 %v2915
        %v2968 = vunpack.c.l.b16 %v2916
        %v2969 = vunpack.c.l.b16 %v2917
        %v2970 = vunpack.c.l.b16 %v2918
        %v2971 = vunpack.c.l.b16 %v2919
        %v2972 = vunpack.c.l.b16 %v2920
        %v2973 = vunpack.c.l.b16 %v2921
        %v2974 = vunpack.c.l.b16 %v2922
        %v2975 = vpack.c.b16 %v2958, %v2957
        %v2976 = vpack.c.b16 %v2960, %v2959
        %v2977 = vpack.c.b16 %v2962, %v2961
        %v2978 = vpack.c.b16 %v2964, %v2963
        %v2979 = vpack.c.b16 %v2966, %v2965
        %v2980 = vpack.c.b16 %v2968, %v2967
        %v2981 = vpack.c.b16 %v2970, %v2969
        %v2982 = vpack.c.b16 %v2972, %v2971
        %v2983 = vpack.c.b16 %v2974, %v2973
        %v3009 = vunpack.c.l.b16 %v2923
        %v3010 = vunpack.c.l.b16 %v2924
        %v3011 = vunpack.c.l.b16 %v2925
        %v3012 = vunpack.c.l.b16 %v2926
        %v3013 = vunpack.c.l.b16 %v2927
        %v3014 = vunpack.c.l.b16 %v2928
        %v3015 = vunpack.c.l.b16 %v2929
        %v3016 = vunpack.c.l.b16 %v2930
        %v3017 = vunpack.c.l.b16 %v2931
        %v3018 = vunpack.c.l.b16 %v2932
        %v3019 = vunpack.c.l.b16 %v2933
        %v3020 = vunpack.c.l.b16 %v2934
        %v3021 = vunpack.c.l.b16 %v2935
        %v3022 = vunpack.c.l.b16 %v2936
        %v3023 = vunpack.c.l.b16 %v2937
        %v3024 = vunpack.c.l.b16 %v2938
        %v3025 = vpack.c.b16 %v3010, %v3009
        %v3026 = vpack.c.b16 %v3012, %v3011
        %v3027 = vpack.c.b16 %v3014, %v3013
        %v3028 = vpack.c.b16 %v3016, %v3015
        %v3029 = vpack.c.b16 %v3018, %v3017
        %v3030 = vpack.c.b16 %v3020, %v3019
        %v3031 = vpack.c.b16 %v3022, %v3021
        %v3032 = vpack.c.b16 %v3024, %v3023
        %3041 = vmatprep.subr.bf16.mxu0 0
        %3042 = vmatpush1.bf16.msra.mxu0 %v3025
        %3043 = vmatprep.subr.bf16.mxu0 0
        %3044 = vmatpush1.bf16.msra.mxu0 %v3026
        %3045 = vmatprep.subr.bf16.mxu0 0
        %3046 = vmatpush1.bf16.msra.mxu0 %v3027
        %3047 = vmatprep.subr.bf16.mxu0 0
        %3048 = vmatpush1.bf16.msra.mxu0 %v3028
        %3049 = vmatprep.subr.bf16.mxu0 0
        %3050 = vmatpush1.bf16.msra.mxu0 %v3029
        %3051 = vmatprep.subr.bf16.mxu0 0
        %3052 = vmatpush1.bf16.msra.mxu0 %v3030
        %3053 = vmatprep.subr.bf16.mxu0 0
        %3054 = vmatpush1.bf16.msra.mxu0 %v3031
        %3055 = vmatprep.subr.bf16.mxu0 0
        %3056 = vmatpush1.bf16.msra.mxu0 %v3032
        %3057 = vmatprep.subr.bf16.mxu0 0
        %3058 = vmatpush1.bf16.msra.mxu0 0
        %3059 = vmatprep.subr.bf16.mxu0 0
        %3060 = vmatpush1.bf16.msra.mxu0 0
        %3061 = vmatprep.subr.bf16.mxu0 0
        %3062 = vmatpush1.bf16.msra.mxu0 0
        %3063 = vmatprep.subr.bf16.mxu0 0
        %3064 = vmatpush1.bf16.msra.mxu0 0
        %3065 = vmatprep.subr.bf16.mxu0 0
        %3066 = vmatpush1.bf16.msra.mxu0 0
        %3067 = vmatprep.subr.bf16.mxu0 0
        %3068 = vmatpush1.bf16.msra.mxu0 0
        %3069 = vmatprep.subr.bf16.mxu0 0
        %3070 = vmatpush1.bf16.msra.mxu0 0
        %3071 = vmatprep.subr.bf16.mxu0 0
        %3072 = vmatpush1.bf16.msra.mxu0 0
        %3073 = vmatprep.mubr.bf16.mxu0 0
        %3074 = vmatmul.mubr.bf16.gmra.mrb[0].mxu0 %v2975
        %v3075 = vpop.f32.mrb[0].mxu0
        %v3076 = vadd.f32 0.0, %v3075
        %v3077 = vpop.f32.mrb[0].mxu0
        %v3078 = vpop.f32.mrb[0].mxu0
        %v3079 = vadd.f32 0.0, %v3078
        %v3080 = vpop.f32.mrb[0].mxu0
        %3081 = vmatprep.mubr.bf16.mxu0 0
        %3082 = vmatmul.mubr.bf16.gmra.mrb[0].mxu0 %v2976
        %v3083 = vpop.f32.mrb[0].mxu0
        %v3084 = vadd.f32 0.0, %v3083
        %v3085 = vpop.f32.mrb[0].mxu0
        %v3086 = vpop.f32.mrb[0].mxu0
        %v3087 = vadd.f32 0.0, %v3086
        %v3088 = vpop.f32.mrb[0].mxu0
        %3089 = vmatprep.mubr.bf16.mxu0 0
        %3090 = vmatmul.mubr.bf16.gmra.mrb[0].mxu0 %v2977
        %v3091 = vpop.f32.mrb[0].mxu0
        %v3092 = vadd.f32 0.0, %v3091
        %v3093 = vpop.f32.mrb[0].mxu0
        %v3094 = vpop.f32.mrb[0].mxu0
        %v3095 = vadd.f32 0.0, %v3094
        %v3096 = vpop.f32.mrb[0].mxu0
        %3097 = vmatprep.mubr.bf16.mxu0 0
        %3098 = vmatmul.mubr.bf16.gmra.mrb[0].mxu0 %v2978
        %v3099 = vpop.f32.mrb[0].mxu0
        %v3100 = vadd.f32 0.0, %v3099
        %v3101 = vpop.f32.mrb[0].mxu0
        %v3102 = vpop.f32.mrb[0].mxu0
        %v3103 = vadd.f32 0.0, %v3102
        %v3104 = vpop.f32.mrb[0].mxu0
        %3105 = vmatprep.mubr.bf16.mxu0 0
        %3106 = vmatmul.mubr.bf16.gmra.mrb[0].mxu0 %v2979
        %v3107 = vpop.f32.mrb[0].mxu0
        %v3108 = vadd.f32 0.0, %v3107
        %v3109 = vpop.f32.mrb[0].mxu0
        %v3110 = vpop.f32.mrb[0].mxu0
        %v3111 = vadd.f32 0.0, %v3110
        %v3112 = vpop.f32.mrb[0].mxu0
        %3113 = vmatprep.mubr.bf16.mxu0 0
        %3114 = vmatmul.mubr.bf16.gmra.mrb[0].mxu0 %v2980
        %v3115 = vpop.f32.mrb[0].mxu0
        %v3116 = vadd.f32 0.0, %v3115
        %v3117 = vpop.f32.mrb[0].mxu0
        %v3118 = vpop.f32.mrb[0].mxu0
        %v3119 = vadd.f32 0.0, %v3118
        %v3120 = vpop.f32.mrb[0].mxu0
        %3121 = vmatprep.mubr.bf16.mxu0 0
        %3122 = vmatmul.mubr.bf16.gmra.mrb[0].mxu0 %v2981
        %v3123 = vpop.f32.mrb[0].mxu0
        %v3124 = vadd.f32 0.0, %v3123
        %v3125 = vpop.f32.mrb[0].mxu0
        %v3126 = vpop.f32.mrb[0].mxu0
        %v3127 = vadd.f32 0.0, %v3126
        %v3128 = vpop.f32.mrb[0].mxu0
        %3129 = vmatprep.mubr.bf16.mxu0 0
        %3130 = vmatmul.mubr.bf16.gmra.mrb[0].mxu0 %v2982
        %v3131 = vpop.f32.mrb[0].mxu0
        %v3132 = vadd.f32 0.0, %v3131
        %v3133 = vpop.f32.mrb[0].mxu0
        %v3134 = vpop.f32.mrb[0].mxu0
        %v3135 = vadd.f32 0.0, %v3134
        %v3136 = vpop.f32.mrb[0].mxu0
        %3137 = vmatprep.mubr.bf16.mxu0 0
        %3138 = vmatmul.mubr.bf16.gmra.mrb[0].mxu0 %v2983
        %v3139 = vpop.f32.mrb[0].mxu0
        %v3140 = vadd.f32 0.0, %v3139
        %v3141 = vpop.f32.mrb[0].mxu0
        %v3142 = vpop.f32.mrb[0].mxu0
        %v3143 = vadd.f32 0.0, %v3142
        %v3144 = vpop.f32.mrb[0].mxu0
        %3145 = vdwg.mxu0
        %v3146 = vadd.f32 %v2902, %v3076
        %v3147 = vadd.f32 %v2902, %v3079
        %v3148 = vadd.f32 %v2902, %v3084
        %v3149 = vadd.f32 %v2902, %v3087
        %v3150 = vadd.f32 %v2902, %v3092
        %v3151 = vadd.f32 %v2902, %v3095
        %v3152 = vadd.f32 %v2902, %v3100
        %v3153 = vadd.f32 %v2902, %v3103
        %v3154 = vadd.f32 %v2902, %v3108
        %v3155 = vadd.f32 %v2902, %v3111
        %v3156 = vadd.f32 %v2902, %v3116
        %v3157 = vadd.f32 %v2902, %v3119
        %v3158 = vadd.f32 %v2902, %v3124
        %v3159 = vadd.f32 %v2902, %v3127
        %v3160 = vadd.f32 %v2902, %v3132
        %v3161 = vadd.f32 %v2902, %v3135
        %3178 = vrot.lane.b32.xlu0 %v3084, 64
        %v3179 = vpop.permute.xlu0 %3178
        %3180 = vrot.lane.b32.xlu0 %v3087, 64
        %v3181 = vpop.permute.xlu0 %3180
        %3182 = vrot.lane.b32.xlu0 %v3092, 64
        %v3183 = vpop.permute.xlu0 %3182
        %3184 = vrot.lane.b32.xlu0 %v3095, 64
        %v3185 = vpop.permute.xlu0 %3184
        %3186 = vrot.lane.b32.xlu0 %v3100, 64
        %v3187 = vpop.permute.xlu0 %3186
        %3188 = vrot.lane.b32.xlu0 %v3103, 64
        %v3189 = vpop.permute.xlu0 %3188
        %3190 = vrot.lane.b32.xlu0 %v3108, 64
        %v3191 = vpop.permute.xlu0 %3190
        %3192 = vrot.lane.b32.xlu0 %v3111, 64
        %v3193 = vpop.permute.xlu0 %3192
        %3194 = vrot.lane.b32.xlu0 %v3116, 64
        %v3195 = vpop.permute.xlu0 %3194
        %3196 = vrot.lane.b32.xlu0 %v3119, 64
        %v3197 = vpop.permute.xlu0 %3196
        %3198 = vrot.lane.b32.xlu0 %v3124, 64
        %v3199 = vpop.permute.xlu0 %3198
        %3200 = vrot.lane.b32.xlu0 %v3127, 64
        %v3201 = vpop.permute.xlu0 %3200
        %3202 = vrot.lane.b32.xlu0 %v3132, 64
        %v3203 = vpop.permute.xlu0 %3202
        %3204 = vrot.lane.b32.xlu0 %v3135, 64
        %v3205 = vpop.permute.xlu0 %3204
        %3206 = vrot.lane.b32.xlu0 %v3140, 64
        %v3207 = vpop.permute.xlu0 %3206
        %3208 = vrot.lane.b32.xlu0 %v3143, 64
        %v3209 = vpop.permute.xlu0 %3208
        %v3226 = vadd.f32 %v3146, %v3179
        %v3227 = vadd.f32 %v3147, %v3181
        %v3228 = vadd.f32 %v3148, %v3183
        %v3229 = vadd.f32 %v3149, %v3185
        %v3230 = vadd.f32 %v3150, %v3187
        %v3231 = vadd.f32 %v3151, %v3189
        %v3232 = vadd.f32 %v3152, %v3191
        %v3233 = vadd.f32 %v3153, %v3193
        %v3234 = vadd.f32 %v3154, %v3195
        %v3235 = vadd.f32 %v3155, %v3197
        %v3236 = vadd.f32 %v3156, %v3199
        %v3237 = vadd.f32 %v3157, %v3201
        %v3238 = vadd.f32 %v3158, %v3203
        %v3239 = vadd.f32 %v3159, %v3205
        %v3240 = vadd.f32 %v3160, %v3207
        %v3241 = vadd.f32 %v3161, %v3209
        %v3242 = vld [vmem:[%s2904] sm:$0xf]
        %v3243 = vld [vmem:[%s2904 + $0x8] sm:$0x1]
        %v3244 = vld [vmem:[%s2904 + $0x10] sm:$0xf]
        %v3245 = vld [vmem:[%s2904 + $0x18] sm:$0x1]
        %v3246 = vld [vmem:[%s2904 + $0x20] sm:$0xf]
        %v3247 = vld [vmem:[%s2904 + $0x28] sm:$0x1]
        %v3248 = vld [vmem:[%s2904 + $0x30] sm:$0xf]
        %v3249 = vld [vmem:[%s2904 + $0x38] sm:$0x1]
        %v3250 = vld [vmem:[%s2904 + $0x40] sm:$0xf]
        %v3251 = vld [vmem:[%s2904 + $0x48] sm:$0x1]
        %v3252 = vld [vmem:[%s2904 + $0x50] sm:$0xf]
        %v3253 = vld [vmem:[%s2904 + $0x58] sm:$0x1]
        %v3254 = vld [vmem:[%s2904 + $0x60] sm:$0xf]
        %v3255 = vld [vmem:[%s2904 + $0x68] sm:$0x1]
        %v3256 = vld [vmem:[%s2904 + $0x70] sm:$0xf]
        %v3257 = vld [vmem:[%s2904 + $0x78] sm:$0x1]
        %v3258 = vld [vmem:[%s2904 + $0x80] sm:$0xf]
        %v3259 = vld [vmem:[%s2904 + $0x88] sm:$0x1]
        %v3260 = vld [vmem:[%s2904 + $0x90] sm:$0xf]
        %v3261 = vld [vmem:[%s2904 + $0x98] sm:$0x1]
        %v3262 = vld [vmem:[%s2904 + $0xa0] sm:$0xf]
        %v3263 = vld [vmem:[%s2904 + $0xa8] sm:$0x1]
        %v3264 = vld [vmem:[%s2904 + $0xb0] sm:$0xf]
        %v3265 = vld [vmem:[%s2904 + $0xb8] sm:$0x1]
        %v3266 = vld [vmem:[%s2904 + $0xc0] sm:$0xf]
        %v3267 = vld [vmem:[%s2904 + $0xc8] sm:$0x1]
        %v3268 = vld [vmem:[%s2904 + $0xd0] sm:$0xf]
        %v3269 = vld [vmem:[%s2904 + $0xd8] sm:$0x1]
        %v3270 = vld [vmem:[%s2904 + $0xe0] sm:$0xf]
        %v3271 = vld [vmem:[%s2904 + $0xe8] sm:$0x1]
        %v3272 = vld [vmem:[%s2904 + $0xf0] sm:$0xf]
        %v3273 = vld [vmem:[%s2904 + $0xf8] sm:$0x1]
        %v3274 = vld [vmem:[%s2904 + $0x100] sm:$0xf]
        %v3275 = vld [vmem:[%s2904 + $0x108] sm:$0x1]
        %v3276 = vld [vmem:[%s2904 + $0x110] sm:$0xf]
        %v3277 = vld [vmem:[%s2904 + $0x118] sm:$0x1]
        %v3279 = vshrl.u32 %v3242, 16
        %v3281 = vrot.slane %v3279, 4
        %v3282 = vshll.u32 %v3242, 16
        %v3284 = vrot.slane %v3282, 5
        %v3285 = vor.u32 %v3281, %v3284
        %v3286 = vrot.slane %v3285, 4
        %v3288 = vshll.u32 %v3243, 16
        %v3290 = vrot.slane %v3288, 5
        %v3291 = vsel %vm1347, %v3286, %v3290
        %v3293 = vshrl.u32 %v3244, 16
        %v3295 = vrot.slane %v3293, 4
        %v3296 = vshll.u32 %v3244, 16
        %v3298 = vrot.slane %v3296, 5
        %v3299 = vor.u32 %v3295, %v3298
        %v3300 = vrot.slane %v3299, 4
        %v3302 = vshll.u32 %v3245, 16
        %v3304 = vrot.slane %v3302, 5
        %v3305 = vsel %vm1347, %v3300, %v3304
        %v3307 = vshrl.u32 %v3246, 16
        %v3309 = vrot.slane %v3307, 4
        %v3310 = vshll.u32 %v3246, 16
        %v3312 = vrot.slane %v3310, 5
        %v3313 = vor.u32 %v3309, %v3312
        %v3314 = vrot.slane %v3313, 4
        %v3316 = vshll.u32 %v3247, 16
        %v3318 = vrot.slane %v3316, 5
        %v3319 = vsel %vm1347, %v3314, %v3318
        %v3321 = vshrl.u32 %v3248, 16
        %v3323 = vrot.slane %v3321, 4
        %v3324 = vshll.u32 %v3248, 16
        %v3326 = vrot.slane %v3324, 5
        %v3327 = vor.u32 %v3323, %v3326
        %v3328 = vrot.slane %v3327, 4
        %v3330 = vshll.u32 %v3249, 16
        %v3332 = vrot.slane %v3330, 5
        %v3333 = vsel %vm1347, %v3328, %v3332
        %v3335 = vshrl.u32 %v3250, 16
        %v3337 = vrot.slane %v3335, 4
        %v3338 = vshll.u32 %v3250, 16
        %v3340 = vrot.slane %v3338, 5
        %v3341 = vor.u32 %v3337, %v3340
        %v3342 = vrot.slane %v3341, 4
        %v3344 = vshll.u32 %v3251, 16
        %v3346 = vrot.slane %v3344, 5
        %v3347 = vsel %vm1347, %v3342, %v3346
        %v3349 = vshrl.u32 %v3252, 16
        %v3351 = vrot.slane %v3349, 4
        %v3352 = vshll.u32 %v3252, 16
        %v3354 = vrot.slane %v3352, 5
        %v3355 = vor.u32 %v3351, %v3354
        %v3356 = vrot.slane %v3355, 4
        %v3358 = vshll.u32 %v3253, 16
        %v3360 = vrot.slane %v3358, 5
        %v3361 = vsel %vm1347, %v3356, %v3360
        %v3363 = vshrl.u32 %v3254, 16
        %v3365 = vrot.slane %v3363, 4
        %v3366 = vshll.u32 %v3254, 16
        %v3368 = vrot.slane %v3366, 5
        %v3369 = vor.u32 %v3365, %v3368
        %v3370 = vrot.slane %v3369, 4
        %v3372 = vshll.u32 %v3255, 16
        %v3374 = vrot.slane %v3372, 5
        %v3375 = vsel %vm1347, %v3370, %v3374
        %v3377 = vshrl.u32 %v3256, 16
        %v3379 = vrot.slane %v3377, 4
        %v3380 = vshll.u32 %v3256, 16
        %v3382 = vrot.slane %v3380, 5
        %v3383 = vor.u32 %v3379, %v3382
        %v3384 = vrot.slane %v3383, 4
        %v3386 = vshll.u32 %v3257, 16
        %v3388 = vrot.slane %v3386, 5
        %v3389 = vsel %vm1347, %v3384, %v3388
        %v3391 = vshrl.u32 %v3258, 16
        %v3393 = vrot.slane %v3391, 4
        %v3394 = vshll.u32 %v3258, 16
        %v3396 = vrot.slane %v3394, 5
        %v3397 = vor.u32 %v3393, %v3396
        %v3398 = vrot.slane %v3397, 4
        %v3400 = vshll.u32 %v3259, 16
        %v3402 = vrot.slane %v3400, 5
        %v3403 = vsel %vm1347, %v3398, %v3402
        %v3405 = vshrl.u32 %v3260, 16
        %v3407 = vrot.slane %v3405, 4
        %v3408 = vshll.u32 %v3260, 16
        %v3410 = vrot.slane %v3408, 5
        %v3411 = vor.u32 %v3407, %v3410
        %v3412 = vrot.slane %v3411, 4
        %v3414 = vshll.u32 %v3261, 16
        %v3416 = vrot.slane %v3414, 5
        %v3417 = vsel %vm1347, %v3412, %v3416
        %v3419 = vshrl.u32 %v3262, 16
        %v3421 = vrot.slane %v3419, 4
        %v3422 = vshll.u32 %v3262, 16
        %v3424 = vrot.slane %v3422, 5
        %v3425 = vor.u32 %v3421, %v3424
        %v3426 = vrot.slane %v3425, 4
        %v3428 = vshll.u32 %v3263, 16
        %v3430 = vrot.slane %v3428, 5
        %v3431 = vsel %vm1347, %v3426, %v3430
        %v3433 = vshrl.u32 %v3264, 16
        %v3435 = vrot.slane %v3433, 4
        %v3436 = vshll.u32 %v3264, 16
        %v3438 = vrot.slane %v3436, 5
        %v3439 = vor.u32 %v3435, %v3438
        %v3440 = vrot.slane %v3439, 4
        %v3442 = vshll.u32 %v3265, 16
        %v3444 = vrot.slane %v3442, 5
        %v3445 = vsel %vm1347, %v3440, %v3444
        %v3447 = vshrl.u32 %v3266, 16
        %v3449 = vrot.slane %v3447, 4
        %v3450 = vshll.u32 %v3266, 16
        %v3452 = vrot.slane %v3450, 5
        %v3453 = vor.u32 %v3449, %v3452
        %v3454 = vrot.slane %v3453, 4
        %v3456 = vshll.u32 %v3267, 16
        %v3458 = vrot.slane %v3456, 5
        %v3459 = vsel %vm1347, %v3454, %v3458
        %v3461 = vshrl.u32 %v3268, 16
        %v3463 = vrot.slane %v3461, 4
        %v3464 = vshll.u32 %v3268, 16
        %v3466 = vrot.slane %v3464, 5
        %v3467 = vor.u32 %v3463, %v3466
        %v3468 = vrot.slane %v3467, 4
        %v3470 = vshll.u32 %v3269, 16
        %v3472 = vrot.slane %v3470, 5
        %v3473 = vsel %vm1347, %v3468, %v3472
        %v3475 = vshrl.u32 %v3270, 16
        %v3477 = vrot.slane %v3475, 4
        %v3478 = vshll.u32 %v3270, 16
        %v3480 = vrot.slane %v3478, 5
        %v3481 = vor.u32 %v3477, %v3480
        %v3482 = vrot.slane %v3481, 4
        %v3484 = vshll.u32 %v3271, 16
        %v3486 = vrot.slane %v3484, 5
        %v3487 = vsel %vm1347, %v3482, %v3486
        %v3489 = vshrl.u32 %v3272, 16
        %v3491 = vrot.slane %v3489, 4
        %v3492 = vshll.u32 %v3272, 16
        %v3494 = vrot.slane %v3492, 5
        %v3495 = vor.u32 %v3491, %v3494
        %v3496 = vrot.slane %v3495, 4
        %v3498 = vshll.u32 %v3273, 16
        %v3500 = vrot.slane %v3498, 5
        %v3501 = vsel %vm1347, %v3496, %v3500
        %v3503 = vshrl.u32 %v3274, 16
        %v3505 = vrot.slane %v3503, 4
        %v3506 = vshll.u32 %v3274, 16
        %v3508 = vrot.slane %v3506, 5
        %v3509 = vor.u32 %v3505, %v3508
        %v3510 = vrot.slane %v3509, 4
        %v3512 = vshll.u32 %v3275, 16
        %v3514 = vrot.slane %v3512, 5
        %v3515 = vsel %vm1347, %v3510, %v3514
        %v3517 = vshrl.u32 %v3276, 16
        %v3519 = vrot.slane %v3517, 4
        %v3520 = vshll.u32 %v3276, 16
        %v3522 = vrot.slane %v3520, 5
        %v3523 = vor.u32 %v3519, %v3522
        %v3524 = vrot.slane %v3523, 4
        %v3526 = vshll.u32 %v3277, 16
        %v3528 = vrot.slane %v3526, 5
        %v3529 = vsel %vm1347, %v3524, %v3528
        %s3530 = scalar_lea.vmem %s6, 64
        %v3531 = vld [vmem:[%s3530] sm:$0xf]
        %v3532 = vld [vmem:[%s3530 + $0x4] sm:$0xf]
        %v3533 = vld [vmem:[%s3530 + $0x8] sm:$0xf]
        %v3534 = vld [vmem:[%s3530 + $0xc] sm:$0xf]
        %v3535 = vld [vmem:[%s3530 + $0x10] sm:$0xf]
        %v3536 = vld [vmem:[%s3530 + $0x14] sm:$0xf]
        %v3537 = vld [vmem:[%s3530 + $0x18] sm:$0xf]
        %v3538 = vld [vmem:[%s3530 + $0x1c] sm:$0xf]
        %v3539 = vld [vmem:[%s3530 + $0x20] sm:$0xf]
        %v3540 = vld [vmem:[%s3530 + $0x24] sm:$0xf]
        %v3541 = vld [vmem:[%s3530 + $0x28] sm:$0xf]
        %v3542 = vld [vmem:[%s3530 + $0x2c] sm:$0xf]
        %v3543 = vld [vmem:[%s3530 + $0x30] sm:$0xf]
        %v3544 = vld [vmem:[%s3530 + $0x34] sm:$0xf]
        %v3545 = vld [vmem:[%s3530 + $0x38] sm:$0xf]
        %v3546 = vld [vmem:[%s3530 + $0x3c] sm:$0xf]
        %v3547 = vunpack.c.l.b16 %v3291
        %v3548 = vunpack.c.l.b16 %v3305
        %v3549 = vunpack.c.l.b16 %v3319
        %v3550 = vunpack.c.l.b16 %v3333
        %v3551 = vunpack.c.l.b16 %v3347
        %v3552 = vunpack.c.l.b16 %v3361
        %v3553 = vunpack.c.l.b16 %v3375
        %v3554 = vunpack.c.l.b16 %v3389
        %v3555 = vunpack.c.l.b16 %v3403
        %v3556 = vunpack.c.l.b16 %v3417
        %v3557 = vunpack.c.l.b16 %v3431
        %v3558 = vunpack.c.l.b16 %v3445
        %v3559 = vunpack.c.l.b16 %v3459
        %v3560 = vunpack.c.l.b16 %v3473
        %v3561 = vunpack.c.l.b16 %v3487
        %v3562 = vunpack.c.l.b16 %v3501
        %v3563 = vunpack.c.l.b16 %v3515
        %v3564 = vunpack.c.l.b16 %v3529
        %v3565 = vpack.c.b16 %v3548, %v3547
        %v3566 = vpack.c.b16 %v3550, %v3549
        %v3567 = vpack.c.b16 %v3552, %v3551
        %v3568 = vpack.c.b16 %v3554, %v3553
        %v3569 = vpack.c.b16 %v3556, %v3555
        %v3570 = vpack.c.b16 %v3558, %v3557
        %v3571 = vpack.c.b16 %v3560, %v3559
        %v3572 = vpack.c.b16 %v3562, %v3561
        %v3573 = vpack.c.b16 %v3564, %v3563
        %v3599 = vunpack.c.l.b16 %v3531
        %v3600 = vunpack.c.l.b16 %v3532
        %v3601 = vunpack.c.l.b16 %v3533
        %v3602 = vunpack.c.l.b16 %v3534
        %v3603 = vunpack.c.l.b16 %v3535
        %v3604 = vunpack.c.l.b16 %v3536
        %v3605 = vunpack.c.l.b16 %v3537
        %v3606 = vunpack.c.l.b16 %v3538
        %v3607 = vunpack.c.l.b16 %v3539
        %v3608 = vunpack.c.l.b16 %v3540
        %v3609 = vunpack.c.l.b16 %v3541
        %v3610 = vunpack.c.l.b16 %v3542
        %v3611 = vunpack.c.l.b16 %v3543
        %v3612 = vunpack.c.l.b16 %v3544
        %v3613 = vunpack.c.l.b16 %v3545
        %v3614 = vunpack.c.l.b16 %v3546
        %v3615 = vpack.c.b16 %v3600, %v3599
        %v3616 = vpack.c.b16 %v3602, %v3601
        %v3617 = vpack.c.b16 %v3604, %v3603
        %v3618 = vpack.c.b16 %v3606, %v3605
        %v3619 = vpack.c.b16 %v3608, %v3607
        %v3620 = vpack.c.b16 %v3610, %v3609
        %v3621 = vpack.c.b16 %v3612, %v3611
        %v3622 = vpack.c.b16 %v3614, %v3613
        %3631 = vmatprep.subr.bf16.mxu0 0
        %3632 = vmatpush1.bf16.msra.mxu0 %v3615
        %3633 = vmatprep.subr.bf16.mxu0 0
        %3634 = vmatpush1.bf16.msra.mxu0 %v3616
        %3635 = vmatprep.subr.bf16.mxu0 0
        %3636 = vmatpush1.bf16.msra.mxu0 %v3617
        %3637 = vmatprep.subr.bf16.mxu0 0
        %3638 = vmatpush1.bf16.msra.mxu0 %v3618
        %3639 = vmatprep.subr.bf16.mxu0 0
        %3640 = vmatpush1.bf16.msra.mxu0 %v3619
        %3641 = vmatprep.subr.bf16.mxu0 0
        %3642 = vmatpush1.bf16.msra.mxu0 %v3620
        %3643 = vmatprep.subr.bf16.mxu0 0
        %3644 = vmatpush1.bf16.msra.mxu0 %v3621
        %3645 = vmatprep.subr.bf16.mxu0 0
        %3646 = vmatpush1.bf16.msra.mxu0 %v3622
        %3647 = vmatprep.subr.bf16.mxu0 0
        %3648 = vmatpush1.bf16.msra.mxu0 0
        %3649 = vmatprep.subr.bf16.mxu0 0
        %3650 = vmatpush1.bf16.msra.mxu0 0
        %3651 = vmatprep.subr.bf16.mxu0 0
        %3652 = vmatpush1.bf16.msra.mxu0 0
        %3653 = vmatprep.subr.bf16.mxu0 0
        %3654 = vmatpush1.bf16.msra.mxu0 0
        %3655 = vmatprep.subr.bf16.mxu0 0
        %3656 = vmatpush1.bf16.msra.mxu0 0
        %3657 = vmatprep.subr.bf16.mxu0 0
        %3658 = vmatpush1.bf16.msra.mxu0 0
        %3659 = vmatprep.subr.bf16.mxu0 0
        %3660 = vmatpush1.bf16.msra.mxu0 0
        %3661 = vmatprep.subr.bf16.mxu0 0
        %3662 = vmatpush1.bf16.msra.mxu0 0
        %3663 = vmatprep.mubr.bf16.mxu0 0
        %3664 = vmatmul.mubr.bf16.gmra.mrb[0].mxu0 %v3565
        %v3665 = vpop.f32.mrb[0].mxu0
        %v3666 = vadd.f32 0.0, %v3665
        %v3667 = vpop.f32.mrb[0].mxu0
        %v3668 = vpop.f32.mrb[0].mxu0
        %v3669 = vadd.f32 0.0, %v3668
        %v3670 = vpop.f32.mrb[0].mxu0
        %3671 = vmatprep.mubr.bf16.mxu0 0
        %3672 = vmatmul.mubr.bf16.gmra.mrb[0].mxu0 %v3566
        %v3673 = vpop.f32.mrb[0].mxu0
        %v3674 = vadd.f32 0.0, %v3673
        %v3675 = vpop.f32.mrb[0].mxu0
        %v3676 = vpop.f32.mrb[0].mxu0
        %v3677 = vadd.f32 0.0, %v3676
        %v3678 = vpop.f32.mrb[0].mxu0
        %3679 = vmatprep.mubr.bf16.mxu0 0
        %3680 = vmatmul.mubr.bf16.gmra.mrb[0].mxu0 %v3567
        %v3681 = vpop.f32.mrb[0].mxu0
        %v3682 = vadd.f32 0.0, %v3681
        %v3683 = vpop.f32.mrb[0].mxu0
        %v3684 = vpop.f32.mrb[0].mxu0
        %v3685 = vadd.f32 0.0, %v3684
        %v3686 = vpop.f32.mrb[0].mxu0
        %3687 = vmatprep.mubr.bf16.mxu0 0
        %3688 = vmatmul.mubr.bf16.gmra.mrb[0].mxu0 %v3568
        %v3689 = vpop.f32.mrb[0].mxu0
        %v3690 = vadd.f32 0.0, %v3689
        %v3691 = vpop.f32.mrb[0].mxu0
        %v3692 = vpop.f32.mrb[0].mxu0
        %v3693 = vadd.f32 0.0, %v3692
        %v3694 = vpop.f32.mrb[0].mxu0
        %3695 = vmatprep.mubr.bf16.mxu0 0
        %3696 = vmatmul.mubr.bf16.gmra.mrb[0].mxu0 %v3569
        %v3697 = vpop.f32.mrb[0].mxu0
        %v3698 = vadd.f32 0.0, %v3697
        %v3699 = vpop.f32.mrb[0].mxu0
        %v3700 = vpop.f32.mrb[0].mxu0
        %v3701 = vadd.f32 0.0, %v3700
        %v3702 = vpop.f32.mrb[0].mxu0
        %3703 = vmatprep.mubr.bf16.mxu0 0
        %3704 = vmatmul.mubr.bf16.gmra.mrb[0].mxu0 %v3570
        %v3705 = vpop.f32.mrb[0].mxu0
        %v3706 = vadd.f32 0.0, %v3705
        %v3707 = vpop.f32.mrb[0].mxu0
        %v3708 = vpop.f32.mrb[0].mxu0
        %v3709 = vadd.f32 0.0, %v3708
        %v3710 = vpop.f32.mrb[0].mxu0
        %3711 = vmatprep.mubr.bf16.mxu0 0
        %3712 = vmatmul.mubr.bf16.gmra.mrb[0].mxu0 %v3571
        %v3713 = vpop.f32.mrb[0].mxu0
        %v3714 = vadd.f32 0.0, %v3713
        %v3715 = vpop.f32.mrb[0].mxu0
        %v3716 = vpop.f32.mrb[0].mxu0
        %v3717 = vadd.f32 0.0, %v3716
        %v3718 = vpop.f32.mrb[0].mxu0
        %3719 = vmatprep.mubr.bf16.mxu0 0
        %3720 = vmatmul.mubr.bf16.gmra.mrb[0].mxu0 %v3572
        %v3721 = vpop.f32.mrb[0].mxu0
        %v3722 = vadd.f32 0.0, %v3721
        %v3723 = vpop.f32.mrb[0].mxu0
        %v3724 = vpop.f32.mrb[0].mxu0
        %v3725 = vadd.f32 0.0, %v3724
        %v3726 = vpop.f32.mrb[0].mxu0
        %3727 = vmatprep.mubr.bf16.mxu0 0
        %3728 = vmatmul.mubr.bf16.gmra.mrb[0].mxu0 %v3573
        %v3729 = vpop.f32.mrb[0].mxu0
        %v3730 = vadd.f32 0.0, %v3729
        %v3731 = vpop.f32.mrb[0].mxu0
        %v3732 = vpop.f32.mrb[0].mxu0
        %v3733 = vadd.f32 0.0, %v3732
        %v3734 = vpop.f32.mrb[0].mxu0
        %3735 = vdwg.mxu0
        %v3736 = vadd.f32 %v3226, %v3666
        %v3737 = vadd.f32 %v3227, %v3669
        %v3738 = vadd.f32 %v3228, %v3674
        %v3739 = vadd.f32 %v3229, %v3677
        %v3740 = vadd.f32 %v3230, %v3682
        %v3741 = vadd.f32 %v3231, %v3685
        %v3742 = vadd.f32 %v3232, %v3690
        %v3743 = vadd.f32 %v3233, %v3693
        %v3744 = vadd.f32 %v3234, %v3698
        %v3745 = vadd.f32 %v3235, %v3701
        %v3746 = vadd.f32 %v3236, %v3706
        %v3747 = vadd.f32 %v3237, %v3709
        %v3748 = vadd.f32 %v3238, %v3714
        %v3749 = vadd.f32 %v3239, %v3717
        %v3750 = vadd.f32 %v3240, %v3722
        %v3751 = vadd.f32 %v3241, %v3725
        %3768 = vrot.lane.b32.xlu0 %v3674, 64
        %v3769 = vpop.permute.xlu0 %3768
        %3770 = vrot.lane.b32.xlu0 %v3677, 64
        %v3771 = vpop.permute.xlu0 %3770
        %3772 = vrot.lane.b32.xlu0 %v3682, 64
        %v3773 = vpop.permute.xlu0 %3772
        %3774 = vrot.lane.b32.xlu0 %v3685, 64
        %v3775 = vpop.permute.xlu0 %3774
        %3776 = vrot.lane.b32.xlu0 %v3690, 64
        %v3777 = vpop.permute.xlu0 %3776
        %3778 = vrot.lane.b32.xlu0 %v3693, 64
        %v3779 = vpop.permute.xlu0 %3778
        %3780 = vrot.lane.b32.xlu0 %v3698, 64
        %v3781 = vpop.permute.xlu0 %3780
        %3782 = vrot.lane.b32.xlu0 %v3701, 64
        %v3783 = vpop.permute.xlu0 %3782
        %3784 = vrot.lane.b32.xlu0 %v3706, 64
        %v3785 = vpop.permute.xlu0 %3784
        %3786 = vrot.lane.b32.xlu0 %v3709, 64
        %v3787 = vpop.permute.xlu0 %3786
        %3788 = vrot.lane.b32.xlu0 %v3714, 64
        %v3789 = vpop.permute.xlu0 %3788
        %3790 = vrot.lane.b32.xlu0 %v3717, 64
        %v3791 = vpop.permute.xlu0 %3790
        %3792 = vrot.lane.b32.xlu0 %v3722, 64
        %v3793 = vpop.permute.xlu0 %3792
        %3794 = vrot.lane.b32.xlu0 %v3725, 64
        %v3795 = vpop.permute.xlu0 %3794
        %3796 = vrot.lane.b32.xlu0 %v3730, 64
        %v3797 = vpop.permute.xlu0 %3796
        %3798 = vrot.lane.b32.xlu0 %v3733, 64
        %v3799 = vpop.permute.xlu0 %3798
        %v3816 = vadd.f32 %v3736, %v3769
        %v3817 = vadd.f32 %v3737, %v3771
        %v3818 = vadd.f32 %v3738, %v3773
        %v3819 = vadd.f32 %v3739, %v3775
        %v3820 = vadd.f32 %v3740, %v3777
        %v3821 = vadd.f32 %v3741, %v3779
        %v3822 = vadd.f32 %v3742, %v3781
        %v3823 = vadd.f32 %v3743, %v3783
        %v3824 = vadd.f32 %v3744, %v3785
        %v3825 = vadd.f32 %v3745, %v3787
        %v3826 = vadd.f32 %v3746, %v3789
        %v3827 = vadd.f32 %v3747, %v3791
        %v3828 = vadd.f32 %v3748, %v3793
        %v3829 = vadd.f32 %v3749, %v3795
        %v3830 = vadd.f32 %v3750, %v3797
        %v3831 = vadd.f32 %v3751, %v3799
        %v3832 = vld [vmem:[%s2904] sm:$0xe]
        %v3833 = vld [vmem:[%s2904 + $0x10] sm:$0xe]
        %v3834 = vld [vmem:[%s2904 + $0x20] sm:$0xe]
        %v3835 = vld [vmem:[%s2904 + $0x30] sm:$0xe]
        %v3836 = vld [vmem:[%s2904 + $0x40] sm:$0xe]
        %v3837 = vld [vmem:[%s2904 + $0x50] sm:$0xe]
        %v3838 = vld [vmem:[%s2904 + $0x60] sm:$0xe]
        %v3839 = vld [vmem:[%s2904 + $0x70] sm:$0xe]
        %v3840 = vld [vmem:[%s2904 + $0x80] sm:$0xe]
        %v3841 = vld [vmem:[%s2904 + $0x90] sm:$0xe]
        %v3842 = vld [vmem:[%s2904 + $0xa0] sm:$0xe]
        %v3843 = vld [vmem:[%s2904 + $0xb0] sm:$0xe]
        %v3844 = vld [vmem:[%s2904 + $0xc0] sm:$0xe]
        %v3845 = vld [vmem:[%s2904 + $0xd0] sm:$0xe]
        %v3846 = vld [vmem:[%s2904 + $0xe0] sm:$0xe]
        %v3847 = vld [vmem:[%s2904 + $0xf0] sm:$0xe]
        %v3848 = vld [vmem:[%s2904 + $0x100] sm:$0xe]
        %v3849 = vld [vmem:[%s2904 + $0x110] sm:$0xe]
        %v3886 = vrot.slane %v3832, 5
        %v3887 = vrot.slane %v3886, 4
        %v3888 = vrot.slane %v3243, 5
        %v3889 = vsel %vm1925, %v3887, %v3888
        %v3890 = vrot.slane %v3833, 5
        %v3891 = vrot.slane %v3890, 4
        %v3892 = vrot.slane %v3245, 5
        %v3893 = vsel %vm1925, %v3891, %v3892
        %v3894 = vrot.slane %v3834, 5
        %v3895 = vrot.slane %v3894, 4
        %v3896 = vrot.slane %v3247, 5
        %v3897 = vsel %vm1925, %v3895, %v3896
        %v3898 = vrot.slane %v3835, 5
        %v3899 = vrot.slane %v3898, 4
        %v3900 = vrot.slane %v3249, 5
        %v3901 = vsel %vm1925, %v3899, %v3900
        %v3902 = vrot.slane %v3836, 5
        %v3903 = vrot.slane %v3902, 4
        %v3904 = vrot.slane %v3251, 5
        %v3905 = vsel %vm1925, %v3903, %v3904
        %v3906 = vrot.slane %v3837, 5
        %v3907 = vrot.slane %v3906, 4
        %v3908 = vrot.slane %v3253, 5
        %v3909 = vsel %vm1925, %v3907, %v3908
        %v3910 = vrot.slane %v3838, 5
        %v3911 = vrot.slane %v3910, 4
        %v3912 = vrot.slane %v3255, 5
        %v3913 = vsel %vm1925, %v3911, %v3912
        %v3914 = vrot.slane %v3839, 5
        %v3915 = vrot.slane %v3914, 4
        %v3916 = vrot.slane %v3257, 5
        %v3917 = vsel %vm1925, %v3915, %v3916
        %v3918 = vrot.slane %v3840, 5
        %v3919 = vrot.slane %v3918, 4
        %v3920 = vrot.slane %v3259, 5
        %v3921 = vsel %vm1925, %v3919, %v3920
        %v3922 = vrot.slane %v3841, 5
        %v3923 = vrot.slane %v3922, 4
        %v3924 = vrot.slane %v3261, 5
        %v3925 = vsel %vm1925, %v3923, %v3924
        %v3926 = vrot.slane %v3842, 5
        %v3927 = vrot.slane %v3926, 4
        %v3928 = vrot.slane %v3263, 5
        %v3929 = vsel %vm1925, %v3927, %v3928
        %v3930 = vrot.slane %v3843, 5
        %v3931 = vrot.slane %v3930, 4
        %v3932 = vrot.slane %v3265, 5
        %v3933 = vsel %vm1925, %v3931, %v3932
        %v3934 = vrot.slane %v3844, 5
        %v3935 = vrot.slane %v3934, 4
        %v3936 = vrot.slane %v3267, 5
        %v3937 = vsel %vm1925, %v3935, %v3936
        %v3938 = vrot.slane %v3845, 5
        %v3939 = vrot.slane %v3938, 4
        %v3940 = vrot.slane %v3269, 5
        %v3941 = vsel %vm1925, %v3939, %v3940
        %v3942 = vrot.slane %v3846, 5
        %v3943 = vrot.slane %v3942, 4
        %v3944 = vrot.slane %v3271, 5
        %v3945 = vsel %vm1925, %v3943, %v3944
        %v3946 = vrot.slane %v3847, 5
        %v3947 = vrot.slane %v3946, 4
        %v3948 = vrot.slane %v3273, 5
        %v3949 = vsel %vm1925, %v3947, %v3948
        %v3950 = vrot.slane %v3848, 5
        %v3951 = vrot.slane %v3950, 4
        %v3952 = vrot.slane %v3275, 5
        %v3953 = vsel %vm1925, %v3951, %v3952
        %v3954 = vrot.slane %v3849, 5
        %v3955 = vrot.slane %v3954, 4
        %v3956 = vrot.slane %v3277, 5
        %v3957 = vsel %vm1925, %v3955, %v3956
        %s3958 = scalar_lea.vmem %s6, 128
        %v3959 = vld [vmem:[%s3958] sm:$0xf]
        %v3960 = vld [vmem:[%s3958 + $0x4] sm:$0xf]
        %v3961 = vld [vmem:[%s3958 + $0x8] sm:$0xf]
        %v3962 = vld [vmem:[%s3958 + $0xc] sm:$0xf]
        %v3963 = vld [vmem:[%s3958 + $0x10] sm:$0xf]
        %v3964 = vld [vmem:[%s3958 + $0x14] sm:$0xf]
        %v3965 = vld [vmem:[%s3958 + $0x18] sm:$0xf]
        %v3966 = vld [vmem:[%s3958 + $0x1c] sm:$0xf]
        %v3967 = vld [vmem:[%s3958 + $0x20] sm:$0xf]
        %v3968 = vld [vmem:[%s3958 + $0x24] sm:$0xf]
        %v3969 = vld [vmem:[%s3958 + $0x28] sm:$0xf]
        %v3970 = vld [vmem:[%s3958 + $0x2c] sm:$0xf]
        %v3971 = vld [vmem:[%s3958 + $0x30] sm:$0xf]
        %v3972 = vld [vmem:[%s3958 + $0x34] sm:$0xf]
        %v3973 = vld [vmem:[%s3958 + $0x38] sm:$0xf]
        %v3974 = vld [vmem:[%s3958 + $0x3c] sm:$0xf]
        %v3975 = vunpack.c.l.b16 %v3889
        %v3976 = vunpack.c.l.b16 %v3893
        %v3977 = vunpack.c.l.b16 %v3897
        %v3978 = vunpack.c.l.b16 %v3901
        %v3979 = vunpack.c.l.b16 %v3905
        %v3980 = vunpack.c.l.b16 %v3909
        %v3981 = vunpack.c.l.b16 %v3913
        %v3982 = vunpack.c.l.b16 %v3917
        %v3983 = vunpack.c.l.b16 %v3921
        %v3984 = vunpack.c.l.b16 %v3925
        %v3985 = vunpack.c.l.b16 %v3929
        %v3986 = vunpack.c.l.b16 %v3933
        %v3987 = vunpack.c.l.b16 %v3937
        %v3988 = vunpack.c.l.b16 %v3941
        %v3989 = vunpack.c.l.b16 %v3945
        %v3990 = vunpack.c.l.b16 %v3949
        %v3991 = vunpack.c.l.b16 %v3953
        %v3992 = vunpack.c.l.b16 %v3957
        %v3993 = vpack.c.b16 %v3976, %v3975
        %v3994 = vpack.c.b16 %v3978, %v3977
        %v3995 = vpack.c.b16 %v3980, %v3979
        %v3996 = vpack.c.b16 %v3982, %v3981
        %v3997 = vpack.c.b16 %v3984, %v3983
        %v3998 = vpack.c.b16 %v3986, %v3985
        %v3999 = vpack.c.b16 %v3988, %v3987
        %v4000 = vpack.c.b16 %v3990, %v3989
        %v4001 = vpack.c.b16 %v3992, %v3991
        %v4027 = vunpack.c.l.b16 %v3959
        %v4028 = vunpack.c.l.b16 %v3960
        %v4029 = vunpack.c.l.b16 %v3961
        %v4030 = vunpack.c.l.b16 %v3962
        %v4031 = vunpack.c.l.b16 %v3963
        %v4032 = vunpack.c.l.b16 %v3964
        %v4033 = vunpack.c.l.b16 %v3965
        %v4034 = vunpack.c.l.b16 %v3966
        %v4035 = vunpack.c.l.b16 %v3967
        %v4036 = vunpack.c.l.b16 %v3968
        %v4037 = vunpack.c.l.b16 %v3969
        %v4038 = vunpack.c.l.b16 %v3970
        %v4039 = vunpack.c.l.b16 %v3971
        %v4040 = vunpack.c.l.b16 %v3972
        %v4041 = vunpack.c.l.b16 %v3973
        %v4042 = vunpack.c.l.b16 %v3974
        %v4043 = vpack.c.b16 %v4028, %v4027
        %v4044 = vpack.c.b16 %v4030, %v4029
        %v4045 = vpack.c.b16 %v4032, %v4031
        %v4046 = vpack.c.b16 %v4034, %v4033
        %v4047 = vpack.c.b16 %v4036, %v4035
        %v4048 = vpack.c.b16 %v4038, %v4037
        %v4049 = vpack.c.b16 %v4040, %v4039
        %v4050 = vpack.c.b16 %v4042, %v4041
        %4059 = vmatprep.subr.bf16.mxu0 0
        %4060 = vmatpush1.bf16.msra.mxu0 %v4043
        %4061 = vmatprep.subr.bf16.mxu0 0
        %4062 = vmatpush1.bf16.msra.mxu0 %v4044
        %4063 = vmatprep.subr.bf16.mxu0 0
        %4064 = vmatpush1.bf16.msra.mxu0 %v4045
        %4065 = vmatprep.subr.bf16.mxu0 0
        %4066 = vmatpush1.bf16.msra.mxu0 %v4046
        %4067 = vmatprep.subr.bf16.mxu0 0
        %4068 = vmatpush1.bf16.msra.mxu0 %v4047
        %4069 = vmatprep.subr.bf16.mxu0 0
        %4070 = vmatpush1.bf16.msra.mxu0 %v4048
        %4071 = vmatprep.subr.bf16.mxu0 0
        %4072 = vmatpush1.bf16.msra.mxu0 %v4049
        %4073 = vmatprep.subr.bf16.mxu0 0
        %4074 = vmatpush1.bf16.msra.mxu0 %v4050
        %4075 = vmatprep.subr.bf16.mxu0 0
        %4076 = vmatpush1.bf16.msra.mxu0 0
        %4077 = vmatprep.subr.bf16.mxu0 0
        %4078 = vmatpush1.bf16.msra.mxu0 0
        %4079 = vmatprep.subr.bf16.mxu0 0
        %4080 = vmatpush1.bf16.msra.mxu0 0
        %4081 = vmatprep.subr.bf16.mxu0 0
        %4082 = vmatpush1.bf16.msra.mxu0 0
        %4083 = vmatprep.subr.bf16.mxu0 0
        %4084 = vmatpush1.bf16.msra.mxu0 0
        %4085 = vmatprep.subr.bf16.mxu0 0
        %4086 = vmatpush1.bf16.msra.mxu0 0
        %4087 = vmatprep.subr.bf16.mxu0 0
        %4088 = vmatpush1.bf16.msra.mxu0 0
        %4089 = vmatprep.subr.bf16.mxu0 0
        %4090 = vmatpush1.bf16.msra.mxu0 0
        %4091 = vmatprep.mubr.bf16.mxu0 0
        %4092 = vmatmul.mubr.bf16.gmra.mrb[0].mxu0 %v3993
        %v4093 = vpop.f32.mrb[0].mxu0
        %v4094 = vadd.f32 0.0, %v4093
        %v4095 = vpop.f32.mrb[0].mxu0
        %v4096 = vpop.f32.mrb[0].mxu0
        %v4097 = vadd.f32 0.0, %v4096
        %v4098 = vpop.f32.mrb[0].mxu0
        %4099 = vmatprep.mubr.bf16.mxu0 0
        %4100 = vmatmul.mubr.bf16.gmra.mrb[0].mxu0 %v3994
        %v4101 = vpop.f32.mrb[0].mxu0
        %v4102 = vadd.f32 0.0, %v4101
        %v4103 = vpop.f32.mrb[0].mxu0
        %v4104 = vpop.f32.mrb[0].mxu0
        %v4105 = vadd.f32 0.0, %v4104
        %v4106 = vpop.f32.mrb[0].mxu0
        %4107 = vmatprep.mubr.bf16.mxu0 0
        %4108 = vmatmul.mubr.bf16.gmra.mrb[0].mxu0 %v3995
        %v4109 = vpop.f32.mrb[0].mxu0
        %v4110 = vadd.f32 0.0, %v4109
        %v4111 = vpop.f32.mrb[0].mxu0
        %v4112 = vpop.f32.mrb[0].mxu0
        %v4113 = vadd.f32 0.0, %v4112
        %v4114 = vpop.f32.mrb[0].mxu0
        %4115 = vmatprep.mubr.bf16.mxu0 0
        %4116 = vmatmul.mubr.bf16.gmra.mrb[0].mxu0 %v3996
        %v4117 = vpop.f32.mrb[0].mxu0
        %v4118 = vadd.f32 0.0, %v4117
        %v4119 = vpop.f32.mrb[0].mxu0
        %v4120 = vpop.f32.mrb[0].mxu0
        %v4121 = vadd.f32 0.0, %v4120
        %v4122 = vpop.f32.mrb[0].mxu0
        %4123 = vmatprep.mubr.bf16.mxu0 0
        %4124 = vmatmul.mubr.bf16.gmra.mrb[0].mxu0 %v3997
        %v4125 = vpop.f32.mrb[0].mxu0
        %v4126 = vadd.f32 0.0, %v4125
        %v4127 = vpop.f32.mrb[0].mxu0
        %v4128 = vpop.f32.mrb[0].mxu0
        %v4129 = vadd.f32 0.0, %v4128
        %v4130 = vpop.f32.mrb[0].mxu0
        %4131 = vmatprep.mubr.bf16.mxu0 0
        %4132 = vmatmul.mubr.bf16.gmra.mrb[0].mxu0 %v3998
        %v4133 = vpop.f32.mrb[0].mxu0
        %v4134 = vadd.f32 0.0, %v4133
        %v4135 = vpop.f32.mrb[0].mxu0
        %v4136 = vpop.f32.mrb[0].mxu0
        %v4137 = vadd.f32 0.0, %v4136
        %v4138 = vpop.f32.mrb[0].mxu0
        %4139 = vmatprep.mubr.bf16.mxu0 0
        %4140 = vmatmul.mubr.bf16.gmra.mrb[0].mxu0 %v3999
        %v4141 = vpop.f32.mrb[0].mxu0
        %v4142 = vadd.f32 0.0, %v4141
        %v4143 = vpop.f32.mrb[0].mxu0
        %v4144 = vpop.f32.mrb[0].mxu0
        %v4145 = vadd.f32 0.0, %v4144
        %v4146 = vpop.f32.mrb[0].mxu0
        %4147 = vmatprep.mubr.bf16.mxu0 0
        %4148 = vmatmul.mubr.bf16.gmra.mrb[0].mxu0 %v4000
        %v4149 = vpop.f32.mrb[0].mxu0
        %v4150 = vadd.f32 0.0, %v4149
        %v4151 = vpop.f32.mrb[0].mxu0
        %v4152 = vpop.f32.mrb[0].mxu0
        %v4153 = vadd.f32 0.0, %v4152
        %v4154 = vpop.f32.mrb[0].mxu0
        %4155 = vmatprep.mubr.bf16.mxu0 0
        %4156 = vmatmul.mubr.bf16.gmra.mrb[0].mxu0 %v4001
        %v4157 = vpop.f32.mrb[0].mxu0
        %v4158 = vadd.f32 0.0, %v4157
        %v4159 = vpop.f32.mrb[0].mxu0
        %v4160 = vpop.f32.mrb[0].mxu0
        %v4161 = vadd.f32 0.0, %v4160
        %v4162 = vpop.f32.mrb[0].mxu0
        %4163 = vdwg.mxu0
        %v4164 = vadd.f32 %v3816, %v4094
        %v4165 = vadd.f32 %v3817, %v4097
        %v4166 = vadd.f32 %v3818, %v4102
        %v4167 = vadd.f32 %v3819, %v4105
        %v4168 = vadd.f32 %v3820, %v4110
        %v4169 = vadd.f32 %v3821, %v4113
        %v4170 = vadd.f32 %v3822, %v4118
        %v4171 = vadd.f32 %v3823, %v4121
        %v4172 = vadd.f32 %v3824, %v4126
        %v4173 = vadd.f32 %v3825, %v4129
        %v4174 = vadd.f32 %v3826, %v4134
        %v4175 = vadd.f32 %v3827, %v4137
        %v4176 = vadd.f32 %v3828, %v4142
        %v4177 = vadd.f32 %v3829, %v4145
        %v4178 = vadd.f32 %v3830, %v4150
        %v4179 = vadd.f32 %v3831, %v4153
        %4196 = vrot.lane.b32.xlu0 %v4102, 64
        %v4197 = vpop.permute.xlu0 %4196
        %4198 = vrot.lane.b32.xlu0 %v4105, 64
        %v4199 = vpop.permute.xlu0 %4198
        %4200 = vrot.lane.b32.xlu0 %v4110, 64
        %v4201 = vpop.permute.xlu0 %4200
        %4202 = vrot.lane.b32.xlu0 %v4113, 64
        %v4203 = vpop.permute.xlu0 %4202
        %4204 = vrot.lane.b32.xlu0 %v4118, 64
        %v4205 = vpop.permute.xlu0 %4204
        %4206 = vrot.lane.b32.xlu0 %v4121, 64
        %v4207 = vpop.permute.xlu0 %4206
        %4208 = vrot.lane.b32.xlu0 %v4126, 64
        %v4209 = vpop.permute.xlu0 %4208
        %4210 = vrot.lane.b32.xlu0 %v4129, 64
        %v4211 = vpop.permute.xlu0 %4210
        %4212 = vrot.lane.b32.xlu0 %v4134, 64
        %v4213 = vpop.permute.xlu0 %4212
        %4214 = vrot.lane.b32.xlu0 %v4137, 64
        %v4215 = vpop.permute.xlu0 %4214
        %4216 = vrot.lane.b32.xlu0 %v4142, 64
        %v4217 = vpop.permute.xlu0 %4216
        %4218 = vrot.lane.b32.xlu0 %v4145, 64
        %v4219 = vpop.permute.xlu0 %4218
        %4220 = vrot.lane.b32.xlu0 %v4150, 64
        %v4221 = vpop.permute.xlu0 %4220
        %4222 = vrot.lane.b32.xlu0 %v4153, 64
        %v4223 = vpop.permute.xlu0 %4222
        %4224 = vrot.lane.b32.xlu0 %v4158, 64
        %v4225 = vpop.permute.xlu0 %4224
        %4226 = vrot.lane.b32.xlu0 %v4161, 64
        %v4227 = vpop.permute.xlu0 %4226
        %v4244 = vadd.f32 %v4164, %v4197
        %v4245 = vadd.f32 %v4165, %v4199
        %v4246 = vadd.f32 %v4166, %v4201
        %v4247 = vadd.f32 %v4167, %v4203
        %v4248 = vadd.f32 %v4168, %v4205
        %v4249 = vadd.f32 %v4169, %v4207
        %v4250 = vadd.f32 %v4170, %v4209
        %v4251 = vadd.f32 %v4171, %v4211
        %v4252 = vadd.f32 %v4172, %v4213
        %v4253 = vadd.f32 %v4173, %v4215
        %v4254 = vadd.f32 %v4174, %v4217
        %v4255 = vadd.f32 %v4175, %v4219
        %v4256 = vadd.f32 %v4176, %v4221
        %v4257 = vadd.f32 %v4177, %v4223
        %v4258 = vadd.f32 %v4178, %v4225
        %v4259 = vadd.f32 %v4179, %v4227
        %v4260 = vsel %vm1083, %v4244, 0.0
        %v4261 = vsel %vm1083, %v4245, 0.0
        %v4262 = vadd.f32 %v4260, %v4261
        %v4263 = vsel %vm1083, %v4246, 0.0
        %v4264 = vadd.f32 %v4262, %v4263
        %v4265 = vsel %vm1083, %v4247, 0.0
        %v4266 = vadd.f32 %v4264, %v4265
        %v4267 = vsel %vm1083, %v4248, 0.0
        %v4268 = vadd.f32 %v4266, %v4267
        %v4269 = vsel %vm1083, %v4249, 0.0
        %v4270 = vadd.f32 %v4268, %v4269
        %v4271 = vsel %vm1083, %v4250, 0.0
        %v4272 = vadd.f32 %v4270, %v4271
        %v4273 = vsel %vm1083, %v4251, 0.0
        %v4274 = vadd.f32 %v4272, %v4273
        %v4275 = vsel %vm1083, %v4252, 0.0
        %v4276 = vadd.f32 %v4274, %v4275
        %v4277 = vsel %vm1083, %v4253, 0.0
        %v4278 = vadd.f32 %v4276, %v4277
        %v4279 = vsel %vm1083, %v4254, 0.0
        %v4280 = vadd.f32 %v4278, %v4279
        %v4281 = vsel %vm1083, %v4255, 0.0
        %v4282 = vadd.f32 %v4280, %v4281
        %v4283 = vsel %vm1083, %v4256, 0.0
        %v4284 = vadd.f32 %v4282, %v4283
        %v4285 = vsel %vm1083, %v4257, 0.0
        %v4286 = vadd.f32 %v4284, %v4285
        %v4287 = vsel %vm1083, %v4258, 0.0
        %v4288 = vadd.f32 %v4286, %v4287
        %v4289 = vsel %vm1083, %v4259, 0.0
        %v4290 = vadd.f32 %v4288, %v4289
        %v4291 = vrot.slane %v4290, 4
        %v4292 = vadd.f32 %v4290, %v4291
        %v4293 = vrot.slane %v4292, 2
        %v4294 = vadd.f32 %v4292, %v4293
        %v4295 = vrot.slane %v4294, 1
        %v4296 = vadd.f32 %v4294, %v4295
        %v4297 = vmul.f32 %v4296, 0.0078125
        %v4298 = vmul.f32 %v4244, %v4244
        %v4299 = vmul.f32 %v4245, %v4245
        %v4300 = vmul.f32 %v4246, %v4246
        %v4301 = vmul.f32 %v4247, %v4247
        %v4302 = vmul.f32 %v4248, %v4248
        %v4303 = vmul.f32 %v4249, %v4249
        %v4304 = vmul.f32 %v4250, %v4250
        %v4305 = vmul.f32 %v4251, %v4251
        %v4306 = vmul.f32 %v4252, %v4252
        %v4307 = vmul.f32 %v4253, %v4253
        %v4308 = vmul.f32 %v4254, %v4254
        %v4309 = vmul.f32 %v4255, %v4255
        %v4310 = vmul.f32 %v4256, %v4256
        %v4311 = vmul.f32 %v4257, %v4257
        %v4312 = vmul.f32 %v4258, %v4258
        %v4313 = vmul.f32 %v4259, %v4259
        %v4314 = vsel %vm1083, %v4298, 0.0
        %v4315 = vsel %vm1083, %v4299, 0.0
        %v4316 = vadd.f32 %v4314, %v4315
        %v4317 = vsel %vm1083, %v4300, 0.0
        %v4318 = vadd.f32 %v4316, %v4317
        %v4319 = vsel %vm1083, %v4301, 0.0
        %v4320 = vadd.f32 %v4318, %v4319
        %v4321 = vsel %vm1083, %v4302, 0.0
        %v4322 = vadd.f32 %v4320, %v4321
        %v4323 = vsel %vm1083, %v4303, 0.0
        %v4324 = vadd.f32 %v4322, %v4323
        %v4325 = vsel %vm1083, %v4304, 0.0
        %v4326 = vadd.f32 %v4324, %v4325
        %v4327 = vsel %vm1083, %v4305, 0.0
        %v4328 = vadd.f32 %v4326, %v4327
        %v4329 = vsel %vm1083, %v4306, 0.0
        %v4330 = vadd.f32 %v4328, %v4329
        %v4331 = vsel %vm1083, %v4307, 0.0
        %v4332 = vadd.f32 %v4330, %v4331
        %v4333 = vsel %vm1083, %v4308, 0.0
        %v4334 = vadd.f32 %v4332, %v4333
        %v4335 = vsel %vm1083, %v4309, 0.0
        %v4336 = vadd.f32 %v4334, %v4335
        %v4337 = vsel %vm1083, %v4310, 0.0
        %v4338 = vadd.f32 %v4336, %v4337
        %v4339 = vsel %vm1083, %v4311, 0.0
        %v4340 = vadd.f32 %v4338, %v4339
        %v4341 = vsel %vm1083, %v4312, 0.0
        %v4342 = vadd.f32 %v4340, %v4341
        %v4343 = vsel %vm1083, %v4313, 0.0
        %v4344 = vadd.f32 %v4342, %v4343
        %v4345 = vrot.slane %v4344, 4
        %v4346 = vadd.f32 %v4344, %v4345
        %v4347 = vrot.slane %v4346, 2
        %v4348 = vadd.f32 %v4346, %v4347
        %v4349 = vrot.slane %v4348, 1
        %v4350 = vadd.f32 %v4348, %v4349
        %v4351 = vmul.f32 %v4350, 0.0078125
        %v4352 = vmul.f32 %v4297, %v4297
        %v4353 = vsub.f32 %v4351, %v4352
        %v4354 = vsub.f32 %v4244, %v4297
        %v4355 = vsub.f32 %v4245, %v4297
        %v4356 = vsub.f32 %v4246, %v4297
        %v4357 = vsub.f32 %v4247, %v4297
        %v4358 = vsub.f32 %v4248, %v4297
        %v4359 = vsub.f32 %v4249, %v4297
        %v4360 = vsub.f32 %v4250, %v4297
        %v4361 = vsub.f32 %v4251, %v4297
        %v4362 = vsub.f32 %v4252, %v4297
        %v4363 = vsub.f32 %v4253, %v4297
        %v4364 = vsub.f32 %v4254, %v4297
        %v4365 = vsub.f32 %v4255, %v4297
        %v4366 = vsub.f32 %v4256, %v4297
        %v4367 = vsub.f32 %v4257, %v4297
        %v4368 = vsub.f32 %v4258, %v4297
        %v4369 = vsub.f32 %v4259, %v4297
        %v4370 = vadd.f32 %v4353, 1e-05
        %v4371 = vrsqrt.pop %v4370
        %v4372 = vmul.f32 %v4354, %v4371
        %v4373 = vmul.f32 %v4355, %v4371
        %v4374 = vmul.f32 %v4356, %v4371
        %v4375 = vmul.f32 %v4357, %v4371
        %v4376 = vmul.f32 %v4358, %v4371
        %v4377 = vmul.f32 %v4359, %v4371
        %v4378 = vmul.f32 %v4360, %v4371
        %v4379 = vmul.f32 %v4361, %v4371
        %v4380 = vmul.f32 %v4362, %v4371
        %v4381 = vmul.f32 %v4363, %v4371
        %v4382 = vmul.f32 %v4364, %v4371
        %v4383 = vmul.f32 %v4365, %v4371
        %v4384 = vmul.f32 %v4366, %v4371
        %v4385 = vmul.f32 %v4367, %v4371
        %v4386 = vmul.f32 %v4368, %v4371
        %v4387 = vmul.f32 %v4369, %v4371
        %v4388 = vld [vmem:[%s8] sm:$0x1]
        %v4390 = vlaneseq
        %v4391 = vshrl.u32 %v4390, 7
        %v4392 = vsub.s32 0, %v4391
        %v4393 = vrot.slane %v4388, %v4392
        %v4395 = vmul.f32 %v4372, %v4393
        %v4396 = vmul.f32 %v4373, %v4393
        %v4397 = vmul.f32 %v4374, %v4393
        %v4398 = vmul.f32 %v4375, %v4393
        %v4399 = vmul.f32 %v4376, %v4393
        %v4400 = vmul.f32 %v4377, %v4393
        %v4401 = vmul.f32 %v4378, %v4393
        %v4402 = vmul.f32 %v4379, %v4393
        %v4403 = vmul.f32 %v4380, %v4393
        %v4404 = vmul.f32 %v4381, %v4393
        %v4405 = vmul.f32 %v4382, %v4393
        %v4406 = vmul.f32 %v4383, %v4393
        %v4407 = vmul.f32 %v4384, %v4393
        %v4408 = vmul.f32 %v4385, %v4393
        %v4409 = vmul.f32 %v4386, %v4393
        %v4410 = vmul.f32 %v4387, %v4393
        %v4411 = vld [vmem:[%s9] sm:$0x1]
        %v4413 = vlaneseq
        %v4414 = vshrl.u32 %v4413, 7
        %v4415 = vsub.s32 0, %v4414
        %v4416 = vrot.slane %v4411, %v4415
        %v4418 = vadd.f32 %v4395, %v4416
        %v4419 = vadd.f32 %v4396, %v4416
        %v4420 = vadd.f32 %v4397, %v4416
        %v4421 = vadd.f32 %v4398, %v4416
        %v4422 = vadd.f32 %v4399, %v4416
        %v4423 = vadd.f32 %v4400, %v4416
        %v4424 = vadd.f32 %v4401, %v4416
        %v4425 = vadd.f32 %v4402, %v4416
        %v4426 = vadd.f32 %v4403, %v4416
        %v4427 = vadd.f32 %v4404, %v4416
        %v4428 = vadd.f32 %v4405, %v4416
        %v4429 = vadd.f32 %v4406, %v4416
        %v4430 = vadd.f32 %v4407, %v4416
        %v4431 = vadd.f32 %v4408, %v4416
        %v4432 = vadd.f32 %v4409, %v4416
        %v4433 = vadd.f32 %v4410, %v4416
        %vm4434 = vcmp.ge.f32.partialorder %v4418, 0.0
        %vm4435 = vcmp.ge.f32.partialorder %v4419, 0.0
        %vm4436 = vcmp.ge.f32.partialorder %v4420, 0.0
        %vm4437 = vcmp.ge.f32.partialorder %v4421, 0.0
        %vm4438 = vcmp.ge.f32.partialorder %v4422, 0.0
        %vm4439 = vcmp.ge.f32.partialorder %v4423, 0.0
        %vm4440 = vcmp.ge.f32.partialorder %v4424, 0.0
        %vm4441 = vcmp.ge.f32.partialorder %v4425, 0.0
        %vm4442 = vcmp.ge.f32.partialorder %v4426, 0.0
        %vm4443 = vcmp.ge.f32.partialorder %v4427, 0.0
        %vm4444 = vcmp.ge.f32.partialorder %v4428, 0.0
        %vm4445 = vcmp.ge.f32.partialorder %v4429, 0.0
        %vm4446 = vcmp.ge.f32.partialorder %v4430, 0.0
        %vm4447 = vcmp.ge.f32.partialorder %v4431, 0.0
        %vm4448 = vcmp.ge.f32.partialorder %v4432, 0.0
        %vm4449 = vcmp.ge.f32.partialorder %v4433, 0.0
        %v4450 = vld [vmem:[%s10] sm:$0x1]
        %v4452 = vlaneseq
        %v4453 = vshrl.u32 %v4452, 7
        %v4454 = vsub.s32 0, %v4453
        %v4455 = vrot.slane %v4450, %v4454
        %v4457 = vmul.f32 %v4455, %v4418
        %v4458 = vmul.f32 %v4455, %v4419
        %v4459 = vmul.f32 %v4455, %v4420
        %v4460 = vmul.f32 %v4455, %v4421
        %v4461 = vmul.f32 %v4455, %v4422
        %v4462 = vmul.f32 %v4455, %v4423
        %v4463 = vmul.f32 %v4455, %v4424
        %v4464 = vmul.f32 %v4455, %v4425
        %v4465 = vmul.f32 %v4455, %v4426
        %v4466 = vmul.f32 %v4455, %v4427
        %v4467 = vmul.f32 %v4455, %v4428
        %v4468 = vmul.f32 %v4455, %v4429
        %v4469 = vmul.f32 %v4455, %v4430
        %v4470 = vmul.f32 %v4455, %v4431
        %v4471 = vmul.f32 %v4455, %v4432
        %v4472 = vmul.f32 %v4455, %v4433
        %v4473 = vsel %vm4434, %v4418, %v4457
        %v4474 = vsel %vm4435, %v4419, %v4458
        %v4475 = vsel %vm4436, %v4420, %v4459
        %v4476 = vsel %vm4437, %v4421, %v4460
        %v4477 = vsel %vm4438, %v4422, %v4461
        %v4478 = vsel %vm4439, %v4423, %v4462
        %v4479 = vsel %vm4440, %v4424, %v4463
        %v4480 = vsel %vm4441, %v4425, %v4464
        %v4481 = vsel %vm4442, %v4426, %v4465
        %v4482 = vsel %vm4443, %v4427, %v4466
        %v4483 = vsel %vm4444, %v4428, %v4467
        %v4484 = vsel %vm4445, %v4429, %v4468
        %v4485 = vsel %vm4446, %v4430, %v4469
        %v4486 = vsel %vm4447, %v4431, %v4470
        %v4487 = vsel %vm4448, %v4432, %v4471
        %v4488 = vsel %vm4449, %v4433, %v4472
        %v4489 = vpack.c.bf16 %v4473, %v4473
        %v4490 = vpack.c.bf16 %v4474, %v4474
        %v4491 = vpack.c.bf16 %v4475, %v4475
        %v4492 = vpack.c.bf16 %v4476, %v4476
        %v4493 = vpack.c.bf16 %v4477, %v4477
        %v4494 = vpack.c.bf16 %v4478, %v4478
        %v4495 = vpack.c.bf16 %v4479, %v4479
        %v4496 = vpack.c.bf16 %v4480, %v4480
        %v4497 = vpack.c.bf16 %v4481, %v4481
        %v4498 = vpack.c.bf16 %v4482, %v4482
        %v4499 = vpack.c.bf16 %v4483, %v4483
        %v4500 = vpack.c.bf16 %v4484, %v4484
        %v4501 = vpack.c.bf16 %v4485, %v4485
        %v4502 = vpack.c.bf16 %v4486, %v4486
        %v4503 = vpack.c.bf16 %v4487, %v4487
        %v4504 = vpack.c.bf16 %v4488, %v4488
        %v4521 = vunpack.c.l.b16 %v4489
        %v4522 = vunpack.c.l.b16 %v4490
        %v4523 = vunpack.c.l.b16 %v4491
        %v4524 = vunpack.c.l.b16 %v4492
        %v4525 = vunpack.c.l.b16 %v4493
        %v4526 = vunpack.c.l.b16 %v4494
        %v4527 = vunpack.c.l.b16 %v4495
        %v4528 = vunpack.c.l.b16 %v4496
        %v4529 = vunpack.c.l.b16 %v4497
        %v4530 = vunpack.c.l.b16 %v4498
        %v4531 = vunpack.c.l.b16 %v4499
        %v4532 = vunpack.c.l.b16 %v4500
        %v4533 = vunpack.c.l.b16 %v4501
        %v4534 = vunpack.c.l.b16 %v4502
        %v4535 = vunpack.c.l.b16 %v4503
        %v4536 = vunpack.c.l.b16 %v4504
        %v4537 = vpack.c.b16 %v4521, %v4521
        %v4538 = vpack.c.b16 %v4522, %v4522
        %v4539 = vpack.c.b16 %v4523, %v4523
        %v4540 = vpack.c.b16 %v4524, %v4524
        %v4541 = vpack.c.b16 %v4525, %v4525
        %v4542 = vpack.c.b16 %v4526, %v4526
        %v4543 = vpack.c.b16 %v4527, %v4527
        %v4544 = vpack.c.b16 %v4528, %v4528
        %v4545 = vpack.c.b16 %v4529, %v4529
        %v4546 = vpack.c.b16 %v4530, %v4530
        %v4547 = vpack.c.b16 %v4531, %v4531
        %v4548 = vpack.c.b16 %v4532, %v4532
        %v4549 = vpack.c.b16 %v4533, %v4533
        %v4550 = vpack.c.b16 %v4534, %v4534
        %v4551 = vpack.c.b16 %v4535, %v4535
        %v4552 = vpack.c.b16 %v4536, %v4536
        %v4554 = vshrl.u32 %v4537, 16
        %v4556 = vrot.slane %v4554, 7
        %v4557 = vshll.u32 %v4537, 16
        %v4559 = vor.u32 %v4556, %v4557
        %v4560 = vrot.slane %v4556, 4
        %v4562 = vshrl.u32 %v4538, 16
        %v4564 = vrot.slane %v4562, 7
        %v4565 = vshll.u32 %v4538, 16
        %v4567 = vor.u32 %v4564, %v4565
        %v4568 = vrot.slane %v4564, 4
        %v4570 = vshrl.u32 %v4539, 16
        %v4572 = vrot.slane %v4570, 7
        %v4573 = vshll.u32 %v4539, 16
        %v4575 = vor.u32 %v4572, %v4573
        %v4576 = vrot.slane %v4572, 4
        %v4578 = vshrl.u32 %v4540, 16
        %v4580 = vrot.slane %v4578, 7
        %v4581 = vshll.u32 %v4540, 16
        %v4583 = vor.u32 %v4580, %v4581
        %v4584 = vrot.slane %v4580, 4
        %v4586 = vshrl.u32 %v4541, 16
        %v4588 = vrot.slane %v4586, 7
        %v4589 = vshll.u32 %v4541, 16
        %v4591 = vor.u32 %v4588, %v4589
        %v4592 = vrot.slane %v4588, 4
        %v4594 = vshrl.u32 %v4542, 16
        %v4596 = vrot.slane %v4594, 7
        %v4597 = vshll.u32 %v4542, 16
        %v4599 = vor.u32 %v4596, %v4597
        %v4600 = vrot.slane %v4596, 4
        %v4602 = vshrl.u32 %v4543, 16
        %v4604 = vrot.slane %v4602, 7
        %v4605 = vshll.u32 %v4543, 16
        %v4607 = vor.u32 %v4604, %v4605
        %v4608 = vrot.slane %v4604, 4
        %v4610 = vshrl.u32 %v4544, 16
        %v4612 = vrot.slane %v4610, 7
        %v4613 = vshll.u32 %v4544, 16
        %v4615 = vor.u32 %v4612, %v4613
        %v4616 = vrot.slane %v4612, 4
        %v4618 = vshrl.u32 %v4545, 16
        %v4620 = vrot.slane %v4618, 7
        %v4621 = vshll.u32 %v4545, 16
        %v4623 = vor.u32 %v4620, %v4621
        %v4624 = vrot.slane %v4620, 4
        %v4626 = vshrl.u32 %v4546, 16
        %v4628 = vrot.slane %v4626, 7
        %v4629 = vshll.u32 %v4546, 16
        %v4631 = vor.u32 %v4628, %v4629
        %v4632 = vrot.slane %v4628, 4
        %v4634 = vshrl.u32 %v4547, 16
        %v4636 = vrot.slane %v4634, 7
        %v4637 = vshll.u32 %v4547, 16
        %v4639 = vor.u32 %v4636, %v4637
        %v4640 = vrot.slane %v4636, 4
        %v4642 = vshrl.u32 %v4548, 16
        %v4644 = vrot.slane %v4642, 7
        %v4645 = vshll.u32 %v4548, 16
        %v4647 = vor.u32 %v4644, %v4645
        %v4648 = vrot.slane %v4644, 4
        %v4650 = vshrl.u32 %v4549, 16
        %v4652 = vrot.slane %v4650, 7
        %v4653 = vshll.u32 %v4549, 16
        %v4655 = vor.u32 %v4652, %v4653
        %v4656 = vrot.slane %v4652, 4
        %v4658 = vshrl.u32 %v4550, 16
        %v4660 = vrot.slane %v4658, 7
        %v4661 = vshll.u32 %v4550, 16
        %v4663 = vor.u32 %v4660, %v4661
        %v4664 = vrot.slane %v4660, 4
        %v4666 = vshrl.u32 %v4551, 16
        %v4668 = vrot.slane %v4666, 7
        %v4669 = vshll.u32 %v4551, 16
        %v4671 = vor.u32 %v4668, %v4669
        %v4672 = vrot.slane %v4668, 4
        %v4674 = vshrl.u32 %v4552, 16
        %v4676 = vrot.slane %v4674, 7
        %v4677 = vshll.u32 %v4552, 16
        %v4679 = vor.u32 %v4676, %v4677
        %v4680 = vrot.slane %v4676, 4
        %v4713 = vld [vmem:[%s880 + $0x4] sm:$0xf]
        %v4714 = vsel %vm883, %v4559, %v4713
        %4715 = vst [vmem:[%s880 + $0x4] sm:$0xf] %v4714
        %v4716 = vld [vmem:[%s880 + $0xc] sm:$0x1]
        %v4717 = vsel %vm889, %v4560, %v4716
        %4718 = vst [vmem:[%s880 + $0xc] sm:$0x1] %v4717
        %v4719 = vld [vmem:[%s880 + $0x14] sm:$0xf]
        %v4720 = vsel %vm883, %v4567, %v4719
        %4721 = vst [vmem:[%s880 + $0x14] sm:$0xf] %v4720
        %v4722 = vld [vmem:[%s880 + $0x1c] sm:$0x1]
        %v4723 = vsel %vm889, %v4568, %v4722
        %4724 = vst [vmem:[%s880 + $0x1c] sm:$0x1] %v4723
        %v4725 = vld [vmem:[%s880 + $0x24] sm:$0xf]
        %v4726 = vsel %vm883, %v4575, %v4725
        %4727 = vst [vmem:[%s880 + $0x24] sm:$0xf] %v4726
        %v4728 = vld [vmem:[%s880 + $0x2c] sm:$0x1]
        %v4729 = vsel %vm889, %v4576, %v4728
        %4730 = vst [vmem:[%s880 + $0x2c] sm:$0x1] %v4729
        %v4731 = vld [vmem:[%s880 + $0x34] sm:$0xf]
        %v4732 = vsel %vm883, %v4583, %v4731
        %4733 = vst [vmem:[%s880 + $0x34] sm:$0xf] %v4732
        %v4734 = vld [vmem:[%s880 + $0x3c] sm:$0x1]
        %v4735 = vsel %vm889, %v4584, %v4734
        %4736 = vst [vmem:[%s880 + $0x3c] sm:$0x1] %v4735
        %v4737 = vld [vmem:[%s880 + $0x44] sm:$0xf]
        %v4738 = vsel %vm883, %v4591, %v4737
        %4739 = vst [vmem:[%s880 + $0x44] sm:$0xf] %v4738
        %v4740 = vld [vmem:[%s880 + $0x4c] sm:$0x1]
        %v4741 = vsel %vm889, %v4592, %v4740
        %4742 = vst [vmem:[%s880 + $0x4c] sm:$0x1] %v4741
        %v4743 = vld [vmem:[%s880 + $0x54] sm:$0xf]
        %v4744 = vsel %vm883, %v4599, %v4743
        %4745 = vst [vmem:[%s880 + $0x54] sm:$0xf] %v4744
        %v4746 = vld [vmem:[%s880 + $0x5c] sm:$0x1]
        %v4747 = vsel %vm889, %v4600, %v4746
        %4748 = vst [vmem:[%s880 + $0x5c] sm:$0x1] %v4747
        %v4749 = vld [vmem:[%s880 + $0x64] sm:$0xf]
        %v4750 = vsel %vm883, %v4607, %v4749
        %4751 = vst [vmem:[%s880 + $0x64] sm:$0xf] %v4750
        %v4752 = vld [vmem:[%s880 + $0x6c] sm:$0x1]
        %v4753 = vsel %vm889, %v4608, %v4752
        %4754 = vst [vmem:[%s880 + $0x6c] sm:$0x1] %v4753
        %v4755 = vld [vmem:[%s880 + $0x74] sm:$0xf]
        %v4756 = vsel %vm883, %v4615, %v4755
        %4757 = vst [vmem:[%s880 + $0x74] sm:$0xf] %v4756
        %v4758 = vld [vmem:[%s880 + $0x7c] sm:$0x1]
        %v4759 = vsel %vm889, %v4616, %v4758
        %4760 = vst [vmem:[%s880 + $0x7c] sm:$0x1] %v4759
        %v4761 = vld [vmem:[%s880 + $0x84] sm:$0xf]
        %v4762 = vsel %vm883, %v4623, %v4761
        %4763 = vst [vmem:[%s880 + $0x84] sm:$0xf] %v4762
        %v4764 = vld [vmem:[%s880 + $0x8c] sm:$0x1]
        %v4765 = vsel %vm889, %v4624, %v4764
        %4766 = vst [vmem:[%s880 + $0x8c] sm:$0x1] %v4765
        %v4767 = vld [vmem:[%s880 + $0x94] sm:$0xf]
        %v4768 = vsel %vm883, %v4631, %v4767
        %4769 = vst [vmem:[%s880 + $0x94] sm:$0xf] %v4768
        %v4770 = vld [vmem:[%s880 + $0x9c] sm:$0x1]
        %v4771 = vsel %vm889, %v4632, %v4770
        %4772 = vst [vmem:[%s880 + $0x9c] sm:$0x1] %v4771
        %v4773 = vld [vmem:[%s880 + $0xa4] sm:$0xf]
        %v4774 = vsel %vm883, %v4639, %v4773
        %4775 = vst [vmem:[%s880 + $0xa4] sm:$0xf] %v4774
        %v4776 = vld [vmem:[%s880 + $0xac] sm:$0x1]
        %v4777 = vsel %vm889, %v4640, %v4776
        %4778 = vst [vmem:[%s880 + $0xac] sm:$0x1] %v4777
        %v4779 = vld [vmem:[%s880 + $0xb4] sm:$0xf]
        %v4780 = vsel %vm883, %v4647, %v4779
        %4781 = vst [vmem:[%s880 + $0xb4] sm:$0xf] %v4780
        %v4782 = vld [vmem:[%s880 + $0xbc] sm:$0x1]
        %v4783 = vsel %vm889, %v4648, %v4782
        %4784 = vst [vmem:[%s880 + $0xbc] sm:$0x1] %v4783
        %v4785 = vld [vmem:[%s880 + $0xc4] sm:$0xf]
        %v4786 = vsel %vm883, %v4655, %v4785
        %4787 = vst [vmem:[%s880 + $0xc4] sm:$0xf] %v4786
        %v4788 = vld [vmem:[%s880 + $0xcc] sm:$0x1]
        %v4789 = vsel %vm889, %v4656, %v4788
        %4790 = vst [vmem:[%s880 + $0xcc] sm:$0x1] %v4789
        %v4791 = vld [vmem:[%s880 + $0xd4] sm:$0xf]
        %v4792 = vsel %vm883, %v4663, %v4791
        %4793 = vst [vmem:[%s880 + $0xd4] sm:$0xf] %v4792
        %v4794 = vld [vmem:[%s880 + $0xdc] sm:$0x1]
        %v4795 = vsel %vm889, %v4664, %v4794
        %4796 = vst [vmem:[%s880 + $0xdc] sm:$0x1] %v4795
        %v4797 = vld [vmem:[%s880 + $0xe4] sm:$0xf]
        %v4798 = vsel %vm883, %v4671, %v4797
        %4799 = vst [vmem:[%s880 + $0xe4] sm:$0xf] %v4798
        %v4800 = vld [vmem:[%s880 + $0xec] sm:$0x1]
        %v4801 = vsel %vm889, %v4672, %v4800
        %4802 = vst [vmem:[%s880 + $0xec] sm:$0x1] %v4801
        %v4803 = vld [vmem:[%s880 + $0xf4] sm:$0xf]
        %v4804 = vsel %vm883, %v4679, %v4803
        %4805 = vst [vmem:[%s880 + $0xf4] sm:$0xf] %v4804
        %v4806 = vld [vmem:[%s880 + $0xfc] sm:$0x1]
        %v4807 = vsel %vm889, %v4680, %v4806
        %4808 = vst [vmem:[%s880 + $0xfc] sm:$0x1] %v4807
        %v4809 = vld [vmem:[%s12] sm:$0x1]
        %v4811 = vlaneseq
        %v4812 = vshrl.u32 %v4811, 7
        %v4813 = vsub.s32 0, %v4812
        %v4814 = vrot.slane %v4809, %v4813
        %s4816 = scalar_lea.vmem [#allocation2], 64
        %v4817 = vld [vmem:[%s4816] sm:$0xff]
        %v4818 = vld [vmem:[%s4816 + $0x10] sm:$0xff]
        %v4819 = vld [vmem:[%s4816 + $0x20] sm:$0xff]
        %v4820 = vld [vmem:[%s4816 + $0x30] sm:$0xff]
        %v4821 = vld [vmem:[%s4816 + $0x40] sm:$0xff]
        %v4822 = vld [vmem:[%s4816 + $0x50] sm:$0xff]
        %v4823 = vld [vmem:[%s4816 + $0x60] sm:$0xff]
        %v4824 = vld [vmem:[%s4816 + $0x70] sm:$0xff]
        %v4825 = vld [vmem:[%s4816 + $0x80] sm:$0xff]
        %v4826 = vld [vmem:[%s4816 + $0x90] sm:$0xff]
        %v4827 = vld [vmem:[%s4816 + $0xa0] sm:$0xff]
        %v4828 = vld [vmem:[%s4816 + $0xb0] sm:$0xff]
        %v4829 = vld [vmem:[%s4816 + $0xc0] sm:$0xff]
        %v4830 = vld [vmem:[%s4816 + $0xd0] sm:$0xff]
        %v4831 = vld [vmem:[%s4816 + $0xe0] sm:$0xff]
        %v4832 = vld [vmem:[%s4816 + $0xf0] sm:$0xff]
        %v4833 = vld [vmem:[%s4816 + $0x100] sm:$0xff]
        %v4834 = vld [vmem:[%s4816 + $0x110] sm:$0xff]
        %v4835 = vld [vmem:[%s4816 + $0x120] sm:$0xff]
        %v4836 = vld [vmem:[%s4816 + $0x130] sm:$0xff]
        %v4837 = vld [vmem:[%s11] sm:$0xf]
        %v4838 = vld [vmem:[%s11 + $0x4] sm:$0xf]
        %v4839 = vld [vmem:[%s11 + $0x8] sm:$0xf]
        %v4840 = vld [vmem:[%s11 + $0xc] sm:$0xf]
        %v4841 = vld [vmem:[%s11 + $0x10] sm:$0xf]
        %v4842 = vld [vmem:[%s11 + $0x14] sm:$0xf]
        %v4843 = vld [vmem:[%s11 + $0x18] sm:$0xf]
        %v4844 = vld [vmem:[%s11 + $0x1c] sm:$0xf]
        %v4845 = vld [vmem:[%s11 + $0x20] sm:$0xf]
        %v4846 = vld [vmem:[%s11 + $0x24] sm:$0xf]
        %v4847 = vld [vmem:[%s11 + $0x28] sm:$0xf]
        %v4848 = vld [vmem:[%s11 + $0x2c] sm:$0xf]
        %v4849 = vld [vmem:[%s11 + $0x30] sm:$0xf]
        %v4850 = vld [vmem:[%s11 + $0x34] sm:$0xf]
        %v4851 = vld [vmem:[%s11 + $0x38] sm:$0xf]
        %v4852 = vld [vmem:[%s11 + $0x3c] sm:$0xf]
        %v4853 = vld [vmem:[%s11 + $0x40] sm:$0xf]
        %v4854 = vld [vmem:[%s11 + $0x44] sm:$0xf]
        %v4855 = vld [vmem:[%s11 + $0x48] sm:$0xf]
        %v4856 = vld [vmem:[%s11 + $0x4c] sm:$0xf]
        %v4857 = vld [vmem:[%s11 + $0x50] sm:$0xf]
        %v4858 = vld [vmem:[%s11 + $0x54] sm:$0xf]
        %v4859 = vld [vmem:[%s11 + $0x58] sm:$0xf]
        %v4860 = vld [vmem:[%s11 + $0x5c] sm:$0xf]
        %v4881 = vunpack.c.l.b16 %v4817
        %v4882 = vunpack.c.h.b16 %v4817
        %v4883 = vunpack.c.l.b16 %v4818
        %v4884 = vunpack.c.h.b16 %v4818
        %v4885 = vunpack.c.l.b16 %v4819
        %v4886 = vunpack.c.h.b16 %v4819
        %v4887 = vunpack.c.l.b16 %v4820
        %v4888 = vunpack.c.h.b16 %v4820
        %v4889 = vunpack.c.l.b16 %v4821
        %v4890 = vunpack.c.h.b16 %v4821
        %v4891 = vunpack.c.l.b16 %v4822
        %v4892 = vunpack.c.h.b16 %v4822
        %v4893 = vunpack.c.l.b16 %v4823
        %v4894 = vunpack.c.h.b16 %v4823
        %v4895 = vunpack.c.l.b16 %v4824
        %v4896 = vunpack.c.h.b16 %v4824
        %v4897 = vunpack.c.l.b16 %v4825
        %v4898 = vunpack.c.h.b16 %v4825
        %v4899 = vunpack.c.l.b16 %v4826
        %v4900 = vunpack.c.h.b16 %v4826
        %v4901 = vunpack.c.l.b16 %v4827
        %v4902 = vunpack.c.h.b16 %v4827
        %v4903 = vunpack.c.l.b16 %v4828
        %v4904 = vunpack.c.h.b16 %v4828
        %v4905 = vunpack.c.l.b16 %v4829
        %v4906 = vunpack.c.h.b16 %v4829
        %v4907 = vunpack.c.l.b16 %v4830
        %v4908 = vunpack.c.h.b16 %v4830
        %v4909 = vunpack.c.l.b16 %v4831
        %v4910 = vunpack.c.h.b16 %v4831
        %v4911 = vunpack.c.l.b16 %v4832
        %v4912 = vunpack.c.h.b16 %v4832
        %v4913 = vunpack.c.l.b16 %v4833
        %v4914 = vunpack.c.h.b16 %v4833
        %v4915 = vunpack.c.l.b16 %v4834
        %v4916 = vunpack.c.h.b16 %v4834
        %v4917 = vunpack.c.l.b16 %v4835
        %v4918 = vunpack.c.h.b16 %v4835
        %v4919 = vunpack.c.l.b16 %v4836
        %v4920 = vunpack.c.h.b16 %v4836
        %v4921 = vpack.c.b16 %v4883, %v4881
        %v4922 = vpack.c.b16 %v4884, %v4882
        %v4923 = vpack.c.b16 %v4887, %v4885
        %v4924 = vpack.c.b16 %v4888, %v4886
        %v4925 = vpack.c.b16 %v4891, %v4889
        %v4926 = vpack.c.b16 %v4892, %v4890
        %v4927 = vpack.c.b16 %v4895, %v4893
        %v4928 = vpack.c.b16 %v4896, %v4894
        %v4929 = vpack.c.b16 %v4899, %v4897
        %v4930 = vpack.c.b16 %v4900, %v4898
        %v4931 = vpack.c.b16 %v4903, %v4901
        %v4932 = vpack.c.b16 %v4904, %v4902
        %v4933 = vpack.c.b16 %v4907, %v4905
        %v4934 = vpack.c.b16 %v4908, %v4906
        %v4935 = vpack.c.b16 %v4911, %v4909
        %v4936 = vpack.c.b16 %v4912, %v4910
        %v4937 = vpack.c.b16 %v4915, %v4913
        %v4938 = vpack.c.b16 %v4916, %v4914
        %v4939 = vpack.c.b16 %v4919, %v4917
        %v4940 = vpack.c.b16 %v4920, %v4918
        %v4975 = vunpack.c.l.b16 %v4837
        %v4976 = vunpack.c.l.b16 %v4838
        %v4977 = vunpack.c.l.b16 %v4839
        %v4978 = vunpack.c.l.b16 %v4840
        %v4979 = vunpack.c.l.b16 %v4841
        %v4980 = vunpack.c.l.b16 %v4842
        %v4981 = vunpack.c.l.b16 %v4843
        %v4982 = vunpack.c.l.b16 %v4844
        %v4983 = vunpack.c.l.b16 %v4845
        %v4984 = vunpack.c.l.b16 %v4846
        %v4985 = vunpack.c.l.b16 %v4847
        %v4986 = vunpack.c.l.b16 %v4848
        %v4987 = vunpack.c.l.b16 %v4849
        %v4988 = vunpack.c.l.b16 %v4850
        %v4989 = vunpack.c.l.b16 %v4851
        %v4990 = vunpack.c.l.b16 %v4852
        %v4991 = vunpack.c.l.b16 %v4853
        %v4992 = vunpack.c.l.b16 %v4854
        %v4993 = vunpack.c.l.b16 %v4855
        %v4994 = vunpack.c.l.b16 %v4856
        %v4995 = vunpack.c.l.b16 %v4857
        %v4996 = vunpack.c.l.b16 %v4858
        %v4997 = vunpack.c.l.b16 %v4859
        %v4998 = vunpack.c.l.b16 %v4860
        %v4999 = vpack.c.b16 %v4976, %v4975
        %v5000 = vpack.c.b16 %v4978, %v4977
        %v5001 = vpack.c.b16 %v4980, %v4979
        %v5002 = vpack.c.b16 %v4982, %v4981
        %v5003 = vpack.c.b16 %v4984, %v4983
        %v5004 = vpack.c.b16 %v4986, %v4985
        %v5005 = vpack.c.b16 %v4988, %v4987
        %v5006 = vpack.c.b16 %v4990, %v4989
        %v5007 = vpack.c.b16 %v4992, %v4991
        %v5008 = vpack.c.b16 %v4994, %v4993
        %v5009 = vpack.c.b16 %v4996, %v4995
        %v5010 = vpack.c.b16 %v4998, %v4997
        %v5024 = vsel %vm1083, %v4922, 0
        %v5027 = vsel %vm1083, %v4924, 0
        %v5030 = vsel %vm1083, %v4926, 0
        %v5033 = vsel %vm1083, %v4928, 0
        %v5036 = vsel %vm1083, %v4930, 0
        %v5039 = vsel %vm1083, %v4932, 0
        %v5042 = vsel %vm1083, %v4934, 0
        %v5045 = vsel %vm1083, %v4936, 0
        %v5048 = vsel %vm1083, %v4938, 0
        %v5051 = vsel %vm1083, %v4940, 0
        %5053 = vmatprep.subr.bf16.mxu0 0
        %5054 = vmatpush1.bf16.msra.mxu0 %v4999
        %5055 = vmatprep.subr.bf16.mxu0 0
        %5056 = vmatpush1.bf16.msra.mxu0 %v5000
        %5057 = vmatprep.subr.bf16.mxu0 0
        %5058 = vmatpush1.bf16.msra.mxu0 %v5001
        %5059 = vmatprep.subr.bf16.mxu0 0
        %5060 = vmatpush1.bf16.msra.mxu0 %v5002
        %5061 = vmatprep.subr.bf16.mxu0 0
        %5062 = vmatpush1.bf16.msra.mxu0 %v5003
        %5063 = vmatprep.subr.bf16.mxu0 0
        %5064 = vmatpush1.bf16.msra.mxu0 %v5004
        %5065 = vmatprep.subr.bf16.mxu0 0
        %5066 = vmatpush1.bf16.msra.mxu0 %v5005
        %5067 = vmatprep.subr.bf16.mxu0 0
        %5068 = vmatpush1.bf16.msra.mxu0 %v5006
        %5069 = vmatprep.subr.bf16.mxu0 0
        %5070 = vmatpush1.bf16.msra.mxu0 %v5007
        %5071 = vmatprep.subr.bf16.mxu0 0
        %5072 = vmatpush1.bf16.msra.mxu0 %v5008
        %5073 = vmatprep.subr.bf16.mxu0 0
        %5074 = vmatpush1.bf16.msra.mxu0 %v5009
        %5075 = vmatprep.subr.bf16.mxu0 0
        %5076 = vmatpush1.bf16.msra.mxu0 %v5010
        %5077 = vmatprep.subr.bf16.mxu0 0
        %5078 = vmatpush1.bf16.msra.mxu0 0
        %5079 = vmatprep.subr.bf16.mxu0 0
        %5080 = vmatpush1.bf16.msra.mxu0 0
        %5081 = vmatprep.subr.bf16.mxu0 0
        %5082 = vmatpush1.bf16.msra.mxu0 0
        %5083 = vmatprep.subr.bf16.mxu0 0
        %5084 = vmatpush1.bf16.msra.mxu0 0
        %5085 = vmatprep.mubr.bf16.mxu0 %v5024
        %5086 = vmatmul.mubr.bf16.gmra.mrb[0].mxu0 %v4921
        %v5087 = vpop.f32.mrb[0].mxu0
        %v5088 = vadd.f32 0.0, %v5087
        %v5089 = vpop.f32.mrb[0].mxu0
        %v5090 = vpop.f32.mrb[0].mxu0
        %v5091 = vadd.f32 0.0, %v5090
        %v5092 = vpop.f32.mrb[0].mxu0
        %5093 = vmatprep.mubr.bf16.mxu0 %v5027
        %5094 = vmatmul.mubr.bf16.gmra.mrb[0].mxu0 %v4923
        %v5095 = vpop.f32.mrb[0].mxu0
        %v5096 = vadd.f32 0.0, %v5095
        %v5097 = vpop.f32.mrb[0].mxu0
        %v5098 = vpop.f32.mrb[0].mxu0
        %v5099 = vadd.f32 0.0, %v5098
        %v5100 = vpop.f32.mrb[0].mxu0
        %5101 = vmatprep.mubr.bf16.mxu0 %v5030
        %5102 = vmatmul.mubr.bf16.gmra.mrb[0].mxu0 %v4925
        %v5103 = vpop.f32.mrb[0].mxu0
        %v5104 = vadd.f32 0.0, %v5103
        %v5105 = vpop.f32.mrb[0].mxu0
        %v5106 = vpop.f32.mrb[0].mxu0
        %v5107 = vadd.f32 0.0, %v5106
        %v5108 = vpop.f32.mrb[0].mxu0
        %5109 = vmatprep.mubr.bf16.mxu0 %v5033
        %5110 = vmatmul.mubr.bf16.gmra.mrb[0].mxu0 %v4927
        %v5111 = vpop.f32.mrb[0].mxu0
        %v5112 = vadd.f32 0.0, %v5111
        %v5113 = vpop.f32.mrb[0].mxu0
        %v5114 = vpop.f32.mrb[0].mxu0
        %v5115 = vadd.f32 0.0, %v5114
        %v5116 = vpop.f32.mrb[0].mxu0
        %5117 = vmatprep.mubr.bf16.mxu0 %v5036
        %5118 = vmatmul.mubr.bf16.gmra.mrb[0].mxu0 %v4929
        %v5119 = vpop.f32.mrb[0].mxu0
        %v5120 = vadd.f32 0.0, %v5119
        %v5121 = vpop.f32.mrb[0].mxu0
        %v5122 = vpop.f32.mrb[0].mxu0
        %v5123 = vadd.f32 0.0, %v5122
        %v5124 = vpop.f32.mrb[0].mxu0
        %5125 = vmatprep.mubr.bf16.mxu0 %v5039
        %5126 = vmatmul.mubr.bf16.gmra.mrb[0].mxu0 %v4931
        %v5127 = vpop.f32.mrb[0].mxu0
        %v5128 = vadd.f32 0.0, %v5127
        %v5129 = vpop.f32.mrb[0].mxu0
        %v5130 = vpop.f32.mrb[0].mxu0
        %v5131 = vadd.f32 0.0, %v5130
        %v5132 = vpop.f32.mrb[0].mxu0
        %5133 = vmatprep.mubr.bf16.mxu0 %v5042
        %5134 = vmatmul.mubr.bf16.gmra.mrb[0].mxu0 %v4933
        %v5135 = vpop.f32.mrb[0].mxu0
        %v5136 = vadd.f32 0.0, %v5135
        %v5137 = vpop.f32.mrb[0].mxu0
        %v5138 = vpop.f32.mrb[0].mxu0
        %v5139 = vadd.f32 0.0, %v5138
        %v5140 = vpop.f32.mrb[0].mxu0
        %5141 = vmatprep.mubr.bf16.mxu0 %v5045
        %5142 = vmatmul.mubr.bf16.gmra.mrb[0].mxu0 %v4935
        %v5143 = vpop.f32.mrb[0].mxu0
        %v5144 = vadd.f32 0.0, %v5143
        %v5145 = vpop.f32.mrb[0].mxu0
        %v5146 = vpop.f32.mrb[0].mxu0
        %v5147 = vadd.f32 0.0, %v5146
        %v5148 = vpop.f32.mrb[0].mxu0
        %5149 = vmatprep.mubr.bf16.mxu0 %v5048
        %5150 = vmatmul.mubr.bf16.gmra.mrb[0].mxu0 %v4937
        %v5151 = vpop.f32.mrb[0].mxu0
        %v5152 = vadd.f32 0.0, %v5151
        %v5153 = vpop.f32.mrb[0].mxu0
        %v5154 = vpop.f32.mrb[0].mxu0
        %v5155 = vadd.f32 0.0, %v5154
        %v5156 = vpop.f32.mrb[0].mxu0
        %5157 = vmatprep.mubr.bf16.mxu0 %v5051
        %5158 = vmatmul.mubr.bf16.gmra.mrb[0].mxu0 %v4939
        %v5159 = vpop.f32.mrb[0].mxu0
        %v5160 = vadd.f32 0.0, %v5159
        %v5161 = vpop.f32.mrb[0].mxu0
        %v5162 = vpop.f32.mrb[0].mxu0
        %v5163 = vadd.f32 0.0, %v5162
        %v5164 = vpop.f32.mrb[0].mxu0
        %5165 = vdwg.mxu0
        %v5166 = vadd.f32 %v4814, %v5088
        %v5167 = vadd.f32 %v4814, %v5091
        %v5168 = vadd.f32 %v4814, %v5096
        %v5169 = vadd.f32 %v4814, %v5099
        %v5170 = vadd.f32 %v4814, %v5104
        %v5171 = vadd.f32 %v4814, %v5107
        %v5172 = vadd.f32 %v4814, %v5112
        %v5173 = vadd.f32 %v4814, %v5115
        %v5174 = vadd.f32 %v4814, %v5120
        %v5175 = vadd.f32 %v4814, %v5123
        %v5176 = vadd.f32 %v4814, %v5128
        %v5177 = vadd.f32 %v4814, %v5131
        %v5178 = vadd.f32 %v4814, %v5136
        %v5179 = vadd.f32 %v4814, %v5139
        %v5180 = vadd.f32 %v4814, %v5144
        %v5181 = vadd.f32 %v4814, %v5147
        %5198 = vrot.lane.b32.xlu0 %v5104, 64
        %v5199 = vpop.permute.xlu0 %5198
        %5200 = vrot.lane.b32.xlu0 %v5107, 64
        %v5201 = vpop.permute.xlu0 %5200
        %5202 = vrot.lane.b32.xlu0 %v5112, 64
        %v5203 = vpop.permute.xlu0 %5202
        %5204 = vrot.lane.b32.xlu0 %v5115, 64
        %v5205 = vpop.permute.xlu0 %5204
        %5206 = vrot.lane.b32.xlu0 %v5120, 64
        %v5207 = vpop.permute.xlu0 %5206
        %5208 = vrot.lane.b32.xlu0 %v5123, 64
        %v5209 = vpop.permute.xlu0 %5208
        %5210 = vrot.lane.b32.xlu0 %v5128, 64
        %v5211 = vpop.permute.xlu0 %5210
        %5212 = vrot.lane.b32.xlu0 %v5131, 64
        %v5213 = vpop.permute.xlu0 %5212
        %5214 = vrot.lane.b32.xlu0 %v5136, 64
        %v5215 = vpop.permute.xlu0 %5214
        %5216 = vrot.lane.b32.xlu0 %v5139, 64
        %v5217 = vpop.permute.xlu0 %5216
        %5218 = vrot.lane.b32.xlu0 %v5144, 64
        %v5219 = vpop.permute.xlu0 %5218
        %5220 = vrot.lane.b32.xlu0 %v5147, 64
        %v5221 = vpop.permute.xlu0 %5220
        %5222 = vrot.lane.b32.xlu0 %v5152, 64
        %v5223 = vpop.permute.xlu0 %5222
        %5224 = vrot.lane.b32.xlu0 %v5155, 64
        %v5225 = vpop.permute.xlu0 %5224
        %5226 = vrot.lane.b32.xlu0 %v5160, 64
        %v5227 = vpop.permute.xlu0 %5226
        %5228 = vrot.lane.b32.xlu0 %v5163, 64
        %v5229 = vpop.permute.xlu0 %5228
        %v5246 = vadd.f32 %v5166, %v5199
        %v5247 = vadd.f32 %v5167, %v5201
        %v5248 = vadd.f32 %v5168, %v5203
        %v5249 = vadd.f32 %v5169, %v5205
        %v5250 = vadd.f32 %v5170, %v5207
        %v5251 = vadd.f32 %v5171, %v5209
        %v5252 = vadd.f32 %v5172, %v5211
        %v5253 = vadd.f32 %v5173, %v5213
        %v5254 = vadd.f32 %v5174, %v5215
        %v5255 = vadd.f32 %v5175, %v5217
        %v5256 = vadd.f32 %v5176, %v5219
        %v5257 = vadd.f32 %v5177, %v5221
        %v5258 = vadd.f32 %v5178, %v5223
        %v5259 = vadd.f32 %v5179, %v5225
        %v5260 = vadd.f32 %v5180, %v5227
        %v5261 = vadd.f32 %v5181, %v5229
        %v5262 = vld [vmem:[%s4816] sm:$0xff]
        %v5263 = vld [vmem:[%s4816 + $0x8] sm:$0x11]
        %v5264 = vld [vmem:[%s4816 + $0x10] sm:$0xff]
        %v5265 = vld [vmem:[%s4816 + $0x18] sm:$0x11]
        %v5266 = vld [vmem:[%s4816 + $0x20] sm:$0xff]
        %v5267 = vld [vmem:[%s4816 + $0x28] sm:$0x11]
        %v5268 = vld [vmem:[%s4816 + $0x30] sm:$0xff]
        %v5269 = vld [vmem:[%s4816 + $0x38] sm:$0x11]
        %v5270 = vld [vmem:[%s4816 + $0x40] sm:$0xff]
        %v5271 = vld [vmem:[%s4816 + $0x48] sm:$0x11]
        %v5272 = vld [vmem:[%s4816 + $0x50] sm:$0xff]
        %v5273 = vld [vmem:[%s4816 + $0x58] sm:$0x11]
        %v5274 = vld [vmem:[%s4816 + $0x60] sm:$0xff]
        %v5275 = vld [vmem:[%s4816 + $0x68] sm:$0x11]
        %v5276 = vld [vmem:[%s4816 + $0x70] sm:$0xff]
        %v5277 = vld [vmem:[%s4816 + $0x78] sm:$0x11]
        %v5278 = vld [vmem:[%s4816 + $0x80] sm:$0xff]
        %v5279 = vld [vmem:[%s4816 + $0x88] sm:$0x11]
        %v5280 = vld [vmem:[%s4816 + $0x90] sm:$0xff]
        %v5281 = vld [vmem:[%s4816 + $0x98] sm:$0x11]
        %v5282 = vld [vmem:[%s4816 + $0xa0] sm:$0xff]
        %v5283 = vld [vmem:[%s4816 + $0xa8] sm:$0x11]
        %v5284 = vld [vmem:[%s4816 + $0xb0] sm:$0xff]
        %v5285 = vld [vmem:[%s4816 + $0xb8] sm:$0x11]
        %v5286 = vld [vmem:[%s4816 + $0xc0] sm:$0xff]
        %v5287 = vld [vmem:[%s4816 + $0xc8] sm:$0x11]
        %v5288 = vld [vmem:[%s4816 + $0xd0] sm:$0xff]
        %v5289 = vld [vmem:[%s4816 + $0xd8] sm:$0x11]
        %v5290 = vld [vmem:[%s4816 + $0xe0] sm:$0xff]
        %v5291 = vld [vmem:[%s4816 + $0xe8] sm:$0x11]
        %v5292 = vld [vmem:[%s4816 + $0xf0] sm:$0xff]
        %v5293 = vld [vmem:[%s4816 + $0xf8] sm:$0x11]
        %v5294 = vld [vmem:[%s4816 + $0x100] sm:$0xff]
        %v5295 = vld [vmem:[%s4816 + $0x108] sm:$0x11]
        %v5296 = vld [vmem:[%s4816 + $0x110] sm:$0xff]
        %v5297 = vld [vmem:[%s4816 + $0x118] sm:$0x11]
        %v5298 = vld [vmem:[%s4816 + $0x120] sm:$0xff]
        %v5299 = vld [vmem:[%s4816 + $0x128] sm:$0x11]
        %v5300 = vld [vmem:[%s4816 + $0x130] sm:$0xff]
        %v5301 = vld [vmem:[%s4816 + $0x138] sm:$0x11]
        %v5303 = vshrl.u32 %v5262, 16
        %v5305 = vrot.slane %v5303, 4
        %v5306 = vshll.u32 %v5262, 16
        %v5308 = vrot.slane %v5306, 5
        %v5309 = vor.u32 %v5305, %v5308
        %v5310 = vrot.slane %v5309, 4
        %v5312 = vshll.u32 %v5263, 16
        %v5314 = vrot.slane %v5312, 5
        %v5315 = vsel %vm1347, %v5310, %v5314
        %v5317 = vshrl.u32 %v5264, 16
        %v5319 = vrot.slane %v5317, 4
        %v5320 = vshll.u32 %v5264, 16
        %v5322 = vrot.slane %v5320, 5
        %v5323 = vor.u32 %v5319, %v5322
        %v5324 = vrot.slane %v5323, 4
        %v5326 = vshll.u32 %v5265, 16
        %v5328 = vrot.slane %v5326, 5
        %v5329 = vsel %vm1347, %v5324, %v5328
        %v5331 = vshrl.u32 %v5266, 16
        %v5333 = vrot.slane %v5331, 4
        %v5334 = vshll.u32 %v5266, 16
        %v5336 = vrot.slane %v5334, 5
        %v5337 = vor.u32 %v5333, %v5336
        %v5338 = vrot.slane %v5337, 4
        %v5340 = vshll.u32 %v5267, 16
        %v5342 = vrot.slane %v5340, 5
        %v5343 = vsel %vm1347, %v5338, %v5342
        %v5345 = vshrl.u32 %v5268, 16
        %v5347 = vrot.slane %v5345, 4
        %v5348 = vshll.u32 %v5268, 16
        %v5350 = vrot.slane %v5348, 5
        %v5351 = vor.u32 %v5347, %v5350
        %v5352 = vrot.slane %v5351, 4
        %v5354 = vshll.u32 %v5269, 16
        %v5356 = vrot.slane %v5354, 5
        %v5357 = vsel %vm1347, %v5352, %v5356
        %v5359 = vshrl.u32 %v5270, 16
        %v5361 = vrot.slane %v5359, 4
        %v5362 = vshll.u32 %v5270, 16
        %v5364 = vrot.slane %v5362, 5
        %v5365 = vor.u32 %v5361, %v5364
        %v5366 = vrot.slane %v5365, 4
        %v5368 = vshll.u32 %v5271, 16
        %v5370 = vrot.slane %v5368, 5
        %v5371 = vsel %vm1347, %v5366, %v5370
        %v5373 = vshrl.u32 %v5272, 16
        %v5375 = vrot.slane %v5373, 4
        %v5376 = vshll.u32 %v5272, 16
        %v5378 = vrot.slane %v5376, 5
        %v5379 = vor.u32 %v5375, %v5378
        %v5380 = vrot.slane %v5379, 4
        %v5382 = vshll.u32 %v5273, 16
        %v5384 = vrot.slane %v5382, 5
        %v5385 = vsel %vm1347, %v5380, %v5384
        %v5387 = vshrl.u32 %v5274, 16
        %v5389 = vrot.slane %v5387, 4
        %v5390 = vshll.u32 %v5274, 16
        %v5392 = vrot.slane %v5390, 5
        %v5393 = vor.u32 %v5389, %v5392
        %v5394 = vrot.slane %v5393, 4
        %v5396 = vshll.u32 %v5275, 16
        %v5398 = vrot.slane %v5396, 5
        %v5399 = vsel %vm1347, %v5394, %v5398
        %v5401 = vshrl.u32 %v5276, 16
        %v5403 = vrot.slane %v5401, 4
        %v5404 = vshll.u32 %v5276, 16
        %v5406 = vrot.slane %v5404, 5
        %v5407 = vor.u32 %v5403, %v5406
        %v5408 = vrot.slane %v5407, 4
        %v5410 = vshll.u32 %v5277, 16
        %v5412 = vrot.slane %v5410, 5
        %v5413 = vsel %vm1347, %v5408, %v5412
        %v5415 = vshrl.u32 %v5278, 16
        %v5417 = vrot.slane %v5415, 4
        %v5418 = vshll.u32 %v5278, 16
        %v5420 = vrot.slane %v5418, 5
        %v5421 = vor.u32 %v5417, %v5420
        %v5422 = vrot.slane %v5421, 4
        %v5424 = vshll.u32 %v5279, 16
        %v5426 = vrot.slane %v5424, 5
        %v5427 = vsel %vm1347, %v5422, %v5426
        %v5429 = vshrl.u32 %v5280, 16
        %v5431 = vrot.slane %v5429, 4
        %v5432 = vshll.u32 %v5280, 16
        %v5434 = vrot.slane %v5432, 5
        %v5435 = vor.u32 %v5431, %v5434
        %v5436 = vrot.slane %v5435, 4
        %v5438 = vshll.u32 %v5281, 16
        %v5440 = vrot.slane %v5438, 5
        %v5441 = vsel %vm1347, %v5436, %v5440
        %v5443 = vshrl.u32 %v5282, 16
        %v5445 = vrot.slane %v5443, 4
        %v5446 = vshll.u32 %v5282, 16
        %v5448 = vrot.slane %v5446, 5
        %v5449 = vor.u32 %v5445, %v5448
        %v5450 = vrot.slane %v5449, 4
        %v5452 = vshll.u32 %v5283, 16
        %v5454 = vrot.slane %v5452, 5
        %v5455 = vsel %vm1347, %v5450, %v5454
        %v5457 = vshrl.u32 %v5284, 16
        %v5459 = vrot.slane %v5457, 4
        %v5460 = vshll.u32 %v5284, 16
        %v5462 = vrot.slane %v5460, 5
        %v5463 = vor.u32 %v5459, %v5462
        %v5464 = vrot.slane %v5463, 4
        %v5466 = vshll.u32 %v5285, 16
        %v5468 = vrot.slane %v5466, 5
        %v5469 = vsel %vm1347, %v5464, %v5468
        %v5471 = vshrl.u32 %v5286, 16
        %v5473 = vrot.slane %v5471, 4
        %v5474 = vshll.u32 %v5286, 16
        %v5476 = vrot.slane %v5474, 5
        %v5477 = vor.u32 %v5473, %v5476
        %v5478 = vrot.slane %v5477, 4
        %v5480 = vshll.u32 %v5287, 16
        %v5482 = vrot.slane %v5480, 5
        %v5483 = vsel %vm1347, %v5478, %v5482
        %v5485 = vshrl.u32 %v5288, 16
        %v5487 = vrot.slane %v5485, 4
        %v5488 = vshll.u32 %v5288, 16
        %v5490 = vrot.slane %v5488, 5
        %v5491 = vor.u32 %v5487, %v5490
        %v5492 = vrot.slane %v5491, 4
        %v5494 = vshll.u32 %v5289, 16
        %v5496 = vrot.slane %v5494, 5
        %v5497 = vsel %vm1347, %v5492, %v5496
        %v5499 = vshrl.u32 %v5290, 16
        %v5501 = vrot.slane %v5499, 4
        %v5502 = vshll.u32 %v5290, 16
        %v5504 = vrot.slane %v5502, 5
        %v5505 = vor.u32 %v5501, %v5504
        %v5506 = vrot.slane %v5505, 4
        %v5508 = vshll.u32 %v5291, 16
        %v5510 = vrot.slane %v5508, 5
        %v5511 = vsel %vm1347, %v5506, %v5510
        %v5513 = vshrl.u32 %v5292, 16
        %v5515 = vrot.slane %v5513, 4
        %v5516 = vshll.u32 %v5292, 16
        %v5518 = vrot.slane %v5516, 5
        %v5519 = vor.u32 %v5515, %v5518
        %v5520 = vrot.slane %v5519, 4
        %v5522 = vshll.u32 %v5293, 16
        %v5524 = vrot.slane %v5522, 5
        %v5525 = vsel %vm1347, %v5520, %v5524
        %v5527 = vshrl.u32 %v5294, 16
        %v5529 = vrot.slane %v5527, 4
        %v5530 = vshll.u32 %v5294, 16
        %v5532 = vrot.slane %v5530, 5
        %v5533 = vor.u32 %v5529, %v5532
        %v5534 = vrot.slane %v5533, 4
        %v5536 = vshll.u32 %v5295, 16
        %v5538 = vrot.slane %v5536, 5
        %v5539 = vsel %vm1347, %v5534, %v5538
        %v5541 = vshrl.u32 %v5296, 16
        %v5543 = vrot.slane %v5541, 4
        %v5544 = vshll.u32 %v5296, 16
        %v5546 = vrot.slane %v5544, 5
        %v5547 = vor.u32 %v5543, %v5546
        %v5548 = vrot.slane %v5547, 4
        %v5550 = vshll.u32 %v5297, 16
        %v5552 = vrot.slane %v5550, 5
        %v5553 = vsel %vm1347, %v5548, %v5552
        %v5555 = vshrl.u32 %v5298, 16
        %v5557 = vrot.slane %v5555, 4
        %v5558 = vshll.u32 %v5298, 16
        %v5560 = vrot.slane %v5558, 5
        %v5561 = vor.u32 %v5557, %v5560
        %v5562 = vrot.slane %v5561, 4
        %v5564 = vshll.u32 %v5299, 16
        %v5566 = vrot.slane %v5564, 5
        %v5567 = vsel %vm1347, %v5562, %v5566
        %v5569 = vshrl.u32 %v5300, 16
        %v5571 = vrot.slane %v5569, 4
        %v5572 = vshll.u32 %v5300, 16
        %v5574 = vrot.slane %v5572, 5
        %v5575 = vor.u32 %v5571, %v5574
        %v5576 = vrot.slane %v5575, 4
        %v5578 = vshll.u32 %v5301, 16
        %v5580 = vrot.slane %v5578, 5
        %v5581 = vsel %vm1347, %v5576, %v5580
        %s5582 = scalar_lea.vmem %s11, 96
        %v5583 = vld [vmem:[%s5582] sm:$0xf]
        %v5584 = vld [vmem:[%s5582 + $0x4] sm:$0xf]
        %v5585 = vld [vmem:[%s5582 + $0x8] sm:$0xf]
        %v5586 = vld [vmem:[%s5582 + $0xc] sm:$0xf]
        %v5587 = vld [vmem:[%s5582 + $0x10] sm:$0xf]
        %v5588 = vld [vmem:[%s5582 + $0x14] sm:$0xf]
        %v5589 = vld [vmem:[%s5582 + $0x18] sm:$0xf]
        %v5590 = vld [vmem:[%s5582 + $0x1c] sm:$0xf]
        %v5591 = vld [vmem:[%s5582 + $0x20] sm:$0xf]
        %v5592 = vld [vmem:[%s5582 + $0x24] sm:$0xf]
        %v5593 = vld [vmem:[%s5582 + $0x28] sm:$0xf]
        %v5594 = vld [vmem:[%s5582 + $0x2c] sm:$0xf]
        %v5595 = vld [vmem:[%s5582 + $0x30] sm:$0xf]
        %v5596 = vld [vmem:[%s5582 + $0x34] sm:$0xf]
        %v5597 = vld [vmem:[%s5582 + $0x38] sm:$0xf]
        %v5598 = vld [vmem:[%s5582 + $0x3c] sm:$0xf]
        %v5599 = vld [vmem:[%s5582 + $0x40] sm:$0xf]
        %v5600 = vld [vmem:[%s5582 + $0x44] sm:$0xf]
        %v5601 = vld [vmem:[%s5582 + $0x48] sm:$0xf]
        %v5602 = vld [vmem:[%s5582 + $0x4c] sm:$0xf]
        %v5603 = vld [vmem:[%s5582 + $0x50] sm:$0xf]
        %v5604 = vld [vmem:[%s5582 + $0x54] sm:$0xf]
        %v5605 = vld [vmem:[%s5582 + $0x58] sm:$0xf]
        %v5606 = vld [vmem:[%s5582 + $0x5c] sm:$0xf]
        %v5607 = vunpack.c.l.b16 %v5315
        %v5608 = vunpack.c.h.b16 %v5315
        %v5609 = vunpack.c.l.b16 %v5329
        %v5610 = vunpack.c.h.b16 %v5329
        %v5611 = vunpack.c.l.b16 %v5343
        %v5612 = vunpack.c.h.b16 %v5343
        %v5613 = vunpack.c.l.b16 %v5357
        %v5614 = vunpack.c.h.b16 %v5357
        %v5615 = vunpack.c.l.b16 %v5371
        %v5616 = vunpack.c.h.b16 %v5371
        %v5617 = vunpack.c.l.b16 %v5385
        %v5618 = vunpack.c.h.b16 %v5385
        %v5619 = vunpack.c.l.b16 %v5399
        %v5620 = vunpack.c.h.b16 %v5399
        %v5621 = vunpack.c.l.b16 %v5413
        %v5622 = vunpack.c.h.b16 %v5413
        %v5623 = vunpack.c.l.b16 %v5427
        %v5624 = vunpack.c.h.b16 %v5427
        %v5625 = vunpack.c.l.b16 %v5441
        %v5626 = vunpack.c.h.b16 %v5441
        %v5627 = vunpack.c.l.b16 %v5455
        %v5628 = vunpack.c.h.b16 %v5455
        %v5629 = vunpack.c.l.b16 %v5469
        %v5630 = vunpack.c.h.b16 %v5469
        %v5631 = vunpack.c.l.b16 %v5483
        %v5632 = vunpack.c.h.b16 %v5483
        %v5633 = vunpack.c.l.b16 %v5497
        %v5634 = vunpack.c.h.b16 %v5497
        %v5635 = vunpack.c.l.b16 %v5511
        %v5636 = vunpack.c.h.b16 %v5511
        %v5637 = vunpack.c.l.b16 %v5525
        %v5638 = vunpack.c.h.b16 %v5525
        %v5639 = vunpack.c.l.b16 %v5539
        %v5640 = vunpack.c.h.b16 %v5539
        %v5641 = vunpack.c.l.b16 %v5553
        %v5642 = vunpack.c.h.b16 %v5553
        %v5643 = vunpack.c.l.b16 %v5567
        %v5644 = vunpack.c.h.b16 %v5567
        %v5645 = vunpack.c.l.b16 %v5581
        %v5646 = vunpack.c.h.b16 %v5581
        %v5647 = vpack.c.b16 %v5609, %v5607
        %v5648 = vpack.c.b16 %v5610, %v5608
        %v5649 = vpack.c.b16 %v5613, %v5611
        %v5650 = vpack.c.b16 %v5614, %v5612
        %v5651 = vpack.c.b16 %v5617, %v5615
        %v5652 = vpack.c.b16 %v5618, %v5616
        %v5653 = vpack.c.b16 %v5621, %v5619
        %v5654 = vpack.c.b16 %v5622, %v5620
        %v5655 = vpack.c.b16 %v5625, %v5623
        %v5656 = vpack.c.b16 %v5626, %v5624
        %v5657 = vpack.c.b16 %v5629, %v5627
        %v5658 = vpack.c.b16 %v5630, %v5628
        %v5659 = vpack.c.b16 %v5633, %v5631
        %v5660 = vpack.c.b16 %v5634, %v5632
        %v5661 = vpack.c.b16 %v5637, %v5635
        %v5662 = vpack.c.b16 %v5638, %v5636
        %v5663 = vpack.c.b16 %v5641, %v5639
        %v5664 = vpack.c.b16 %v5642, %v5640
        %v5665 = vpack.c.b16 %v5645, %v5643
        %v5666 = vpack.c.b16 %v5646, %v5644
        %v5701 = vunpack.c.l.b16 %v5583
        %v5702 = vunpack.c.l.b16 %v5584
        %v5703 = vunpack.c.l.b16 %v5585
        %v5704 = vunpack.c.l.b16 %v5586
        %v5705 = vunpack.c.l.b16 %v5587
        %v5706 = vunpack.c.l.b16 %v5588
        %v5707 = vunpack.c.l.b16 %v5589
        %v5708 = vunpack.c.l.b16 %v5590
        %v5709 = vunpack.c.l.b16 %v5591
        %v5710 = vunpack.c.l.b16 %v5592
        %v5711 = vunpack.c.l.b16 %v5593
        %v5712 = vunpack.c.l.b16 %v5594
        %v5713 = vunpack.c.l.b16 %v5595
        %v5714 = vunpack.c.l.b16 %v5596
        %v5715 = vunpack.c.l.b16 %v5597
        %v5716 = vunpack.c.l.b16 %v5598
        %v5717 = vunpack.c.l.b16 %v5599
        %v5718 = vunpack.c.l.b16 %v5600
        %v5719 = vunpack.c.l.b16 %v5601
        %v5720 = vunpack.c.l.b16 %v5602
        %v5721 = vunpack.c.l.b16 %v5603
        %v5722 = vunpack.c.l.b16 %v5604
        %v5723 = vunpack.c.l.b16 %v5605
        %v5724 = vunpack.c.l.b16 %v5606
        %v5725 = vpack.c.b16 %v5702, %v5701
        %v5726 = vpack.c.b16 %v5704, %v5703
        %v5727 = vpack.c.b16 %v5706, %v5705
        %v5728 = vpack.c.b16 %v5708, %v5707
        %v5729 = vpack.c.b16 %v5710, %v5709
        %v5730 = vpack.c.b16 %v5712, %v5711
        %v5731 = vpack.c.b16 %v5714, %v5713
        %v5732 = vpack.c.b16 %v5716, %v5715
        %v5733 = vpack.c.b16 %v5718, %v5717
        %v5734 = vpack.c.b16 %v5720, %v5719
        %v5735 = vpack.c.b16 %v5722, %v5721
        %v5736 = vpack.c.b16 %v5724, %v5723
        %v5750 = vsel %vm1083, %v5648, 0
        %v5753 = vsel %vm1083, %v5650, 0
        %v5756 = vsel %vm1083, %v5652, 0
        %v5759 = vsel %vm1083, %v5654, 0
        %v5762 = vsel %vm1083, %v5656, 0
        %v5765 = vsel %vm1083, %v5658, 0
        %v5768 = vsel %vm1083, %v5660, 0
        %v5771 = vsel %vm1083, %v5662, 0
        %v5774 = vsel %vm1083, %v5664, 0
        %v5777 = vsel %vm1083, %v5666, 0
        %5779 = vmatprep.subr.bf16.mxu0 0
        %5780 = vmatpush1.bf16.msra.mxu0 %v5725
        %5781 = vmatprep.subr.bf16.mxu0 0
        %5782 = vmatpush1.bf16.msra.mxu0 %v5726
        %5783 = vmatprep.subr.bf16.mxu0 0
        %5784 = vmatpush1.bf16.msra.mxu0 %v5727
        %5785 = vmatprep.subr.bf16.mxu0 0
        %5786 = vmatpush1.bf16.msra.mxu0 %v5728
        %5787 = vmatprep.subr.bf16.mxu0 0
        %5788 = vmatpush1.bf16.msra.mxu0 %v5729
        %5789 = vmatprep.subr.bf16.mxu0 0
        %5790 = vmatpush1.bf16.msra.mxu0 %v5730
        %5791 = vmatprep.subr.bf16.mxu0 0
        %5792 = vmatpush1.bf16.msra.mxu0 %v5731
        %5793 = vmatprep.subr.bf16.mxu0 0
        %5794 = vmatpush1.bf16.msra.mxu0 %v5732
        %5795 = vmatprep.subr.bf16.mxu0 0
        %5796 = vmatpush1.bf16.msra.mxu0 %v5733
        %5797 = vmatprep.subr.bf16.mxu0 0
        %5798 = vmatpush1.bf16.msra.mxu0 %v5734
        %5799 = vmatprep.subr.bf16.mxu0 0
        %5800 = vmatpush1.bf16.msra.mxu0 %v5735
        %5801 = vmatprep.subr.bf16.mxu0 0
        %5802 = vmatpush1.bf16.msra.mxu0 %v5736
        %5803 = vmatprep.subr.bf16.mxu0 0
        %5804 = vmatpush1.bf16.msra.mxu0 0
        %5805 = vmatprep.subr.bf16.mxu0 0
        %5806 = vmatpush1.bf16.msra.mxu0 0
        %5807 = vmatprep.subr.bf16.mxu0 0
        %5808 = vmatpush1.bf16.msra.mxu0 0
        %5809 = vmatprep.subr.bf16.mxu0 0
        %5810 = vmatpush1.bf16.msra.mxu0 0
        %5811 = vmatprep.mubr.bf16.mxu0 %v5750
        %5812 = vmatmul.mubr.bf16.gmra.mrb[0].mxu0 %v5647
        %v5813 = vpop.f32.mrb[0].mxu0
        %v5814 = vadd.f32 0.0, %v5813
        %v5815 = vpop.f32.mrb[0].mxu0
        %v5816 = vpop.f32.mrb[0].mxu0
        %v5817 = vadd.f32 0.0, %v5816
        %v5818 = vpop.f32.mrb[0].mxu0
        %5819 = vmatprep.mubr.bf16.mxu0 %v5753
        %5820 = vmatmul.mubr.bf16.gmra.mrb[0].mxu0 %v5649
        %v5821 = vpop.f32.mrb[0].mxu0
        %v5822 = vadd.f32 0.0, %v5821
        %v5823 = vpop.f32.mrb[0].mxu0
        %v5824 = vpop.f32.mrb[0].mxu0
        %v5825 = vadd.f32 0.0, %v5824
        %v5826 = vpop.f32.mrb[0].mxu0
        %5827 = vmatprep.mubr.bf16.mxu0 %v5756
        %5828 = vmatmul.mubr.bf16.gmra.mrb[0].mxu0 %v5651
        %v5829 = vpop.f32.mrb[0].mxu0
        %v5830 = vadd.f32 0.0, %v5829
        %v5831 = vpop.f32.mrb[0].mxu0
        %v5832 = vpop.f32.mrb[0].mxu0
        %v5833 = vadd.f32 0.0, %v5832
        %v5834 = vpop.f32.mrb[0].mxu0
        %5835 = vmatprep.mubr.bf16.mxu0 %v5759
        %5836 = vmatmul.mubr.bf16.gmra.mrb[0].mxu0 %v5653
        %v5837 = vpop.f32.mrb[0].mxu0
        %v5838 = vadd.f32 0.0, %v5837
        %v5839 = vpop.f32.mrb[0].mxu0
        %v5840 = vpop.f32.mrb[0].mxu0
        %v5841 = vadd.f32 0.0, %v5840
        %v5842 = vpop.f32.mrb[0].mxu0
        %5843 = vmatprep.mubr.bf16.mxu0 %v5762
        %5844 = vmatmul.mubr.bf16.gmra.mrb[0].mxu0 %v5655
        %v5845 = vpop.f32.mrb[0].mxu0
        %v5846 = vadd.f32 0.0, %v5845
        %v5847 = vpop.f32.mrb[0].mxu0
        %v5848 = vpop.f32.mrb[0].mxu0
        %v5849 = vadd.f32 0.0, %v5848
        %v5850 = vpop.f32.mrb[0].mxu0
        %5851 = vmatprep.mubr.bf16.mxu0 %v5765
        %5852 = vmatmul.mubr.bf16.gmra.mrb[0].mxu0 %v5657
        %v5853 = vpop.f32.mrb[0].mxu0
        %v5854 = vadd.f32 0.0, %v5853
        %v5855 = vpop.f32.mrb[0].mxu0
        %v5856 = vpop.f32.mrb[0].mxu0
        %v5857 = vadd.f32 0.0, %v5856
        %v5858 = vpop.f32.mrb[0].mxu0
        %5859 = vmatprep.mubr.bf16.mxu0 %v5768
        %5860 = vmatmul.mubr.bf16.gmra.mrb[0].mxu0 %v5659
        %v5861 = vpop.f32.mrb[0].mxu0
        %v5862 = vadd.f32 0.0, %v5861
        %v5863 = vpop.f32.mrb[0].mxu0
        %v5864 = vpop.f32.mrb[0].mxu0
        %v5865 = vadd.f32 0.0, %v5864
        %v5866 = vpop.f32.mrb[0].mxu0
        %5867 = vmatprep.mubr.bf16.mxu0 %v5771
        %5868 = vmatmul.mubr.bf16.gmra.mrb[0].mxu0 %v5661
        %v5869 = vpop.f32.mrb[0].mxu0
        %v5870 = vadd.f32 0.0, %v5869
        %v5871 = vpop.f32.mrb[0].mxu0
        %v5872 = vpop.f32.mrb[0].mxu0
        %v5873 = vadd.f32 0.0, %v5872
        %v5874 = vpop.f32.mrb[0].mxu0
        %5875 = vmatprep.mubr.bf16.mxu0 %v5774
        %5876 = vmatmul.mubr.bf16.gmra.mrb[0].mxu0 %v5663
        %v5877 = vpop.f32.mrb[0].mxu0
        %v5878 = vadd.f32 0.0, %v5877
        %v5879 = vpop.f32.mrb[0].mxu0
        %v5880 = vpop.f32.mrb[0].mxu0
        %v5881 = vadd.f32 0.0, %v5880
        %v5882 = vpop.f32.mrb[0].mxu0
        %5883 = vmatprep.mubr.bf16.mxu0 %v5777
        %5884 = vmatmul.mubr.bf16.gmra.mrb[0].mxu0 %v5665
        %v5885 = vpop.f32.mrb[0].mxu0
        %v5886 = vadd.f32 0.0, %v5885
        %v5887 = vpop.f32.mrb[0].mxu0
        %v5888 = vpop.f32.mrb[0].mxu0
        %v5889 = vadd.f32 0.0, %v5888
        %v5890 = vpop.f32.mrb[0].mxu0
        %5891 = vdwg.mxu0
        %v5892 = vadd.f32 %v5246, %v5814
        %v5893 = vadd.f32 %v5247, %v5817
        %v5894 = vadd.f32 %v5248, %v5822
        %v5895 = vadd.f32 %v5249, %v5825
        %v5896 = vadd.f32 %v5250, %v5830
        %v5897 = vadd.f32 %v5251, %v5833
        %v5898 = vadd.f32 %v5252, %v5838
        %v5899 = vadd.f32 %v5253, %v5841
        %v5900 = vadd.f32 %v5254, %v5846
        %v5901 = vadd.f32 %v5255, %v5849
        %v5902 = vadd.f32 %v5256, %v5854
        %v5903 = vadd.f32 %v5257, %v5857
        %v5904 = vadd.f32 %v5258, %v5862
        %v5905 = vadd.f32 %v5259, %v5865
        %v5906 = vadd.f32 %v5260, %v5870
        %v5907 = vadd.f32 %v5261, %v5873
        %5924 = vrot.lane.b32.xlu0 %v5830, 64
        %v5925 = vpop.permute.xlu0 %5924
        %5926 = vrot.lane.b32.xlu0 %v5833, 64
        %v5927 = vpop.permute.xlu0 %5926
        %5928 = vrot.lane.b32.xlu0 %v5838, 64
        %v5929 = vpop.permute.xlu0 %5928
        %5930 = vrot.lane.b32.xlu0 %v5841, 64
        %v5931 = vpop.permute.xlu0 %5930
        %5932 = vrot.lane.b32.xlu0 %v5846, 64
        %v5933 = vpop.permute.xlu0 %5932
        %5934 = vrot.lane.b32.xlu0 %v5849, 64
        %v5935 = vpop.permute.xlu0 %5934
        %5936 = vrot.lane.b32.xlu0 %v5854, 64
        %v5937 = vpop.permute.xlu0 %5936
        %5938 = vrot.lane.b32.xlu0 %v5857, 64
        %v5939 = vpop.permute.xlu0 %5938
        %5940 = vrot.lane.b32.xlu0 %v5862, 64
        %v5941 = vpop.permute.xlu0 %5940
        %5942 = vrot.lane.b32.xlu0 %v5865, 64
        %v5943 = vpop.permute.xlu0 %5942
        %5944 = vrot.lane.b32.xlu0 %v5870, 64
        %v5945 = vpop.permute.xlu0 %5944
        %5946 = vrot.lane.b32.xlu0 %v5873, 64
        %v5947 = vpop.permute.xlu0 %5946
        %5948 = vrot.lane.b32.xlu0 %v5878, 64
        %v5949 = vpop.permute.xlu0 %5948
        %5950 = vrot.lane.b32.xlu0 %v5881, 64
        %v5951 = vpop.permute.xlu0 %5950
        %5952 = vrot.lane.b32.xlu0 %v5886, 64
        %v5953 = vpop.permute.xlu0 %5952
        %5954 = vrot.lane.b32.xlu0 %v5889, 64
        %v5955 = vpop.permute.xlu0 %5954
        %v5972 = vadd.f32 %v5892, %v5925
        %v5973 = vadd.f32 %v5893, %v5927
        %v5974 = vadd.f32 %v5894, %v5929
        %v5975 = vadd.f32 %v5895, %v5931
        %v5976 = vadd.f32 %v5896, %v5933
        %v5977 = vadd.f32 %v5897, %v5935
        %v5978 = vadd.f32 %v5898, %v5937
        %v5979 = vadd.f32 %v5899, %v5939
        %v5980 = vadd.f32 %v5900, %v5941
        %v5981 = vadd.f32 %v5901, %v5943
        %v5982 = vadd.f32 %v5902, %v5945
        %v5983 = vadd.f32 %v5903, %v5947
        %v5984 = vadd.f32 %v5904, %v5949
        %v5985 = vadd.f32 %v5905, %v5951
        %v5986 = vadd.f32 %v5906, %v5953
        %v5987 = vadd.f32 %v5907, %v5955
        %v5988 = vld [vmem:[%s4816] sm:$0xee]
        %v5989 = vld [vmem:[%s4816 + $0x10] sm:$0xee]
        %v5990 = vld [vmem:[%s4816 + $0x20] sm:$0xee]
        %v5991 = vld [vmem:[%s4816 + $0x30] sm:$0xee]
        %v5992 = vld [vmem:[%s4816 + $0x40] sm:$0xee]
        %v5993 = vld [vmem:[%s4816 + $0x50] sm:$0xee]
        %v5994 = vld [vmem:[%s4816 + $0x60] sm:$0xee]
        %v5995 = vld [vmem:[%s4816 + $0x70] sm:$0xee]
        %v5996 = vld [vmem:[%s4816 + $0x80] sm:$0xee]
        %v5997 = vld [vmem:[%s4816 + $0x90] sm:$0xee]
        %v5998 = vld [vmem:[%s4816 + $0xa0] sm:$0xee]
        %v5999 = vld [vmem:[%s4816 + $0xb0] sm:$0xee]
        %v6000 = vld [vmem:[%s4816 + $0xc0] sm:$0xee]
        %v6001 = vld [vmem:[%s4816 + $0xd0] sm:$0xee]
        %v6002 = vld [vmem:[%s4816 + $0xe0] sm:$0xee]
        %v6003 = vld [vmem:[%s4816 + $0xf0] sm:$0xee]
        %v6004 = vld [vmem:[%s4816 + $0x100] sm:$0xee]
        %v6005 = vld [vmem:[%s4816 + $0x110] sm:$0xee]
        %v6006 = vld [vmem:[%s4816 + $0x120] sm:$0xee]
        %v6007 = vld [vmem:[%s4816 + $0x130] sm:$0xee]
        %v6048 = vrot.slane %v5988, 5
        %v6049 = vrot.slane %v6048, 4
        %v6050 = vrot.slane %v5263, 5
        %v6051 = vsel %vm1925, %v6049, %v6050
        %v6052 = vrot.slane %v5989, 5
        %v6053 = vrot.slane %v6052, 4
        %v6054 = vrot.slane %v5265, 5
        %v6055 = vsel %vm1925, %v6053, %v6054
        %v6056 = vrot.slane %v5990, 5
        %v6057 = vrot.slane %v6056, 4
        %v6058 = vrot.slane %v5267, 5
        %v6059 = vsel %vm1925, %v6057, %v6058
        %v6060 = vrot.slane %v5991, 5
        %v6061 = vrot.slane %v6060, 4
        %v6062 = vrot.slane %v5269, 5
        %v6063 = vsel %vm1925, %v6061, %v6062
        %v6064 = vrot.slane %v5992, 5
        %v6065 = vrot.slane %v6064, 4
        %v6066 = vrot.slane %v5271, 5
        %v6067 = vsel %vm1925, %v6065, %v6066
        %v6068 = vrot.slane %v5993, 5
        %v6069 = vrot.slane %v6068, 4
        %v6070 = vrot.slane %v5273, 5
        %v6071 = vsel %vm1925, %v6069, %v6070
        %v6072 = vrot.slane %v5994, 5
        %v6073 = vrot.slane %v6072, 4
        %v6074 = vrot.slane %v5275, 5
        %v6075 = vsel %vm1925, %v6073, %v6074
        %v6076 = vrot.slane %v5995, 5
        %v6077 = vrot.slane %v6076, 4
        %v6078 = vrot.slane %v5277, 5
        %v6079 = vsel %vm1925, %v6077, %v6078
        %v6080 = vrot.slane %v5996, 5
        %v6081 = vrot.slane %v6080, 4
        %v6082 = vrot.slane %v5279, 5
        %v6083 = vsel %vm1925, %v6081, %v6082
        %v6084 = vrot.slane %v5997, 5
        %v6085 = vrot.slane %v6084, 4
        %v6086 = vrot.slane %v5281, 5
        %v6087 = vsel %vm1925, %v6085, %v6086
        %v6088 = vrot.slane %v5998, 5
        %v6089 = vrot.slane %v6088, 4
        %v6090 = vrot.slane %v5283, 5
        %v6091 = vsel %vm1925, %v6089, %v6090
        %v6092 = vrot.slane %v5999, 5
        %v6093 = vrot.slane %v6092, 4
        %v6094 = vrot.slane %v5285, 5
        %v6095 = vsel %vm1925, %v6093, %v6094
        %v6096 = vrot.slane %v6000, 5
        %v6097 = vrot.slane %v6096, 4
        %v6098 = vrot.slane %v5287, 5
        %v6099 = vsel %vm1925, %v6097, %v6098
        %v6100 = vrot.slane %v6001, 5
        %v6101 = vrot.slane %v6100, 4
        %v6102 = vrot.slane %v5289, 5
        %v6103 = vsel %vm1925, %v6101, %v6102
        %v6104 = vrot.slane %v6002, 5
        %v6105 = vrot.slane %v6104, 4
        %v6106 = vrot.slane %v5291, 5
        %v6107 = vsel %vm1925, %v6105, %v6106
        %v6108 = vrot.slane %v6003, 5
        %v6109 = vrot.slane %v6108, 4
        %v6110 = vrot.slane %v5293, 5
        %v6111 = vsel %vm1925, %v6109, %v6110
        %v6112 = vrot.slane %v6004, 5
        %v6113 = vrot.slane %v6112, 4
        %v6114 = vrot.slane %v5295, 5
        %v6115 = vsel %vm1925, %v6113, %v6114
        %v6116 = vrot.slane %v6005, 5
        %v6117 = vrot.slane %v6116, 4
        %v6118 = vrot.slane %v5297, 5
        %v6119 = vsel %vm1925, %v6117, %v6118
        %v6120 = vrot.slane %v6006, 5
        %v6121 = vrot.slane %v6120, 4
        %v6122 = vrot.slane %v5299, 5
        %v6123 = vsel %vm1925, %v6121, %v6122
        %v6124 = vrot.slane %v6007, 5
        %v6125 = vrot.slane %v6124, 4
        %v6126 = vrot.slane %v5301, 5
        %v6127 = vsel %vm1925, %v6125, %v6126
        %s6128 = scalar_lea.vmem %s11, 192
        %v6129 = vld [vmem:[%s6128] sm:$0xf]
        %v6130 = vld [vmem:[%s6128 + $0x4] sm:$0xf]
        %v6131 = vld [vmem:[%s6128 + $0x8] sm:$0xf]
        %v6132 = vld [vmem:[%s6128 + $0xc] sm:$0xf]
        %v6133 = vld [vmem:[%s6128 + $0x10] sm:$0xf]
        %v6134 = vld [vmem:[%s6128 + $0x14] sm:$0xf]
        %v6135 = vld [vmem:[%s6128 + $0x18] sm:$0xf]
        %v6136 = vld [vmem:[%s6128 + $0x1c] sm:$0xf]
        %v6137 = vld [vmem:[%s6128 + $0x20] sm:$0xf]
        %v6138 = vld [vmem:[%s6128 + $0x24] sm:$0xf]
        %v6139 = vld [vmem:[%s6128 + $0x28] sm:$0xf]
        %v6140 = vld [vmem:[%s6128 + $0x2c] sm:$0xf]
        %v6141 = vld [vmem:[%s6128 + $0x30] sm:$0xf]
        %v6142 = vld [vmem:[%s6128 + $0x34] sm:$0xf]
        %v6143 = vld [vmem:[%s6128 + $0x38] sm:$0xf]
        %v6144 = vld [vmem:[%s6128 + $0x3c] sm:$0xf]
        %v6145 = vld [vmem:[%s6128 + $0x40] sm:$0xf]
        %v6146 = vld [vmem:[%s6128 + $0x44] sm:$0xf]
        %v6147 = vld [vmem:[%s6128 + $0x48] sm:$0xf]
        %v6148 = vld [vmem:[%s6128 + $0x4c] sm:$0xf]
        %v6149 = vld [vmem:[%s6128 + $0x50] sm:$0xf]
        %v6150 = vld [vmem:[%s6128 + $0x54] sm:$0xf]
        %v6151 = vld [vmem:[%s6128 + $0x58] sm:$0xf]
        %v6152 = vld [vmem:[%s6128 + $0x5c] sm:$0xf]
        %v6153 = vunpack.c.l.b16 %v6051
        %v6154 = vunpack.c.h.b16 %v6051
        %v6155 = vunpack.c.l.b16 %v6055
        %v6156 = vunpack.c.h.b16 %v6055
        %v6157 = vunpack.c.l.b16 %v6059
        %v6158 = vunpack.c.h.b16 %v6059
        %v6159 = vunpack.c.l.b16 %v6063
        %v6160 = vunpack.c.h.b16 %v6063
        %v6161 = vunpack.c.l.b16 %v6067
        %v6162 = vunpack.c.h.b16 %v6067
        %v6163 = vunpack.c.l.b16 %v6071
        %v6164 = vunpack.c.h.b16 %v6071
        %v6165 = vunpack.c.l.b16 %v6075
        %v6166 = vunpack.c.h.b16 %v6075
        %v6167 = vunpack.c.l.b16 %v6079
        %v6168 = vunpack.c.h.b16 %v6079
        %v6169 = vunpack.c.l.b16 %v6083
        %v6170 = vunpack.c.h.b16 %v6083
        %v6171 = vunpack.c.l.b16 %v6087
        %v6172 = vunpack.c.h.b16 %v6087
        %v6173 = vunpack.c.l.b16 %v6091
        %v6174 = vunpack.c.h.b16 %v6091
        %v6175 = vunpack.c.l.b16 %v6095
        %v6176 = vunpack.c.h.b16 %v6095
        %v6177 = vunpack.c.l.b16 %v6099
        %v6178 = vunpack.c.h.b16 %v6099
        %v6179 = vunpack.c.l.b16 %v6103
        %v6180 = vunpack.c.h.b16 %v6103
        %v6181 = vunpack.c.l.b16 %v6107
        %v6182 = vunpack.c.h.b16 %v6107
        %v6183 = vunpack.c.l.b16 %v6111
        %v6184 = vunpack.c.h.b16 %v6111
        %v6185 = vunpack.c.l.b16 %v6115
        %v6186 = vunpack.c.h.b16 %v6115
        %v6187 = vunpack.c.l.b16 %v6119
        %v6188 = vunpack.c.h.b16 %v6119
        %v6189 = vunpack.c.l.b16 %v6123
        %v6190 = vunpack.c.h.b16 %v6123
        %v6191 = vunpack.c.l.b16 %v6127
        %v6192 = vunpack.c.h.b16 %v6127
        %v6193 = vpack.c.b16 %v6155, %v6153
        %v6194 = vpack.c.b16 %v6156, %v6154
        %v6195 = vpack.c.b16 %v6159, %v6157
        %v6196 = vpack.c.b16 %v6160, %v6158
        %v6197 = vpack.c.b16 %v6163, %v6161
        %v6198 = vpack.c.b16 %v6164, %v6162
        %v6199 = vpack.c.b16 %v6167, %v6165
        %v6200 = vpack.c.b16 %v6168, %v6166
        %v6201 = vpack.c.b16 %v6171, %v6169
        %v6202 = vpack.c.b16 %v6172, %v6170
        %v6203 = vpack.c.b16 %v6175, %v6173
        %v6204 = vpack.c.b16 %v6176, %v6174
        %v6205 = vpack.c.b16 %v6179, %v6177
        %v6206 = vpack.c.b16 %v6180, %v6178
        %v6207 = vpack.c.b16 %v6183, %v6181
        %v6208 = vpack.c.b16 %v6184, %v6182
        %v6209 = vpack.c.b16 %v6187, %v6185
        %v6210 = vpack.c.b16 %v6188, %v6186
        %v6211 = vpack.c.b16 %v6191, %v6189
        %v6212 = vpack.c.b16 %v6192, %v6190
        %v6247 = vunpack.c.l.b16 %v6129
        %v6248 = vunpack.c.l.b16 %v6130
        %v6249 = vunpack.c.l.b16 %v6131
        %v6250 = vunpack.c.l.b16 %v6132
        %v6251 = vunpack.c.l.b16 %v6133
        %v6252 = vunpack.c.l.b16 %v6134
        %v6253 = vunpack.c.l.b16 %v6135
        %v6254 = vunpack.c.l.b16 %v6136
        %v6255 = vunpack.c.l.b16 %v6137
        %v6256 = vunpack.c.l.b16 %v6138
        %v6257 = vunpack.c.l.b16 %v6139
        %v6258 = vunpack.c.l.b16 %v6140
        %v6259 = vunpack.c.l.b16 %v6141
        %v6260 = vunpack.c.l.b16 %v6142
        %v6261 = vunpack.c.l.b16 %v6143
        %v6262 = vunpack.c.l.b16 %v6144
        %v6263 = vunpack.c.l.b16 %v6145
        %v6264 = vunpack.c.l.b16 %v6146
        %v6265 = vunpack.c.l.b16 %v6147
        %v6266 = vunpack.c.l.b16 %v6148
        %v6267 = vunpack.c.l.b16 %v6149
        %v6268 = vunpack.c.l.b16 %v6150
        %v6269 = vunpack.c.l.b16 %v6151
        %v6270 = vunpack.c.l.b16 %v6152
        %v6271 = vpack.c.b16 %v6248, %v6247
        %v6272 = vpack.c.b16 %v6250, %v6249
        %v6273 = vpack.c.b16 %v6252, %v6251
        %v6274 = vpack.c.b16 %v6254, %v6253
        %v6275 = vpack.c.b16 %v6256, %v6255
        %v6276 = vpack.c.b16 %v6258, %v6257
        %v6277 = vpack.c.b16 %v6260, %v6259
        %v6278 = vpack.c.b16 %v6262, %v6261
        %v6279 = vpack.c.b16 %v6264, %v6263
        %v6280 = vpack.c.b16 %v6266, %v6265
        %v6281 = vpack.c.b16 %v6268, %v6267
        %v6282 = vpack.c.b16 %v6270, %v6269
        %v6296 = vsel %vm1083, %v6194, 0
        %v6299 = vsel %vm1083, %v6196, 0
        %v6302 = vsel %vm1083, %v6198, 0
        %v6305 = vsel %vm1083, %v6200, 0
        %v6308 = vsel %vm1083, %v6202, 0
        %v6311 = vsel %vm1083, %v6204, 0
        %v6314 = vsel %vm1083, %v6206, 0
        %v6317 = vsel %vm1083, %v6208, 0
        %v6320 = vsel %vm1083, %v6210, 0
        %v6323 = vsel %vm1083, %v6212, 0
        %6325 = vmatprep.subr.bf16.mxu0 0
        %6326 = vmatpush1.bf16.msra.mxu0 %v6271
        %6327 = vmatprep.subr.bf16.mxu0 0
        %6328 = vmatpush1.bf16.msra.mxu0 %v6272
        %6329 = vmatprep.subr.bf16.mxu0 0
        %6330 = vmatpush1.bf16.msra.mxu0 %v6273
        %6331 = vmatprep.subr.bf16.mxu0 0
        %6332 = vmatpush1.bf16.msra.mxu0 %v6274
        %6333 = vmatprep.subr.bf16.mxu0 0
        %6334 = vmatpush1.bf16.msra.mxu0 %v6275
        %6335 = vmatprep.subr.bf16.mxu0 0
        %6336 = vmatpush1.bf16.msra.mxu0 %v6276
        %6337 = vmatprep.subr.bf16.mxu0 0
        %6338 = vmatpush1.bf16.msra.mxu0 %v6277
        %6339 = vmatprep.subr.bf16.mxu0 0
        %6340 = vmatpush1.bf16.msra.mxu0 %v6278
        %6341 = vmatprep.subr.bf16.mxu0 0
        %6342 = vmatpush1.bf16.msra.mxu0 %v6279
        %6343 = vmatprep.subr.bf16.mxu0 0
        %6344 = vmatpush1.bf16.msra.mxu0 %v6280
        %6345 = vmatprep.subr.bf16.mxu0 0
        %6346 = vmatpush1.bf16.msra.mxu0 %v6281
        %6347 = vmatprep.subr.bf16.mxu0 0
        %6348 = vmatpush1.bf16.msra.mxu0 %v6282
        %6349 = vmatprep.subr.bf16.mxu0 0
        %6350 = vmatpush1.bf16.msra.mxu0 0
        %6351 = vmatprep.subr.bf16.mxu0 0
        %6352 = vmatpush1.bf16.msra.mxu0 0
        %6353 = vmatprep.subr.bf16.mxu0 0
        %6354 = vmatpush1.bf16.msra.mxu0 0
        %6355 = vmatprep.subr.bf16.mxu0 0
        %6356 = vmatpush1.bf16.msra.mxu0 0
        %6357 = vmatprep.mubr.bf16.mxu0 %v6296
        %6358 = vmatmul.mubr.bf16.gmra.mrb[0].mxu0 %v6193
        %v6359 = vpop.f32.mrb[0].mxu0
        %v6360 = vadd.f32 0.0, %v6359
        %v6361 = vpop.f32.mrb[0].mxu0
        %v6362 = vpop.f32.mrb[0].mxu0
        %v6363 = vadd.f32 0.0, %v6362
        %v6364 = vpop.f32.mrb[0].mxu0
        %6365 = vmatprep.mubr.bf16.mxu0 %v6299
        %6366 = vmatmul.mubr.bf16.gmra.mrb[0].mxu0 %v6195
        %v6367 = vpop.f32.mrb[0].mxu0
        %v6368 = vadd.f32 0.0, %v6367
        %v6369 = vpop.f32.mrb[0].mxu0
        %v6370 = vpop.f32.mrb[0].mxu0
        %v6371 = vadd.f32 0.0, %v6370
        %v6372 = vpop.f32.mrb[0].mxu0
        %6373 = vmatprep.mubr.bf16.mxu0 %v6302
        %6374 = vmatmul.mubr.bf16.gmra.mrb[0].mxu0 %v6197
        %v6375 = vpop.f32.mrb[0].mxu0
        %v6376 = vadd.f32 0.0, %v6375
        %v6377 = vpop.f32.mrb[0].mxu0
        %v6378 = vpop.f32.mrb[0].mxu0
        %v6379 = vadd.f32 0.0, %v6378
        %v6380 = vpop.f32.mrb[0].mxu0
        %6381 = vmatprep.mubr.bf16.mxu0 %v6305
        %6382 = vmatmul.mubr.bf16.gmra.mrb[0].mxu0 %v6199
        %v6383 = vpop.f32.mrb[0].mxu0
        %v6384 = vadd.f32 0.0, %v6383
        %v6385 = vpop.f32.mrb[0].mxu0
        %v6386 = vpop.f32.mrb[0].mxu0
        %v6387 = vadd.f32 0.0, %v6386
        %v6388 = vpop.f32.mrb[0].mxu0
        %6389 = vmatprep.mubr.bf16.mxu0 %v6308
        %6390 = vmatmul.mubr.bf16.gmra.mrb[0].mxu0 %v6201
        %v6391 = vpop.f32.mrb[0].mxu0
        %v6392 = vadd.f32 0.0, %v6391
        %v6393 = vpop.f32.mrb[0].mxu0
        %v6394 = vpop.f32.mrb[0].mxu0
        %v6395 = vadd.f32 0.0, %v6394
        %v6396 = vpop.f32.mrb[0].mxu0
        %6397 = vmatprep.mubr.bf16.mxu0 %v6311
        %6398 = vmatmul.mubr.bf16.gmra.mrb[0].mxu0 %v6203
        %v6399 = vpop.f32.mrb[0].mxu0
        %v6400 = vadd.f32 0.0, %v6399
        %v6401 = vpop.f32.mrb[0].mxu0
        %v6402 = vpop.f32.mrb[0].mxu0
        %v6403 = vadd.f32 0.0, %v6402
        %v6404 = vpop.f32.mrb[0].mxu0
        %6405 = vmatprep.mubr.bf16.mxu0 %v6314
        %6406 = vmatmul.mubr.bf16.gmra.mrb[0].mxu0 %v6205
        %v6407 = vpop.f32.mrb[0].mxu0
        %v6408 = vadd.f32 0.0, %v6407
        %v6409 = vpop.f32.mrb[0].mxu0
        %v6410 = vpop.f32.mrb[0].mxu0
        %v6411 = vadd.f32 0.0, %v6410
        %v6412 = vpop.f32.mrb[0].mxu0
        %6413 = vmatprep.mubr.bf16.mxu0 %v6317
        %6414 = vmatmul.mubr.bf16.gmra.mrb[0].mxu0 %v6207
        %v6415 = vpop.f32.mrb[0].mxu0
        %v6416 = vadd.f32 0.0, %v6415
        %v6417 = vpop.f32.mrb[0].mxu0
        %v6418 = vpop.f32.mrb[0].mxu0
        %v6419 = vadd.f32 0.0, %v6418
        %v6420 = vpop.f32.mrb[0].mxu0
        %6421 = vmatprep.mubr.bf16.mxu0 %v6320
        %6422 = vmatmul.mubr.bf16.gmra.mrb[0].mxu0 %v6209
        %v6423 = vpop.f32.mrb[0].mxu0
        %v6424 = vadd.f32 0.0, %v6423
        %v6425 = vpop.f32.mrb[0].mxu0
        %v6426 = vpop.f32.mrb[0].mxu0
        %v6427 = vadd.f32 0.0, %v6426
        %v6428 = vpop.f32.mrb[0].mxu0
        %6429 = vmatprep.mubr.bf16.mxu0 %v6323
        %6430 = vmatmul.mubr.bf16.gmra.mrb[0].mxu0 %v6211
        %v6431 = vpop.f32.mrb[0].mxu0
        %v6432 = vadd.f32 0.0, %v6431
        %v6433 = vpop.f32.mrb[0].mxu0
        %v6434 = vpop.f32.mrb[0].mxu0
        %v6435 = vadd.f32 0.0, %v6434
        %v6436 = vpop.f32.mrb[0].mxu0
        %6437 = vdwg.mxu0
        %v6438 = vadd.f32 %v5972, %v6360
        %v6439 = vadd.f32 %v5973, %v6363
        %v6440 = vadd.f32 %v5974, %v6368
        %v6441 = vadd.f32 %v5975, %v6371
        %v6442 = vadd.f32 %v5976, %v6376
        %v6443 = vadd.f32 %v5977, %v6379
        %v6444 = vadd.f32 %v5978, %v6384
        %v6445 = vadd.f32 %v5979, %v6387
        %v6446 = vadd.f32 %v5980, %v6392
        %v6447 = vadd.f32 %v5981, %v6395
        %v6448 = vadd.f32 %v5982, %v6400
        %v6449 = vadd.f32 %v5983, %v6403
        %v6450 = vadd.f32 %v5984, %v6408
        %v6451 = vadd.f32 %v5985, %v6411
        %v6452 = vadd.f32 %v5986, %v6416
        %v6453 = vadd.f32 %v5987, %v6419
        %6470 = vrot.lane.b32.xlu0 %v6376, 64
        %v6471 = vpop.permute.xlu0 %6470
        %6472 = vrot.lane.b32.xlu0 %v6379, 64
        %v6473 = vpop.permute.xlu0 %6472
        %6474 = vrot.lane.b32.xlu0 %v6384, 64
        %v6475 = vpop.permute.xlu0 %6474
        %6476 = vrot.lane.b32.xlu0 %v6387, 64
        %v6477 = vpop.permute.xlu0 %6476
        %6478 = vrot.lane.b32.xlu0 %v6392, 64
        %v6479 = vpop.permute.xlu0 %6478
        %6480 = vrot.lane.b32.xlu0 %v6395, 64
        %v6481 = vpop.permute.xlu0 %6480
        %6482 = vrot.lane.b32.xlu0 %v6400, 64
        %v6483 = vpop.permute.xlu0 %6482
        %6484 = vrot.lane.b32.xlu0 %v6403, 64
        %v6485 = vpop.permute.xlu0 %6484
        %6486 = vrot.lane.b32.xlu0 %v6408, 64
        %v6487 = vpop.permute.xlu0 %6486
        %6488 = vrot.lane.b32.xlu0 %v6411, 64
        %v6489 = vpop.permute.xlu0 %6488
        %6490 = vrot.lane.b32.xlu0 %v6416, 64
        %v6491 = vpop.permute.xlu0 %6490
        %6492 = vrot.lane.b32.xlu0 %v6419, 64
        %v6493 = vpop.permute.xlu0 %6492
        %6494 = vrot.lane.b32.xlu0 %v6424, 64
        %v6495 = vpop.permute.xlu0 %6494
        %6496 = vrot.lane.b32.xlu0 %v6427, 64
        %v6497 = vpop.permute.xlu0 %6496
        %6498 = vrot.lane.b32.xlu0 %v6432, 64
        %v6499 = vpop.permute.xlu0 %6498
        %6500 = vrot.lane.b32.xlu0 %v6435, 64
        %v6501 = vpop.permute.xlu0 %6500
        %v6518 = vadd.f32 %v6438, %v6471
        %v6519 = vadd.f32 %v6439, %v6473
        %v6520 = vadd.f32 %v6440, %v6475
        %v6521 = vadd.f32 %v6441, %v6477
        %v6522 = vadd.f32 %v6442, %v6479
        %v6523 = vadd.f32 %v6443, %v6481
        %v6524 = vadd.f32 %v6444, %v6483
        %v6525 = vadd.f32 %v6445, %v6485
        %v6526 = vadd.f32 %v6446, %v6487
        %v6527 = vadd.f32 %v6447, %v6489
        %v6528 = vadd.f32 %v6448, %v6491
        %v6529 = vadd.f32 %v6449, %v6493
        %v6530 = vadd.f32 %v6450, %v6495
        %v6531 = vadd.f32 %v6451, %v6497
        %v6532 = vadd.f32 %v6452, %v6499
        %v6533 = vadd.f32 %v6453, %v6501
        %v6534 = vsel %vm1083, %v6518, 0.0
        %v6535 = vsel %vm1083, %v6519, 0.0
        %v6536 = vadd.f32 %v6534, %v6535
        %v6537 = vsel %vm1083, %v6520, 0.0
        %v6538 = vadd.f32 %v6536, %v6537
        %v6539 = vsel %vm1083, %v6521, 0.0
        %v6540 = vadd.f32 %v6538, %v6539
        %v6541 = vsel %vm1083, %v6522, 0.0
        %v6542 = vadd.f32 %v6540, %v6541
        %v6543 = vsel %vm1083, %v6523, 0.0
        %v6544 = vadd.f32 %v6542, %v6543
        %v6545 = vsel %vm1083, %v6524, 0.0
        %v6546 = vadd.f32 %v6544, %v6545
        %v6547 = vsel %vm1083, %v6525, 0.0
        %v6548 = vadd.f32 %v6546, %v6547
        %v6549 = vsel %vm1083, %v6526, 0.0
        %v6550 = vadd.f32 %v6548, %v6549
        %v6551 = vsel %vm1083, %v6527, 0.0
        %v6552 = vadd.f32 %v6550, %v6551
        %v6553 = vsel %vm1083, %v6528, 0.0
        %v6554 = vadd.f32 %v6552, %v6553
        %v6555 = vsel %vm1083, %v6529, 0.0
        %v6556 = vadd.f32 %v6554, %v6555
        %v6557 = vsel %vm1083, %v6530, 0.0
        %v6558 = vadd.f32 %v6556, %v6557
        %v6559 = vsel %vm1083, %v6531, 0.0
        %v6560 = vadd.f32 %v6558, %v6559
        %v6561 = vsel %vm1083, %v6532, 0.0
        %v6562 = vadd.f32 %v6560, %v6561
        %v6563 = vsel %vm1083, %v6533, 0.0
        %v6564 = vadd.f32 %v6562, %v6563
        %v6565 = vrot.slane %v6564, 4
        %v6566 = vadd.f32 %v6564, %v6565
        %v6567 = vrot.slane %v6566, 2
        %v6568 = vadd.f32 %v6566, %v6567
        %v6569 = vrot.slane %v6568, 1
        %v6570 = vadd.f32 %v6568, %v6569
        %v6571 = vmul.f32 %v6570, 0.0078125
        %v6572 = vmul.f32 %v6518, %v6518
        %v6573 = vmul.f32 %v6519, %v6519
        %v6574 = vmul.f32 %v6520, %v6520
        %v6575 = vmul.f32 %v6521, %v6521
        %v6576 = vmul.f32 %v6522, %v6522
        %v6577 = vmul.f32 %v6523, %v6523
        %v6578 = vmul.f32 %v6524, %v6524
        %v6579 = vmul.f32 %v6525, %v6525
        %v6580 = vmul.f32 %v6526, %v6526
        %v6581 = vmul.f32 %v6527, %v6527
        %v6582 = vmul.f32 %v6528, %v6528
        %v6583 = vmul.f32 %v6529, %v6529
        %v6584 = vmul.f32 %v6530, %v6530
        %v6585 = vmul.f32 %v6531, %v6531
        %v6586 = vmul.f32 %v6532, %v6532
        %v6587 = vmul.f32 %v6533, %v6533
        %v6588 = vsel %vm1083, %v6572, 0.0
        %v6589 = vsel %vm1083, %v6573, 0.0
        %v6590 = vadd.f32 %v6588, %v6589
        %v6591 = vsel %vm1083, %v6574, 0.0
        %v6592 = vadd.f32 %v6590, %v6591
        %v6593 = vsel %vm1083, %v6575, 0.0
        %v6594 = vadd.f32 %v6592, %v6593
        %v6595 = vsel %vm1083, %v6576, 0.0
        %v6596 = vadd.f32 %v6594, %v6595
        %v6597 = vsel %vm1083, %v6577, 0.0
        %v6598 = vadd.f32 %v6596, %v6597
        %v6599 = vsel %vm1083, %v6578, 0.0
        %v6600 = vadd.f32 %v6598, %v6599
        %v6601 = vsel %vm1083, %v6579, 0.0
        %v6602 = vadd.f32 %v6600, %v6601
        %v6603 = vsel %vm1083, %v6580, 0.0
        %v6604 = vadd.f32 %v6602, %v6603
        %v6605 = vsel %vm1083, %v6581, 0.0
        %v6606 = vadd.f32 %v6604, %v6605
        %v6607 = vsel %vm1083, %v6582, 0.0
        %v6608 = vadd.f32 %v6606, %v6607
        %v6609 = vsel %vm1083, %v6583, 0.0
        %v6610 = vadd.f32 %v6608, %v6609
        %v6611 = vsel %vm1083, %v6584, 0.0
        %v6612 = vadd.f32 %v6610, %v6611
        %v6613 = vsel %vm1083, %v6585, 0.0
        %v6614 = vadd.f32 %v6612, %v6613
        %v6615 = vsel %vm1083, %v6586, 0.0
        %v6616 = vadd.f32 %v6614, %v6615
        %v6617 = vsel %vm1083, %v6587, 0.0
        %v6618 = vadd.f32 %v6616, %v6617
        %v6619 = vrot.slane %v6618, 4
        %v6620 = vadd.f32 %v6618, %v6619
        %v6621 = vrot.slane %v6620, 2
        %v6622 = vadd.f32 %v6620, %v6621
        %v6623 = vrot.slane %v6622, 1
        %v6624 = vadd.f32 %v6622, %v6623
        %v6625 = vmul.f32 %v6624, 0.0078125
        %v6626 = vmul.f32 %v6571, %v6571
        %v6627 = vsub.f32 %v6625, %v6626
        %v6628 = vsub.f32 %v6518, %v6571
        %v6629 = vsub.f32 %v6519, %v6571
        %v6630 = vsub.f32 %v6520, %v6571
        %v6631 = vsub.f32 %v6521, %v6571
        %v6632 = vsub.f32 %v6522, %v6571
        %v6633 = vsub.f32 %v6523, %v6571
        %v6634 = vsub.f32 %v6524, %v6571
        %v6635 = vsub.f32 %v6525, %v6571
        %v6636 = vsub.f32 %v6526, %v6571
        %v6637 = vsub.f32 %v6527, %v6571
        %v6638 = vsub.f32 %v6528, %v6571
        %v6639 = vsub.f32 %v6529, %v6571
        %v6640 = vsub.f32 %v6530, %v6571
        %v6641 = vsub.f32 %v6531, %v6571
        %v6642 = vsub.f32 %v6532, %v6571
        %v6643 = vsub.f32 %v6533, %v6571
        %v6644 = vadd.f32 %v6627, 1e-05
        %v6645 = vrsqrt.pop %v6644
        %v6646 = vmul.f32 %v6628, %v6645
        %v6647 = vmul.f32 %v6629, %v6645
        %v6648 = vmul.f32 %v6630, %v6645
        %v6649 = vmul.f32 %v6631, %v6645
        %v6650 = vmul.f32 %v6632, %v6645
        %v6651 = vmul.f32 %v6633, %v6645
        %v6652 = vmul.f32 %v6634, %v6645
        %v6653 = vmul.f32 %v6635, %v6645
        %v6654 = vmul.f32 %v6636, %v6645
        %v6655 = vmul.f32 %v6637, %v6645
        %v6656 = vmul.f32 %v6638, %v6645
        %v6657 = vmul.f32 %v6639, %v6645
        %v6658 = vmul.f32 %v6640, %v6645
        %v6659 = vmul.f32 %v6641, %v6645
        %v6660 = vmul.f32 %v6642, %v6645
        %v6661 = vmul.f32 %v6643, %v6645
        %v6662 = vld [vmem:[%s13] sm:$0x1]
        %v6664 = vlaneseq
        %v6665 = vshrl.u32 %v6664, 7
        %v6666 = vsub.s32 0, %v6665
        %v6667 = vrot.slane %v6662, %v6666
        %v6669 = vmul.f32 %v6646, %v6667
        %v6670 = vmul.f32 %v6647, %v6667
        %v6671 = vmul.f32 %v6648, %v6667
        %v6672 = vmul.f32 %v6649, %v6667
        %v6673 = vmul.f32 %v6650, %v6667
        %v6674 = vmul.f32 %v6651, %v6667
        %v6675 = vmul.f32 %v6652, %v6667
        %v6676 = vmul.f32 %v6653, %v6667
        %v6677 = vmul.f32 %v6654, %v6667
        %v6678 = vmul.f32 %v6655, %v6667
        %v6679 = vmul.f32 %v6656, %v6667
        %v6680 = vmul.f32 %v6657, %v6667
        %v6681 = vmul.f32 %v6658, %v6667
        %v6682 = vmul.f32 %v6659, %v6667
        %v6683 = vmul.f32 %v6660, %v6667
        %v6684 = vmul.f32 %v6661, %v6667
        %v6685 = vld [vmem:[%s14] sm:$0x1]
        %v6687 = vlaneseq
        %v6688 = vshrl.u32 %v6687, 7
        %v6689 = vsub.s32 0, %v6688
        %v6690 = vrot.slane %v6685, %v6689
        %v6692 = vadd.f32 %v6669, %v6690
        %v6693 = vadd.f32 %v6670, %v6690
        %v6694 = vadd.f32 %v6671, %v6690
        %v6695 = vadd.f32 %v6672, %v6690
        %v6696 = vadd.f32 %v6673, %v6690
        %v6697 = vadd.f32 %v6674, %v6690
        %v6698 = vadd.f32 %v6675, %v6690
        %v6699 = vadd.f32 %v6676, %v6690
        %v6700 = vadd.f32 %v6677, %v6690
        %v6701 = vadd.f32 %v6678, %v6690
        %v6702 = vadd.f32 %v6679, %v6690
        %v6703 = vadd.f32 %v6680, %v6690
        %v6704 = vadd.f32 %v6681, %v6690
        %v6705 = vadd.f32 %v6682, %v6690
        %v6706 = vadd.f32 %v6683, %v6690
        %v6707 = vadd.f32 %v6684, %v6690
        %vm6708 = vcmp.ge.f32.partialorder %v6692, 0.0
        %vm6709 = vcmp.ge.f32.partialorder %v6693, 0.0
        %vm6710 = vcmp.ge.f32.partialorder %v6694, 0.0
        %vm6711 = vcmp.ge.f32.partialorder %v6695, 0.0
        %vm6712 = vcmp.ge.f32.partialorder %v6696, 0.0
        %vm6713 = vcmp.ge.f32.partialorder %v6697, 0.0
        %vm6714 = vcmp.ge.f32.partialorder %v6698, 0.0
        %vm6715 = vcmp.ge.f32.partialorder %v6699, 0.0
        %vm6716 = vcmp.ge.f32.partialorder %v6700, 0.0
        %vm6717 = vcmp.ge.f32.partialorder %v6701, 0.0
        %vm6718 = vcmp.ge.f32.partialorder %v6702, 0.0
        %vm6719 = vcmp.ge.f32.partialorder %v6703, 0.0
        %vm6720 = vcmp.ge.f32.partialorder %v6704, 0.0
        %vm6721 = vcmp.ge.f32.partialorder %v6705, 0.0
        %vm6722 = vcmp.ge.f32.partialorder %v6706, 0.0
        %vm6723 = vcmp.ge.f32.partialorder %v6707, 0.0
        %v6724 = vld [vmem:[%s15] sm:$0x1]
        %v6726 = vlaneseq
        %v6727 = vshrl.u32 %v6726, 7
        %v6728 = vsub.s32 0, %v6727
        %v6729 = vrot.slane %v6724, %v6728
        %v6731 = vmul.f32 %v6729, %v6692
        %v6732 = vmul.f32 %v6729, %v6693
        %v6733 = vmul.f32 %v6729, %v6694
        %v6734 = vmul.f32 %v6729, %v6695
        %v6735 = vmul.f32 %v6729, %v6696
        %v6736 = vmul.f32 %v6729, %v6697
        %v6737 = vmul.f32 %v6729, %v6698
        %v6738 = vmul.f32 %v6729, %v6699
        %v6739 = vmul.f32 %v6729, %v6700
        %v6740 = vmul.f32 %v6729, %v6701
        %v6741 = vmul.f32 %v6729, %v6702
        %v6742 = vmul.f32 %v6729, %v6703
        %v6743 = vmul.f32 %v6729, %v6704
        %v6744 = vmul.f32 %v6729, %v6705
        %v6745 = vmul.f32 %v6729, %v6706
        %v6746 = vmul.f32 %v6729, %v6707
        %v6747 = vsel %vm6708, %v6692, %v6731
        %v6748 = vsel %vm6709, %v6693, %v6732
        %v6749 = vsel %vm6710, %v6694, %v6733
        %v6750 = vsel %vm6711, %v6695, %v6734
        %v6751 = vsel %vm6712, %v6696, %v6735
        %v6752 = vsel %vm6713, %v6697, %v6736
        %v6753 = vsel %vm6714, %v6698, %v6737
        %v6754 = vsel %vm6715, %v6699, %v6738
        %v6755 = vsel %vm6716, %v6700, %v6739
        %v6756 = vsel %vm6717, %v6701, %v6740
        %v6757 = vsel %vm6718, %v6702, %v6741
        %v6758 = vsel %vm6719, %v6703, %v6742
        %v6759 = vsel %vm6720, %v6704, %v6743
        %v6760 = vsel %vm6721, %v6705, %v6744
        %v6761 = vsel %vm6722, %v6706, %v6745
        %v6762 = vsel %vm6723, %v6707, %v6746
        %v6763 = vpack.c.bf16 %v6747, %v6747
        %v6764 = vpack.c.bf16 %v6748, %v6748
        %v6765 = vpack.c.bf16 %v6749, %v6749
        %v6766 = vpack.c.bf16 %v6750, %v6750
        %v6767 = vpack.c.bf16 %v6751, %v6751
        %v6768 = vpack.c.bf16 %v6752, %v6752
        %v6769 = vpack.c.bf16 %v6753, %v6753
        %v6770 = vpack.c.bf16 %v6754, %v6754
        %v6771 = vpack.c.bf16 %v6755, %v6755
        %v6772 = vpack.c.bf16 %v6756, %v6756
        %v6773 = vpack.c.bf16 %v6757, %v6757
        %v6774 = vpack.c.bf16 %v6758, %v6758
        %v6775 = vpack.c.bf16 %v6759, %v6759
        %v6776 = vpack.c.bf16 %v6760, %v6760
        %v6777 = vpack.c.bf16 %v6761, %v6761
        %v6778 = vpack.c.bf16 %v6762, %v6762
        %v6795 = vunpack.c.l.b16 %v6763
        %v6796 = vunpack.c.l.b16 %v6764
        %v6797 = vunpack.c.l.b16 %v6765
        %v6798 = vunpack.c.l.b16 %v6766
        %v6799 = vunpack.c.l.b16 %v6767
        %v6800 = vunpack.c.l.b16 %v6768
        %v6801 = vunpack.c.l.b16 %v6769
        %v6802 = vunpack.c.l.b16 %v6770
        %v6803 = vunpack.c.l.b16 %v6771
        %v6804 = vunpack.c.l.b16 %v6772
        %v6805 = vunpack.c.l.b16 %v6773
        %v6806 = vunpack.c.l.b16 %v6774
        %v6807 = vunpack.c.l.b16 %v6775
        %v6808 = vunpack.c.l.b16 %v6776
        %v6809 = vunpack.c.l.b16 %v6777
        %v6810 = vunpack.c.l.b16 %v6778
        %v6811 = vpack.c.b16 %v6795, %v6795
        %v6812 = vpack.c.b16 %v6796, %v6796
        %v6813 = vpack.c.b16 %v6797, %v6797
        %v6814 = vpack.c.b16 %v6798, %v6798
        %v6815 = vpack.c.b16 %v6799, %v6799
        %v6816 = vpack.c.b16 %v6800, %v6800
        %v6817 = vpack.c.b16 %v6801, %v6801
        %v6818 = vpack.c.b16 %v6802, %v6802
        %v6819 = vpack.c.b16 %v6803, %v6803
        %v6820 = vpack.c.b16 %v6804, %v6804
        %v6821 = vpack.c.b16 %v6805, %v6805
        %v6822 = vpack.c.b16 %v6806, %v6806
        %v6823 = vpack.c.b16 %v6807, %v6807
        %v6824 = vpack.c.b16 %v6808, %v6808
        %v6825 = vpack.c.b16 %v6809, %v6809
        %v6826 = vpack.c.b16 %v6810, %v6810
        %v6828 = vshrl.u32 %v6811, 16
        %v6830 = vrot.slane %v6828, 7
        %v6831 = vshll.u32 %v6811, 16
        %v6833 = vor.u32 %v6830, %v6831
        %v6834 = vrot.slane %v6830, 4
        %v6836 = vshrl.u32 %v6812, 16
        %v6838 = vrot.slane %v6836, 7
        %v6839 = vshll.u32 %v6812, 16
        %v6841 = vor.u32 %v6838, %v6839
        %v6842 = vrot.slane %v6838, 4
        %v6844 = vshrl.u32 %v6813, 16
        %v6846 = vrot.slane %v6844, 7
        %v6847 = vshll.u32 %v6813, 16
        %v6849 = vor.u32 %v6846, %v6847
        %v6850 = vrot.slane %v6846, 4
        %v6852 = vshrl.u32 %v6814, 16
        %v6854 = vrot.slane %v6852, 7
        %v6855 = vshll.u32 %v6814, 16
        %v6857 = vor.u32 %v6854, %v6855
        %v6858 = vrot.slane %v6854, 4
        %v6860 = vshrl.u32 %v6815, 16
        %v6862 = vrot.slane %v6860, 7
        %v6863 = vshll.u32 %v6815, 16
        %v6865 = vor.u32 %v6862, %v6863
        %v6866 = vrot.slane %v6862, 4
        %v6868 = vshrl.u32 %v6816, 16
        %v6870 = vrot.slane %v6868, 7
        %v6871 = vshll.u32 %v6816, 16
        %v6873 = vor.u32 %v6870, %v6871
        %v6874 = vrot.slane %v6870, 4
        %v6876 = vshrl.u32 %v6817, 16
        %v6878 = vrot.slane %v6876, 7
        %v6879 = vshll.u32 %v6817, 16
        %v6881 = vor.u32 %v6878, %v6879
        %v6882 = vrot.slane %v6878, 4
        %v6884 = vshrl.u32 %v6818, 16
        %v6886 = vrot.slane %v6884, 7
        %v6887 = vshll.u32 %v6818, 16
        %v6889 = vor.u32 %v6886, %v6887
        %v6890 = vrot.slane %v6886, 4
        %v6892 = vshrl.u32 %v6819, 16
        %v6894 = vrot.slane %v6892, 7
        %v6895 = vshll.u32 %v6819, 16
        %v6897 = vor.u32 %v6894, %v6895
        %v6898 = vrot.slane %v6894, 4
        %v6900 = vshrl.u32 %v6820, 16
        %v6902 = vrot.slane %v6900, 7
        %v6903 = vshll.u32 %v6820, 16
        %v6905 = vor.u32 %v6902, %v6903
        %v6906 = vrot.slane %v6902, 4
        %v6908 = vshrl.u32 %v6821, 16
        %v6910 = vrot.slane %v6908, 7
        %v6911 = vshll.u32 %v6821, 16
        %v6913 = vor.u32 %v6910, %v6911
        %v6914 = vrot.slane %v6910, 4
        %v6916 = vshrl.u32 %v6822, 16
        %v6918 = vrot.slane %v6916, 7
        %v6919 = vshll.u32 %v6822, 16
        %v6921 = vor.u32 %v6918, %v6919
        %v6922 = vrot.slane %v6918, 4
        %v6924 = vshrl.u32 %v6823, 16
        %v6926 = vrot.slane %v6924, 7
        %v6927 = vshll.u32 %v6823, 16
        %v6929 = vor.u32 %v6926, %v6927
        %v6930 = vrot.slane %v6926, 4
        %v6932 = vshrl.u32 %v6824, 16
        %v6934 = vrot.slane %v6932, 7
        %v6935 = vshll.u32 %v6824, 16
        %v6937 = vor.u32 %v6934, %v6935
        %v6938 = vrot.slane %v6934, 4
        %v6940 = vshrl.u32 %v6825, 16
        %v6942 = vrot.slane %v6940, 7
        %v6943 = vshll.u32 %v6825, 16
        %v6945 = vor.u32 %v6942, %v6943
        %v6946 = vrot.slane %v6942, 4
        %v6948 = vshrl.u32 %v6826, 16
        %v6950 = vrot.slane %v6948, 7
        %v6951 = vshll.u32 %v6826, 16
        %v6953 = vor.u32 %v6950, %v6951
        %v6954 = vrot.slane %v6950, 4
        %6955 = vrot.lane.b32.xlu0 %v6833, 64
        %v6956 = vpop.permute.xlu0 %6955
        %6957 = vrot.lane.b32.xlu0 %v6834, 64
        %v6958 = vpop.permute.xlu0 %6957
        %6959 = vrot.lane.b32.xlu0 %v6841, 64
        %v6960 = vpop.permute.xlu0 %6959
        %6961 = vrot.lane.b32.xlu0 %v6842, 64
        %v6962 = vpop.permute.xlu0 %6961
        %6963 = vrot.lane.b32.xlu0 %v6849, 64
        %v6964 = vpop.permute.xlu0 %6963
        %6965 = vrot.lane.b32.xlu0 %v6850, 64
        %v6966 = vpop.permute.xlu0 %6965
        %6967 = vrot.lane.b32.xlu0 %v6857, 64
        %v6968 = vpop.permute.xlu0 %6967
        %6969 = vrot.lane.b32.xlu0 %v6858, 64
        %v6970 = vpop.permute.xlu0 %6969
        %6971 = vrot.lane.b32.xlu0 %v6865, 64
        %v6972 = vpop.permute.xlu0 %6971
        %6973 = vrot.lane.b32.xlu0 %v6866, 64
        %v6974 = vpop.permute.xlu0 %6973
        %6975 = vrot.lane.b32.xlu0 %v6873, 64
        %v6976 = vpop.permute.xlu0 %6975
        %6977 = vrot.lane.b32.xlu0 %v6874, 64
        %v6978 = vpop.permute.xlu0 %6977
        %6979 = vrot.lane.b32.xlu0 %v6881, 64
        %v6980 = vpop.permute.xlu0 %6979
        %6981 = vrot.lane.b32.xlu0 %v6882, 64
        %v6982 = vpop.permute.xlu0 %6981
        %6983 = vrot.lane.b32.xlu0 %v6889, 64
        %v6984 = vpop.permute.xlu0 %6983
        %6985 = vrot.lane.b32.xlu0 %v6890, 64
        %v6986 = vpop.permute.xlu0 %6985
        %6987 = vrot.lane.b32.xlu0 %v6897, 64
        %v6988 = vpop.permute.xlu0 %6987
        %6989 = vrot.lane.b32.xlu0 %v6898, 64
        %v6990 = vpop.permute.xlu0 %6989
        %6991 = vrot.lane.b32.xlu0 %v6905, 64
        %v6992 = vpop.permute.xlu0 %6991
        %6993 = vrot.lane.b32.xlu0 %v6906, 64
        %v6994 = vpop.permute.xlu0 %6993
        %6995 = vrot.lane.b32.xlu0 %v6913, 64
        %v6996 = vpop.permute.xlu0 %6995
        %6997 = vrot.lane.b32.xlu0 %v6914, 64
        %v6998 = vpop.permute.xlu0 %6997
        %6999 = vrot.lane.b32.xlu0 %v6921, 64
        %v7000 = vpop.permute.xlu0 %6999
        %7001 = vrot.lane.b32.xlu0 %v6922, 64
        %v7002 = vpop.permute.xlu0 %7001
        %7003 = vrot.lane.b32.xlu0 %v6929, 64
        %v7004 = vpop.permute.xlu0 %7003
        %7005 = vrot.lane.b32.xlu0 %v6930, 64
        %v7006 = vpop.permute.xlu0 %7005
        %7007 = vrot.lane.b32.xlu0 %v6937, 64
        %v7008 = vpop.permute.xlu0 %7007
        %7009 = vrot.lane.b32.xlu0 %v6938, 64
        %v7010 = vpop.permute.xlu0 %7009
        %7011 = vrot.lane.b32.xlu0 %v6945, 64
        %v7012 = vpop.permute.xlu0 %7011
        %7013 = vrot.lane.b32.xlu0 %v6946, 64
        %v7014 = vpop.permute.xlu0 %7013
        %7015 = vrot.lane.b32.xlu0 %v6953, 64
        %v7016 = vpop.permute.xlu0 %7015
        %7017 = vrot.lane.b32.xlu0 %v6954, 64
        %v7018 = vpop.permute.xlu0 %7017
        %v7051 = vld [vmem:[%s880 + $0x4] sm:$0xf]
        %v7052 = vsel %vm2798, %v6956, %v7051
        %7053 = vst [vmem:[%s880 + $0x4] sm:$0xf] %v7052
        %v7054 = vld [vmem:[%s880 + $0xc] sm:$0x1]
        %v7055 = vsel %vm2803, %v6958, %v7054
        %7056 = vst [vmem:[%s880 + $0xc] sm:$0x1] %v7055
        %v7057 = vld [vmem:[%s880 + $0x14] sm:$0xf]
        %v7058 = vsel %vm2798, %v6960, %v7057
        %7059 = vst [vmem:[%s880 + $0x14] sm:$0xf] %v7058
        %v7060 = vld [vmem:[%s880 + $0x1c] sm:$0x1]
        %v7061 = vsel %vm2803, %v6962, %v7060
        %7062 = vst [vmem:[%s880 + $0x1c] sm:$0x1] %v7061
        %v7063 = vld [vmem:[%s880 + $0x24] sm:$0xf]
        %v7064 = vsel %vm2798, %v6964, %v7063
        %7065 = vst [vmem:[%s880 + $0x24] sm:$0xf] %v7064
        %v7066 = vld [vmem:[%s880 + $0x2c] sm:$0x1]
        %v7067 = vsel %vm2803, %v6966, %v7066
        %7068 = vst [vmem:[%s880 + $0x2c] sm:$0x1] %v7067
        %v7069 = vld [vmem:[%s880 + $0x34] sm:$0xf]
        %v7070 = vsel %vm2798, %v6968, %v7069
        %7071 = vst [vmem:[%s880 + $0x34] sm:$0xf] %v7070
        %v7072 = vld [vmem:[%s880 + $0x3c] sm:$0x1]
        %v7073 = vsel %vm2803, %v6970, %v7072
        %7074 = vst [vmem:[%s880 + $0x3c] sm:$0x1] %v7073
        %v7075 = vld [vmem:[%s880 + $0x44] sm:$0xf]
        %v7076 = vsel %vm2798, %v6972, %v7075
        %7077 = vst [vmem:[%s880 + $0x44] sm:$0xf] %v7076
        %v7078 = vld [vmem:[%s880 + $0x4c] sm:$0x1]
        %v7079 = vsel %vm2803, %v6974, %v7078
        %7080 = vst [vmem:[%s880 + $0x4c] sm:$0x1] %v7079
        %v7081 = vld [vmem:[%s880 + $0x54] sm:$0xf]
        %v7082 = vsel %vm2798, %v6976, %v7081
        %7083 = vst [vmem:[%s880 + $0x54] sm:$0xf] %v7082
        %v7084 = vld [vmem:[%s880 + $0x5c] sm:$0x1]
        %v7085 = vsel %vm2803, %v6978, %v7084
        %7086 = vst [vmem:[%s880 + $0x5c] sm:$0x1] %v7085
        %v7087 = vld [vmem:[%s880 + $0x64] sm:$0xf]
        %v7088 = vsel %vm2798, %v6980, %v7087
        %7089 = vst [vmem:[%s880 + $0x64] sm:$0xf] %v7088
        %v7090 = vld [vmem:[%s880 + $0x6c] sm:$0x1]
        %v7091 = vsel %vm2803, %v6982, %v7090
        %7092 = vst [vmem:[%s880 + $0x6c] sm:$0x1] %v7091
        %v7093 = vld [vmem:[%s880 + $0x74] sm:$0xf]
        %v7094 = vsel %vm2798, %v6984, %v7093
        %7095 = vst [vmem:[%s880 + $0x74] sm:$0xf] %v7094
        %v7096 = vld [vmem:[%s880 + $0x7c] sm:$0x1]
        %v7097 = vsel %vm2803, %v6986, %v7096
        %7098 = vst [vmem:[%s880 + $0x7c] sm:$0x1] %v7097
        %v7099 = vld [vmem:[%s880 + $0x84] sm:$0xf]
        %v7100 = vsel %vm2798, %v6988, %v7099
        %7101 = vst [vmem:[%s880 + $0x84] sm:$0xf] %v7100
        %v7102 = vld [vmem:[%s880 + $0x8c] sm:$0x1]
        %v7103 = vsel %vm2803, %v6990, %v7102
        %7104 = vst [vmem:[%s880 + $0x8c] sm:$0x1] %v7103
        %v7105 = vld [vmem:[%s880 + $0x94] sm:$0xf]
        %v7106 = vsel %vm2798, %v6992, %v7105
        %7107 = vst [vmem:[%s880 + $0x94] sm:$0xf] %v7106
        %v7108 = vld [vmem:[%s880 + $0x9c] sm:$0x1]
        %v7109 = vsel %vm2803, %v6994, %v7108
        %7110 = vst [vmem:[%s880 + $0x9c] sm:$0x1] %v7109
        %v7111 = vld [vmem:[%s880 + $0xa4] sm:$0xf]
        %v7112 = vsel %vm2798, %v6996, %v7111
        %7113 = vst [vmem:[%s880 + $0xa4] sm:$0xf] %v7112
        %v7114 = vld [vmem:[%s880 + $0xac] sm:$0x1]
        %v7115 = vsel %vm2803, %v6998, %v7114
        %7116 = vst [vmem:[%s880 + $0xac] sm:$0x1] %v7115
        %v7117 = vld [vmem:[%s880 + $0xb4] sm:$0xf]
        %v7118 = vsel %vm2798, %v7000, %v7117
        %7119 = vst [vmem:[%s880 + $0xb4] sm:$0xf] %v7118
        %v7120 = vld [vmem:[%s880 + $0xbc] sm:$0x1]
        %v7121 = vsel %vm2803, %v7002, %v7120
        %7122 = vst [vmem:[%s880 + $0xbc] sm:$0x1] %v7121
        %v7123 = vld [vmem:[%s880 + $0xc4] sm:$0xf]
        %v7124 = vsel %vm2798, %v7004, %v7123
        %7125 = vst [vmem:[%s880 + $0xc4] sm:$0xf] %v7124
        %v7126 = vld [vmem:[%s880 + $0xcc] sm:$0x1]
        %v7127 = vsel %vm2803, %v7006, %v7126
        %7128 = vst [vmem:[%s880 + $0xcc] sm:$0x1] %v7127
        %v7129 = vld [vmem:[%s880 + $0xd4] sm:$0xf]
        %v7130 = vsel %vm2798, %v7008, %v7129
        %7131 = vst [vmem:[%s880 + $0xd4] sm:$0xf] %v7130
        %v7132 = vld [vmem:[%s880 + $0xdc] sm:$0x1]
        %v7133 = vsel %vm2803, %v7010, %v7132
        %7134 = vst [vmem:[%s880 + $0xdc] sm:$0x1] %v7133
        %v7135 = vld [vmem:[%s880 + $0xe4] sm:$0xf]
        %v7136 = vsel %vm2798, %v7012, %v7135
        %7137 = vst [vmem:[%s880 + $0xe4] sm:$0xf] %v7136
        %v7138 = vld [vmem:[%s880 + $0xec] sm:$0x1]
        %v7139 = vsel %vm2803, %v7014, %v7138
        %7140 = vst [vmem:[%s880 + $0xec] sm:$0x1] %v7139
        %v7141 = vld [vmem:[%s880 + $0xf4] sm:$0xf]
        %v7142 = vsel %vm2798, %v7016, %v7141
        %7143 = vst [vmem:[%s880 + $0xf4] sm:$0xf] %v7142
        %v7144 = vld [vmem:[%s880 + $0xfc] sm:$0x1]
        %v7145 = vsel %vm2803, %v7018, %v7144
        %7146 = vst [vmem:[%s880 + $0xfc] sm:$0x1] %v7145
        %v7147 = vld [vmem:[%s17] sm:$0x1]
        %v7149 = vlaneseq
        %v7150 = vshrl.u32 %v7149, 7
        %v7151 = vsub.s32 0, %v7150
        %v7152 = vrot.slane %v7147, %v7151
        %v7154 = vld [vmem:[#allocation2] sm:$0xff]
        %v7155 = vld [vmem:[#allocation2 + $0x10] sm:$0xff]
        %v7156 = vld [vmem:[#allocation2 + $0x20] sm:$0xff]
        %v7157 = vld [vmem:[#allocation2 + $0x30] sm:$0xff]
        %v7158 = vld [vmem:[#allocation2 + $0x40] sm:$0xff]
        %v7159 = vld [vmem:[#allocation2 + $0x50] sm:$0xff]
        %v7160 = vld [vmem:[#allocation2 + $0x60] sm:$0xff]
        %v7161 = vld [vmem:[#allocation2 + $0x70] sm:$0xff]
        %v7162 = vld [vmem:[#allocation2 + $0x80] sm:$0xff]
        %v7163 = vld [vmem:[#allocation2 + $0x90] sm:$0xff]
        %v7164 = vld [vmem:[#allocation2 + $0xa0] sm:$0xff]
        %v7165 = vld [vmem:[#allocation2 + $0xb0] sm:$0xff]
        %v7166 = vld [vmem:[#allocation2 + $0xc0] sm:$0xff]
        %v7167 = vld [vmem:[#allocation2 + $0xd0] sm:$0xff]
        %v7168 = vld [vmem:[#allocation2 + $0xe0] sm:$0xff]
        %v7169 = vld [vmem:[#allocation2 + $0xf0] sm:$0xff]
        %v7170 = vld [vmem:[#allocation2 + $0x100] sm:$0xff]
        %v7171 = vld [vmem:[#allocation2 + $0x110] sm:$0xff]
        %v7172 = vld [vmem:[#allocation2 + $0x120] sm:$0xff]
        %v7173 = vld [vmem:[#allocation2 + $0x130] sm:$0xff]
        %v7174 = vld [vmem:[#allocation2 + $0x140] sm:$0xff]
        %v7175 = vld [vmem:[#allocation2 + $0x150] sm:$0xff]
        %v7176 = vld [vmem:[#allocation2 + $0x160] sm:$0xff]
        %v7177 = vld [vmem:[#allocation2 + $0x170] sm:$0xff]
        %v7178 = vld [vmem:[%s16] sm:$0xf]
        %v7179 = vld [vmem:[%s16 + $0x4] sm:$0xf]
        %v7180 = vld [vmem:[%s16 + $0x8] sm:$0xf]
        %v7181 = vld [vmem:[%s16 + $0xc] sm:$0xf]
        %v7182 = vld [vmem:[%s16 + $0x10] sm:$0xf]
        %v7183 = vld [vmem:[%s16 + $0x14] sm:$0xf]
        %v7184 = vld [vmem:[%s16 + $0x18] sm:$0xf]
        %v7185 = vld [vmem:[%s16 + $0x1c] sm:$0xf]
        %v7186 = vld [vmem:[%s16 + $0x20] sm:$0xf]
        %v7187 = vld [vmem:[%s16 + $0x24] sm:$0xf]
        %v7188 = vld [vmem:[%s16 + $0x28] sm:$0xf]
        %v7189 = vld [vmem:[%s16 + $0x2c] sm:$0xf]
        %v7190 = vld [vmem:[%s16 + $0x30] sm:$0xf]
        %v7191 = vld [vmem:[%s16 + $0x34] sm:$0xf]
        %v7192 = vld [vmem:[%s16 + $0x38] sm:$0xf]
        %v7193 = vld [vmem:[%s16 + $0x3c] sm:$0xf]
        %v7194 = vld [vmem:[%s16 + $0x40] sm:$0xf]
        %v7195 = vld [vmem:[%s16 + $0x44] sm:$0xf]
        %v7196 = vld [vmem:[%s16 + $0x48] sm:$0xf]
        %v7197 = vld [vmem:[%s16 + $0x4c] sm:$0xf]
        %v7198 = vld [vmem:[%s16 + $0x50] sm:$0xf]
        %v7199 = vld [vmem:[%s16 + $0x54] sm:$0xf]
        %v7200 = vld [vmem:[%s16 + $0x58] sm:$0xf]
        %v7201 = vld [vmem:[%s16 + $0x5c] sm:$0xf]
        %v7202 = vld [vmem:[%s16 + $0x60] sm:$0xf]
        %v7203 = vld [vmem:[%s16 + $0x64] sm:$0xf]
        %v7204 = vld [vmem:[%s16 + $0x68] sm:$0xf]
        %v7205 = vld [vmem:[%s16 + $0x6c] sm:$0xf]
        %v7206 = vld [vmem:[%s16 + $0x70] sm:$0xf]
        %v7207 = vld [vmem:[%s16 + $0x74] sm:$0xf]
        %v7208 = vld [vmem:[%s16 + $0x78] sm:$0xf]
        %v7209 = vld [vmem:[%s16 + $0x7c] sm:$0xf]
        %v7234 = vunpack.c.l.b16 %v7154
        %v7235 = vunpack.c.h.b16 %v7154
        %v7236 = vunpack.c.l.b16 %v7155
        %v7237 = vunpack.c.h.b16 %v7155
        %v7238 = vunpack.c.l.b16 %v7156
        %v7239 = vunpack.c.h.b16 %v7156
        %v7240 = vunpack.c.l.b16 %v7157
        %v7241 = vunpack.c.h.b16 %v7157
        %v7242 = vunpack.c.l.b16 %v7158
        %v7243 = vunpack.c.h.b16 %v7158
        %v7244 = vunpack.c.l.b16 %v7159
        %v7245 = vunpack.c.h.b16 %v7159
        %v7246 = vunpack.c.l.b16 %v7160
        %v7247 = vunpack.c.h.b16 %v7160
        %v7248 = vunpack.c.l.b16 %v7161
        %v7249 = vunpack.c.h.b16 %v7161
        %v7250 = vunpack.c.l.b16 %v7162
        %v7251 = vunpack.c.h.b16 %v7162
        %v7252 = vunpack.c.l.b16 %v7163
        %v7253 = vunpack.c.h.b16 %v7163
        %v7254 = vunpack.c.l.b16 %v7164
        %v7255 = vunpack.c.h.b16 %v7164
        %v7256 = vunpack.c.l.b16 %v7165
        %v7257 = vunpack.c.h.b16 %v7165
        %v7258 = vunpack.c.l.b16 %v7166
        %v7259 = vunpack.c.h.b16 %v7166
        %v7260 = vunpack.c.l.b16 %v7167
        %v7261 = vunpack.c.h.b16 %v7167
        %v7262 = vunpack.c.l.b16 %v7168
        %v7263 = vunpack.c.h.b16 %v7168
        %v7264 = vunpack.c.l.b16 %v7169
        %v7265 = vunpack.c.h.b16 %v7169
        %v7266 = vunpack.c.l.b16 %v7170
        %v7267 = vunpack.c.h.b16 %v7170
        %v7268 = vunpack.c.l.b16 %v7171
        %v7269 = vunpack.c.h.b16 %v7171
        %v7270 = vunpack.c.l.b16 %v7172
        %v7271 = vunpack.c.h.b16 %v7172
        %v7272 = vunpack.c.l.b16 %v7173
        %v7273 = vunpack.c.h.b16 %v7173
        %v7274 = vunpack.c.l.b16 %v7174
        %v7275 = vunpack.c.h.b16 %v7174
        %v7276 = vunpack.c.l.b16 %v7175
        %v7277 = vunpack.c.h.b16 %v7175
        %v7278 = vunpack.c.l.b16 %v7176
        %v7279 = vunpack.c.h.b16 %v7176
        %v7280 = vunpack.c.l.b16 %v7177
        %v7281 = vunpack.c.h.b16 %v7177
        %v7282 = vpack.c.b16 %v7236, %v7234
        %v7283 = vpack.c.b16 %v7237, %v7235
        %v7284 = vpack.c.b16 %v7240, %v7238
        %v7285 = vpack.c.b16 %v7241, %v7239
        %v7286 = vpack.c.b16 %v7244, %v7242
        %v7287 = vpack.c.b16 %v7245, %v7243
        %v7288 = vpack.c.b16 %v7248, %v7246
        %v7289 = vpack.c.b16 %v7249, %v7247
        %v7290 = vpack.c.b16 %v7252, %v7250
        %v7291 = vpack.c.b16 %v7253, %v7251
        %v7292 = vpack.c.b16 %v7256, %v7254
        %v7293 = vpack.c.b16 %v7257, %v7255
        %v7294 = vpack.c.b16 %v7260, %v7258
        %v7295 = vpack.c.b16 %v7261, %v7259
        %v7296 = vpack.c.b16 %v7264, %v7262
        %v7297 = vpack.c.b16 %v7265, %v7263
        %v7298 = vpack.c.b16 %v7268, %v7266
        %v7299 = vpack.c.b16 %v7269, %v7267
        %v7300 = vpack.c.b16 %v7272, %v7270
        %v7301 = vpack.c.b16 %v7273, %v7271
        %v7302 = vpack.c.b16 %v7276, %v7274
        %v7303 = vpack.c.b16 %v7277, %v7275
        %v7304 = vpack.c.b16 %v7280, %v7278
        %v7305 = vpack.c.b16 %v7281, %v7279
        %v7362 = vunpack.c.l.b16 %v7178
        %v7363 = vunpack.c.l.b16 %v7179
        %v7364 = vunpack.c.l.b16 %v7180
        %v7365 = vunpack.c.l.b16 %v7181
        %v7366 = vunpack.c.l.b16 %v7182
        %v7367 = vunpack.c.l.b16 %v7183
        %v7368 = vunpack.c.l.b16 %v7184
        %v7369 = vunpack.c.l.b16 %v7185
        %v7370 = vunpack.c.l.b16 %v7186
        %v7371 = vunpack.c.l.b16 %v7187
        %v7372 = vunpack.c.l.b16 %v7188
        %v7373 = vunpack.c.l.b16 %v7189
        %v7374 = vunpack.c.l.b16 %v7190
        %v7375 = vunpack.c.l.b16 %v7191
        %v7376 = vunpack.c.l.b16 %v7192
        %v7377 = vunpack.c.l.b16 %v7193
        %v7378 = vunpack.c.l.b16 %v7194
        %v7379 = vunpack.c.l.b16 %v7195
        %v7380 = vunpack.c.l.b16 %v7196
        %v7381 = vunpack.c.l.b16 %v7197
        %v7382 = vunpack.c.l.b16 %v7198
        %v7383 = vunpack.c.l.b16 %v7199
        %v7384 = vunpack.c.l.b16 %v7200
        %v7385 = vunpack.c.l.b16 %v7201
        %v7386 = vunpack.c.l.b16 %v7202
        %v7387 = vunpack.c.l.b16 %v7203
        %v7388 = vunpack.c.l.b16 %v7204
        %v7389 = vunpack.c.l.b16 %v7205
        %v7390 = vunpack.c.l.b16 %v7206
        %v7391 = vunpack.c.l.b16 %v7207
        %v7392 = vunpack.c.l.b16 %v7208
        %v7393 = vunpack.c.l.b16 %v7209
        %v7394 = vpack.c.b16 %v7363, %v7362
        %v7395 = vpack.c.b16 %v7365, %v7364
        %v7396 = vpack.c.b16 %v7367, %v7366
        %v7397 = vpack.c.b16 %v7369, %v7368
        %v7398 = vpack.c.b16 %v7371, %v7370
        %v7399 = vpack.c.b16 %v7373, %v7372
        %v7400 = vpack.c.b16 %v7375, %v7374
        %v7401 = vpack.c.b16 %v7377, %v7376
        %v7402 = vpack.c.b16 %v7379, %v7378
        %v7403 = vpack.c.b16 %v7381, %v7380
        %v7404 = vpack.c.b16 %v7383, %v7382
        %v7405 = vpack.c.b16 %v7385, %v7384
        %v7406 = vpack.c.b16 %v7387, %v7386
        %v7407 = vpack.c.b16 %v7389, %v7388
        %v7408 = vpack.c.b16 %v7391, %v7390
        %v7409 = vpack.c.b16 %v7393, %v7392
        %7426 = vmatprep.subr.bf16.mxu0 0
        %7427 = vmatpush1.bf16.msra.mxu0 %v7394
        %7428 = vmatprep.subr.bf16.mxu0 0
        %7429 = vmatpush1.bf16.msra.mxu0 %v7395
        %7430 = vmatprep.subr.bf16.mxu0 0
        %7431 = vmatpush1.bf16.msra.mxu0 %v7396
        %7432 = vmatprep.subr.bf16.mxu0 0
        %7433 = vmatpush1.bf16.msra.mxu0 %v7397
        %7434 = vmatprep.subr.bf16.mxu0 0
        %7435 = vmatpush1.bf16.msra.mxu0 %v7398
        %7436 = vmatprep.subr.bf16.mxu0 0
        %7437 = vmatpush1.bf16.msra.mxu0 %v7399
        %7438 = vmatprep.subr.bf16.mxu0 0
        %7439 = vmatpush1.bf16.msra.mxu0 %v7400
        %7440 = vmatprep.subr.bf16.mxu0 0
        %7441 = vmatpush1.bf16.msra.mxu0 %v7401
        %7442 = vmatprep.subr.bf16.mxu0 0
        %7443 = vmatpush1.bf16.msra.mxu0 %v7402
        %7444 = vmatprep.subr.bf16.mxu0 0
        %7445 = vmatpush1.bf16.msra.mxu0 %v7403
        %7446 = vmatprep.subr.bf16.mxu0 0
        %7447 = vmatpush1.bf16.msra.mxu0 %v7404
        %7448 = vmatprep.subr.bf16.mxu0 0
        %7449 = vmatpush1.bf16.msra.mxu0 %v7405
        %7450 = vmatprep.subr.bf16.mxu0 0
        %7451 = vmatpush1.bf16.msra.mxu0 %v7406
        %7452 = vmatprep.subr.bf16.mxu0 0
        %7453 = vmatpush1.bf16.msra.mxu0 %v7407
        %7454 = vmatprep.subr.bf16.mxu0 0
        %7455 = vmatpush1.bf16.msra.mxu0 %v7408
        %7456 = vmatprep.subr.bf16.mxu0 0
        %7457 = vmatpush1.bf16.msra.mxu0 %v7409
        %7458 = vmatprep.mubr.bf16.mxu0 %v7283
        %7459 = vmatmul.mubr.bf16.gmra.mrb[0].mxu0 %v7282
        %v7460 = vpop.f32.mrb[0].mxu0
        %v7461 = vadd.f32 0.0, %v7460
        %v7462 = vpop.f32.mrb[0].mxu0
        %v7463 = vpop.f32.mrb[0].mxu0
        %v7464 = vadd.f32 0.0, %v7463
        %v7465 = vpop.f32.mrb[0].mxu0
        %7466 = vmatprep.mubr.bf16.mxu0 %v7285
        %7467 = vmatmul.mubr.bf16.gmra.mrb[0].mxu0 %v7284
        %v7468 = vpop.f32.mrb[0].mxu0
        %v7469 = vadd.f32 0.0, %v7468
        %v7470 = vpop.f32.mrb[0].mxu0
        %v7471 = vpop.f32.mrb[0].mxu0
        %v7472 = vadd.f32 0.0, %v7471
        %v7473 = vpop.f32.mrb[0].mxu0
        %7474 = vmatprep.mubr.bf16.mxu0 %v7287
        %7475 = vmatmul.mubr.bf16.gmra.mrb[0].mxu0 %v7286
        %v7476 = vpop.f32.mrb[0].mxu0
        %v7477 = vadd.f32 0.0, %v7476
        %v7478 = vpop.f32.mrb[0].mxu0
        %v7479 = vpop.f32.mrb[0].mxu0
        %v7480 = vadd.f32 0.0, %v7479
        %v7481 = vpop.f32.mrb[0].mxu0
        %7482 = vmatprep.mubr.bf16.mxu0 %v7289
        %7483 = vmatmul.mubr.bf16.gmra.mrb[0].mxu0 %v7288
        %v7484 = vpop.f32.mrb[0].mxu0
        %v7485 = vadd.f32 0.0, %v7484
        %v7486 = vpop.f32.mrb[0].mxu0
        %v7487 = vpop.f32.mrb[0].mxu0
        %v7488 = vadd.f32 0.0, %v7487
        %v7489 = vpop.f32.mrb[0].mxu0
        %7490 = vmatprep.mubr.bf16.mxu0 %v7291
        %7491 = vmatmul.mubr.bf16.gmra.mrb[0].mxu0 %v7290
        %v7492 = vpop.f32.mrb[0].mxu0
        %v7493 = vadd.f32 0.0, %v7492
        %v7494 = vpop.f32.mrb[0].mxu0
        %v7495 = vpop.f32.mrb[0].mxu0
        %v7496 = vadd.f32 0.0, %v7495
        %v7497 = vpop.f32.mrb[0].mxu0
        %7498 = vmatprep.mubr.bf16.mxu0 %v7293
        %7499 = vmatmul.mubr.bf16.gmra.mrb[0].mxu0 %v7292
        %v7500 = vpop.f32.mrb[0].mxu0
        %v7501 = vadd.f32 0.0, %v7500
        %v7502 = vpop.f32.mrb[0].mxu0
        %v7503 = vpop.f32.mrb[0].mxu0
        %v7504 = vadd.f32 0.0, %v7503
        %v7505 = vpop.f32.mrb[0].mxu0
        %7506 = vmatprep.mubr.bf16.mxu0 %v7295
        %7507 = vmatmul.mubr.bf16.gmra.mrb[0].mxu0 %v7294
        %v7508 = vpop.f32.mrb[0].mxu0
        %v7509 = vadd.f32 0.0, %v7508
        %v7510 = vpop.f32.mrb[0].mxu0
        %v7511 = vpop.f32.mrb[0].mxu0
        %v7512 = vadd.f32 0.0, %v7511
        %v7513 = vpop.f32.mrb[0].mxu0
        %7514 = vmatprep.mubr.bf16.mxu0 %v7297
        %7515 = vmatmul.mubr.bf16.gmra.mrb[0].mxu0 %v7296
        %v7516 = vpop.f32.mrb[0].mxu0
        %v7517 = vadd.f32 0.0, %v7516
        %v7518 = vpop.f32.mrb[0].mxu0
        %v7519 = vpop.f32.mrb[0].mxu0
        %v7520 = vadd.f32 0.0, %v7519
        %v7521 = vpop.f32.mrb[0].mxu0
        %7522 = vmatprep.mubr.bf16.mxu0 %v7299
        %7523 = vmatmul.mubr.bf16.gmra.mrb[0].mxu0 %v7298
        %v7524 = vpop.f32.mrb[0].mxu0
        %v7525 = vadd.f32 0.0, %v7524
        %v7526 = vpop.f32.mrb[0].mxu0
        %v7527 = vpop.f32.mrb[0].mxu0
        %v7528 = vadd.f32 0.0, %v7527
        %v7529 = vpop.f32.mrb[0].mxu0
        %7530 = vmatprep.mubr.bf16.mxu0 %v7301
        %7531 = vmatmul.mubr.bf16.gmra.mrb[0].mxu0 %v7300
        %v7532 = vpop.f32.mrb[0].mxu0
        %v7533 = vadd.f32 0.0, %v7532
        %v7534 = vpop.f32.mrb[0].mxu0
        %v7535 = vpop.f32.mrb[0].mxu0
        %v7536 = vadd.f32 0.0, %v7535
        %v7537 = vpop.f32.mrb[0].mxu0
        %7538 = vmatprep.mubr.bf16.mxu0 %v7303
        %7539 = vmatmul.mubr.bf16.gmra.mrb[0].mxu0 %v7302
        %v7540 = vpop.f32.mrb[0].mxu0
        %v7541 = vadd.f32 0.0, %v7540
        %v7542 = vpop.f32.mrb[0].mxu0
        %v7543 = vpop.f32.mrb[0].mxu0
        %v7544 = vadd.f32 0.0, %v7543
        %v7545 = vpop.f32.mrb[0].mxu0
        %7546 = vmatprep.mubr.bf16.mxu0 %v7305
        %7547 = vmatmul.mubr.bf16.gmra.mrb[0].mxu0 %v7304
        %v7548 = vpop.f32.mrb[0].mxu0
        %v7549 = vadd.f32 0.0, %v7548
        %v7550 = vpop.f32.mrb[0].mxu0
        %v7551 = vpop.f32.mrb[0].mxu0
        %v7552 = vadd.f32 0.0, %v7551
        %v7553 = vpop.f32.mrb[0].mxu0
        %7554 = vdwg.mxu0
        %v7555 = vadd.f32 %v7152, %v7461
        %v7556 = vadd.f32 %v7152, %v7464
        %v7557 = vadd.f32 %v7152, %v7469
        %v7558 = vadd.f32 %v7152, %v7472
        %v7559 = vadd.f32 %v7152, %v7477
        %v7560 = vadd.f32 %v7152, %v7480
        %v7561 = vadd.f32 %v7152, %v7485
        %v7562 = vadd.f32 %v7152, %v7488
        %v7563 = vadd.f32 %v7152, %v7493
        %v7564 = vadd.f32 %v7152, %v7496
        %v7565 = vadd.f32 %v7152, %v7501
        %v7566 = vadd.f32 %v7152, %v7504
        %v7567 = vadd.f32 %v7152, %v7509
        %v7568 = vadd.f32 %v7152, %v7512
        %v7569 = vadd.f32 %v7152, %v7517
        %v7570 = vadd.f32 %v7152, %v7520
        %7587 = vrot.lane.b32.xlu0 %v7493, 64
        %v7588 = vpop.permute.xlu0 %7587
        %7589 = vrot.lane.b32.xlu0 %v7496, 64
        %v7590 = vpop.permute.xlu0 %7589
        %7591 = vrot.lane.b32.xlu0 %v7501, 64
        %v7592 = vpop.permute.xlu0 %7591
        %7593 = vrot.lane.b32.xlu0 %v7504, 64
        %v7594 = vpop.permute.xlu0 %7593
        %7595 = vrot.lane.b32.xlu0 %v7509, 64
        %v7596 = vpop.permute.xlu0 %7595
        %7597 = vrot.lane.b32.xlu0 %v7512, 64
        %v7598 = vpop.permute.xlu0 %7597
        %7599 = vrot.lane.b32.xlu0 %v7517, 64
        %v7600 = vpop.permute.xlu0 %7599
        %7601 = vrot.lane.b32.xlu0 %v7520, 64
        %v7602 = vpop.permute.xlu0 %7601
        %7603 = vrot.lane.b32.xlu0 %v7525, 64
        %v7604 = vpop.permute.xlu0 %7603
        %7605 = vrot.lane.b32.xlu0 %v7528, 64
        %v7606 = vpop.permute.xlu0 %7605
        %7607 = vrot.lane.b32.xlu0 %v7533, 64
        %v7608 = vpop.permute.xlu0 %7607
        %7609 = vrot.lane.b32.xlu0 %v7536, 64
        %v7610 = vpop.permute.xlu0 %7609
        %7611 = vrot.lane.b32.xlu0 %v7541, 64
        %v7612 = vpop.permute.xlu0 %7611
        %7613 = vrot.lane.b32.xlu0 %v7544, 64
        %v7614 = vpop.permute.xlu0 %7613
        %7615 = vrot.lane.b32.xlu0 %v7549, 64
        %v7616 = vpop.permute.xlu0 %7615
        %7617 = vrot.lane.b32.xlu0 %v7552, 64
        %v7618 = vpop.permute.xlu0 %7617
        %v7635 = vadd.f32 %v7555, %v7588
        %v7636 = vadd.f32 %v7556, %v7590
        %v7637 = vadd.f32 %v7557, %v7592
        %v7638 = vadd.f32 %v7558, %v7594
        %v7639 = vadd.f32 %v7559, %v7596
        %v7640 = vadd.f32 %v7560, %v7598
        %v7641 = vadd.f32 %v7561, %v7600
        %v7642 = vadd.f32 %v7562, %v7602
        %v7643 = vadd.f32 %v7563, %v7604
        %v7644 = vadd.f32 %v7564, %v7606
        %v7645 = vadd.f32 %v7565, %v7608
        %v7646 = vadd.f32 %v7566, %v7610
        %v7647 = vadd.f32 %v7567, %v7612
        %v7648 = vadd.f32 %v7568, %v7614
        %v7649 = vadd.f32 %v7569, %v7616
        %v7650 = vadd.f32 %v7570, %v7618
        %v7651 = vld [vmem:[#allocation2] sm:$0xff]
        %v7652 = vld [vmem:[#allocation2 + $0x8] sm:$0x11]
        %v7653 = vld [vmem:[#allocation2 + $0x10] sm:$0xff]
        %v7654 = vld [vmem:[#allocation2 + $0x18] sm:$0x11]
        %v7655 = vld [vmem:[#allocation2 + $0x20] sm:$0xff]
        %v7656 = vld [vmem:[#allocation2 + $0x28] sm:$0x11]
        %v7657 = vld [vmem:[#allocation2 + $0x30] sm:$0xff]
        %v7658 = vld [vmem:[#allocation2 + $0x38] sm:$0x11]
        %v7659 = vld [vmem:[#allocation2 + $0x40] sm:$0xff]
        %v7660 = vld [vmem:[#allocation2 + $0x48] sm:$0x11]
        %v7661 = vld [vmem:[#allocation2 + $0x50] sm:$0xff]
        %v7662 = vld [vmem:[#allocation2 + $0x58] sm:$0x11]
        %v7663 = vld [vmem:[#allocation2 + $0x60] sm:$0xff]
        %v7664 = vld [vmem:[#allocation2 + $0x68] sm:$0x11]
        %v7665 = vld [vmem:[#allocation2 + $0x70] sm:$0xff]
        %v7666 = vld [vmem:[#allocation2 + $0x78] sm:$0x11]
        %v7667 = vld [vmem:[#allocation2 + $0x80] sm:$0xff]
        %v7668 = vld [vmem:[#allocation2 + $0x88] sm:$0x11]
        %v7669 = vld [vmem:[#allocation2 + $0x90] sm:$0xff]
        %v7670 = vld [vmem:[#allocation2 + $0x98] sm:$0x11]
        %v7671 = vld [vmem:[#allocation2 + $0xa0] sm:$0xff]
        %v7672 = vld [vmem:[#allocation2 + $0xa8] sm:$0x11]
        %v7673 = vld [vmem:[#allocation2 + $0xb0] sm:$0xff]
        %v7674 = vld [vmem:[#allocation2 + $0xb8] sm:$0x11]
        %v7675 = vld [vmem:[#allocation2 + $0xc0] sm:$0xff]
        %v7676 = vld [vmem:[#allocation2 + $0xc8] sm:$0x11]
        %v7677 = vld [vmem:[#allocation2 + $0xd0] sm:$0xff]
        %v7678 = vld [vmem:[#allocation2 + $0xd8] sm:$0x11]
        %v7679 = vld [vmem:[#allocation2 + $0xe0] sm:$0xff]
        %v7680 = vld [vmem:[#allocation2 + $0xe8] sm:$0x11]
        %v7681 = vld [vmem:[#allocation2 + $0xf0] sm:$0xff]
        %v7682 = vld [vmem:[#allocation2 + $0xf8] sm:$0x11]
        %v7683 = vld [vmem:[#allocation2 + $0x100] sm:$0xff]
        %v7684 = vld [vmem:[#allocation2 + $0x108] sm:$0x11]
        %v7685 = vld [vmem:[#allocation2 + $0x110] sm:$0xff]
        %v7686 = vld [vmem:[#allocation2 + $0x118] sm:$0x11]
        %v7687 = vld [vmem:[#allocation2 + $0x120] sm:$0xff]
        %v7688 = vld [vmem:[#allocation2 + $0x128] sm:$0x11]
        %v7689 = vld [vmem:[#allocation2 + $0x130] sm:$0xff]
        %v7690 = vld [vmem:[#allocation2 + $0x138] sm:$0x11]
        %v7691 = vld [vmem:[#allocation2 + $0x140] sm:$0xff]
        %v7692 = vld [vmem:[#allocation2 + $0x148] sm:$0x11]
        %v7693 = vld [vmem:[#allocation2 + $0x150] sm:$0xff]
        %v7694 = vld [vmem:[#allocation2 + $0x158] sm:$0x11]
        %v7695 = vld [vmem:[#allocation2 + $0x160] sm:$0xff]
        %v7696 = vld [vmem:[#allocation2 + $0x168] sm:$0x11]
        %v7697 = vld [vmem:[#allocation2 + $0x170] sm:$0xff]
        %v7698 = vld [vmem:[#allocation2 + $0x178] sm:$0x11]
        %v7700 = vshrl.u32 %v7651, 16
        %v7702 = vrot.slane %v7700, 4
        %v7703 = vshll.u32 %v7651, 16
        %v7705 = vrot.slane %v7703, 5
        %v7706 = vor.u32 %v7702, %v7705
        %v7707 = vrot.slane %v7706, 4
        %v7709 = vshll.u32 %v7652, 16
        %v7711 = vrot.slane %v7709, 5
        %v7712 = vsel %vm1347, %v7707, %v7711
        %v7714 = vshrl.u32 %v7653, 16
        %v7716 = vrot.slane %v7714, 4
        %v7717 = vshll.u32 %v7653, 16
        %v7719 = vrot.slane %v7717, 5
        %v7720 = vor.u32 %v7716, %v7719
        %v7721 = vrot.slane %v7720, 4
        %v7723 = vshll.u32 %v7654, 16
        %v7725 = vrot.slane %v7723, 5
        %v7726 = vsel %vm1347, %v7721, %v7725
        %v7728 = vshrl.u32 %v7655, 16
        %v7730 = vrot.slane %v7728, 4
        %v7731 = vshll.u32 %v7655, 16
        %v7733 = vrot.slane %v7731, 5
        %v7734 = vor.u32 %v7730, %v7733
        %v7735 = vrot.slane %v7734, 4
        %v7737 = vshll.u32 %v7656, 16
        %v7739 = vrot.slane %v7737, 5
        %v7740 = vsel %vm1347, %v7735, %v7739
        %v7742 = vshrl.u32 %v7657, 16
        %v7744 = vrot.slane %v7742, 4
        %v7745 = vshll.u32 %v7657, 16
        %v7747 = vrot.slane %v7745, 5
        %v7748 = vor.u32 %v7744, %v7747
        %v7749 = vrot.slane %v7748, 4
        %v7751 = vshll.u32 %v7658, 16
        %v7753 = vrot.slane %v7751, 5
        %v7754 = vsel %vm1347, %v7749, %v7753
        %v7756 = vshrl.u32 %v7659, 16
        %v7758 = vrot.slane %v7756, 4
        %v7759 = vshll.u32 %v7659, 16
        %v7761 = vrot.slane %v7759, 5
        %v7762 = vor.u32 %v7758, %v7761
        %v7763 = vrot.slane %v7762, 4
        %v7765 = vshll.u32 %v7660, 16
        %v7767 = vrot.slane %v7765, 5
        %v7768 = vsel %vm1347, %v7763, %v7767
        %v7770 = vshrl.u32 %v7661, 16
        %v7772 = vrot.slane %v7770, 4
        %v7773 = vshll.u32 %v7661, 16
        %v7775 = vrot.slane %v7773, 5
        %v7776 = vor.u32 %v7772, %v7775
        %v7777 = vrot.slane %v7776, 4
        %v7779 = vshll.u32 %v7662, 16
        %v7781 = vrot.slane %v7779, 5
        %v7782 = vsel %vm1347, %v7777, %v7781
        %v7784 = vshrl.u32 %v7663, 16
        %v7786 = vrot.slane %v7784, 4
        %v7787 = vshll.u32 %v7663, 16
        %v7789 = vrot.slane %v7787, 5
        %v7790 = vor.u32 %v7786, %v7789
        %v7791 = vrot.slane %v7790, 4
        %v7793 = vshll.u32 %v7664, 16
        %v7795 = vrot.slane %v7793, 5
        %v7796 = vsel %vm1347, %v7791, %v7795
        %v7798 = vshrl.u32 %v7665, 16
        %v7800 = vrot.slane %v7798, 4
        %v7801 = vshll.u32 %v7665, 16
        %v7803 = vrot.slane %v7801, 5
        %v7804 = vor.u32 %v7800, %v7803
        %v7805 = vrot.slane %v7804, 4
        %v7807 = vshll.u32 %v7666, 16
        %v7809 = vrot.slane %v7807, 5
        %v7810 = vsel %vm1347, %v7805, %v7809
        %v7812 = vshrl.u32 %v7667, 16
        %v7814 = vrot.slane %v7812, 4
        %v7815 = vshll.u32 %v7667, 16
        %v7817 = vrot.slane %v7815, 5
        %v7818 = vor.u32 %v7814, %v7817
        %v7819 = vrot.slane %v7818, 4
        %v7821 = vshll.u32 %v7668, 16
        %v7823 = vrot.slane %v7821, 5
        %v7824 = vsel %vm1347, %v7819, %v7823
        %v7826 = vshrl.u32 %v7669, 16
        %v7828 = vrot.slane %v7826, 4
        %v7829 = vshll.u32 %v7669, 16
        %v7831 = vrot.slane %v7829, 5
        %v7832 = vor.u32 %v7828, %v7831
        %v7833 = vrot.slane %v7832, 4
        %v7835 = vshll.u32 %v7670, 16
        %v7837 = vrot.slane %v7835, 5
        %v7838 = vsel %vm1347, %v7833, %v7837
        %v7840 = vshrl.u32 %v7671, 16
        %v7842 = vrot.slane %v7840, 4
        %v7843 = vshll.u32 %v7671, 16
        %v7845 = vrot.slane %v7843, 5
        %v7846 = vor.u32 %v7842, %v7845
        %v7847 = vrot.slane %v7846, 4
        %v7849 = vshll.u32 %v7672, 16
        %v7851 = vrot.slane %v7849, 5
        %v7852 = vsel %vm1347, %v7847, %v7851
        %v7854 = vshrl.u32 %v7673, 16
        %v7856 = vrot.slane %v7854, 4
        %v7857 = vshll.u32 %v7673, 16
        %v7859 = vrot.slane %v7857, 5
        %v7860 = vor.u32 %v7856, %v7859
        %v7861 = vrot.slane %v7860, 4
        %v7863 = vshll.u32 %v7674, 16
        %v7865 = vrot.slane %v7863, 5
        %v7866 = vsel %vm1347, %v7861, %v7865
        %v7868 = vshrl.u32 %v7675, 16
        %v7870 = vrot.slane %v7868, 4
        %v7871 = vshll.u32 %v7675, 16
        %v7873 = vrot.slane %v7871, 5
        %v7874 = vor.u32 %v7870, %v7873
        %v7875 = vrot.slane %v7874, 4
        %v7877 = vshll.u32 %v7676, 16
        %v7879 = vrot.slane %v7877, 5
        %v7880 = vsel %vm1347, %v7875, %v7879
        %v7882 = vshrl.u32 %v7677, 16
        %v7884 = vrot.slane %v7882, 4
        %v7885 = vshll.u32 %v7677, 16
        %v7887 = vrot.slane %v7885, 5
        %v7888 = vor.u32 %v7884, %v7887
        %v7889 = vrot.slane %v7888, 4
        %v7891 = vshll.u32 %v7678, 16
        %v7893 = vrot.slane %v7891, 5
        %v7894 = vsel %vm1347, %v7889, %v7893
        %v7896 = vshrl.u32 %v7679, 16
        %v7898 = vrot.slane %v7896, 4
        %v7899 = vshll.u32 %v7679, 16
        %v7901 = vrot.slane %v7899, 5
        %v7902 = vor.u32 %v7898, %v7901
        %v7903 = vrot.slane %v7902, 4
        %v7905 = vshll.u32 %v7680, 16
        %v7907 = vrot.slane %v7905, 5
        %v7908 = vsel %vm1347, %v7903, %v7907
        %v7910 = vshrl.u32 %v7681, 16
        %v7912 = vrot.slane %v7910, 4
        %v7913 = vshll.u32 %v7681, 16
        %v7915 = vrot.slane %v7913, 5
        %v7916 = vor.u32 %v7912, %v7915
        %v7917 = vrot.slane %v7916, 4
        %v7919 = vshll.u32 %v7682, 16
        %v7921 = vrot.slane %v7919, 5
        %v7922 = vsel %vm1347, %v7917, %v7921
        %v7924 = vshrl.u32 %v7683, 16
        %v7926 = vrot.slane %v7924, 4
        %v7927 = vshll.u32 %v7683, 16
        %v7929 = vrot.slane %v7927, 5
        %v7930 = vor.u32 %v7926, %v7929
        %v7931 = vrot.slane %v7930, 4
        %v7933 = vshll.u32 %v7684, 16
        %v7935 = vrot.slane %v7933, 5
        %v7936 = vsel %vm1347, %v7931, %v7935
        %v7938 = vshrl.u32 %v7685, 16
        %v7940 = vrot.slane %v7938, 4
        %v7941 = vshll.u32 %v7685, 16
        %v7943 = vrot.slane %v7941, 5
        %v7944 = vor.u32 %v7940, %v7943
        %v7945 = vrot.slane %v7944, 4
        %v7947 = vshll.u32 %v7686, 16
        %v7949 = vrot.slane %v7947, 5
        %v7950 = vsel %vm1347, %v7945, %v7949
        %v7952 = vshrl.u32 %v7687, 16
        %v7954 = vrot.slane %v7952, 4
        %v7955 = vshll.u32 %v7687, 16
        %v7957 = vrot.slane %v7955, 5
        %v7958 = vor.u32 %v7954, %v7957
        %v7959 = vrot.slane %v7958, 4
        %v7961 = vshll.u32 %v7688, 16
        %v7963 = vrot.slane %v7961, 5
        %v7964 = vsel %vm1347, %v7959, %v7963
        %v7966 = vshrl.u32 %v7689, 16
        %v7968 = vrot.slane %v7966, 4
        %v7969 = vshll.u32 %v7689, 16
        %v7971 = vrot.slane %v7969, 5
        %v7972 = vor.u32 %v7968, %v7971
        %v7973 = vrot.slane %v7972, 4
        %v7975 = vshll.u32 %v7690, 16
        %v7977 = vrot.slane %v7975, 5
        %v7978 = vsel %vm1347, %v7973, %v7977
        %v7980 = vshrl.u32 %v7691, 16
        %v7982 = vrot.slane %v7980, 4
        %v7983 = vshll.u32 %v7691, 16
        %v7985 = vrot.slane %v7983, 5
        %v7986 = vor.u32 %v7982, %v7985
        %v7987 = vrot.slane %v7986, 4
        %v7989 = vshll.u32 %v7692, 16
        %v7991 = vrot.slane %v7989, 5
        %v7992 = vsel %vm1347, %v7987, %v7991
        %v7994 = vshrl.u32 %v7693, 16
        %v7996 = vrot.slane %v7994, 4
        %v7997 = vshll.u32 %v7693, 16
        %v7999 = vrot.slane %v7997, 5
        %v8000 = vor.u32 %v7996, %v7999
        %v8001 = vrot.slane %v8000, 4
        %v8003 = vshll.u32 %v7694, 16
        %v8005 = vrot.slane %v8003, 5
        %v8006 = vsel %vm1347, %v8001, %v8005
        %v8008 = vshrl.u32 %v7695, 16
        %v8010 = vrot.slane %v8008, 4
        %v8011 = vshll.u32 %v7695, 16
        %v8013 = vrot.slane %v8011, 5
        %v8014 = vor.u32 %v8010, %v8013
        %v8015 = vrot.slane %v8014, 4
        %v8017 = vshll.u32 %v7696, 16
        %v8019 = vrot.slane %v8017, 5
        %v8020 = vsel %vm1347, %v8015, %v8019
        %v8022 = vshrl.u32 %v7697, 16
        %v8024 = vrot.slane %v8022, 4
        %v8025 = vshll.u32 %v7697, 16
        %v8027 = vrot.slane %v8025, 5
        %v8028 = vor.u32 %v8024, %v8027
        %v8029 = vrot.slane %v8028, 4
        %v8031 = vshll.u32 %v7698, 16
        %v8033 = vrot.slane %v8031, 5
        %v8034 = vsel %vm1347, %v8029, %v8033
        %s8035 = scalar_lea.vmem %s16, 128
        %v8036 = vld [vmem:[%s8035] sm:$0xf]
        %v8037 = vld [vmem:[%s8035 + $0x4] sm:$0xf]
        %v8038 = vld [vmem:[%s8035 + $0x8] sm:$0xf]
        %v8039 = vld [vmem:[%s8035 + $0xc] sm:$0xf]
        %v8040 = vld [vmem:[%s8035 + $0x10] sm:$0xf]
        %v8041 = vld [vmem:[%s8035 + $0x14] sm:$0xf]
        %v8042 = vld [vmem:[%s8035 + $0x18] sm:$0xf]
        %v8043 = vld [vmem:[%s8035 + $0x1c] sm:$0xf]
        %v8044 = vld [vmem:[%s8035 + $0x20] sm:$0xf]
        %v8045 = vld [vmem:[%s8035 + $0x24] sm:$0xf]
        %v8046 = vld [vmem:[%s8035 + $0x28] sm:$0xf]
        %v8047 = vld [vmem:[%s8035 + $0x2c] sm:$0xf]
        %v8048 = vld [vmem:[%s8035 + $0x30] sm:$0xf]
        %v8049 = vld [vmem:[%s8035 + $0x34] sm:$0xf]
        %v8050 = vld [vmem:[%s8035 + $0x38] sm:$0xf]
        %v8051 = vld [vmem:[%s8035 + $0x3c] sm:$0xf]
        %v8052 = vld [vmem:[%s8035 + $0x40] sm:$0xf]
        %v8053 = vld [vmem:[%s8035 + $0x44] sm:$0xf]
        %v8054 = vld [vmem:[%s8035 + $0x48] sm:$0xf]
        %v8055 = vld [vmem:[%s8035 + $0x4c] sm:$0xf]
        %v8056 = vld [vmem:[%s8035 + $0x50] sm:$0xf]
        %v8057 = vld [vmem:[%s8035 + $0x54] sm:$0xf]
        %v8058 = vld [vmem:[%s8035 + $0x58] sm:$0xf]
        %v8059 = vld [vmem:[%s8035 + $0x5c] sm:$0xf]
        %v8060 = vld [vmem:[%s8035 + $0x60] sm:$0xf]
        %v8061 = vld [vmem:[%s8035 + $0x64] sm:$0xf]
        %v8062 = vld [vmem:[%s8035 + $0x68] sm:$0xf]
        %v8063 = vld [vmem:[%s8035 + $0x6c] sm:$0xf]
        %v8064 = vld [vmem:[%s8035 + $0x70] sm:$0xf]
        %v8065 = vld [vmem:[%s8035 + $0x74] sm:$0xf]
        %v8066 = vld [vmem:[%s8035 + $0x78] sm:$0xf]
        %v8067 = vld [vmem:[%s8035 + $0x7c] sm:$0xf]
        %v8068 = vunpack.c.l.b16 %v7712
        %v8069 = vunpack.c.h.b16 %v7712
        %v8070 = vunpack.c.l.b16 %v7726
        %v8071 = vunpack.c.h.b16 %v7726
        %v8072 = vunpack.c.l.b16 %v7740
        %v8073 = vunpack.c.h.b16 %v7740
        %v8074 = vunpack.c.l.b16 %v7754
        %v8075 = vunpack.c.h.b16 %v7754
        %v8076 = vunpack.c.l.b16 %v7768
        %v8077 = vunpack.c.h.b16 %v7768
        %v8078 = vunpack.c.l.b16 %v7782
        %v8079 = vunpack.c.h.b16 %v7782
        %v8080 = vunpack.c.l.b16 %v7796
        %v8081 = vunpack.c.h.b16 %v7796
        %v8082 = vunpack.c.l.b16 %v7810
        %v8083 = vunpack.c.h.b16 %v7810
        %v8084 = vunpack.c.l.b16 %v7824
        %v8085 = vunpack.c.h.b16 %v7824
        %v8086 = vunpack.c.l.b16 %v7838
        %v8087 = vunpack.c.h.b16 %v7838
        %v8088 = vunpack.c.l.b16 %v7852
        %v8089 = vunpack.c.h.b16 %v7852
        %v8090 = vunpack.c.l.b16 %v7866
        %v8091 = vunpack.c.h.b16 %v7866
        %v8092 = vunpack.c.l.b16 %v7880
        %v8093 = vunpack.c.h.b16 %v7880
        %v8094 = vunpack.c.l.b16 %v7894
        %v8095 = vunpack.c.h.b16 %v7894
        %v8096 = vunpack.c.l.b16 %v7908
        %v8097 = vunpack.c.h.b16 %v7908
        %v8098 = vunpack.c.l.b16 %v7922
        %v8099 = vunpack.c.h.b16 %v7922
        %v8100 = vunpack.c.l.b16 %v7936
        %v8101 = vunpack.c.h.b16 %v7936
        %v8102 = vunpack.c.l.b16 %v7950
        %v8103 = vunpack.c.h.b16 %v7950
        %v8104 = vunpack.c.l.b16 %v7964
        %v8105 = vunpack.c.h.b16 %v7964
        %v8106 = vunpack.c.l.b16 %v7978
        %v8107 = vunpack.c.h.b16 %v7978
        %v8108 = vunpack.c.l.b16 %v7992
        %v8109 = vunpack.c.h.b16 %v7992
        %v8110 = vunpack.c.l.b16 %v8006
        %v8111 = vunpack.c.h.b16 %v8006
        %v8112 = vunpack.c.l.b16 %v8020
        %v8113 = vunpack.c.h.b16 %v8020
        %v8114 = vunpack.c.l.b16 %v8034
        %v8115 = vunpack.c.h.b16 %v8034
        %v8116 = vpack.c.b16 %v8070, %v8068
        %v8117 = vpack.c.b16 %v8071, %v8069
        %v8118 = vpack.c.b16 %v8074, %v8072
        %v8119 = vpack.c.b16 %v8075, %v8073
        %v8120 = vpack.c.b16 %v8078, %v8076
        %v8121 = vpack.c.b16 %v8079, %v8077
        %v8122 = vpack.c.b16 %v8082, %v8080
        %v8123 = vpack.c.b16 %v8083, %v8081
        %v8124 = vpack.c.b16 %v8086, %v8084
        %v8125 = vpack.c.b16 %v8087, %v8085
        %v8126 = vpack.c.b16 %v8090, %v8088
        %v8127 = vpack.c.b16 %v8091, %v8089
        %v8128 = vpack.c.b16 %v8094, %v8092
        %v8129 = vpack.c.b16 %v8095, %v8093
        %v8130 = vpack.c.b16 %v8098, %v8096
        %v8131 = vpack.c.b16 %v8099, %v8097
        %v8132 = vpack.c.b16 %v8102, %v8100
        %v8133 = vpack.c.b16 %v8103, %v8101
        %v8134 = vpack.c.b16 %v8106, %v8104
        %v8135 = vpack.c.b16 %v8107, %v8105
        %v8136 = vpack.c.b16 %v8110, %v8108
        %v8137 = vpack.c.b16 %v8111, %v8109
        %v8138 = vpack.c.b16 %v8114, %v8112
        %v8139 = vpack.c.b16 %v8115, %v8113
        %v8196 = vunpack.c.l.b16 %v8036
        %v8197 = vunpack.c.l.b16 %v8037
        %v8198 = vunpack.c.l.b16 %v8038
        %v8199 = vunpack.c.l.b16 %v8039
        %v8200 = vunpack.c.l.b16 %v8040
        %v8201 = vunpack.c.l.b16 %v8041
        %v8202 = vunpack.c.l.b16 %v8042
        %v8203 = vunpack.c.l.b16 %v8043
        %v8204 = vunpack.c.l.b16 %v8044
        %v8205 = vunpack.c.l.b16 %v8045
        %v8206 = vunpack.c.l.b16 %v8046
        %v8207 = vunpack.c.l.b16 %v8047
        %v8208 = vunpack.c.l.b16 %v8048
        %v8209 = vunpack.c.l.b16 %v8049
        %v8210 = vunpack.c.l.b16 %v8050
        %v8211 = vunpack.c.l.b16 %v8051
        %v8212 = vunpack.c.l.b16 %v8052
        %v8213 = vunpack.c.l.b16 %v8053
        %v8214 = vunpack.c.l.b16 %v8054
        %v8215 = vunpack.c.l.b16 %v8055
        %v8216 = vunpack.c.l.b16 %v8056
        %v8217 = vunpack.c.l.b16 %v8057
        %v8218 = vunpack.c.l.b16 %v8058
        %v8219 = vunpack.c.l.b16 %v8059
        %v8220 = vunpack.c.l.b16 %v8060
        %v8221 = vunpack.c.l.b16 %v8061
        %v8222 = vunpack.c.l.b16 %v8062
        %v8223 = vunpack.c.l.b16 %v8063
        %v8224 = vunpack.c.l.b16 %v8064
        %v8225 = vunpack.c.l.b16 %v8065
        %v8226 = vunpack.c.l.b16 %v8066
        %v8227 = vunpack.c.l.b16 %v8067
        %v8228 = vpack.c.b16 %v8197, %v8196
        %v8229 = vpack.c.b16 %v8199, %v8198
        %v8230 = vpack.c.b16 %v8201, %v8200
        %v8231 = vpack.c.b16 %v8203, %v8202
        %v8232 = vpack.c.b16 %v8205, %v8204
        %v8233 = vpack.c.b16 %v8207, %v8206
        %v8234 = vpack.c.b16 %v8209, %v8208
        %v8235 = vpack.c.b16 %v8211, %v8210
        %v8236 = vpack.c.b16 %v8213, %v8212
        %v8237 = vpack.c.b16 %v8215, %v8214
        %v8238 = vpack.c.b16 %v8217, %v8216
        %v8239 = vpack.c.b16 %v8219, %v8218
        %v8240 = vpack.c.b16 %v8221, %v8220
        %v8241 = vpack.c.b16 %v8223, %v8222
        %v8242 = vpack.c.b16 %v8225, %v8224
        %v8243 = vpack.c.b16 %v8227, %v8226
        %8260 = vmatprep.subr.bf16.mxu0 0
        %8261 = vmatpush1.bf16.msra.mxu0 %v8228
        %8262 = vmatprep.subr.bf16.mxu0 0
        %8263 = vmatpush1.bf16.msra.mxu0 %v8229
        %8264 = vmatprep.subr.bf16.mxu0 0
        %8265 = vmatpush1.bf16.msra.mxu0 %v8230
        %8266 = vmatprep.subr.bf16.mxu0 0
        %8267 = vmatpush1.bf16.msra.mxu0 %v8231
        %8268 = vmatprep.subr.bf16.mxu0 0
        %8269 = vmatpush1.bf16.msra.mxu0 %v8232
        %8270 = vmatprep.subr.bf16.mxu0 0
        %8271 = vmatpush1.bf16.msra.mxu0 %v8233
        %8272 = vmatprep.subr.bf16.mxu0 0
        %8273 = vmatpush1.bf16.msra.mxu0 %v8234
        %8274 = vmatprep.subr.bf16.mxu0 0
        %8275 = vmatpush1.bf16.msra.mxu0 %v8235
        %8276 = vmatprep.subr.bf16.mxu0 0
        %8277 = vmatpush1.bf16.msra.mxu0 %v8236
        %8278 = vmatprep.subr.bf16.mxu0 0
        %8279 = vmatpush1.bf16.msra.mxu0 %v8237
        %8280 = vmatprep.subr.bf16.mxu0 0
        %8281 = vmatpush1.bf16.msra.mxu0 %v8238
        %8282 = vmatprep.subr.bf16.mxu0 0
        %8283 = vmatpush1.bf16.msra.mxu0 %v8239
        %8284 = vmatprep.subr.bf16.mxu0 0
        %8285 = vmatpush1.bf16.msra.mxu0 %v8240
        %8286 = vmatprep.subr.bf16.mxu0 0
        %8287 = vmatpush1.bf16.msra.mxu0 %v8241
        %8288 = vmatprep.subr.bf16.mxu0 0
        %8289 = vmatpush1.bf16.msra.mxu0 %v8242
        %8290 = vmatprep.subr.bf16.mxu0 0
        %8291 = vmatpush1.bf16.msra.mxu0 %v8243
        %8292 = vmatprep.mubr.bf16.mxu0 %v8117
        %8293 = vmatmul.mubr.bf16.gmra.mrb[0].mxu0 %v8116
        %v8294 = vpop.f32.mrb[0].mxu0
        %v8295 = vadd.f32 0.0, %v8294
        %v8296 = vpop.f32.mrb[0].mxu0
        %v8297 = vpop.f32.mrb[0].mxu0
        %v8298 = vadd.f32 0.0, %v8297
        %v8299 = vpop.f32.mrb[0].mxu0
        %8300 = vmatprep.mubr.bf16.mxu0 %v8119
        %8301 = vmatmul.mubr.bf16.gmra.mrb[0].mxu0 %v8118
        %v8302 = vpop.f32.mrb[0].mxu0
        %v8303 = vadd.f32 0.0, %v8302
        %v8304 = vpop.f32.mrb[0].mxu0
        %v8305 = vpop.f32.mrb[0].mxu0
        %v8306 = vadd.f32 0.0, %v8305
        %v8307 = vpop.f32.mrb[0].mxu0
        %8308 = vmatprep.mubr.bf16.mxu0 %v8121
        %8309 = vmatmul.mubr.bf16.gmra.mrb[0].mxu0 %v8120
        %v8310 = vpop.f32.mrb[0].mxu0
        %v8311 = vadd.f32 0.0, %v8310
        %v8312 = vpop.f32.mrb[0].mxu0
        %v8313 = vpop.f32.mrb[0].mxu0
        %v8314 = vadd.f32 0.0, %v8313
        %v8315 = vpop.f32.mrb[0].mxu0
        %8316 = vmatprep.mubr.bf16.mxu0 %v8123
        %8317 = vmatmul.mubr.bf16.gmra.mrb[0].mxu0 %v8122
        %v8318 = vpop.f32.mrb[0].mxu0
        %v8319 = vadd.f32 0.0, %v8318
        %v8320 = vpop.f32.mrb[0].mxu0
        %v8321 = vpop.f32.mrb[0].mxu0
        %v8322 = vadd.f32 0.0, %v8321
        %v8323 = vpop.f32.mrb[0].mxu0
        %8324 = vmatprep.mubr.bf16.mxu0 %v8125
        %8325 = vmatmul.mubr.bf16.gmra.mrb[0].mxu0 %v8124
        %v8326 = vpop.f32.mrb[0].mxu0
        %v8327 = vadd.f32 0.0, %v8326
        %v8328 = vpop.f32.mrb[0].mxu0
        %v8329 = vpop.f32.mrb[0].mxu0
        %v8330 = vadd.f32 0.0, %v8329
        %v8331 = vpop.f32.mrb[0].mxu0
        %8332 = vmatprep.mubr.bf16.mxu0 %v8127
        %8333 = vmatmul.mubr.bf16.gmra.mrb[0].mxu0 %v8126
        %v8334 = vpop.f32.mrb[0].mxu0
        %v8335 = vadd.f32 0.0, %v8334
        %v8336 = vpop.f32.mrb[0].mxu0
        %v8337 = vpop.f32.mrb[0].mxu0
        %v8338 = vadd.f32 0.0, %v8337
        %v8339 = vpop.f32.mrb[0].mxu0
        %8340 = vmatprep.mubr.bf16.mxu0 %v8129
        %8341 = vmatmul.mubr.bf16.gmra.mrb[0].mxu0 %v8128
        %v8342 = vpop.f32.mrb[0].mxu0
        %v8343 = vadd.f32 0.0, %v8342
        %v8344 = vpop.f32.mrb[0].mxu0
        %v8345 = vpop.f32.mrb[0].mxu0
        %v8346 = vadd.f32 0.0, %v8345
        %v8347 = vpop.f32.mrb[0].mxu0
        %8348 = vmatprep.mubr.bf16.mxu0 %v8131
        %8349 = vmatmul.mubr.bf16.gmra.mrb[0].mxu0 %v8130
        %v8350 = vpop.f32.mrb[0].mxu0
        %v8351 = vadd.f32 0.0, %v8350
        %v8352 = vpop.f32.mrb[0].mxu0
        %v8353 = vpop.f32.mrb[0].mxu0
        %v8354 = vadd.f32 0.0, %v8353
        %v8355 = vpop.f32.mrb[0].mxu0
        %8356 = vmatprep.mubr.bf16.mxu0 %v8133
        %8357 = vmatmul.mubr.bf16.gmra.mrb[0].mxu0 %v8132
        %v8358 = vpop.f32.mrb[0].mxu0
        %v8359 = vadd.f32 0.0, %v8358
        %v8360 = vpop.f32.mrb[0].mxu0
        %v8361 = vpop.f32.mrb[0].mxu0
        %v8362 = vadd.f32 0.0, %v8361
        %v8363 = vpop.f32.mrb[0].mxu0
        %8364 = vmatprep.mubr.bf16.mxu0 %v8135
        %8365 = vmatmul.mubr.bf16.gmra.mrb[0].mxu0 %v8134
        %v8366 = vpop.f32.mrb[0].mxu0
        %v8367 = vadd.f32 0.0, %v8366
        %v8368 = vpop.f32.mrb[0].mxu0
        %v8369 = vpop.f32.mrb[0].mxu0
        %v8370 = vadd.f32 0.0, %v8369
        %v8371 = vpop.f32.mrb[0].mxu0
        %8372 = vmatprep.mubr.bf16.mxu0 %v8137
        %8373 = vmatmul.mubr.bf16.gmra.mrb[0].mxu0 %v8136
        %v8374 = vpop.f32.mrb[0].mxu0
        %v8375 = vadd.f32 0.0, %v8374
        %v8376 = vpop.f32.mrb[0].mxu0
        %v8377 = vpop.f32.mrb[0].mxu0
        %v8378 = vadd.f32 0.0, %v8377
        %v8379 = vpop.f32.mrb[0].mxu0
        %8380 = vmatprep.mubr.bf16.mxu0 %v8139
        %8381 = vmatmul.mubr.bf16.gmra.mrb[0].mxu0 %v8138
        %v8382 = vpop.f32.mrb[0].mxu0
        %v8383 = vadd.f32 0.0, %v8382
        %v8384 = vpop.f32.mrb[0].mxu0
        %v8385 = vpop.f32.mrb[0].mxu0
        %v8386 = vadd.f32 0.0, %v8385
        %v8387 = vpop.f32.mrb[0].mxu0
        %8388 = vdwg.mxu0
        %v8389 = vadd.f32 %v7635, %v8295
        %v8390 = vadd.f32 %v7636, %v8298
        %v8391 = vadd.f32 %v7637, %v8303
        %v8392 = vadd.f32 %v7638, %v8306
        %v8393 = vadd.f32 %v7639, %v8311
        %v8394 = vadd.f32 %v7640, %v8314
        %v8395 = vadd.f32 %v7641, %v8319
        %v8396 = vadd.f32 %v7642, %v8322
        %v8397 = vadd.f32 %v7643, %v8327
        %v8398 = vadd.f32 %v7644, %v8330
        %v8399 = vadd.f32 %v7645, %v8335
        %v8400 = vadd.f32 %v7646, %v8338
        %v8401 = vadd.f32 %v7647, %v8343
        %v8402 = vadd.f32 %v7648, %v8346
        %v8403 = vadd.f32 %v7649, %v8351
        %v8404 = vadd.f32 %v7650, %v8354
        %8421 = vrot.lane.b32.xlu0 %v8327, 64
        %v8422 = vpop.permute.xlu0 %8421
        %8423 = vrot.lane.b32.xlu0 %v8330, 64
        %v8424 = vpop.permute.xlu0 %8423
        %8425 = vrot.lane.b32.xlu0 %v8335, 64
        %v8426 = vpop.permute.xlu0 %8425
        %8427 = vrot.lane.b32.xlu0 %v8338, 64
        %v8428 = vpop.permute.xlu0 %8427
        %8429 = vrot.lane.b32.xlu0 %v8343, 64
        %v8430 = vpop.permute.xlu0 %8429
        %8431 = vrot.lane.b32.xlu0 %v8346, 64
        %v8432 = vpop.permute.xlu0 %8431
        %8433 = vrot.lane.b32.xlu0 %v8351, 64
        %v8434 = vpop.permute.xlu0 %8433
        %8435 = vrot.lane.b32.xlu0 %v8354, 64
        %v8436 = vpop.permute.xlu0 %8435
        %8437 = vrot.lane.b32.xlu0 %v8359, 64
        %v8438 = vpop.permute.xlu0 %8437
        %8439 = vrot.lane.b32.xlu0 %v8362, 64
        %v8440 = vpop.permute.xlu0 %8439
        %8441 = vrot.lane.b32.xlu0 %v8367, 64
        %v8442 = vpop.permute.xlu0 %8441
        %8443 = vrot.lane.b32.xlu0 %v8370, 64
        %v8444 = vpop.permute.xlu0 %8443
        %8445 = vrot.lane.b32.xlu0 %v8375, 64
        %v8446 = vpop.permute.xlu0 %8445
        %8447 = vrot.lane.b32.xlu0 %v8378, 64
        %v8448 = vpop.permute.xlu0 %8447
        %8449 = vrot.lane.b32.xlu0 %v8383, 64
        %v8450 = vpop.permute.xlu0 %8449
        %8451 = vrot.lane.b32.xlu0 %v8386, 64
        %v8452 = vpop.permute.xlu0 %8451
        %v8469 = vadd.f32 %v8389, %v8422
        %v8470 = vadd.f32 %v8390, %v8424
        %v8471 = vadd.f32 %v8391, %v8426
        %v8472 = vadd.f32 %v8392, %v8428
        %v8473 = vadd.f32 %v8393, %v8430
        %v8474 = vadd.f32 %v8394, %v8432
        %v8475 = vadd.f32 %v8395, %v8434
        %v8476 = vadd.f32 %v8396, %v8436
        %v8477 = vadd.f32 %v8397, %v8438
        %v8478 = vadd.f32 %v8398, %v8440
        %v8479 = vadd.f32 %v8399, %v8442
        %v8480 = vadd.f32 %v8400, %v8444
        %v8481 = vadd.f32 %v8401, %v8446
        %v8482 = vadd.f32 %v8402, %v8448
        %v8483 = vadd.f32 %v8403, %v8450
        %v8484 = vadd.f32 %v8404, %v8452
        %v8485 = vld [vmem:[#allocation2] sm:$0xee]
        %v8486 = vld [vmem:[#allocation2 + $0x10] sm:$0xee]
        %v8487 = vld [vmem:[#allocation2 + $0x20] sm:$0xee]
        %v8488 = vld [vmem:[#allocation2 + $0x30] sm:$0xee]
        %v8489 = vld [vmem:[#allocation2 + $0x40] sm:$0xee]
        %v8490 = vld [vmem:[#allocation2 + $0x50] sm:$0xee]
        %v8491 = vld [vmem:[#allocation2 + $0x60] sm:$0xee]
        %v8492 = vld [vmem:[#allocation2 + $0x70] sm:$0xee]
        %v8493 = vld [vmem:[#allocation2 + $0x80] sm:$0xee]
        %v8494 = vld [vmem:[#allocation2 + $0x90] sm:$0xee]
        %v8495 = vld [vmem:[#allocation2 + $0xa0] sm:$0xee]
        %v8496 = vld [vmem:[#allocation2 + $0xb0] sm:$0xee]
        %v8497 = vld [vmem:[#allocation2 + $0xc0] sm:$0xee]
        %v8498 = vld [vmem:[#allocation2 + $0xd0] sm:$0xee]
        %v8499 = vld [vmem:[#allocation2 + $0xe0] sm:$0xee]
        %v8500 = vld [vmem:[#allocation2 + $0xf0] sm:$0xee]
        %v8501 = vld [vmem:[#allocation2 + $0x100] sm:$0xee]
        %v8502 = vld [vmem:[#allocation2 + $0x110] sm:$0xee]
        %v8503 = vld [vmem:[#allocation2 + $0x120] sm:$0xee]
        %v8504 = vld [vmem:[#allocation2 + $0x130] sm:$0xee]
        %v8505 = vld [vmem:[#allocation2 + $0x140] sm:$0xee]
        %v8506 = vld [vmem:[#allocation2 + $0x150] sm:$0xee]
        %v8507 = vld [vmem:[#allocation2 + $0x160] sm:$0xee]
        %v8508 = vld [vmem:[#allocation2 + $0x170] sm:$0xee]
        %v8557 = vrot.slane %v8485, 5
        %v8558 = vrot.slane %v8557, 4
        %v8559 = vrot.slane %v7652, 5
        %v8560 = vsel %vm1925, %v8558, %v8559
        %v8561 = vrot.slane %v8486, 5
        %v8562 = vrot.slane %v8561, 4
        %v8563 = vrot.slane %v7654, 5
        %v8564 = vsel %vm1925, %v8562, %v8563
        %v8565 = vrot.slane %v8487, 5
        %v8566 = vrot.slane %v8565, 4
        %v8567 = vrot.slane %v7656, 5
        %v8568 = vsel %vm1925, %v8566, %v8567
        %v8569 = vrot.slane %v8488, 5
        %v8570 = vrot.slane %v8569, 4
        %v8571 = vrot.slane %v7658, 5
        %v8572 = vsel %vm1925, %v8570, %v8571
        %v8573 = vrot.slane %v8489, 5
        %v8574 = vrot.slane %v8573, 4
        %v8575 = vrot.slane %v7660, 5
        %v8576 = vsel %vm1925, %v8574, %v8575
        %v8577 = vrot.slane %v8490, 5
        %v8578 = vrot.slane %v8577, 4
        %v8579 = vrot.slane %v7662, 5
        %v8580 = vsel %vm1925, %v8578, %v8579
        %v8581 = vrot.slane %v8491, 5
        %v8582 = vrot.slane %v8581, 4
        %v8583 = vrot.slane %v7664, 5
        %v8584 = vsel %vm1925, %v8582, %v8583
        %v8585 = vrot.slane %v8492, 5
        %v8586 = vrot.slane %v8585, 4
        %v8587 = vrot.slane %v7666, 5
        %v8588 = vsel %vm1925, %v8586, %v8587
        %v8589 = vrot.slane %v8493, 5
        %v8590 = vrot.slane %v8589, 4
        %v8591 = vrot.slane %v7668, 5
        %v8592 = vsel %vm1925, %v8590, %v8591
        %v8593 = vrot.slane %v8494, 5
        %v8594 = vrot.slane %v8593, 4
        %v8595 = vrot.slane %v7670, 5
        %v8596 = vsel %vm1925, %v8594, %v8595
        %v8597 = vrot.slane %v8495, 5
        %v8598 = vrot.slane %v8597, 4
        %v8599 = vrot.slane %v7672, 5
        %v8600 = vsel %vm1925, %v8598, %v8599
        %v8601 = vrot.slane %v8496, 5
        %v8602 = vrot.slane %v8601, 4
        %v8603 = vrot.slane %v7674, 5
        %v8604 = vsel %vm1925, %v8602, %v8603
        %v8605 = vrot.slane %v8497, 5
        %v8606 = vrot.slane %v8605, 4
        %v8607 = vrot.slane %v7676, 5
        %v8608 = vsel %vm1925, %v8606, %v8607
        %v8609 = vrot.slane %v8498, 5
        %v8610 = vrot.slane %v8609, 4
        %v8611 = vrot.slane %v7678, 5
        %v8612 = vsel %vm1925, %v8610, %v8611
        %v8613 = vrot.slane %v8499, 5
        %v8614 = vrot.slane %v8613, 4
        %v8615 = vrot.slane %v7680, 5
        %v8616 = vsel %vm1925, %v8614, %v8615
        %v8617 = vrot.slane %v8500, 5
        %v8618 = vrot.slane %v8617, 4
        %v8619 = vrot.slane %v7682, 5
        %v8620 = vsel %vm1925, %v8618, %v8619
        %v8621 = vrot.slane %v8501, 5
        %v8622 = vrot.slane %v8621, 4
        %v8623 = vrot.slane %v7684, 5
        %v8624 = vsel %vm1925, %v8622, %v8623
        %v8625 = vrot.slane %v8502, 5
        %v8626 = vrot.slane %v8625, 4
        %v8627 = vrot.slane %v7686, 5
        %v8628 = vsel %vm1925, %v8626, %v8627
        %v8629 = vrot.slane %v8503, 5
        %v8630 = vrot.slane %v8629, 4
        %v8631 = vrot.slane %v7688, 5
        %v8632 = vsel %vm1925, %v8630, %v8631
        %v8633 = vrot.slane %v8504, 5
        %v8634 = vrot.slane %v8633, 4
        %v8635 = vrot.slane %v7690, 5
        %v8636 = vsel %vm1925, %v8634, %v8635
        %v8637 = vrot.slane %v8505, 5
        %v8638 = vrot.slane %v8637, 4
        %v8639 = vrot.slane %v7692, 5
        %v8640 = vsel %vm1925, %v8638, %v8639
        %v8641 = vrot.slane %v8506, 5
        %v8642 = vrot.slane %v8641, 4
        %v8643 = vrot.slane %v7694, 5
        %v8644 = vsel %vm1925, %v8642, %v8643
        %v8645 = vrot.slane %v8507, 5
        %v8646 = vrot.slane %v8645, 4
        %v8647 = vrot.slane %v7696, 5
        %v8648 = vsel %vm1925, %v8646, %v8647
        %v8649 = vrot.slane %v8508, 5
        %v8650 = vrot.slane %v8649, 4
        %v8651 = vrot.slane %v7698, 5
        %v8652 = vsel %vm1925, %v8650, %v8651
        %s8653 = scalar_lea.vmem %s16, 256
        %v8654 = vld [vmem:[%s8653] sm:$0xf]
        %v8655 = vld [vmem:[%s8653 + $0x4] sm:$0xf]
        %v8656 = vld [vmem:[%s8653 + $0x8] sm:$0xf]
        %v8657 = vld [vmem:[%s8653 + $0xc] sm:$0xf]
        %v8658 = vld [vmem:[%s8653 + $0x10] sm:$0xf]
        %v8659 = vld [vmem:[%s8653 + $0x14] sm:$0xf]
        %v8660 = vld [vmem:[%s8653 + $0x18] sm:$0xf]
        %v8661 = vld [vmem:[%s8653 + $0x1c] sm:$0xf]
        %v8662 = vld [vmem:[%s8653 + $0x20] sm:$0xf]
        %v8663 = vld [vmem:[%s8653 + $0x24] sm:$0xf]
        %v8664 = vld [vmem:[%s8653 + $0x28] sm:$0xf]
        %v8665 = vld [vmem:[%s8653 + $0x2c] sm:$0xf]
        %v8666 = vld [vmem:[%s8653 + $0x30] sm:$0xf]
        %v8667 = vld [vmem:[%s8653 + $0x34] sm:$0xf]
        %v8668 = vld [vmem:[%s8653 + $0x38] sm:$0xf]
        %v8669 = vld [vmem:[%s8653 + $0x3c] sm:$0xf]
        %v8670 = vld [vmem:[%s8653 + $0x40] sm:$0xf]
        %v8671 = vld [vmem:[%s8653 + $0x44] sm:$0xf]
        %v8672 = vld [vmem:[%s8653 + $0x48] sm:$0xf]
        %v8673 = vld [vmem:[%s8653 + $0x4c] sm:$0xf]
        %v8674 = vld [vmem:[%s8653 + $0x50] sm:$0xf]
        %v8675 = vld [vmem:[%s8653 + $0x54] sm:$0xf]
        %v8676 = vld [vmem:[%s8653 + $0x58] sm:$0xf]
        %v8677 = vld [vmem:[%s8653 + $0x5c] sm:$0xf]
        %v8678 = vld [vmem:[%s8653 + $0x60] sm:$0xf]
        %v8679 = vld [vmem:[%s8653 + $0x64] sm:$0xf]
        %v8680 = vld [vmem:[%s8653 + $0x68] sm:$0xf]
        %v8681 = vld [vmem:[%s8653 + $0x6c] sm:$0xf]
        %v8682 = vld [vmem:[%s8653 + $0x70] sm:$0xf]
        %v8683 = vld [vmem:[%s8653 + $0x74] sm:$0xf]
        %v8684 = vld [vmem:[%s8653 + $0x78] sm:$0xf]
        %v8685 = vld [vmem:[%s8653 + $0x7c] sm:$0xf]
        %v8686 = vunpack.c.l.b16 %v8560
        %v8687 = vunpack.c.h.b16 %v8560
        %v8688 = vunpack.c.l.b16 %v8564
        %v8689 = vunpack.c.h.b16 %v8564
        %v8690 = vunpack.c.l.b16 %v8568
        %v8691 = vunpack.c.h.b16 %v8568
        %v8692 = vunpack.c.l.b16 %v8572
        %v8693 = vunpack.c.h.b16 %v8572
        %v8694 = vunpack.c.l.b16 %v8576
        %v8695 = vunpack.c.h.b16 %v8576
        %v8696 = vunpack.c.l.b16 %v8580
        %v8697 = vunpack.c.h.b16 %v8580
        %v8698 = vunpack.c.l.b16 %v8584
        %v8699 = vunpack.c.h.b16 %v8584
        %v8700 = vunpack.c.l.b16 %v8588
        %v8701 = vunpack.c.h.b16 %v8588
        %v8702 = vunpack.c.l.b16 %v8592
        %v8703 = vunpack.c.h.b16 %v8592
        %v8704 = vunpack.c.l.b16 %v8596
        %v8705 = vunpack.c.h.b16 %v8596
        %v8706 = vunpack.c.l.b16 %v8600
        %v8707 = vunpack.c.h.b16 %v8600
        %v8708 = vunpack.c.l.b16 %v8604
        %v8709 = vunpack.c.h.b16 %v8604
        %v8710 = vunpack.c.l.b16 %v8608
        %v8711 = vunpack.c.h.b16 %v8608
        %v8712 = vunpack.c.l.b16 %v8612
        %v8713 = vunpack.c.h.b16 %v8612
        %v8714 = vunpack.c.l.b16 %v8616
        %v8715 = vunpack.c.h.b16 %v8616
        %v8716 = vunpack.c.l.b16 %v8620
        %v8717 = vunpack.c.h.b16 %v8620
        %v8718 = vunpack.c.l.b16 %v8624
        %v8719 = vunpack.c.h.b16 %v8624
        %v8720 = vunpack.c.l.b16 %v8628
        %v8721 = vunpack.c.h.b16 %v8628
        %v8722 = vunpack.c.l.b16 %v8632
        %v8723 = vunpack.c.h.b16 %v8632
        %v8724 = vunpack.c.l.b16 %v8636
        %v8725 = vunpack.c.h.b16 %v8636
        %v8726 = vunpack.c.l.b16 %v8640
        %v8727 = vunpack.c.h.b16 %v8640
        %v8728 = vunpack.c.l.b16 %v8644
        %v8729 = vunpack.c.h.b16 %v8644
        %v8730 = vunpack.c.l.b16 %v8648
        %v8731 = vunpack.c.h.b16 %v8648
        %v8732 = vunpack.c.l.b16 %v8652
        %v8733 = vunpack.c.h.b16 %v8652
        %v8734 = vpack.c.b16 %v8688, %v8686
        %v8735 = vpack.c.b16 %v8689, %v8687
        %v8736 = vpack.c.b16 %v8692, %v8690
        %v8737 = vpack.c.b16 %v8693, %v8691
        %v8738 = vpack.c.b16 %v8696, %v8694
        %v8739 = vpack.c.b16 %v8697, %v8695
        %v8740 = vpack.c.b16 %v8700, %v8698
        %v8741 = vpack.c.b16 %v8701, %v8699
        %v8742 = vpack.c.b16 %v8704, %v8702
        %v8743 = vpack.c.b16 %v8705, %v8703
        %v8744 = vpack.c.b16 %v8708, %v8706
        %v8745 = vpack.c.b16 %v8709, %v8707
        %v8746 = vpack.c.b16 %v8712, %v8710
        %v8747 = vpack.c.b16 %v8713, %v8711
        %v8748 = vpack.c.b16 %v8716, %v8714
        %v8749 = vpack.c.b16 %v8717, %v8715
        %v8750 = vpack.c.b16 %v8720, %v8718
        %v8751 = vpack.c.b16 %v8721, %v8719
        %v8752 = vpack.c.b16 %v8724, %v8722
        %v8753 = vpack.c.b16 %v8725, %v8723
        %v8754 = vpack.c.b16 %v8728, %v8726
        %v8755 = vpack.c.b16 %v8729, %v8727
        %v8756 = vpack.c.b16 %v8732, %v8730
        %v8757 = vpack.c.b16 %v8733, %v8731
        %v8814 = vunpack.c.l.b16 %v8654
        %v8815 = vunpack.c.l.b16 %v8655
        %v8816 = vunpack.c.l.b16 %v8656
        %v8817 = vunpack.c.l.b16 %v8657
        %v8818 = vunpack.c.l.b16 %v8658
        %v8819 = vunpack.c.l.b16 %v8659
        %v8820 = vunpack.c.l.b16 %v8660
        %v8821 = vunpack.c.l.b16 %v8661
        %v8822 = vunpack.c.l.b16 %v8662
        %v8823 = vunpack.c.l.b16 %v8663
        %v8824 = vunpack.c.l.b16 %v8664
        %v8825 = vunpack.c.l.b16 %v8665
        %v8826 = vunpack.c.l.b16 %v8666
        %v8827 = vunpack.c.l.b16 %v8667
        %v8828 = vunpack.c.l.b16 %v8668
        %v8829 = vunpack.c.l.b16 %v8669
        %v8830 = vunpack.c.l.b16 %v8670
        %v8831 = vunpack.c.l.b16 %v8671
        %v8832 = vunpack.c.l.b16 %v8672
        %v8833 = vunpack.c.l.b16 %v8673
        %v8834 = vunpack.c.l.b16 %v8674
        %v8835 = vunpack.c.l.b16 %v8675
        %v8836 = vunpack.c.l.b16 %v8676
        %v8837 = vunpack.c.l.b16 %v8677
        %v8838 = vunpack.c.l.b16 %v8678
        %v8839 = vunpack.c.l.b16 %v8679
        %v8840 = vunpack.c.l.b16 %v8680
        %v8841 = vunpack.c.l.b16 %v8681
        %v8842 = vunpack.c.l.b16 %v8682
        %v8843 = vunpack.c.l.b16 %v8683
        %v8844 = vunpack.c.l.b16 %v8684
        %v8845 = vunpack.c.l.b16 %v8685
        %v8846 = vpack.c.b16 %v8815, %v8814
        %v8847 = vpack.c.b16 %v8817, %v8816
        %v8848 = vpack.c.b16 %v8819, %v8818
        %v8849 = vpack.c.b16 %v8821, %v8820
        %v8850 = vpack.c.b16 %v8823, %v8822
        %v8851 = vpack.c.b16 %v8825, %v8824
        %v8852 = vpack.c.b16 %v8827, %v8826
        %v8853 = vpack.c.b16 %v8829, %v8828
        %v8854 = vpack.c.b16 %v8831, %v8830
        %v8855 = vpack.c.b16 %v8833, %v8832
        %v8856 = vpack.c.b16 %v8835, %v8834
        %v8857 = vpack.c.b16 %v8837, %v8836
        %v8858 = vpack.c.b16 %v8839, %v8838
        %v8859 = vpack.c.b16 %v8841, %v8840
        %v8860 = vpack.c.b16 %v8843, %v8842
        %v8861 = vpack.c.b16 %v8845, %v8844
        %8878 = vmatprep.subr.bf16.mxu0 0
        %8879 = vmatpush1.bf16.msra.mxu0 %v8846
        %8880 = vmatprep.subr.bf16.mxu0 0
        %8881 = vmatpush1.bf16.msra.mxu0 %v8847
        %8882 = vmatprep.subr.bf16.mxu0 0
        %8883 = vmatpush1.bf16.msra.mxu0 %v8848
        %8884 = vmatprep.subr.bf16.mxu0 0
        %8885 = vmatpush1.bf16.msra.mxu0 %v8849
        %8886 = vmatprep.subr.bf16.mxu0 0
        %8887 = vmatpush1.bf16.msra.mxu0 %v8850
        %8888 = vmatprep.subr.bf16.mxu0 0
        %8889 = vmatpush1.bf16.msra.mxu0 %v8851
        %8890 = vmatprep.subr.bf16.mxu0 0
        %8891 = vmatpush1.bf16.msra.mxu0 %v8852
        %8892 = vmatprep.subr.bf16.mxu0 0
        %8893 = vmatpush1.bf16.msra.mxu0 %v8853
        %8894 = vmatprep.subr.bf16.mxu0 0
        %8895 = vmatpush1.bf16.msra.mxu0 %v8854
        %8896 = vmatprep.subr.bf16.mxu0 0
        %8897 = vmatpush1.bf16.msra.mxu0 %v8855
        %8898 = vmatprep.subr.bf16.mxu0 0
        %8899 = vmatpush1.bf16.msra.mxu0 %v8856
        %8900 = vmatprep.subr.bf16.mxu0 0
        %8901 = vmatpush1.bf16.msra.mxu0 %v8857
        %8902 = vmatprep.subr.bf16.mxu0 0
        %8903 = vmatpush1.bf16.msra.mxu0 %v8858
        %8904 = vmatprep.subr.bf16.mxu0 0
        %8905 = vmatpush1.bf16.msra.mxu0 %v8859
        %8906 = vmatprep.subr.bf16.mxu0 0
        %8907 = vmatpush1.bf16.msra.mxu0 %v8860
        %8908 = vmatprep.subr.bf16.mxu0 0
        %8909 = vmatpush1.bf16.msra.mxu0 %v8861
        %8910 = vmatprep.mubr.bf16.mxu0 %v8735
        %8911 = vmatmul.mubr.bf16.gmra.mrb[0].mxu0 %v8734
        %v8912 = vpop.f32.mrb[0].mxu0
        %v8913 = vadd.f32 0.0, %v8912
        %v8914 = vpop.f32.mrb[0].mxu0
        %v8915 = vpop.f32.mrb[0].mxu0
        %v8916 = vadd.f32 0.0, %v8915
        %v8917 = vpop.f32.mrb[0].mxu0
        %8918 = vmatprep.mubr.bf16.mxu0 %v8737
        %8919 = vmatmul.mubr.bf16.gmra.mrb[0].mxu0 %v8736
        %v8920 = vpop.f32.mrb[0].mxu0
        %v8921 = vadd.f32 0.0, %v8920
        %v8922 = vpop.f32.mrb[0].mxu0
        %v8923 = vpop.f32.mrb[0].mxu0
        %v8924 = vadd.f32 0.0, %v8923
        %v8925 = vpop.f32.mrb[0].mxu0
        %8926 = vmatprep.mubr.bf16.mxu0 %v8739
        %8927 = vmatmul.mubr.bf16.gmra.mrb[0].mxu0 %v8738
        %v8928 = vpop.f32.mrb[0].mxu0
        %v8929 = vadd.f32 0.0, %v8928
        %v8930 = vpop.f32.mrb[0].mxu0
        %v8931 = vpop.f32.mrb[0].mxu0
        %v8932 = vadd.f32 0.0, %v8931
        %v8933 = vpop.f32.mrb[0].mxu0
        %8934 = vmatprep.mubr.bf16.mxu0 %v8741
        %8935 = vmatmul.mubr.bf16.gmra.mrb[0].mxu0 %v8740
        %v8936 = vpop.f32.mrb[0].mxu0
        %v8937 = vadd.f32 0.0, %v8936
        %v8938 = vpop.f32.mrb[0].mxu0
        %v8939 = vpop.f32.mrb[0].mxu0
        %v8940 = vadd.f32 0.0, %v8939
        %v8941 = vpop.f32.mrb[0].mxu0
        %8942 = vmatprep.mubr.bf16.mxu0 %v8743
        %8943 = vmatmul.mubr.bf16.gmra.mrb[0].mxu0 %v8742
        %v8944 = vpop.f32.mrb[0].mxu0
        %v8945 = vadd.f32 0.0, %v8944
        %v8946 = vpop.f32.mrb[0].mxu0
        %v8947 = vpop.f32.mrb[0].mxu0
        %v8948 = vadd.f32 0.0, %v8947
        %v8949 = vpop.f32.mrb[0].mxu0
        %8950 = vmatprep.mubr.bf16.mxu0 %v8745
        %8951 = vmatmul.mubr.bf16.gmra.mrb[0].mxu0 %v8744
        %v8952 = vpop.f32.mrb[0].mxu0
        %v8953 = vadd.f32 0.0, %v8952
        %v8954 = vpop.f32.mrb[0].mxu0
        %v8955 = vpop.f32.mrb[0].mxu0
        %v8956 = vadd.f32 0.0, %v8955
        %v8957 = vpop.f32.mrb[0].mxu0
        %8958 = vmatprep.mubr.bf16.mxu0 %v8747
        %8959 = vmatmul.mubr.bf16.gmra.mrb[0].mxu0 %v8746
        %v8960 = vpop.f32.mrb[0].mxu0
        %v8961 = vadd.f32 0.0, %v8960
        %v8962 = vpop.f32.mrb[0].mxu0
        %v8963 = vpop.f32.mrb[0].mxu0
        %v8964 = vadd.f32 0.0, %v8963
        %v8965 = vpop.f32.mrb[0].mxu0
        %8966 = vmatprep.mubr.bf16.mxu0 %v8749
        %8967 = vmatmul.mubr.bf16.gmra.mrb[0].mxu0 %v8748
        %v8968 = vpop.f32.mrb[0].mxu0
        %v8969 = vadd.f32 0.0, %v8968
        %v8970 = vpop.f32.mrb[0].mxu0
        %v8971 = vpop.f32.mrb[0].mxu0
        %v8972 = vadd.f32 0.0, %v8971
        %v8973 = vpop.f32.mrb[0].mxu0
        %8974 = vmatprep.mubr.bf16.mxu0 %v8751
        %8975 = vmatmul.mubr.bf16.gmra.mrb[0].mxu0 %v8750
        %v8976 = vpop.f32.mrb[0].mxu0
        %v8977 = vadd.f32 0.0, %v8976
        %v8978 = vpop.f32.mrb[0].mxu0
        %v8979 = vpop.f32.mrb[0].mxu0
        %v8980 = vadd.f32 0.0, %v8979
        %v8981 = vpop.f32.mrb[0].mxu0
        %8982 = vmatprep.mubr.bf16.mxu0 %v8753
        %8983 = vmatmul.mubr.bf16.gmra.mrb[0].mxu0 %v8752
        %v8984 = vpop.f32.mrb[0].mxu0
        %v8985 = vadd.f32 0.0, %v8984
        %v8986 = vpop.f32.mrb[0].mxu0
        %v8987 = vpop.f32.mrb[0].mxu0
        %v8988 = vadd.f32 0.0, %v8987
        %v8989 = vpop.f32.mrb[0].mxu0
        %8990 = vmatprep.mubr.bf16.mxu0 %v8755
        %8991 = vmatmul.mubr.bf16.gmra.mrb[0].mxu0 %v8754
        %v8992 = vpop.f32.mrb[0].mxu0
        %v8993 = vadd.f32 0.0, %v8992
        %v8994 = vpop.f32.mrb[0].mxu0
        %v8995 = vpop.f32.mrb[0].mxu0
        %v8996 = vadd.f32 0.0, %v8995
        %v8997 = vpop.f32.mrb[0].mxu0
        %8998 = vmatprep.mubr.bf16.mxu0 %v8757
        %8999 = vmatmul.mubr.bf16.gmra.mrb[0].mxu0 %v8756
        %v9000 = vpop.f32.mrb[0].mxu0
        %v9001 = vadd.f32 0.0, %v9000
        %v9002 = vpop.f32.mrb[0].mxu0
        %v9003 = vpop.f32.mrb[0].mxu0
        %v9004 = vadd.f32 0.0, %v9003
        %v9005 = vpop.f32.mrb[0].mxu0
        %9006 = vdwg.mxu0
        %v9007 = vadd.f32 %v8469, %v8913
        %v9008 = vadd.f32 %v8470, %v8916
        %v9009 = vadd.f32 %v8471, %v8921
        %v9010 = vadd.f32 %v8472, %v8924
        %v9011 = vadd.f32 %v8473, %v8929
        %v9012 = vadd.f32 %v8474, %v8932
        %v9013 = vadd.f32 %v8475, %v8937
        %v9014 = vadd.f32 %v8476, %v8940
        %v9015 = vadd.f32 %v8477, %v8945
        %v9016 = vadd.f32 %v8478, %v8948
        %v9017 = vadd.f32 %v8479, %v8953
        %v9018 = vadd.f32 %v8480, %v8956
        %v9019 = vadd.f32 %v8481, %v8961
        %v9020 = vadd.f32 %v8482, %v8964
        %v9021 = vadd.f32 %v8483, %v8969
        %v9022 = vadd.f32 %v8484, %v8972
        %9039 = vrot.lane.b32.xlu0 %v8945, 64
        %v9040 = vpop.permute.xlu0 %9039
        %9041 = vrot.lane.b32.xlu0 %v8948, 64
        %v9042 = vpop.permute.xlu0 %9041
        %9043 = vrot.lane.b32.xlu0 %v8953, 64
        %v9044 = vpop.permute.xlu0 %9043
        %9045 = vrot.lane.b32.xlu0 %v8956, 64
        %v9046 = vpop.permute.xlu0 %9045
        %9047 = vrot.lane.b32.xlu0 %v8961, 64
        %v9048 = vpop.permute.xlu0 %9047
        %9049 = vrot.lane.b32.xlu0 %v8964, 64
        %v9050 = vpop.permute.xlu0 %9049
        %9051 = vrot.lane.b32.xlu0 %v8969, 64
        %v9052 = vpop.permute.xlu0 %9051
        %9053 = vrot.lane.b32.xlu0 %v8972, 64
        %v9054 = vpop.permute.xlu0 %9053
        %9055 = vrot.lane.b32.xlu0 %v8977, 64
        %v9056 = vpop.permute.xlu0 %9055
        %9057 = vrot.lane.b32.xlu0 %v8980, 64
        %v9058 = vpop.permute.xlu0 %9057
        %9059 = vrot.lane.b32.xlu0 %v8985, 64
        %v9060 = vpop.permute.xlu0 %9059
        %9061 = vrot.lane.b32.xlu0 %v8988, 64
        %v9062 = vpop.permute.xlu0 %9061
        %9063 = vrot.lane.b32.xlu0 %v8993, 64
        %v9064 = vpop.permute.xlu0 %9063
        %9065 = vrot.lane.b32.xlu0 %v8996, 64
        %v9066 = vpop.permute.xlu0 %9065
        %9067 = vrot.lane.b32.xlu0 %v9001, 64
        %v9068 = vpop.permute.xlu0 %9067
        %9069 = vrot.lane.b32.xlu0 %v9004, 64
        %v9070 = vpop.permute.xlu0 %9069
        %v9087 = vadd.f32 %v9007, %v9040
        %v9088 = vadd.f32 %v9008, %v9042
        %v9089 = vadd.f32 %v9009, %v9044
        %v9090 = vadd.f32 %v9010, %v9046
        %v9091 = vadd.f32 %v9011, %v9048
        %v9092 = vadd.f32 %v9012, %v9050
        %v9093 = vadd.f32 %v9013, %v9052
        %v9094 = vadd.f32 %v9014, %v9054
        %v9095 = vadd.f32 %v9015, %v9056
        %v9096 = vadd.f32 %v9016, %v9058
        %v9097 = vadd.f32 %v9017, %v9060
        %v9098 = vadd.f32 %v9018, %v9062
        %v9099 = vadd.f32 %v9019, %v9064
        %v9100 = vadd.f32 %v9020, %v9066
        %v9101 = vadd.f32 %v9021, %v9068
        %v9102 = vadd.f32 %v9022, %v9070
        %v9103 = vsel %vm1083, %v9087, 0.0
        %v9104 = vsel %vm1083, %v9088, 0.0
        %v9105 = vadd.f32 %v9103, %v9104
        %v9106 = vsel %vm1083, %v9089, 0.0
        %v9107 = vadd.f32 %v9105, %v9106
        %v9108 = vsel %vm1083, %v9090, 0.0
        %v9109 = vadd.f32 %v9107, %v9108
        %v9110 = vsel %vm1083, %v9091, 0.0
        %v9111 = vadd.f32 %v9109, %v9110
        %v9112 = vsel %vm1083, %v9092, 0.0
        %v9113 = vadd.f32 %v9111, %v9112
        %v9114 = vsel %vm1083, %v9093, 0.0
        %v9115 = vadd.f32 %v9113, %v9114
        %v9116 = vsel %vm1083, %v9094, 0.0
        %v9117 = vadd.f32 %v9115, %v9116
        %v9118 = vsel %vm1083, %v9095, 0.0
        %v9119 = vadd.f32 %v9117, %v9118
        %v9120 = vsel %vm1083, %v9096, 0.0
        %v9121 = vadd.f32 %v9119, %v9120
        %v9122 = vsel %vm1083, %v9097, 0.0
        %v9123 = vadd.f32 %v9121, %v9122
        %v9124 = vsel %vm1083, %v9098, 0.0
        %v9125 = vadd.f32 %v9123, %v9124
        %v9126 = vsel %vm1083, %v9099, 0.0
        %v9127 = vadd.f32 %v9125, %v9126
        %v9128 = vsel %vm1083, %v9100, 0.0
        %v9129 = vadd.f32 %v9127, %v9128
        %v9130 = vsel %vm1083, %v9101, 0.0
        %v9131 = vadd.f32 %v9129, %v9130
        %v9132 = vsel %vm1083, %v9102, 0.0
        %v9133 = vadd.f32 %v9131, %v9132
        %v9134 = vrot.slane %v9133, 4
        %v9135 = vadd.f32 %v9133, %v9134
        %v9136 = vrot.slane %v9135, 2
        %v9137 = vadd.f32 %v9135, %v9136
        %v9138 = vrot.slane %v9137, 1
        %v9139 = vadd.f32 %v9137, %v9138
        %v9140 = vmul.f32 %v9139, 0.0078125
        %v9141 = vmul.f32 %v9087, %v9087
        %v9142 = vmul.f32 %v9088, %v9088
        %v9143 = vmul.f32 %v9089, %v9089
        %v9144 = vmul.f32 %v9090, %v9090
        %v9145 = vmul.f32 %v9091, %v9091
        %v9146 = vmul.f32 %v9092, %v9092
        %v9147 = vmul.f32 %v9093, %v9093
        %v9148 = vmul.f32 %v9094, %v9094
        %v9149 = vmul.f32 %v9095, %v9095
        %v9150 = vmul.f32 %v9096, %v9096
        %v9151 = vmul.f32 %v9097, %v9097
        %v9152 = vmul.f32 %v9098, %v9098
        %v9153 = vmul.f32 %v9099, %v9099
        %v9154 = vmul.f32 %v9100, %v9100
        %v9155 = vmul.f32 %v9101, %v9101
        %v9156 = vmul.f32 %v9102, %v9102
        %v9157 = vsel %vm1083, %v9141, 0.0
        %v9158 = vsel %vm1083, %v9142, 0.0
        %v9159 = vadd.f32 %v9157, %v9158
        %v9160 = vsel %vm1083, %v9143, 0.0
        %v9161 = vadd.f32 %v9159, %v9160
        %v9162 = vsel %vm1083, %v9144, 0.0
        %v9163 = vadd.f32 %v9161, %v9162
        %v9164 = vsel %vm1083, %v9145, 0.0
        %v9165 = vadd.f32 %v9163, %v9164
        %v9166 = vsel %vm1083, %v9146, 0.0
        %v9167 = vadd.f32 %v9165, %v9166
        %v9168 = vsel %vm1083, %v9147, 0.0
        %v9169 = vadd.f32 %v9167, %v9168
        %v9170 = vsel %vm1083, %v9148, 0.0
        %v9171 = vadd.f32 %v9169, %v9170
        %v9172 = vsel %vm1083, %v9149, 0.0
        %v9173 = vadd.f32 %v9171, %v9172
        %v9174 = vsel %vm1083, %v9150, 0.0
        %v9175 = vadd.f32 %v9173, %v9174
        %v9176 = vsel %vm1083, %v9151, 0.0
        %v9177 = vadd.f32 %v9175, %v9176
        %v9178 = vsel %vm1083, %v9152, 0.0
        %v9179 = vadd.f32 %v9177, %v9178
        %v9180 = vsel %vm1083, %v9153, 0.0
        %v9181 = vadd.f32 %v9179, %v9180
        %v9182 = vsel %vm1083, %v9154, 0.0
        %v9183 = vadd.f32 %v9181, %v9182
        %v9184 = vsel %vm1083, %v9155, 0.0
        %v9185 = vadd.f32 %v9183, %v9184
        %v9186 = vsel %vm1083, %v9156, 0.0
        %v9187 = vadd.f32 %v9185, %v9186
        %v9188 = vrot.slane %v9187, 4
        %v9189 = vadd.f32 %v9187, %v9188
        %v9190 = vrot.slane %v9189, 2
        %v9191 = vadd.f32 %v9189, %v9190
        %v9192 = vrot.slane %v9191, 1
        %v9193 = vadd.f32 %v9191, %v9192
        %v9194 = vmul.f32 %v9193, 0.0078125
        %v9195 = vmul.f32 %v9140, %v9140
        %v9196 = vsub.f32 %v9194, %v9195
        %v9197 = vsub.f32 %v9087, %v9140
        %v9198 = vsub.f32 %v9088, %v9140
        %v9199 = vsub.f32 %v9089, %v9140
        %v9200 = vsub.f32 %v9090, %v9140
        %v9201 = vsub.f32 %v9091, %v9140
        %v9202 = vsub.f32 %v9092, %v9140
        %v9203 = vsub.f32 %v9093, %v9140
        %v9204 = vsub.f32 %v9094, %v9140
        %v9205 = vsub.f32 %v9095, %v9140
        %v9206 = vsub.f32 %v9096, %v9140
        %v9207 = vsub.f32 %v9097, %v9140
        %v9208 = vsub.f32 %v9098, %v9140
        %v9209 = vsub.f32 %v9099, %v9140
        %v9210 = vsub.f32 %v9100, %v9140
        %v9211 = vsub.f32 %v9101, %v9140
        %v9212 = vsub.f32 %v9102, %v9140
        %v9213 = vadd.f32 %v9196, 1e-05
        %v9214 = vrsqrt.pop %v9213
        %v9215 = vmul.f32 %v9197, %v9214
        %v9216 = vmul.f32 %v9198, %v9214
        %v9217 = vmul.f32 %v9199, %v9214
        %v9218 = vmul.f32 %v9200, %v9214
        %v9219 = vmul.f32 %v9201, %v9214
        %v9220 = vmul.f32 %v9202, %v9214
        %v9221 = vmul.f32 %v9203, %v9214
        %v9222 = vmul.f32 %v9204, %v9214
        %v9223 = vmul.f32 %v9205, %v9214
        %v9224 = vmul.f32 %v9206, %v9214
        %v9225 = vmul.f32 %v9207, %v9214
        %v9226 = vmul.f32 %v9208, %v9214
        %v9227 = vmul.f32 %v9209, %v9214
        %v9228 = vmul.f32 %v9210, %v9214
        %v9229 = vmul.f32 %v9211, %v9214
        %v9230 = vmul.f32 %v9212, %v9214
        %v9231 = vld [vmem:[%s18] sm:$0x1]
        %v9233 = vlaneseq
        %v9234 = vshrl.u32 %v9233, 7
        %v9235 = vsub.s32 0, %v9234
        %v9236 = vrot.slane %v9231, %v9235
        %v9238 = vmul.f32 %v9215, %v9236
        %v9239 = vmul.f32 %v9216, %v9236
        %v9240 = vmul.f32 %v9217, %v9236
        %v9241 = vmul.f32 %v9218, %v9236
        %v9242 = vmul.f32 %v9219, %v9236
        %v9243 = vmul.f32 %v9220, %v9236
        %v9244 = vmul.f32 %v9221, %v9236
        %v9245 = vmul.f32 %v9222, %v9236
        %v9246 = vmul.f32 %v9223, %v9236
        %v9247 = vmul.f32 %v9224, %v9236
        %v9248 = vmul.f32 %v9225, %v9236
        %v9249 = vmul.f32 %v9226, %v9236
        %v9250 = vmul.f32 %v9227, %v9236
        %v9251 = vmul.f32 %v9228, %v9236
        %v9252 = vmul.f32 %v9229, %v9236
        %v9253 = vmul.f32 %v9230, %v9236
        %v9254 = vld [vmem:[%s19] sm:$0x1]
        %v9256 = vlaneseq
        %v9257 = vshrl.u32 %v9256, 7
        %v9258 = vsub.s32 0, %v9257
        %v9259 = vrot.slane %v9254, %v9258
        %v9261 = vadd.f32 %v9238, %v9259
        %v9262 = vadd.f32 %v9239, %v9259
        %v9263 = vadd.f32 %v9240, %v9259
        %v9264 = vadd.f32 %v9241, %v9259
        %v9265 = vadd.f32 %v9242, %v9259
        %v9266 = vadd.f32 %v9243, %v9259
        %v9267 = vadd.f32 %v9244, %v9259
        %v9268 = vadd.f32 %v9245, %v9259
        %v9269 = vadd.f32 %v9246, %v9259
        %v9270 = vadd.f32 %v9247, %v9259
        %v9271 = vadd.f32 %v9248, %v9259
        %v9272 = vadd.f32 %v9249, %v9259
        %v9273 = vadd.f32 %v9250, %v9259
        %v9274 = vadd.f32 %v9251, %v9259
        %v9275 = vadd.f32 %v9252, %v9259
        %v9276 = vadd.f32 %v9253, %v9259
        %vm9277 = vcmp.ge.f32.partialorder %v9261, 0.0
        %vm9278 = vcmp.ge.f32.partialorder %v9262, 0.0
        %vm9279 = vcmp.ge.f32.partialorder %v9263, 0.0
        %vm9280 = vcmp.ge.f32.partialorder %v9264, 0.0
        %vm9281 = vcmp.ge.f32.partialorder %v9265, 0.0
        %vm9282 = vcmp.ge.f32.partialorder %v9266, 0.0
        %vm9283 = vcmp.ge.f32.partialorder %v9267, 0.0
        %vm9284 = vcmp.ge.f32.partialorder %v9268, 0.0
        %vm9285 = vcmp.ge.f32.partialorder %v9269, 0.0
        %vm9286 = vcmp.ge.f32.partialorder %v9270, 0.0
        %vm9287 = vcmp.ge.f32.partialorder %v9271, 0.0
        %vm9288 = vcmp.ge.f32.partialorder %v9272, 0.0
        %vm9289 = vcmp.ge.f32.partialorder %v9273, 0.0
        %vm9290 = vcmp.ge.f32.partialorder %v9274, 0.0
        %vm9291 = vcmp.ge.f32.partialorder %v9275, 0.0
        %vm9292 = vcmp.ge.f32.partialorder %v9276, 0.0
        %v9293 = vld [vmem:[%s20] sm:$0x1]
        %v9295 = vlaneseq
        %v9296 = vshrl.u32 %v9295, 7
        %v9297 = vsub.s32 0, %v9296
        %v9298 = vrot.slane %v9293, %v9297
        %v9300 = vmul.f32 %v9298, %v9261
        %v9301 = vmul.f32 %v9298, %v9262
        %v9302 = vmul.f32 %v9298, %v9263
        %v9303 = vmul.f32 %v9298, %v9264
        %v9304 = vmul.f32 %v9298, %v9265
        %v9305 = vmul.f32 %v9298, %v9266
        %v9306 = vmul.f32 %v9298, %v9267
        %v9307 = vmul.f32 %v9298, %v9268
        %v9308 = vmul.f32 %v9298, %v9269
        %v9309 = vmul.f32 %v9298, %v9270
        %v9310 = vmul.f32 %v9298, %v9271
        %v9311 = vmul.f32 %v9298, %v9272
        %v9312 = vmul.f32 %v9298, %v9273
        %v9313 = vmul.f32 %v9298, %v9274
        %v9314 = vmul.f32 %v9298, %v9275
        %v9315 = vmul.f32 %v9298, %v9276
        %v9316 = vsel %vm9277, %v9261, %v9300
        %v9317 = vsel %vm9278, %v9262, %v9301
        %v9318 = vsel %vm9279, %v9263, %v9302
        %v9319 = vsel %vm9280, %v9264, %v9303
        %v9320 = vsel %vm9281, %v9265, %v9304
        %v9321 = vsel %vm9282, %v9266, %v9305
        %v9322 = vsel %vm9283, %v9267, %v9306
        %v9323 = vsel %vm9284, %v9268, %v9307
        %v9324 = vsel %vm9285, %v9269, %v9308
        %v9325 = vsel %vm9286, %v9270, %v9309
        %v9326 = vsel %vm9287, %v9271, %v9310
        %v9327 = vsel %vm9288, %v9272, %v9311
        %v9328 = vsel %vm9289, %v9273, %v9312
        %v9329 = vsel %vm9290, %v9274, %v9313
        %v9330 = vsel %vm9291, %v9275, %v9314
        %v9331 = vsel %vm9292, %v9276, %v9315
        %9332 = vst.msk [vmem:[%s649] sm:$0xff] %vm1083, %v9316
        %9333 = vst.msk [vmem:[%s649 + $0x8] sm:$0xff] %vm1083, %v9317
        %9334 = vst.msk [vmem:[%s649 + $0x10] sm:$0xff] %vm1083, %v9318
        %9335 = vst.msk [vmem:[%s649 + $0x18] sm:$0xff] %vm1083, %v9319
        %9336 = vst.msk [vmem:[%s649 + $0x20] sm:$0xff] %vm1083, %v9320
        %9337 = vst.msk [vmem:[%s649 + $0x28] sm:$0xff] %vm1083, %v9321
        %9338 = vst.msk [vmem:[%s649 + $0x30] sm:$0xff] %vm1083, %v9322
        %9339 = vst.msk [vmem:[%s649 + $0x38] sm:$0xff] %vm1083, %v9323
        %9340 = vst.msk [vmem:[%s649 + $0x40] sm:$0xff] %vm1083, %v9324
        %9341 = vst.msk [vmem:[%s649 + $0x48] sm:$0xff] %vm1083, %v9325
        %9342 = vst.msk [vmem:[%s649 + $0x50] sm:$0xff] %vm1083, %v9326
        %9343 = vst.msk [vmem:[%s649 + $0x58] sm:$0xff] %vm1083, %v9327
        %9344 = vst.msk [vmem:[%s649 + $0x60] sm:$0xff] %vm1083, %v9328
        %9345 = vst.msk [vmem:[%s649 + $0x68] sm:$0xff] %vm1083, %v9329
        %9346 = vst.msk [vmem:[%s649 + $0x70] sm:$0xff] %vm1083, %v9330
        %9347 = vst.msk [vmem:[%s649 + $0x78] sm:$0xff] %vm1083, %v9331
        %s9348 = sand.u32 %s489, 1
        %s9349 = scalar_lea.sflag [#allocation4], %s9348
        %s9350 = sand.u32 %s489, 1
        %s9351 = smul.addr %s9350, 128
        %s9352 = scalar_lea.vmem [#allocation3], %s9351
        // Predicated region
        $region105: #{dilated_dense_net.1} parent=103 // pred_check
          %p9353 = pneg %p499
        $region106: #{dilated_dense_net.1} parent=103 // pred_check_branch
          %9355 = sbr.rel (%p9353) target = $region108
        $region107: #{dilated_dense_net.1} parent=103 // pred_region
          %s9357 = ssub.s32 2048, 2048
          %9358 = vsyncadd %s9349, %s9357
          %s9359 = smul.addr %s35, 16
          %s9360 = smul.addr %s9359, 128
          %s9361 = scalar_lea.hbm %s21, %s9360
          %s9362 = sshll.u32 %s9352, 4
          %s9363 = int_to_ptr.vmem [resolvable:$true] %s9362
          %9368 = dma.vmem_to_hbm [thread:$0]  %s9363, 2048, %s9361, %s9349, 128, 128, 8
        $region108: #{dilated_dense_net.1} parent=103 // pred_fallthru
          _
      $region104: #{dilated_dense_net.1} parent=5 // pred_fallthru
        _
      %p9369 = scmp.le.s32.totalorder 2, %s30
      // Predicated region
      $region109: #{dilated_dense_net.1} parent=5 // pred_check
        %p9370 = pneg %p9369
      $region110: #{dilated_dense_net.1} parent=5 // pred_check_branch
        %9372 = sbr.rel (%p9370) target = $region112
      $region111: #{dilated_dense_net.1} parent=5 // pred_region
        %s9373 = ssub.s32 %s30, 2
        // Predicated region
        $region113: #{dilated_dense_net.1} parent=111 // pred_check
          %p9374 = pneg %p505
        $region114: #{dilated_dense_net.1} parent=111 // pred_check_branch
          %9376 = sbr.rel (%p9374) target = $region116
        $region115: #{dilated_dense_net.1} parent=111 // pred_region
          %s9377 = sand.u32 %s490, 1
          %s9378 = scalar_lea.sflag [#allocation4], %s9377
          %s9379 = sand.u32 %s490, 1
          %s9380 = smul.addr %s9379, 128
          %s9381 = scalar_lea.vmem [#allocation3], %s9380
          %9382 = dma.done %s9378, 2048
        $region116: #{dilated_dense_net.1} parent=111 // pred_fallthru
          _
      $region112: #{dilated_dense_net.1} parent=5 // pred_fallthru
        _
    $region6: #{dilated_dense_net.1} parent=1 // loop_footer
      %s34 = sadd.s32 1, %s30
    $region7: #{dilated_dense_net.1} parent=1 // loop_footer_branch
      %29 = sbr.rel target = $region3
    $region8: #{dilated_dense_net.1} parent=1 // loop_exit
      _
    %9383 = vsyncpa [#allocation4], 1
    %s9384 = scalar_lea.sflag [#allocation4], 1
    %9385 = vsyncpa %s9384, 1

</llo_original>
